<compile_context>
chip_gen: v7x
topology: tpu7x:2x2x1
jax: 0.10.0
libtpu: 0.0.40
codegen_flags: <defaults>
</compile_context>

<pallas_src>
import functools

import jax
import jax.numpy as jnp
from jax.experimental import pallas as pl
from jax.experimental.pallas import tpu as pltpu


_FULL_K_MAX = 4096          # largest K kept as a single (un-tiled) reduction
_TK_BIG = 2048              # K tile when K > _FULL_K_MAX
_VMEM_LIMIT = 32 * 1024 * 1024   # explicit scoped-VMEM budget (safe on v5e/v6e/v7x)


def _round_up(x, m):
    return (x + m - 1) // m * m


def _pick_tile(p, candidates):
    """Largest candidate that exactly divides p, else p itself (full dim)."""
    for c in candidates:
        if p % c == 0:
            return c
    return p


# ---------------------------------------------------------------------------
# Pallas kernels: matmul + bias + (optional) ReLU, f32 accumulation on MXU.
# ---------------------------------------------------------------------------
def _mm_bias_kernel(x_ref, w_ref, b_ref, o_ref, *, relu):
    """Single K step: no accumulator scratch, no pl.when."""
    out = jnp.dot(x_ref[...], w_ref[...], preferred_element_type=jnp.float32)
    out = out + b_ref[...]
    if relu:
        out = jnp.maximum(out, 0.0)
    o_ref[...] = out.astype(o_ref.dtype)


def _mm_bias_acc_kernel(x_ref, w_ref, b_ref, o_ref, acc_ref, *, relu):
    """K-tiled fallback for very large K (not used at the test shapes)."""
    k = pl.program_id(2)
    prod = jnp.dot(x_ref[...], w_ref[...], preferred_element_type=jnp.float32)

    @pl.when(k == 0)
    def _init():
        acc_ref[...] = prod          # direct write: no zero-fill + "+="

    @pl.when(k > 0)
    def _accum():
        acc_ref[...] += prod

    @pl.when(k == pl.num_programs(2) - 1)
    def _finalize():
        out = acc_ref[...] + b_ref[...]
        if relu:
            out = jnp.maximum(out, 0.0)
        o_ref[...] = out.astype(o_ref.dtype)


def matmul_bias(x2d, w, b, *, relu, out_dtype):
    """act(x @ w + b) with a tiled Pallas kernel.

    w: (K, N) bf16, b: (1, N) f32 — packed once at init, no K/N zero padding
    (full-dim blocks are used instead, which the (8,128) rule allows).
    """
    M, K = x2d.shape
    Kw, N = w.shape
    assert Kw == K, (Kw, K)

    xb = x2d.astype(jnp.bfloat16)

    # ---- N tiling: never pad N; tile only if it is large and 128-divisible.
    tn = N if N <= 512 else _pick_tile(N, (512, 256, 128))
    n_tiles_n = N // tn

    # ---- M tiling: minimize padding; when the N axis has a single tile,
    # prefer two M tiles so both TensorCores are busy on v7x.
    want_split_m = (n_tiles_n == 1)
    if M <= 512:
        if want_split_m and M >= 256 and M % 2 == 0 and (M // 2) % 8 == 0:
            tm, Mp = M // 2, M
        else:
            tm, Mp = M, M                      # single full-M block, no padding
    else:
        best = None
        for cand in (512, 256, 128, 64, 32, 16, 8):
            mp_c = _round_up(M, cand)
            nmt = mp_c // cand
            even_pen = 0 if (not want_split_m or nmt % 2 == 0) else 1
            key = (mp_c - M, even_pen, -cand)
            if best is None or key < best[0]:
                best = (key, cand, mp_c)
        tm, Mp = best[1], best[2]

    # ---- K tiling: full K (single step) whenever it fits comfortably.
    if K <= _FULL_K_MAX:
        tk, Kp, nk = K, K, 1
    else:
        tk = _TK_BIG
        Kp = _round_up(K, tk)
        nk = Kp // tk

    if (Mp, Kp) != (M, K):
        xb = jnp.pad(xb, ((0, Mp - M), (0, Kp - K)))
    wp = w if Kp == K else jnp.pad(w, ((0, Kp - K), (0, 0)))

    nm = Mp // tm
    out_item = jnp.dtype(out_dtype).itemsize
    cost = pl.CostEstimate(
        flops=2 * Mp * N * Kp,
        transcendentals=0,
        bytes_accessed=(Mp * Kp + Kp * N) * 2 + N * 4 + Mp * N * out_item,
    )

    if nk == 1:
        kernel = functools.partial(_mm_bias_kernel, relu=relu)
        grid = (nm, n_tiles_n)
        in_specs = [
            pl.BlockSpec((tm, tk), lambda i, j: (i, 0)),
            pl.BlockSpec((tk, tn), lambda i, j: (0, j)),
            pl.BlockSpec((1, tn), lambda i, j: (0, j)),
        ]
        out_specs = pl.BlockSpec((tm, tn), lambda i, j: (i, j))
        scratch = []
        semantics = ("parallel", "parallel")
    else:
        kernel = functools.partial(_mm_bias_acc_kernel, relu=relu)
        grid = (nm, n_tiles_n, nk)
        in_specs = [
            pl.BlockSpec((tm, tk), lambda i, j, k: (i, k)),
            pl.BlockSpec((tk, tn), lambda i, j, k: (k, j)),
            pl.BlockSpec((1, tn), lambda i, j, k: (0, j)),
        ]
        out_specs = pl.BlockSpec((tm, tn), lambda i, j, k: (i, j))
        scratch = [pltpu.VMEM((tm, tn), jnp.float32)]
        semantics = ("parallel", "parallel", "arbitrary")

    out = pl.pallas_call(
        kernel,
        out_shape=jax.ShapeDtypeStruct((Mp, N), out_dtype),
        grid_spec=pltpu.PrefetchScalarGridSpec(
            num_scalar_prefetch=0,
            grid=grid,
            in_specs=in_specs,
            out_specs=out_specs,
            scratch_shapes=scratch,
        ),
        compiler_params=pltpu.CompilerParams(
            dimension_semantics=semantics,
            vmem_limit_bytes=_VMEM_LIMIT),
        cost_estimate=cost,
    )(xb, wp, b)

    return out if Mp == M else out[:M]


# ---------------------------------------------------------------------------
# Conv2dSame (PyTorch padding rule) lowered to im2col + Pallas matmul kernel.
# ---------------------------------------------------------------------------
def conv2d_same(x_nhwc, w, b, *, ksize, stride, relu, out_dtype):
    n, h, wd, cin = x_nhwc.shape
    kk_cin, cout = w.shape
    assert kk_cin == ksize * ksize * cin, (kk_cin, ksize, cin)

    total = ksize - 1
    lo, hi = total // 2, total - total // 2          # symmetric for k=3 (1,1)
    xp = jnp.pad(x_nhwc, ((0, 0), (lo, hi), (lo, hi), (0, 0)))
    hp, wp_ = h + total, wd + total
    ho = (hp - ksize) // stride + 1
    wo = (wp_ - ksize) // stride + 1

    # TODO(synk): fuse this 3x3 patch gather into the Pallas kernel's K axis
    # (shifted/strided index_maps or manual halo DMA) instead of materializing
    # the 9x patch tensor in HBM.
    cols = []
    for kh in range(ksize):
        for kw in range(ksize):
            cols.append(xp[:, kh:kh + stride * (ho - 1) + 1:stride,
                              kw:kw + stride * (wo - 1) + 1:stride, :])
    patches = jnp.concatenate(cols, axis=-1)          # (N, Ho, Wo, k*k*Cin)
    x2d = patches.reshape(n * ho * wo, ksize * ksize * cin)

    out2d = matmul_bias(x2d, w, b, relu=relu, out_dtype=out_dtype)
    return out2d.reshape(n, ho, wo, cout)


# ---------------------------------------------------------------------------
# affine_grid + grid_sample (bilinear, zero padding, align_corners=False).
# ---------------------------------------------------------------------------
def affine_grid(theta, size_hw):
    """theta: (N, 2, 3) f32 -> normalized sampling grid (N, H, W, 2)."""
    H, W = size_hw
    xs = (2.0 * (jnp.arange(W, dtype=jnp.float32) + 0.5) / W) - 1.0
    ys = (2.0 * (jnp.arange(H, dtype=jnp.float32) + 0.5) / H) - 1.0
    gx, gy = jnp.meshgrid(xs, ys)                          # (H, W)
    base = jnp.stack([gx, gy, jnp.ones_like(gx)], axis=-1)  # (H, W, 3)
    return jnp.einsum("hwk,nck->nhwc", base, theta)         # (N, H, W, 2)


def grid_sample_bilinear(img_nhwc, grid):
    """Bilinear grid sample, zero padding, align_corners=False (PyTorch)."""
    # TODO(synk): data-dependent bilinear gather kept in plain JAX; a Pallas
    #             scalar-prefetch / DMA gather kernel is the next step.
    n, h, w, c = img_nhwc.shape
    gx, gy = grid[..., 0], grid[..., 1]
    ix = ((gx + 1.0) * w - 1.0) / 2.0
    iy = ((gy + 1.0) * h - 1.0) / 2.0
    ix0 = jnp.floor(ix)
    iy0 = jnp.floor(iy)
    ix1, iy1 = ix0 + 1.0, iy0 + 1.0
    wx1, wy1 = ix - ix0, iy - iy0
    wx0, wy0 = 1.0 - wx1, 1.0 - wy1
    bidx = jnp.arange(n).reshape(n, 1, 1)

    def gather(iy_, ix_):
        valid = (ix_ >= 0) & (ix_ <= w - 1) & (iy_ >= 0) & (iy_ <= h - 1)
        ixc = jnp.clip(ix_, 0, w - 1).astype(jnp.int32)
        iyc = jnp.clip(iy_, 0, h - 1).astype(jnp.int32)
        vals = img_nhwc[bidx, iyc, ixc]                    # (N, Ho, Wo, C)
        return vals * valid[..., None].astype(img_nhwc.dtype)

    return (gather(iy0, ix0) * (wy0 * wx0)[..., None]
            + gather(iy0, ix1) * (wy0 * wx1)[..., None]
            + gather(iy1, ix0) * (wy1 * wx0)[..., None]
            + gather(iy1, ix1) * (wy1 * wx1)[..., None])


# ---------------------------------------------------------------------------
# Parameter packing.  Weights are cast to bf16 and laid out ONCE at init; no
# K/N zero padding (the kernel uses full-dim blocks); biases stay f32 (1, N).
# All static architecture metadata lives in the Python constants below, never
# in the traced params pytree (this is what broke the previous version).
# ---------------------------------------------------------------------------
_STN_CONVS = (("stn_conv1", 2), ("stn_conv2", 2), ("stn_conv3", 2))
_DEC_CONVS = (("dec_conv1", 2), ("dec_conv2", 1), ("dec_conv3", 2),
              ("dec_conv4", 1), ("dec_conv5", 2), ("dec_conv6", 2),
              ("dec_conv7", 2))


def _pack_matmul(w2d, bias):
    return {"w": jnp.asarray(w2d, jnp.bfloat16),
            "b": jnp.asarray(bias, jnp.float32).reshape(1, -1)}


def _chw_to_hwc_rows(w_rows, c, h, w):
    """Permute fan-in rows from PyTorch CHW-major flatten to HWC-major so the
    runtime flatten of the NHWC activation is a plain reshape (no transpose)."""
    fan_out = w_rows.shape[-1]
    return (w_rows.reshape(c, h, w, fan_out)
                  .transpose(1, 2, 0, 3)
                  .reshape(c * h * w, fan_out))


def _pack_dense(key, fan_in, fan_out, scale=0.05, chw_shape=None):
    kw, kb = jax.random.split(key)
    w = jax.random.normal(kw, (fan_in, fan_out), jnp.float32) * scale
    b = jax.random.normal(kb, (fan_out,), jnp.float32) * scale
    if chw_shape is not None:
        w = _chw_to_hwc_rows(w, *chw_shape)     # hoisted permutation (init-time)
    return _pack_matmul(w, b)


def _pack_conv(key, k, cin, cout, scale=0.05):
    kw, kb = jax.random.split(key)
    # HWIO weight; flattened (kh, kw, cin) row order matches the im2col gather.
    w = jax.random.normal(kw, (k, k, cin, cout), jnp.float32) * scale
    b = jax.random.normal(kb, (cout,), jnp.float32) * scale
    return _pack_matmul(w.reshape(k * k * cin, cout), b)


def init_stegastamp_decoder_params(key, secret_size, height, width, in_channel):
    keys = jax.random.split(key, 13)
    c = in_channel
    p = {}
    # STN feature extractor.
    p["stn_conv1"] = _pack_conv(keys[0], 3, c, 32)
    p["stn_conv2"] = _pack_conv(keys[1], 3, 32, 64)
    p["stn_conv3"] = _pack_conv(keys[2], 3, 64, 128)
    p["stn_fc"] = _pack_dense(keys[3], 128 * (height // 8) * (width // 8), 128,
                              chw_shape=(128, height // 8, width // 8))
    # W_fc1 / b_fc1: identity affine at init, exactly as in the PyTorch module.
    p["fc1_w"] = jnp.zeros((128, 6), jnp.float32)
    p["fc1_b"] = jnp.array([1.0, 0.0, 0.0, 0.0, 1.0, 0.0], jnp.float32)
    # Decoder conv tower.
    p["dec_conv1"] = _pack_conv(keys[4], 3, c, 32)
    p["dec_conv2"] = _pack_conv(keys[5], 3, 32, 32)
    p["dec_conv3"] = _pack_conv(keys[6], 3, 32, 64)
    p["dec_conv4"] = _pack_conv(keys[7], 3, 64, 64)
    p["dec_conv5"] = _pack_conv(keys[8], 3, 64, 64)
    p["dec_conv6"] = _pack_conv(keys[9], 3, 64, 128)
    p["dec_conv7"] = _pack_conv(keys[10], 3, 128, 128)
    p["dec_fc1"] = _pack_dense(keys[11], 128 * (height // 32) * (width // 32), 512,
                               chw_shape=(128, height // 32, width // 32))
    p["dec_fc2"] = _pack_dense(keys[12], 512, secret_size)
    return p


# ---------------------------------------------------------------------------
# Forward pass (matches StegaStampDecoder.forward).
# ---------------------------------------------------------------------------
def stegastamp_decoder_forward(params, image_nchw, *, height, width, in_channel):
    n = image_nchw.shape[0]
    image = image_nchw.astype(jnp.float32) - 0.5
    img_nhwc = jnp.transpose(image, (0, 2, 3, 1))

    # ---- STN feature extractor + affine params ----
    x = img_nhwc
    for name, stride in _STN_CONVS:
        x = conv2d_same(x, params[name]["w"], params[name]["b"],
                        ksize=3, stride=stride, relu=True, out_dtype=jnp.bfloat16)
    # stn_fc weight rows were pre-permuted to HWC order at init, so a plain
    # NHWC reshape replaces PyTorch's NCHW .view(N, -1) flatten.
    stn_flat = x.reshape(n, -1)
    stn = matmul_bias(stn_flat, params["stn_fc"]["w"], params["stn_fc"]["b"],
                      relu=True, out_dtype=jnp.float32)

    # Tiny, correctness-sensitive affine head (128 -> 6): plain f32 jnp.dot.
    # A pallas_call here is launch-overhead dominated (<5% MXU utilization).
    theta = (jnp.dot(stn, params["fc1_w"]) + params["fc1_b"]).reshape(n, 2, 3)

    # ---- spatial transformer: affine_grid + bilinear grid_sample ----
    grid = affine_grid(theta, (height, width))
    transformed = grid_sample_bilinear(img_nhwc, grid)

    # ---- decoder conv tower ----
    y = transformed
    for name, stride in _DEC_CONVS:
        y = conv2d_same(y, params[name]["w"], params[name]["b"],
                        ksize=3, stride=stride, relu=True, out_dtype=jnp.bfloat16)

    flat = y.reshape(n, -1)         # dec_fc1 rows pre-permuted to HWC at init
    h1 = matmul_bias(flat, params["dec_fc1"]["w"], params["dec_fc1"]["b"],
                     relu=True, out_dtype=jnp.bfloat16)
    secret = matmul_bias(h1, params["dec_fc2"]["w"], params["dec_fc2"]["b"],
                         relu=False, out_dtype=jnp.float32)
    return secret


# ---------------------------------------------------------------------------
if __name__ == "__main__":
    # Smallest shapes consistent with the module (spatial must be >= 32 so the
    # decoder's H//32 flatten is non-degenerate).
    SECRET_SIZE = 8
    HEIGHT = 32
    WIDTH = 32
    IN_CHANNEL = 3
    BATCH = 2

    key = jax.random.PRNGKey(0)
    k_params, k_image = jax.random.split(key)

    params = init_stegastamp_decoder_params(
        k_params, SECRET_SIZE, HEIGHT, WIDTH, IN_CHANNEL)
    image = jax.random.uniform(
        k_image, (BATCH, IN_CHANNEL, HEIGHT, WIDTH), jnp.float32)

    fwd = jax.jit(functools.partial(
        stegastamp_decoder_forward,
        height=HEIGHT, width=WIDTH, in_channel=IN_CHANNEL))
    out = fwd(params, image)
    jax.block_until_ready(out)

    assert out.shape == (BATCH, SECRET_SIZE), out.shape
    assert out.dtype == jnp.float32
    print("KERNEL_OK")
</pallas_src>

<mosaic_0001>
module attributes {stable_mosaic.version = 11 : i64} {
  func.func private @main(%arg0: i32) attributes {dimension_semantics = [#tpu.dimension_semantics<core_parallel>], iteration_bounds = array<i64: 2>, tpu.core_type = #tpu.core_type<sc_scalar_subcore>, window_params = []} {
    return
  }
}

module attributes {stable_mosaic.version = 11 : i64} {
  func.func private @main(%arg0: i32) attributes {dimension_semantics = [#tpu.dimension_semantics<core_parallel>], iteration_bounds = array<i64: 2>, tpu.core_type = #tpu.core_type<sc_scalar_subcore>, window_params = []} {
    return
  }
}

module attributes {stable_mosaic.version = 11 : i64} {
  func.func @_mm_bias_kernel(%arg0: i32, %arg1: i32, %arg2: memref<256x27xbf16, #tpu.memory_space<vmem>>, %arg3: memref<27x32xbf16, #tpu.memory_space<vmem>>, %arg4: memref<1x32xf32, #tpu.memory_space<vmem>>, %arg5: memref<256x32xbf16, #tpu.memory_space<vmem>>) attributes {dimension_semantics = [#tpu.dimension_semantics<parallel>, #tpu.dimension_semantics<parallel>], iteration_bounds = array<i64: 2, 1>, scalar_prefetch = 0 : i64, scratch_operands = 0 : i64, tpu.core_type = #tpu.core_type<tc>, window_params = [{transform_indices = @transform_0, window_bounds = array<i64: 256, 27>}, {transform_indices = @transform_1, window_bounds = array<i64: 27, 32>}, {transform_indices = @transform_2, window_bounds = array<i64: 1, 32>}, {transform_indices = @transform_3, window_bounds = array<i64: 256, 32>}]} {
    %c0 = arith.constant 0 : index
    %c0_0 = arith.constant 0 : index
    %0 = vector.load %arg2[%c0, %c0_0] : memref<256x27xbf16, #tpu.memory_space<vmem>>, vector<256x27xbf16>
    %c0_1 = arith.constant 0 : index
    %c0_2 = arith.constant 0 : index
    %1 = vector.load %arg3[%c0_1, %c0_2] : memref<27x32xbf16, #tpu.memory_space<vmem>>, vector<27x32xbf16>
    %cst = arith.constant dense<0.000000e+00> : vector<256x32xf32>
    %2 = tpu.matmul %0, %1, %cst {dimension_numbers = #tpu.dot_dimension_numbers<[1], [0], [0], [1], [0, 0, 1, 1], [], []>} : vector<256x27xbf16>, vector<27x32xbf16>, vector<256x32xf32> -> vector<256x32xf32>
    %c0_3 = arith.constant 0 : index
    %c0_4 = arith.constant 0 : index
    %3 = vector.load %arg4[%c0_3, %c0_4] : memref<1x32xf32, #tpu.memory_space<vmem>>, vector<1x32xf32>
    %4 = vector.broadcast %3 : vector<1x32xf32> to vector<256x32xf32>
    %5 = arith.addf %2, %4 : vector<256x32xf32>
    %cst_5 = arith.constant 0.000000e+00 : f32
    %6 = vector.broadcast %cst_5 : f32 to vector<256x32xf32>
    %7 = arith.maximumf %5, %6 : vector<256x32xf32>
    %8 = arith.truncf %7 : vector<256x32xf32> to vector<256x32xbf16>
    %c0_6 = arith.constant 0 : index
    %c0_7 = arith.constant 0 : index
    %9 = vector.load %arg5[%c0_6, %c0_7] : memref<256x32xbf16, #tpu.memory_space<vmem>>, vector<256x32xbf16>
    tpu.vector_store %arg5[%c0_6, %c0_7], %8 {strides = array<i32>} : memref<256x32xbf16, #tpu.memory_space<vmem>>, vector<256x32xbf16>,
    return
  }
  func.func @transform_0(%arg0: i32, %arg1: i32) -> (i32, i32) {
    %c0_i32 = arith.constant 0 : i32
    %c0_i32_0 = arith.constant 0 : i32
    return %arg0, %c0_i32 : i32, i32
  }
  func.func @transform_1(%arg0: i32, %arg1: i32) -> (i32, i32) {
    %c0_i32 = arith.constant 0 : i32
    %c0_i32_0 = arith.constant 0 : i32
    return %c0_i32, %arg1 : i32, i32
  }
  func.func @transform_2(%arg0: i32, %arg1: i32) -> (i32, i32) {
    %c0_i32 = arith.constant 0 : i32
    %c0_i32_0 = arith.constant 0 : i32
    return %c0_i32, %arg1 : i32, i32
  }
  func.func @transform_3(%arg0: i32, %arg1: i32) -> (i32, i32) {
    %c0_i32 = arith.constant 0 : i32
    return %arg0, %arg1 : i32, i32
  }
}

module attributes {stable_mosaic.version = 11 : i64} {
  func.func @_mm_bias_kernel(%arg0: i32, %arg1: i32, %arg2: memref<128x288xbf16, #tpu.memory_space<vmem>>, %arg3: memref<288x64xbf16, #tpu.memory_space<vmem>>, %arg4: memref<1x64xf32, #tpu.memory_space<vmem>>, %arg5: memref<128x64xbf16, #tpu.memory_space<vmem>>) attributes {dimension_semantics = [#tpu.dimension_semantics<parallel>, #tpu.dimension_semantics<parallel>], iteration_bounds = array<i64: 1, 1>, scalar_prefetch = 0 : i64, scratch_operands = 0 : i64, tpu.core_type = #tpu.core_type<tc>, window_params = [{transform_indices = @transform_0, window_bounds = array<i64: 128, 288>}, {transform_indices = @transform_1, window_bounds = array<i64: 288, 64>}, {transform_indices = @transform_2, window_bounds = array<i64: 1, 64>}, {transform_indices = @transform_3, window_bounds = array<i64: 128, 64>}]} {
    %c0 = arith.constant 0 : index
    %c0_0 = arith.constant 0 : index
    %0 = vector.load %arg2[%c0, %c0_0] : memref<128x288xbf16, #tpu.memory_space<vmem>>, vector<128x288xbf16>
    %c0_1 = arith.constant 0 : index
    %c0_2 = arith.constant 0 : index
    %1 = vector.load %arg3[%c0_1, %c0_2] : memref<288x64xbf16, #tpu.memory_space<vmem>>, vector<288x64xbf16>
    %cst = arith.constant dense<0.000000e+00> : vector<128x64xf32>
    %2 = tpu.matmul %0, %1, %cst {dimension_numbers = #tpu.dot_dimension_numbers<[1], [0], [0], [1], [0, 0, 1, 1], [], []>} : vector<128x288xbf16>, vector<288x64xbf16>, vector<128x64xf32> -> vector<128x64xf32>
    %c0_3 = arith.constant 0 : index
    %c0_4 = arith.constant 0 : index
    %3 = vector.load %arg4[%c0_3, %c0_4] : memref<1x64xf32, #tpu.memory_space<vmem>>, vector<1x64xf32>
    %4 = vector.broadcast %3 : vector<1x64xf32> to vector<128x64xf32>
    %5 = arith.addf %2, %4 : vector<128x64xf32>
    %cst_5 = arith.constant 0.000000e+00 : f32
    %6 = vector.broadcast %cst_5 : f32 to vector<128x64xf32>
    %7 = arith.maximumf %5, %6 : vector<128x64xf32>
    %8 = arith.truncf %7 : vector<128x64xf32> to vector<128x64xbf16>
    %c0_6 = arith.constant 0 : index
    %c0_7 = arith.constant 0 : index
    %9 = vector.load %arg5[%c0_6, %c0_7] : memref<128x64xbf16, #tpu.memory_space<vmem>>, vector<128x64xbf16>
    tpu.vector_store %arg5[%c0_6, %c0_7], %8 {strides = array<i32>} : memref<128x64xbf16, #tpu.memory_space<vmem>>, vector<128x64xbf16>,
    return
  }
  func.func @transform_0(%arg0: i32, %arg1: i32) -> (i32, i32) {
    %c0_i32 = arith.constant 0 : i32
    %c0_i32_0 = arith.constant 0 : i32
    return %arg0, %c0_i32 : i32, i32
  }
  func.func @transform_1(%arg0: i32, %arg1: i32) -> (i32, i32) {
    %c0_i32 = arith.constant 0 : i32
    %c0_i32_0 = arith.constant 0 : i32
    return %c0_i32, %arg1 : i32, i32
  }
  func.func @transform_2(%arg0: i32, %arg1: i32) -> (i32, i32) {
    %c0_i32 = arith.constant 0 : i32
    %c0_i32_0 = arith.constant 0 : i32
    return %c0_i32, %arg1 : i32, i32
  }
  func.func @transform_3(%arg0: i32, %arg1: i32) -> (i32, i32) {
    %c0_i32 = arith.constant 0 : i32
    return %arg0, %arg1 : i32, i32
  }
}

module attributes {stable_mosaic.version = 11 : i64} {
  func.func @_mm_bias_kernel(%arg0: i32, %arg1: i32, %arg2: memref<32x576xbf16, #tpu.memory_space<vmem>>, %arg3: memref<576x128xbf16, #tpu.memory_space<vmem>>, %arg4: memref<1x128xf32, #tpu.memory_space<vmem>>, %arg5: memref<32x128xbf16, #tpu.memory_space<vmem>>) attributes {dimension_semantics = [#tpu.dimension_semantics<parallel>, #tpu.dimension_semantics<parallel>], iteration_bounds = array<i64: 1, 1>, scalar_prefetch = 0 : i64, scratch_operands = 0 : i64, tpu.core_type = #tpu.core_type<tc>, window_params = [{transform_indices = @transform_0, window_bounds = array<i64: 32, 576>}, {transform_indices = @transform_1, window_bounds = array<i64: 576, 128>}, {transform_indices = @transform_2, window_bounds = array<i64: 1, 128>}, {transform_indices = @transform_3, window_bounds = array<i64: 32, 128>}]} {
    %c0 = arith.constant 0 : index
    %c0_0 = arith.constant 0 : index
    %0 = vector.load %arg2[%c0, %c0_0] : memref<32x576xbf16, #tpu.memory_space<vmem>>, vector<32x576xbf16>
    %c0_1 = arith.constant 0 : index
    %c0_2 = arith.constant 0 : index
    %1 = vector.load %arg3[%c0_1, %c0_2] : memref<576x128xbf16, #tpu.memory_space<vmem>>, vector<576x128xbf16>
    %cst = arith.constant dense<0.000000e+00> : vector<32x128xf32>
    %2 = tpu.matmul %0, %1, %cst {dimension_numbers = #tpu.dot_dimension_numbers<[1], [0], [0], [1], [0, 0, 1, 1], [], []>} : vector<32x576xbf16>, vector<576x128xbf16>, vector<32x128xf32> -> vector<32x128xf32>
    %c0_3 = arith.constant 0 : index
    %c0_4 = arith.constant 0 : index
    %3 = vector.load %arg4[%c0_3, %c0_4] : memref<1x128xf32, #tpu.memory_space<vmem>>, vector<1x128xf32>
    %4 = vector.broadcast %3 : vector<1x128xf32> to vector<32x128xf32>
    %5 = arith.addf %2, %4 : vector<32x128xf32>
    %cst_5 = arith.constant 0.000000e+00 : f32
    %6 = vector.broadcast %cst_5 : f32 to vector<32x128xf32>
    %7 = arith.maximumf %5, %6 : vector<32x128xf32>
    %8 = arith.truncf %7 : vector<32x128xf32> to vector<32x128xbf16>
    %c0_6 = arith.constant 0 : index
    %c0_7 = arith.constant 0 : index
    %9 = vector.load %arg5[%c0_6, %c0_7] : memref<32x128xbf16, #tpu.memory_space<vmem>>, vector<32x128xbf16>
    tpu.vector_store %arg5[%c0_6, %c0_7], %8 {strides = array<i32>} : memref<32x128xbf16, #tpu.memory_space<vmem>>, vector<32x128xbf16>,
    return
  }
  func.func @transform_0(%arg0: i32, %arg1: i32) -> (i32, i32) {
    %c0_i32 = arith.constant 0 : i32
    %c0_i32_0 = arith.constant 0 : i32
    return %arg0, %c0_i32 : i32, i32
  }
  func.func @transform_1(%arg0: i32, %arg1: i32) -> (i32, i32) {
    %c0_i32 = arith.constant 0 : i32
    %c0_i32_0 = arith.constant 0 : i32
    return %c0_i32, %arg1 : i32, i32
  }
  func.func @transform_2(%arg0: i32, %arg1: i32) -> (i32, i32) {
    %c0_i32 = arith.constant 0 : i32
    %c0_i32_0 = arith.constant 0 : i32
    return %c0_i32, %arg1 : i32, i32
  }
  func.func @transform_3(%arg0: i32, %arg1: i32) -> (i32, i32) {
    %c0_i32 = arith.constant 0 : i32
    return %arg0, %arg1 : i32, i32
  }
}

module attributes {stable_mosaic.version = 11 : i64} {
  func.func @_mm_bias_kernel(%arg0: i32, %arg1: i32, %arg2: memref<2x2048xbf16, #tpu.memory_space<vmem>>, %arg3: memref<2048x128xbf16, #tpu.memory_space<vmem>>, %arg4: memref<1x128xf32, #tpu.memory_space<vmem>>, %arg5: memref<2x128xf32, #tpu.memory_space<vmem>>) attributes {dimension_semantics = [#tpu.dimension_semantics<parallel>, #tpu.dimension_semantics<parallel>], iteration_bounds = array<i64: 1, 1>, scalar_prefetch = 0 : i64, scratch_operands = 0 : i64, tpu.core_type = #tpu.core_type<tc>, window_params = [{transform_indices = @transform_0, window_bounds = array<i64: 2, 2048>}, {transform_indices = @transform_1, window_bounds = array<i64: 2048, 128>}, {transform_indices = @transform_2, window_bounds = array<i64: 1, 128>}, {transform_indices = @transform_3, window_bounds = array<i64: 2, 128>}]} {
    %c0 = arith.constant 0 : index
    %c0_0 = arith.constant 0 : index
    %0 = vector.load %arg2[%c0, %c0_0] : memref<2x2048xbf16, #tpu.memory_space<vmem>>, vector<2x2048xbf16>
    %c0_1 = arith.constant 0 : index
    %c0_2 = arith.constant 0 : index
    %1 = vector.load %arg3[%c0_1, %c0_2] : memref<2048x128xbf16, #tpu.memory_space<vmem>>, vector<2048x128xbf16>
    %cst = arith.constant dense<0.000000e+00> : vector<2x128xf32>
    %2 = tpu.matmul %0, %1, %cst {dimension_numbers = #tpu.dot_dimension_numbers<[1], [0], [0], [1], [0, 0, 1, 1], [], []>} : vector<2x2048xbf16>, vector<2048x128xbf16>, vector<2x128xf32> -> vector<2x128xf32>
    %c0_3 = arith.constant 0 : index
    %c0_4 = arith.constant 0 : index
    %3 = vector.load %arg4[%c0_3, %c0_4] : memref<1x128xf32, #tpu.memory_space<vmem>>, vector<1x128xf32>
    %4 = vector.broadcast %3 : vector<1x128xf32> to vector<2x128xf32>
    %5 = arith.addf %2, %4 : vector<2x128xf32>
    %cst_5 = arith.constant 0.000000e+00 : f32
    %6 = vector.broadcast %cst_5 : f32 to vector<2x128xf32>
    %7 = arith.maximumf %5, %6 : vector<2x128xf32>
    %c0_6 = arith.constant 0 : index
    %c0_7 = arith.constant 0 : index
    %8 = vector.load %arg5[%c0_6, %c0_7] : memref<2x128xf32, #tpu.memory_space<vmem>>, vector<2x128xf32>
    tpu.vector_store %arg5[%c0_6, %c0_7], %7 {strides = array<i32>} : memref<2x128xf32, #tpu.memory_space<vmem>>, vector<2x128xf32>,
    return
  }
  func.func @transform_0(%arg0: i32, %arg1: i32) -> (i32, i32) {
    %c0_i32 = arith.constant 0 : i32
    %c0_i32_0 = arith.constant 0 : i32
    return %arg0, %c0_i32 : i32, i32
  }
  func.func @transform_1(%arg0: i32, %arg1: i32) -> (i32, i32) {
    %c0_i32 = arith.constant 0 : i32
    %c0_i32_0 = arith.constant 0 : i32
    return %c0_i32, %arg1 : i32, i32
  }
  func.func @transform_2(%arg0: i32, %arg1: i32) -> (i32, i32) {
    %c0_i32 = arith.constant 0 : i32
    %c0_i32_0 = arith.constant 0 : i32
    return %c0_i32, %arg1 : i32, i32
  }
  func.func @transform_3(%arg0: i32, %arg1: i32) -> (i32, i32) {
    %c0_i32 = arith.constant 0 : i32
    return %arg0, %arg1 : i32, i32
  }
}

module attributes {stable_mosaic.version = 11 : i64} {
  func.func @_mm_bias_kernel(%arg0: i32, %arg1: i32, %arg2: memref<256x288xbf16, #tpu.memory_space<vmem>>, %arg3: memref<288x32xbf16, #tpu.memory_space<vmem>>, %arg4: memref<1x32xf32, #tpu.memory_space<vmem>>, %arg5: memref<256x32xbf16, #tpu.memory_space<vmem>>) attributes {dimension_semantics = [#tpu.dimension_semantics<parallel>, #tpu.dimension_semantics<parallel>], iteration_bounds = array<i64: 2, 1>, scalar_prefetch = 0 : i64, scratch_operands = 0 : i64, tpu.core_type = #tpu.core_type<tc>, window_params = [{transform_indices = @transform_0, window_bounds = array<i64: 256, 288>}, {transform_indices = @transform_1, window_bounds = array<i64: 288, 32>}, {transform_indices = @transform_2, window_bounds = array<i64: 1, 32>}, {transform_indices = @transform_3, window_bounds = array<i64: 256, 32>}]} {
    %c0 = arith.constant 0 : index
    %c0_0 = arith.constant 0 : index
    %0 = vector.load %arg2[%c0, %c0_0] : memref<256x288xbf16, #tpu.memory_space<vmem>>, vector<256x288xbf16>
    %c0_1 = arith.constant 0 : index
    %c0_2 = arith.constant 0 : index
    %1 = vector.load %arg3[%c0_1, %c0_2] : memref<288x32xbf16, #tpu.memory_space<vmem>>, vector<288x32xbf16>
    %cst = arith.constant dense<0.000000e+00> : vector<256x32xf32>
    %2 = tpu.matmul %0, %1, %cst {dimension_numbers = #tpu.dot_dimension_numbers<[1], [0], [0], [1], [0, 0, 1, 1], [], []>} : vector<256x288xbf16>, vector<288x32xbf16>, vector<256x32xf32> -> vector<256x32xf32>
    %c0_3 = arith.constant 0 : index
    %c0_4 = arith.constant 0 : index
    %3 = vector.load %arg4[%c0_3, %c0_4] : memref<1x32xf32, #tpu.memory_space<vmem>>, vector<1x32xf32>
    %4 = vector.broadcast %3 : vector<1x32xf32> to vector<256x32xf32>
    %5 = arith.addf %2, %4 : vector<256x32xf32>
    %cst_5 = arith.constant 0.000000e+00 : f32
    %6 = vector.broadcast %cst_5 : f32 to vector<256x32xf32>
    %7 = arith.maximumf %5, %6 : vector<256x32xf32>
    %8 = arith.truncf %7 : vector<256x32xf32> to vector<256x32xbf16>
    %c0_6 = arith.constant 0 : index
    %c0_7 = arith.constant 0 : index
    %9 = vector.load %arg5[%c0_6, %c0_7] : memref<256x32xbf16, #tpu.memory_space<vmem>>, vector<256x32xbf16>
    tpu.vector_store %arg5[%c0_6, %c0_7], %8 {strides = array<i32>} : memref<256x32xbf16, #tpu.memory_space<vmem>>, vector<256x32xbf16>,
    return
  }
  func.func @transform_0(%arg0: i32, %arg1: i32) -> (i32, i32) {
    %c0_i32 = arith.constant 0 : i32
    %c0_i32_0 = arith.constant 0 : i32
    return %arg0, %c0_i32 : i32, i32
  }
  func.func @transform_1(%arg0: i32, %arg1: i32) -> (i32, i32) {
    %c0_i32 = arith.constant 0 : i32
    %c0_i32_0 = arith.constant 0 : i32
    return %c0_i32, %arg1 : i32, i32
  }
  func.func @transform_2(%arg0: i32, %arg1: i32) -> (i32, i32) {
    %c0_i32 = arith.constant 0 : i32
    %c0_i32_0 = arith.constant 0 : i32
    return %c0_i32, %arg1 : i32, i32
  }
  func.func @transform_3(%arg0: i32, %arg1: i32) -> (i32, i32) {
    %c0_i32 = arith.constant 0 : i32
    return %arg0, %arg1 : i32, i32
  }
}

module attributes {stable_mosaic.version = 11 : i64} {
  func.func @_mm_bias_kernel(%arg0: i32, %arg1: i32, %arg2: memref<128x576xbf16, #tpu.memory_space<vmem>>, %arg3: memref<576x64xbf16, #tpu.memory_space<vmem>>, %arg4: memref<1x64xf32, #tpu.memory_space<vmem>>, %arg5: memref<128x64xbf16, #tpu.memory_space<vmem>>) attributes {dimension_semantics = [#tpu.dimension_semantics<parallel>, #tpu.dimension_semantics<parallel>], iteration_bounds = array<i64: 1, 1>, scalar_prefetch = 0 : i64, scratch_operands = 0 : i64, tpu.core_type = #tpu.core_type<tc>, window_params = [{transform_indices = @transform_0, window_bounds = array<i64: 128, 576>}, {transform_indices = @transform_1, window_bounds = array<i64: 576, 64>}, {transform_indices = @transform_2, window_bounds = array<i64: 1, 64>}, {transform_indices = @transform_3, window_bounds = array<i64: 128, 64>}]} {
    %c0 = arith.constant 0 : index
    %c0_0 = arith.constant 0 : index
    %0 = vector.load %arg2[%c0, %c0_0] : memref<128x576xbf16, #tpu.memory_space<vmem>>, vector<128x576xbf16>
    %c0_1 = arith.constant 0 : index
    %c0_2 = arith.constant 0 : index
    %1 = vector.load %arg3[%c0_1, %c0_2] : memref<576x64xbf16, #tpu.memory_space<vmem>>, vector<576x64xbf16>
    %cst = arith.constant dense<0.000000e+00> : vector<128x64xf32>
    %2 = tpu.matmul %0, %1, %cst {dimension_numbers = #tpu.dot_dimension_numbers<[1], [0], [0], [1], [0, 0, 1, 1], [], []>} : vector<128x576xbf16>, vector<576x64xbf16>, vector<128x64xf32> -> vector<128x64xf32>
    %c0_3 = arith.constant 0 : index
    %c0_4 = arith.constant 0 : index
    %3 = vector.load %arg4[%c0_3, %c0_4] : memref<1x64xf32, #tpu.memory_space<vmem>>, vector<1x64xf32>
    %4 = vector.broadcast %3 : vector<1x64xf32> to vector<128x64xf32>
    %5 = arith.addf %2, %4 : vector<128x64xf32>
    %cst_5 = arith.constant 0.000000e+00 : f32
    %6 = vector.broadcast %cst_5 : f32 to vector<128x64xf32>
    %7 = arith.maximumf %5, %6 : vector<128x64xf32>
    %8 = arith.truncf %7 : vector<128x64xf32> to vector<128x64xbf16>
    %c0_6 = arith.constant 0 : index
    %c0_7 = arith.constant 0 : index
    %9 = vector.load %arg5[%c0_6, %c0_7] : memref<128x64xbf16, #tpu.memory_space<vmem>>, vector<128x64xbf16>
    tpu.vector_store %arg5[%c0_6, %c0_7], %8 {strides = array<i32>} : memref<128x64xbf16, #tpu.memory_space<vmem>>, vector<128x64xbf16>,
    return
  }
  func.func @transform_0(%arg0: i32, %arg1: i32) -> (i32, i32) {
    %c0_i32 = arith.constant 0 : i32
    %c0_i32_0 = arith.constant 0 : i32
    return %arg0, %c0_i32 : i32, i32
  }
  func.func @transform_1(%arg0: i32, %arg1: i32) -> (i32, i32) {
    %c0_i32 = arith.constant 0 : i32
    %c0_i32_0 = arith.constant 0 : i32
    return %c0_i32, %arg1 : i32, i32
  }
  func.func @transform_2(%arg0: i32, %arg1: i32) -> (i32, i32) {
    %c0_i32 = arith.constant 0 : i32
    %c0_i32_0 = arith.constant 0 : i32
    return %c0_i32, %arg1 : i32, i32
  }
  func.func @transform_3(%arg0: i32, %arg1: i32) -> (i32, i32) {
    %c0_i32 = arith.constant 0 : i32
    return %arg0, %arg1 : i32, i32
  }
}

module attributes {stable_mosaic.version = 11 : i64} {
  func.func @_mm_bias_kernel(%arg0: i32, %arg1: i32, %arg2: memref<32x576xbf16, #tpu.memory_space<vmem>>, %arg3: memref<576x64xbf16, #tpu.memory_space<vmem>>, %arg4: memref<1x64xf32, #tpu.memory_space<vmem>>, %arg5: memref<32x64xbf16, #tpu.memory_space<vmem>>) attributes {dimension_semantics = [#tpu.dimension_semantics<parallel>, #tpu.dimension_semantics<parallel>], iteration_bounds = array<i64: 1, 1>, scalar_prefetch = 0 : i64, scratch_operands = 0 : i64, tpu.core_type = #tpu.core_type<tc>, window_params = [{transform_indices = @transform_0, window_bounds = array<i64: 32, 576>}, {transform_indices = @transform_1, window_bounds = array<i64: 576, 64>}, {transform_indices = @transform_2, window_bounds = array<i64: 1, 64>}, {transform_indices = @transform_3, window_bounds = array<i64: 32, 64>}]} {
    %c0 = arith.constant 0 : index
    %c0_0 = arith.constant 0 : index
    %0 = vector.load %arg2[%c0, %c0_0] : memref<32x576xbf16, #tpu.memory_space<vmem>>, vector<32x576xbf16>
    %c0_1 = arith.constant 0 : index
    %c0_2 = arith.constant 0 : index
    %1 = vector.load %arg3[%c0_1, %c0_2] : memref<576x64xbf16, #tpu.memory_space<vmem>>, vector<576x64xbf16>
    %cst = arith.constant dense<0.000000e+00> : vector<32x64xf32>
    %2 = tpu.matmul %0, %1, %cst {dimension_numbers = #tpu.dot_dimension_numbers<[1], [0], [0], [1], [0, 0, 1, 1], [], []>} : vector<32x576xbf16>, vector<576x64xbf16>, vector<32x64xf32> -> vector<32x64xf32>
    %c0_3 = arith.constant 0 : index
    %c0_4 = arith.constant 0 : index
    %3 = vector.load %arg4[%c0_3, %c0_4] : memref<1x64xf32, #tpu.memory_space<vmem>>, vector<1x64xf32>
    %4 = vector.broadcast %3 : vector<1x64xf32> to vector<32x64xf32>
    %5 = arith.addf %2, %4 : vector<32x64xf32>
    %cst_5 = arith.constant 0.000000e+00 : f32
    %6 = vector.broadcast %cst_5 : f32 to vector<32x64xf32>
    %7 = arith.maximumf %5, %6 : vector<32x64xf32>
    %8 = arith.truncf %7 : vector<32x64xf32> to vector<32x64xbf16>
    %c0_6 = arith.constant 0 : index
    %c0_7 = arith.constant 0 : index
    %9 = vector.load %arg5[%c0_6, %c0_7] : memref<32x64xbf16, #tpu.memory_space<vmem>>, vector<32x64xbf16>
    tpu.vector_store %arg5[%c0_6, %c0_7], %8 {strides = array<i32>} : memref<32x64xbf16, #tpu.memory_space<vmem>>, vector<32x64xbf16>,
    return
  }
  func.func @transform_0(%arg0: i32, %arg1: i32) -> (i32, i32) {
    %c0_i32 = arith.constant 0 : i32
    %c0_i32_0 = arith.constant 0 : i32
    return %arg0, %c0_i32 : i32, i32
  }
  func.func @transform_1(%arg0: i32, %arg1: i32) -> (i32, i32) {
    %c0_i32 = arith.constant 0 : i32
    %c0_i32_0 = arith.constant 0 : i32
    return %c0_i32, %arg1 : i32, i32
  }
  func.func @transform_2(%arg0: i32, %arg1: i32) -> (i32, i32) {
    %c0_i32 = arith.constant 0 : i32
    %c0_i32_0 = arith.constant 0 : i32
    return %c0_i32, %arg1 : i32, i32
  }
  func.func @transform_3(%arg0: i32, %arg1: i32) -> (i32, i32) {
    %c0_i32 = arith.constant 0 : i32
    return %arg0, %arg1 : i32, i32
  }
}

module attributes {stable_mosaic.version = 11 : i64} {
  func.func @_mm_bias_kernel(%arg0: i32, %arg1: i32, %arg2: memref<8x576xbf16, #tpu.memory_space<vmem>>, %arg3: memref<576x128xbf16, #tpu.memory_space<vmem>>, %arg4: memref<1x128xf32, #tpu.memory_space<vmem>>, %arg5: memref<8x128xbf16, #tpu.memory_space<vmem>>) attributes {dimension_semantics = [#tpu.dimension_semantics<parallel>, #tpu.dimension_semantics<parallel>], iteration_bounds = array<i64: 1, 1>, scalar_prefetch = 0 : i64, scratch_operands = 0 : i64, tpu.core_type = #tpu.core_type<tc>, window_params = [{transform_indices = @transform_0, window_bounds = array<i64: 8, 576>}, {transform_indices = @transform_1, window_bounds = array<i64: 576, 128>}, {transform_indices = @transform_2, window_bounds = array<i64: 1, 128>}, {transform_indices = @transform_3, window_bounds = array<i64: 8, 128>}]} {
    %c0 = arith.constant 0 : index
    %c0_0 = arith.constant 0 : index
    %0 = vector.load %arg2[%c0, %c0_0] : memref<8x576xbf16, #tpu.memory_space<vmem>>, vector<8x576xbf16>
    %c0_1 = arith.constant 0 : index
    %c0_2 = arith.constant 0 : index
    %1 = vector.load %arg3[%c0_1, %c0_2] : memref<576x128xbf16, #tpu.memory_space<vmem>>, vector<576x128xbf16>
    %cst = arith.constant dense<0.000000e+00> : vector<8x128xf32>
    %2 = tpu.matmul %0, %1, %cst {dimension_numbers = #tpu.dot_dimension_numbers<[1], [0], [0], [1], [0, 0, 1, 1], [], []>} : vector<8x576xbf16>, vector<576x128xbf16>, vector<8x128xf32> -> vector<8x128xf32>
    %c0_3 = arith.constant 0 : index
    %c0_4 = arith.constant 0 : index
    %3 = vector.load %arg4[%c0_3, %c0_4] : memref<1x128xf32, #tpu.memory_space<vmem>>, vector<1x128xf32>
    %4 = vector.broadcast %3 : vector<1x128xf32> to vector<8x128xf32>
    %5 = arith.addf %2, %4 : vector<8x128xf32>
    %cst_5 = arith.constant 0.000000e+00 : f32
    %6 = vector.broadcast %cst_5 : f32 to vector<8x128xf32>
    %7 = arith.maximumf %5, %6 : vector<8x128xf32>
    %8 = arith.truncf %7 : vector<8x128xf32> to vector<8x128xbf16>
    %c0_6 = arith.constant 0 : index
    %c0_7 = arith.constant 0 : index
    %9 = vector.load %arg5[%c0_6, %c0_7] : memref<8x128xbf16, #tpu.memory_space<vmem>>, vector<8x128xbf16>
    tpu.vector_store %arg5[%c0_6, %c0_7], %8 {strides = array<i32>} : memref<8x128xbf16, #tpu.memory_space<vmem>>, vector<8x128xbf16>,
    return
  }
  func.func @transform_0(%arg0: i32, %arg1: i32) -> (i32, i32) {
    %c0_i32 = arith.constant 0 : i32
    %c0_i32_0 = arith.constant 0 : i32
    return %arg0, %c0_i32 : i32, i32
  }
  func.func @transform_1(%arg0: i32, %arg1: i32) -> (i32, i32) {
    %c0_i32 = arith.constant 0 : i32
    %c0_i32_0 = arith.constant 0 : i32
    return %c0_i32, %arg1 : i32, i32
  }
  func.func @transform_2(%arg0: i32, %arg1: i32) -> (i32, i32) {
    %c0_i32 = arith.constant 0 : i32
    %c0_i32_0 = arith.constant 0 : i32
    return %c0_i32, %arg1 : i32, i32
  }
  func.func @transform_3(%arg0: i32, %arg1: i32) -> (i32, i32) {
    %c0_i32 = arith.constant 0 : i32
    return %arg0, %arg1 : i32, i32
  }
}

module attributes {stable_mosaic.version = 11 : i64} {
  func.func @_mm_bias_kernel(%arg0: i32, %arg1: i32, %arg2: memref<2x512xbf16, #tpu.memory_space<vmem>>, %arg3: memref<512x8xbf16, #tpu.memory_space<vmem>>, %arg4: memref<1x8xf32, #tpu.memory_space<vmem>>, %arg5: memref<2x8xf32, #tpu.memory_space<vmem>>) attributes {dimension_semantics = [#tpu.dimension_semantics<parallel>, #tpu.dimension_semantics<parallel>], iteration_bounds = array<i64: 1, 1>, scalar_prefetch = 0 : i64, scratch_operands = 0 : i64, tpu.core_type = #tpu.core_type<tc>, window_params = [{transform_indices = @transform_0, window_bounds = array<i64: 2, 512>}, {transform_indices = @transform_1, window_bounds = array<i64: 512, 8>}, {transform_indices = @transform_2, window_bounds = array<i64: 1, 8>}, {transform_indices = @transform_3, window_bounds = array<i64: 2, 8>}]} {
    %c0 = arith.constant 0 : index
    %c0_0 = arith.constant 0 : index
    %0 = vector.load %arg2[%c0, %c0_0] : memref<2x512xbf16, #tpu.memory_space<vmem>>, vector<2x512xbf16>
    %c0_1 = arith.constant 0 : index
    %c0_2 = arith.constant 0 : index
    %1 = vector.load %arg3[%c0_1, %c0_2] : memref<512x8xbf16, #tpu.memory_space<vmem>>, vector<512x8xbf16>
    %cst = arith.constant dense<0.000000e+00> : vector<2x8xf32>
    %2 = tpu.matmul %0, %1, %cst {dimension_numbers = #tpu.dot_dimension_numbers<[1], [0], [0], [1], [0, 0, 1, 1], [], []>} : vector<2x512xbf16>, vector<512x8xbf16>, vector<2x8xf32> -> vector<2x8xf32>
    %c0_3 = arith.constant 0 : index
    %c0_4 = arith.constant 0 : index
    %3 = vector.load %arg4[%c0_3, %c0_4] : memref<1x8xf32, #tpu.memory_space<vmem>>, vector<1x8xf32>
    %4 = vector.broadcast %3 : vector<1x8xf32> to vector<2x8xf32>
    %5 = arith.addf %2, %4 : vector<2x8xf32>
    %c0_5 = arith.constant 0 : index
    %c0_6 = arith.constant 0 : index
    %6 = vector.load %arg5[%c0_5, %c0_6] : memref<2x8xf32, #tpu.memory_space<vmem>>, vector<2x8xf32>
    tpu.vector_store %arg5[%c0_5, %c0_6], %5 {strides = array<i32>} : memref<2x8xf32, #tpu.memory_space<vmem>>, vector<2x8xf32>,
    return
  }
  func.func @transform_0(%arg0: i32, %arg1: i32) -> (i32, i32) {
    %c0_i32 = arith.constant 0 : i32
    %c0_i32_0 = arith.constant 0 : i32
    return %arg0, %c0_i32 : i32, i32
  }
  func.func @transform_1(%arg0: i32, %arg1: i32) -> (i32, i32) {
    %c0_i32 = arith.constant 0 : i32
    %c0_i32_0 = arith.constant 0 : i32
    return %c0_i32, %arg1 : i32, i32
  }
  func.func @transform_2(%arg0: i32, %arg1: i32) -> (i32, i32) {
    %c0_i32 = arith.constant 0 : i32
    %c0_i32_0 = arith.constant 0 : i32
    return %c0_i32, %arg1 : i32, i32
  }
  func.func @transform_3(%arg0: i32, %arg1: i32) -> (i32, i32) {
    %c0_i32 = arith.constant 0 : i32
    return %arg0, %arg1 : i32, i32
  }
}

module attributes {stable_mosaic.version = 11 : i64} {
  func.func @_mm_bias_kernel(%arg0: i32, %arg1: i32, %arg2: memref<2x1152xbf16, #tpu.memory_space<vmem>>, %arg3: memref<1152x128xbf16, #tpu.memory_space<vmem>>, %arg4: memref<1x128xf32, #tpu.memory_space<vmem>>, %arg5: memref<2x128xbf16, #tpu.memory_space<vmem>>) attributes {dimension_semantics = [#tpu.dimension_semantics<parallel>, #tpu.dimension_semantics<parallel>], iteration_bounds = array<i64: 1, 1>, scalar_prefetch = 0 : i64, scratch_operands = 0 : i64, tpu.core_type = #tpu.core_type<tc>, window_params = [{transform_indices = @transform_0, window_bounds = array<i64: 2, 1152>}, {transform_indices = @transform_1, window_bounds = array<i64: 1152, 128>}, {transform_indices = @transform_2, window_bounds = array<i64: 1, 128>}, {transform_indices = @transform_3, window_bounds = array<i64: 2, 128>}]} {
    %c0 = arith.constant 0 : index
    %c0_0 = arith.constant 0 : index
    %0 = vector.load %arg2[%c0, %c0_0] : memref<2x1152xbf16, #tpu.memory_space<vmem>>, vector<2x1152xbf16>
    %c0_1 = arith.constant 0 : index
    %c0_2 = arith.constant 0 : index
    %1 = vector.load %arg3[%c0_1, %c0_2] : memref<1152x128xbf16, #tpu.memory_space<vmem>>, vector<1152x128xbf16>
    %cst = arith.constant dense<0.000000e+00> : vector<2x128xf32>
    %2 = tpu.matmul %0, %1, %cst {dimension_numbers = #tpu.dot_dimension_numbers<[1], [0], [0], [1], [0, 0, 1, 1], [], []>} : vector<2x1152xbf16>, vector<1152x128xbf16>, vector<2x128xf32> -> vector<2x128xf32>
    %c0_3 = arith.constant 0 : index
    %c0_4 = arith.constant 0 : index
    %3 = vector.load %arg4[%c0_3, %c0_4] : memref<1x128xf32, #tpu.memory_space<vmem>>, vector<1x128xf32>
    %4 = vector.broadcast %3 : vector<1x128xf32> to vector<2x128xf32>
    %5 = arith.addf %2, %4 : vector<2x128xf32>
    %cst_5 = arith.constant 0.000000e+00 : f32
    %6 = vector.broadcast %cst_5 : f32 to vector<2x128xf32>
    %7 = arith.maximumf %5, %6 : vector<2x128xf32>
    %8 = arith.truncf %7 : vector<2x128xf32> to vector<2x128xbf16>
    %c0_6 = arith.constant 0 : index
    %c0_7 = arith.constant 0 : index
    %9 = vector.load %arg5[%c0_6, %c0_7] : memref<2x128xbf16, #tpu.memory_space<vmem>>, vector<2x128xbf16>
    tpu.vector_store %arg5[%c0_6, %c0_7], %8 {strides = array<i32>} : memref<2x128xbf16, #tpu.memory_space<vmem>>, vector<2x128xbf16>,
    return
  }
  func.func @transform_0(%arg0: i32, %arg1: i32) -> (i32, i32) {
    %c0_i32 = arith.constant 0 : i32
    %c0_i32_0 = arith.constant 0 : i32
    return %arg0, %c0_i32 : i32, i32
  }
  func.func @transform_1(%arg0: i32, %arg1: i32) -> (i32, i32) {
    %c0_i32 = arith.constant 0 : i32
    %c0_i32_0 = arith.constant 0 : i32
    return %c0_i32, %arg1 : i32, i32
  }
  func.func @transform_2(%arg0: i32, %arg1: i32) -> (i32, i32) {
    %c0_i32 = arith.constant 0 : i32
    %c0_i32_0 = arith.constant 0 : i32
    return %c0_i32, %arg1 : i32, i32
  }
  func.func @transform_3(%arg0: i32, %arg1: i32) -> (i32, i32) {
    %c0_i32 = arith.constant 0 : i32
    return %arg0, %arg1 : i32, i32
  }
}

module attributes {stable_mosaic.version = 11 : i64} {
  func.func @_mm_bias_kernel(%arg0: i32, %arg1: i32, %arg2: memref<2x128xbf16, #tpu.memory_space<vmem>>, %arg3: memref<128x512xbf16, #tpu.memory_space<vmem>>, %arg4: memref<1x512xf32, #tpu.memory_space<vmem>>, %arg5: memref<2x512xbf16, #tpu.memory_space<vmem>>) attributes {dimension_semantics = [#tpu.dimension_semantics<parallel>, #tpu.dimension_semantics<parallel>], iteration_bounds = array<i64: 1, 1>, scalar_prefetch = 0 : i64, scratch_operands = 0 : i64, tpu.core_type = #tpu.core_type<tc>, window_params = [{transform_indices = @transform_0, window_bounds = array<i64: 2, 128>}, {transform_indices = @transform_1, window_bounds = array<i64: 128, 512>}, {transform_indices = @transform_2, window_bounds = array<i64: 1, 512>}, {transform_indices = @transform_3, window_bounds = array<i64: 2, 512>}]} {
    %c0 = arith.constant 0 : index
    %c0_0 = arith.constant 0 : index
    %0 = vector.load %arg2[%c0, %c0_0] : memref<2x128xbf16, #tpu.memory_space<vmem>>, vector<2x128xbf16>
    %c0_1 = arith.constant 0 : index
    %c0_2 = arith.constant 0 : index
    %1 = vector.load %arg3[%c0_1, %c0_2] : memref<128x512xbf16, #tpu.memory_space<vmem>>, vector<128x512xbf16>
    %cst = arith.constant dense<0.000000e+00> : vector<2x512xf32>
    %2 = tpu.matmul %0, %1, %cst {dimension_numbers = #tpu.dot_dimension_numbers<[1], [0], [0], [1], [0, 0, 1, 1], [], []>} : vector<2x128xbf16>, vector<128x512xbf16>, vector<2x512xf32> -> vector<2x512xf32>
    %c0_3 = arith.constant 0 : index
    %c0_4 = arith.constant 0 : index
    %3 = vector.load %arg4[%c0_3, %c0_4] : memref<1x512xf32, #tpu.memory_space<vmem>>, vector<1x512xf32>
    %4 = vector.broadcast %3 : vector<1x512xf32> to vector<2x512xf32>
    %5 = arith.addf %2, %4 : vector<2x512xf32>
    %cst_5 = arith.constant 0.000000e+00 : f32
    %6 = vector.broadcast %cst_5 : f32 to vector<2x512xf32>
    %7 = arith.maximumf %5, %6 : vector<2x512xf32>
    %8 = arith.truncf %7 : vector<2x512xf32> to vector<2x512xbf16>
    %c0_6 = arith.constant 0 : index
    %c0_7 = arith.constant 0 : index
    %9 = vector.load %arg5[%c0_6, %c0_7] : memref<2x512xbf16, #tpu.memory_space<vmem>>, vector<2x512xbf16>
    tpu.vector_store %arg5[%c0_6, %c0_7], %8 {strides = array<i32>} : memref<2x512xbf16, #tpu.memory_space<vmem>>, vector<2x512xbf16>,
    return
  }
  func.func @transform_0(%arg0: i32, %arg1: i32) -> (i32, i32) {
    %c0_i32 = arith.constant 0 : i32
    %c0_i32_0 = arith.constant 0 : i32
    return %arg0, %c0_i32 : i32, i32
  }
  func.func @transform_1(%arg0: i32, %arg1: i32) -> (i32, i32) {
    %c0_i32 = arith.constant 0 : i32
    %c0_i32_0 = arith.constant 0 : i32
    return %c0_i32, %arg1 : i32, i32
  }
  func.func @transform_2(%arg0: i32, %arg1: i32) -> (i32, i32) {
    %c0_i32 = arith.constant 0 : i32
    %c0_i32_0 = arith.constant 0 : i32
    return %c0_i32, %arg1 : i32, i32
  }
  func.func @transform_3(%arg0: i32, %arg1: i32) -> (i32, i32) {
    %c0_i32 = arith.constant 0 : i32
    return %arg0, %arg1 : i32, i32
  }
}

</mosaic_0001>

<llo_original>
// kernel: stegastamp_decoder_forward.13
$region0: #{stegastamp_decoder_forward.13}
  #allocation0 [shape = 'u32[]', space=smem, size = 0x4, offset = 0x4, fixed_abs, tag = 'smem constant byte address 0x4 - core index']
  #allocation1 [shape = 'u32[144,128]{1,0:T(1,128)}', space=vmem, size = 0x12000, scoped, tag = 'internal scratch']
  %s0 = inlined_call_operand.vmem [shape: bf16[512,27], index: 0, kind: input, shape index: {}]
  %s1 = inlined_call_operand.vmem [shape: bf16[27,32], index: 1, kind: input, shape index: {}]
  %s2 = inlined_call_operand.vmem [shape: f32[1,32], index: 2, kind: input, shape index: {}]
  %s3 = inlined_call_operand.vmem [shape: bf16[512,32], index: 3, kind: output, shape index: {}]
  %s4 = sld [smem:[#allocation0]]
  $region45: #{stegastamp_decoder_forward.13} parent=0
    _
  %s6 = ssub.s32 1, %s4
  %s7 = scalar_select 0, %s6, %s4
  loop: start=0, step=1, limit=4
  $region2: #{stegastamp_decoder_forward.13} parent=0 // loop_pre_header
    _
  $region3: #{stegastamp_decoder_forward.13} parent=0 // loop_header
    %s9 = sphi 0, %s13
    %p10 = scmp.ge.s32.totalorder %s9, 4
    %s16 = sphi 0, %s28
    %s17 = sphi 0, %s24
    %s18 = sphi 0, %s16
    %s19 = sphi 0, %s17
    %s20 = sphi 0, %s18
    %s21 = sphi 0, %s19
    %s31 = sphi 0, %s33
    %s34 = sphi 0, %s31
    %s35 = sphi 0, %s34
    %s51 = sphi 0, %s35
    %s57 = sphi 0, %s59
    %s60 = sphi 0, %s57
    %s61 = sphi 0, %s60
    %s77 = sphi 0, %s61
    %s83 = sphi 0, %s85
    %s86 = sphi 0, %s83
    %s87 = sphi 0, %s86
    %s103 = sphi 0, %s87
    %s111 = sphi 0, %s113
    %s114 = sphi 0, %s111
    %s115 = sphi 0, %s114
    %s131 = sphi 0, %s115
  $region4: #{stegastamp_decoder_forward.13} parent=0 // loop_header_branch
    %12 = sbr.rel (%p10) target = $region8
  $region5: #{stegastamp_decoder_forward.13} parent=0 // loop_body
    %s14 = ssub.s32 %s9, 1
    %s15 = ssub.s32 %s9, 2
    %s22 = sadd.s32 1, %s17
    %p23 = scmp.ge.s32.totalorder %s22, 1
    %s24 = scalar_select %p23, 0, %s22
    %s25 = sadd.s32 1, %s16
    %s26 = scalar_select %p23, %s25, %s16
    %p27 = scmp.ge.s32.totalorder %s26, 2
    %s28 = scalar_select %p27, 0, %s26
    %s29 = ssub.s32 %s16, %s28
    %p30 = scmp.eq.s32.totalorder %s29, 0
    %s32 = sadd.s32 %s31, 1
    %s33 = scalar_select %p30, %s31, %s32
    %p36 = pneg %p30
    %p37 = scmp.eq.s32.totalorder %s9, 1
    %p38 = por %p36, %p37
    %p39 = scmp.ne.s32.totalorder %s31, %s34
    %p40 = scmp.eq.s32.totalorder %s9, 0
    %p41 = por %p39, %p40
    %p42 = scmp.ne.s32.totalorder %s31, %s34
    %p43 = scmp.eq.s32.totalorder %s14, 1
    %p44 = por %p42, %p43
    %p45 = scmp.ne.s32.totalorder %s34, %s35
    %p46 = scmp.eq.s32.totalorder %s14, 0
    %p47 = por %p45, %p46
    %p48 = scmp.ne.s32.totalorder %s34, %s35
    %p49 = scmp.eq.s32.totalorder %s15, 1
    %p50 = por %p48, %p49
    %p52 = scmp.ne.s32.totalorder %s35, %s51
    %p53 = scmp.eq.s32.totalorder %s15, 0
    %p54 = por %p52, %p53
    %s55 = ssub.s32 %s17, %s24
    %p56 = scmp.eq.s32.totalorder %s55, 0
    %s58 = sadd.s32 %s57, 1
    %s59 = scalar_select %p56, %s57, %s58
    %p62 = pneg %p56
    %p63 = scmp.eq.s32.totalorder %s9, 1
    %p64 = por %p62, %p63
    %p65 = scmp.ne.s32.totalorder %s57, %s60
    %p66 = scmp.eq.s32.totalorder %s9, 0
    %p67 = por %p65, %p66
    %p68 = scmp.ne.s32.totalorder %s57, %s60
    %p69 = scmp.eq.s32.totalorder %s14, 1
    %p70 = por %p68, %p69
    %p71 = scmp.ne.s32.totalorder %s60, %s61
    %p72 = scmp.eq.s32.totalorder %s14, 0
    %p73 = por %p71, %p72
    %p74 = scmp.ne.s32.totalorder %s60, %s61
    %p75 = scmp.eq.s32.totalorder %s15, 1
    %p76 = por %p74, %p75
    %p78 = scmp.ne.s32.totalorder %s61, %s77
    %p79 = scmp.eq.s32.totalorder %s15, 0
    %p80 = por %p78, %p79
    %s81 = ssub.s32 %s17, %s24
    %p82 = scmp.eq.s32.totalorder %s81, 0
    %s84 = sadd.s32 %s83, 1
    %s85 = scalar_select %p82, %s83, %s84
    %p88 = pneg %p82
    %p89 = scmp.eq.s32.totalorder %s9, 1
    %p90 = por %p88, %p89
    %p91 = scmp.ne.s32.totalorder %s83, %s86
    %p92 = scmp.eq.s32.totalorder %s9, 0
    %p93 = por %p91, %p92
    %p94 = scmp.ne.s32.totalorder %s83, %s86
    %p95 = scmp.eq.s32.totalorder %s14, 1
    %p96 = por %p94, %p95
    %p97 = scmp.ne.s32.totalorder %s86, %s87
    %p98 = scmp.eq.s32.totalorder %s14, 0
    %p99 = por %p97, %p98
    %p100 = scmp.ne.s32.totalorder %s86, %s87
    %p101 = scmp.eq.s32.totalorder %s15, 1
    %p102 = por %p100, %p101
    %p104 = scmp.ne.s32.totalorder %s87, %s103
    %p105 = scmp.eq.s32.totalorder %s15, 0
    %p106 = por %p104, %p105
    %s107 = ssub.s32 %s16, %s28
    %s108 = ssub.s32 %s17, %s24
    %s109 = sor.u32 %s107, %s108
    %p110 = scmp.eq.s32.totalorder %s109, 0
    %s112 = sadd.s32 %s111, 1
    %s113 = scalar_select %p110, %s111, %s112
    %p116 = pneg %p110
    %p117 = scmp.eq.s32.totalorder %s9, 1
    %p118 = por %p116, %p117
    %p119 = scmp.ne.s32.totalorder %s111, %s114
    %p120 = scmp.eq.s32.totalorder %s9, 0
    %p121 = por %p119, %p120
    %p122 = scmp.ne.s32.totalorder %s111, %s114
    %p123 = scmp.eq.s32.totalorder %s14, 1
    %p124 = por %p122, %p123
    %p125 = scmp.ne.s32.totalorder %s114, %s115
    %p126 = scmp.eq.s32.totalorder %s14, 0
    %p127 = por %p125, %p126
    %p128 = scmp.ne.s32.totalorder %s114, %s115
    %p129 = scmp.eq.s32.totalorder %s15, 1
    %p130 = por %p128, %p129
    %p132 = scmp.ne.s32.totalorder %s115, %s131
    %p133 = scmp.eq.s32.totalorder %s15, 0
    %p134 = por %p132, %p133
    %p135 = scmp.le.s32.totalorder 1, %s9
    %p136 = scmp.lt.s32.totalorder %s9, 3
    %p137 = pnand %p135, %p136
    %p138 = pneg %p137
    // Predicated region
    $region9: #{stegastamp_decoder_forward.13} parent=5 // pred_check
      _
    $region10: #{stegastamp_decoder_forward.13} parent=5 // pred_check_branch
      %140 = sbr.rel (%p137) target = $region12
    $region11: #{stegastamp_decoder_forward.13} parent=5 // pred_region
      %s141 = ssub.s32 %s9, 1
      // Predicated region
      $region13: #{stegastamp_decoder_forward.13} parent=11 // pred_check
        %p142 = pneg %p73
      $region14: #{stegastamp_decoder_forward.13} parent=11 // pred_check_branch
        %144 = sbr.rel (%p142) target = $region16
      $region15: #{stegastamp_decoder_forward.13} parent=11 // pred_region
        %p145 = scmp.lt.s32.totalorder %s19, 0
        %s146 = scalar_select %p145, %s19, 0
        %s147 = smul.addr %s146, 4
        %s148 = scalar_lea.vmem %s1, %s147
      $region16: #{stegastamp_decoder_forward.13} parent=11 // pred_fallthru
        _
      // Predicated region
      $region17: #{stegastamp_decoder_forward.13} parent=11 // pred_check
        %p149 = pneg %p99
      $region18: #{stegastamp_decoder_forward.13} parent=11 // pred_check_branch
        %151 = sbr.rel (%p149) target = $region20
      $region19: #{stegastamp_decoder_forward.13} parent=11 // pred_region
        %p152 = scmp.lt.s32.totalorder %s19, 0
        %s153 = scalar_select %p152, %s19, 0
        %s154 = scalar_lea.vmem %s2, %s153
      $region20: #{stegastamp_decoder_forward.13} parent=11 // pred_fallthru
        _
    $region12: #{stegastamp_decoder_forward.13} parent=5 // pred_fallthru
      _
    %p155 = scmp.lt.s32.totalorder %s9, 2
    // Predicated region
    $region21: #{stegastamp_decoder_forward.13} parent=5 // pred_check
      %p156 = pneg %p155
    $region22: #{stegastamp_decoder_forward.13} parent=5 // pred_check_branch
      %158 = sbr.rel (%p156) target = $region24
    $region23: #{stegastamp_decoder_forward.13} parent=5 // pred_region
      // Predicated region
      $region25: #{stegastamp_decoder_forward.13} parent=23 // pred_check
        %p159 = pneg %p41
      $region26: #{stegastamp_decoder_forward.13} parent=23 // pred_check_branch
        %161 = sbr.rel (%p159) target = $region28
      $region27: #{stegastamp_decoder_forward.13} parent=23 // pred_region
        %s162 = smul.u32 32, %s16
        %p163 = scmp.lt.s32.totalorder %s162, 63
        %s164 = scalar_select %p163, %s162, 63
        %s165 = smul.addr %s164, 4
        %s166 = scalar_lea.vmem %s0, %s165
        %s167 = smul.u32 32, %s16
      $region28: #{stegastamp_decoder_forward.13} parent=23 // pred_fallthru
        _
    $region24: #{stegastamp_decoder_forward.13} parent=5 // pred_fallthru
      _
    %p168 = scmp.le.s32.totalorder 1, %s9
    %p169 = scmp.lt.s32.totalorder %s9, 3
    %p170 = pnand %p168, %p169
    %p171 = pneg %p170
    // Predicated region
    $region29: #{stegastamp_decoder_forward.13} parent=5 // pred_check
      _
    $region30: #{stegastamp_decoder_forward.13} parent=5 // pred_check_branch
      %173 = sbr.rel (%p170) target = $region32
    $region31: #{stegastamp_decoder_forward.13} parent=5 // pred_region
      %s174 = ssub.s32 %s9, 1
      %s175 = smul.u32 32, %s18
      %p176 = scmp.lt.s32.totalorder %s175, 63
      %s177 = scalar_select %p176, %s175, 63
      %s178 = smul.addr %s177, 4
      %s179 = scalar_lea.vmem %s0, %s178
      %p180 = pneg %p47
      %p181 = pneg %p44
      %p182 = scmp.lt.s32.totalorder %s19, 0
      %s183 = scalar_select %p182, %s19, 0
      %s184 = smul.addr %s183, 4
      %s185 = scalar_lea.vmem %s1, %s184
      %p186 = pneg %p73
      %p187 = pneg %p70
      %p188 = scmp.lt.s32.totalorder %s19, 0
      %s189 = scalar_select %p188, %s19, 0
      %s190 = scalar_lea.vmem %s2, %s189
      %p191 = pneg %p99
      %p192 = pneg %p96
      %p193 = pneg %p127
      %p194 = pneg %p124
      %s195 = smul.u32 32, %s18
      %p196 = scmp.lt.s32.totalorder %s195, 63
      %s197 = scalar_select %p196, %s195, 63
      %p198 = scmp.lt.s32.totalorder %s19, 0
      %s199 = scalar_select %p198, %s19, 0
      %s200 = sadd.s32 %s199, %s197
      %s201 = smul.addr %s200, 4
      %s202 = scalar_lea.vmem %s3, %s201
      %s203 = smul.u32 32, %s18
      %p204 = scmp.lt.s32.totalorder %s203, 63
      %s205 = scalar_select %p204, %s203, 63
      %s206 = smul.addr %s205, 4
      %s207 = scalar_lea.vmem %s0, %s206
      %s208 = smul.u32 32, %s18
      %p209 = scmp.lt.s32.totalorder %s19, 0
      %s210 = scalar_select %p209, %s19, 0
      %s211 = smul.addr %s210, 4
      %s212 = scalar_lea.vmem %s1, %s211
      %p213 = scmp.lt.s32.totalorder %s19, 0
      %s214 = scalar_select %p213, %s19, 0
      %s215 = scalar_lea.vmem %s2, %s214
      %s216 = smul.u32 32, %s18
      %p217 = scmp.lt.s32.totalorder %s216, 63
      %s218 = scalar_select %p217, %s216, 63
      %p219 = scmp.lt.s32.totalorder %s19, 0
      %s220 = scalar_select %p219, %s19, 0
      %s221 = sadd.s32 %s220, %s218
      %s222 = smul.addr %s221, 4
      %s223 = scalar_lea.vmem %s3, %s222
      %s224 = smul.u32 32, %s18
      %v226 = vld [vmem:[%s207] sm:$0xf]
      %v227 = vld [vmem:[%s207 + $0x4] sm:$0xf]
      %v228 = vld [vmem:[%s207 + $0x8] sm:$0xf]
      %v229 = vld [vmem:[%s207 + $0xc] sm:$0xf]
      %v230 = vld [vmem:[%s207 + $0x10] sm:$0xf]
      %v231 = vld [vmem:[%s207 + $0x14] sm:$0xf]
      %v232 = vld [vmem:[%s207 + $0x18] sm:$0xf]
      %v233 = vld [vmem:[%s207 + $0x1c] sm:$0xf]
      %v234 = vld [vmem:[%s207 + $0x20] sm:$0xf]
      %v235 = vld [vmem:[%s207 + $0x24] sm:$0xf]
      %v236 = vld [vmem:[%s207 + $0x28] sm:$0xf]
      %v237 = vld [vmem:[%s207 + $0x2c] sm:$0xf]
      %v238 = vld [vmem:[%s207 + $0x30] sm:$0xf]
      %v239 = vld [vmem:[%s207 + $0x34] sm:$0xf]
      %v240 = vld [vmem:[%s207 + $0x38] sm:$0xf]
      %v241 = vld [vmem:[%s207 + $0x3c] sm:$0xf]
      %v242 = vld [vmem:[%s207 + $0x40] sm:$0xf]
      %v243 = vld [vmem:[%s207 + $0x44] sm:$0xf]
      %v244 = vld [vmem:[%s207 + $0x48] sm:$0xf]
      %v245 = vld [vmem:[%s207 + $0x4c] sm:$0xf]
      %v246 = vld [vmem:[%s207 + $0x50] sm:$0xf]
      %v247 = vld [vmem:[%s207 + $0x54] sm:$0xf]
      %v248 = vld [vmem:[%s207 + $0x58] sm:$0xf]
      %v249 = vld [vmem:[%s207 + $0x5c] sm:$0xf]
      %v250 = vld [vmem:[%s207 + $0x60] sm:$0xf]
      %v251 = vld [vmem:[%s207 + $0x64] sm:$0xf]
      %v252 = vld [vmem:[%s207 + $0x68] sm:$0xf]
      %v253 = vld [vmem:[%s207 + $0x6c] sm:$0xf]
      %v254 = vld [vmem:[%s207 + $0x70] sm:$0xf]
      %v255 = vld [vmem:[%s207 + $0x74] sm:$0xf]
      %v256 = vld [vmem:[%s207 + $0x78] sm:$0xf]
      %v257 = vld [vmem:[%s207 + $0x7c] sm:$0xf]
      %v258 = vld [vmem:[%s212] sm:$0xf]
      %v259 = vld [vmem:[%s212 + $0x4] sm:$0xf]
      %v260 = vld [vmem:[%s212 + $0x8] sm:$0xf]
      %v261 = vld [vmem:[%s212 + $0xc] sm:$0x3]
      %v262 = vld [vmem:[%s215] sm:$0x1]
      %v264 = vlaneseq
      %v265 = vshrl.u32 %v264, 7
      %v266 = vsub.s32 0, %v265
      %v267 = vrot.slane %v262, %v266
      %v301 = vunpack.c.l.b16 %v226
      %v302 = vunpack.c.l.b16 %v227
      %v303 = vunpack.c.l.b16 %v228
      %v304 = vunpack.c.l.b16 %v229
      %v305 = vunpack.c.l.b16 %v230
      %v306 = vunpack.c.l.b16 %v231
      %v307 = vunpack.c.l.b16 %v232
      %v308 = vunpack.c.l.b16 %v233
      %v309 = vunpack.c.l.b16 %v234
      %v310 = vunpack.c.l.b16 %v235
      %v311 = vunpack.c.l.b16 %v236
      %v312 = vunpack.c.l.b16 %v237
      %v313 = vunpack.c.l.b16 %v238
      %v314 = vunpack.c.l.b16 %v239
      %v315 = vunpack.c.l.b16 %v240
      %v316 = vunpack.c.l.b16 %v241
      %v317 = vunpack.c.l.b16 %v242
      %v318 = vunpack.c.l.b16 %v243
      %v319 = vunpack.c.l.b16 %v244
      %v320 = vunpack.c.l.b16 %v245
      %v321 = vunpack.c.l.b16 %v246
      %v322 = vunpack.c.l.b16 %v247
      %v323 = vunpack.c.l.b16 %v248
      %v324 = vunpack.c.l.b16 %v249
      %v325 = vunpack.c.l.b16 %v250
      %v326 = vunpack.c.l.b16 %v251
      %v327 = vunpack.c.l.b16 %v252
      %v328 = vunpack.c.l.b16 %v253
      %v329 = vunpack.c.l.b16 %v254
      %v330 = vunpack.c.l.b16 %v255
      %v331 = vunpack.c.l.b16 %v256
      %v332 = vunpack.c.l.b16 %v257
      %v333 = vpack.c.b16 %v302, %v301
      %v334 = vpack.c.b16 %v304, %v303
      %v335 = vpack.c.b16 %v306, %v305
      %v336 = vpack.c.b16 %v308, %v307
      %v337 = vpack.c.b16 %v310, %v309
      %v338 = vpack.c.b16 %v312, %v311
      %v339 = vpack.c.b16 %v314, %v313
      %v340 = vpack.c.b16 %v316, %v315
      %v341 = vpack.c.b16 %v318, %v317
      %v342 = vpack.c.b16 %v320, %v319
      %v343 = vpack.c.b16 %v322, %v321
      %v344 = vpack.c.b16 %v324, %v323
      %v345 = vpack.c.b16 %v326, %v325
      %v346 = vpack.c.b16 %v328, %v327
      %v347 = vpack.c.b16 %v330, %v329
      %v348 = vpack.c.b16 %v332, %v331
      %v353 = vunpack.c.l.b16 %v258
      %v354 = vunpack.c.l.b16 %v259
      %v355 = vunpack.c.l.b16 %v260
      %v356 = vunpack.c.l.b16 %v261
      %v357 = vpack.c.b16 %v354, %v353
      %v358 = vpack.c.b16 %v356, %v355
      %vm360 = vcmask 220160
      %v362 = vsel %vm360, %v333, 0
      %v365 = vsel %vm360, %v334, 0
      %v368 = vsel %vm360, %v335, 0
      %v371 = vsel %vm360, %v336, 0
      %v374 = vsel %vm360, %v337, 0
      %v377 = vsel %vm360, %v338, 0
      %v380 = vsel %vm360, %v339, 0
      %v383 = vsel %vm360, %v340, 0
      %v386 = vsel %vm360, %v341, 0
      %v389 = vsel %vm360, %v342, 0
      %v392 = vsel %vm360, %v343, 0
      %v395 = vsel %vm360, %v344, 0
      %v398 = vsel %vm360, %v345, 0
      %v401 = vsel %vm360, %v346, 0
      %v404 = vsel %vm360, %v347, 0
      %v407 = vsel %vm360, %v348, 0
      %vm409 = vcmask 1044480
      %vm410 = vcmask 1045504
      %v411 = vsel %vm409, 4294967295, 65535
      %v412 = vsel %vm410, %v411, 0
      %v414 = vand.u32 %v358, %v412
      %416 = vmatprep.subr.bf16.mxu0 0
      %417 = vmatpush1.bf16.msra.mxu0 %v357
      %418 = vmatprep.subr.bf16.mxu0 0
      %419 = vmatpush1.bf16.msra.mxu0 %v414
      %420 = vmatprep.subr.bf16.mxu0 0
      %421 = vmatpush1.bf16.msra.mxu0 0
      %422 = vmatprep.subr.bf16.mxu0 0
      %423 = vmatpush1.bf16.msra.mxu0 0
      %424 = vmatprep.subr.bf16.mxu0 0
      %425 = vmatpush1.bf16.msra.mxu0 0
      %426 = vmatprep.subr.bf16.mxu0 0
      %427 = vmatpush1.bf16.msra.mxu0 0
      %428 = vmatprep.subr.bf16.mxu0 0
      %429 = vmatpush1.bf16.msra.mxu0 0
      %430 = vmatprep.subr.bf16.mxu0 0
      %431 = vmatpush1.bf16.msra.mxu0 0
      %432 = vmatprep.subr.bf16.mxu0 0
      %433 = vmatpush1.bf16.msra.mxu0 0
      %434 = vmatprep.subr.bf16.mxu0 0
      %435 = vmatpush1.bf16.msra.mxu0 0
      %436 = vmatprep.subr.bf16.mxu0 0
      %437 = vmatpush1.bf16.msra.mxu0 0
      %438 = vmatprep.subr.bf16.mxu0 0
      %439 = vmatpush1.bf16.msra.mxu0 0
      %440 = vmatprep.subr.bf16.mxu0 0
      %441 = vmatpush1.bf16.msra.mxu0 0
      %442 = vmatprep.subr.bf16.mxu0 0
      %443 = vmatpush1.bf16.msra.mxu0 0
      %444 = vmatprep.subr.bf16.mxu0 0
      %445 = vmatpush1.bf16.msra.mxu0 0
      %446 = vmatprep.subr.bf16.mxu0 0
      %447 = vmatpush1.bf16.msra.mxu0 0
      %448 = vmatprep.mubr.bf16.mxu0 0
      %449 = vmatmul.mubr.bf16.gmra.mrb[0].mxu0 %v362
      %v450 = vpop.f32.mrb[0].mxu0
      %v451 = vadd.f32 %v267, %v450
      %v452 = vpop.f32.mrb[0].mxu0
      %v453 = vpop.f32.mrb[0].mxu0
      %v454 = vadd.f32 %v267, %v453
      %v455 = vpop.f32.mrb[0].mxu0
      %456 = vmatprep.mubr.bf16.mxu0 0
      %457 = vmatmul.mubr.bf16.gmra.mrb[0].mxu0 %v365
      %v458 = vpop.f32.mrb[0].mxu0
      %v459 = vadd.f32 %v267, %v458
      %v460 = vpop.f32.mrb[0].mxu0
      %v461 = vpop.f32.mrb[0].mxu0
      %v462 = vadd.f32 %v267, %v461
      %v463 = vpop.f32.mrb[0].mxu0
      %464 = vmatprep.mubr.bf16.mxu0 0
      %465 = vmatmul.mubr.bf16.gmra.mrb[0].mxu0 %v368
      %v466 = vpop.f32.mrb[0].mxu0
      %v467 = vadd.f32 %v267, %v466
      %v468 = vpop.f32.mrb[0].mxu0
      %v469 = vpop.f32.mrb[0].mxu0
      %v470 = vadd.f32 %v267, %v469
      %v471 = vpop.f32.mrb[0].mxu0
      %472 = vmatprep.mubr.bf16.mxu0 0
      %473 = vmatmul.mubr.bf16.gmra.mrb[0].mxu0 %v371
      %v474 = vpop.f32.mrb[0].mxu0
      %v475 = vadd.f32 %v267, %v474
      %v476 = vpop.f32.mrb[0].mxu0
      %v477 = vpop.f32.mrb[0].mxu0
      %v478 = vadd.f32 %v267, %v477
      %v479 = vpop.f32.mrb[0].mxu0
      %480 = vmatprep.mubr.bf16.mxu0 0
      %481 = vmatmul.mubr.bf16.gmra.mrb[0].mxu0 %v374
      %v482 = vpop.f32.mrb[0].mxu0
      %v483 = vadd.f32 %v267, %v482
      %v484 = vpop.f32.mrb[0].mxu0
      %v485 = vpop.f32.mrb[0].mxu0
      %v486 = vadd.f32 %v267, %v485
      %v487 = vpop.f32.mrb[0].mxu0
      %488 = vmatprep.mubr.bf16.mxu0 0
      %489 = vmatmul.mubr.bf16.gmra.mrb[0].mxu0 %v377
      %v490 = vpop.f32.mrb[0].mxu0
      %v491 = vadd.f32 %v267, %v490
      %v492 = vpop.f32.mrb[0].mxu0
      %v493 = vpop.f32.mrb[0].mxu0
      %v494 = vadd.f32 %v267, %v493
      %v495 = vpop.f32.mrb[0].mxu0
      %496 = vmatprep.mubr.bf16.mxu0 0
      %497 = vmatmul.mubr.bf16.gmra.mrb[0].mxu0 %v380
      %v498 = vpop.f32.mrb[0].mxu0
      %v499 = vadd.f32 %v267, %v498
      %v500 = vpop.f32.mrb[0].mxu0
      %v501 = vpop.f32.mrb[0].mxu0
      %v502 = vadd.f32 %v267, %v501
      %v503 = vpop.f32.mrb[0].mxu0
      %504 = vmatprep.mubr.bf16.mxu0 0
      %505 = vmatmul.mubr.bf16.gmra.mrb[0].mxu0 %v383
      %v506 = vpop.f32.mrb[0].mxu0
      %v507 = vadd.f32 %v267, %v506
      %v508 = vpop.f32.mrb[0].mxu0
      %v509 = vpop.f32.mrb[0].mxu0
      %v510 = vadd.f32 %v267, %v509
      %v511 = vpop.f32.mrb[0].mxu0
      %512 = vmatprep.mubr.bf16.mxu0 0
      %513 = vmatmul.mubr.bf16.gmra.mrb[0].mxu0 %v386
      %v514 = vpop.f32.mrb[0].mxu0
      %v515 = vadd.f32 %v267, %v514
      %v516 = vpop.f32.mrb[0].mxu0
      %v517 = vpop.f32.mrb[0].mxu0
      %v518 = vadd.f32 %v267, %v517
      %v519 = vpop.f32.mrb[0].mxu0
      %520 = vmatprep.mubr.bf16.mxu0 0
      %521 = vmatmul.mubr.bf16.gmra.mrb[0].mxu0 %v389
      %v522 = vpop.f32.mrb[0].mxu0
      %v523 = vadd.f32 %v267, %v522
      %v524 = vpop.f32.mrb[0].mxu0
      %v525 = vpop.f32.mrb[0].mxu0
      %v526 = vadd.f32 %v267, %v525
      %v527 = vpop.f32.mrb[0].mxu0
      %528 = vmatprep.mubr.bf16.mxu0 0
      %529 = vmatmul.mubr.bf16.gmra.mrb[0].mxu0 %v392
      %v530 = vpop.f32.mrb[0].mxu0
      %v531 = vadd.f32 %v267, %v530
      %v532 = vpop.f32.mrb[0].mxu0
      %v533 = vpop.f32.mrb[0].mxu0
      %v534 = vadd.f32 %v267, %v533
      %v535 = vpop.f32.mrb[0].mxu0
      %536 = vmatprep.mubr.bf16.mxu0 0
      %537 = vmatmul.mubr.bf16.gmra.mrb[0].mxu0 %v395
      %v538 = vpop.f32.mrb[0].mxu0
      %v539 = vadd.f32 %v267, %v538
      %v540 = vpop.f32.mrb[0].mxu0
      %v541 = vpop.f32.mrb[0].mxu0
      %v542 = vadd.f32 %v267, %v541
      %v543 = vpop.f32.mrb[0].mxu0
      %544 = vmatprep.mubr.bf16.mxu0 0
      %545 = vmatmul.mubr.bf16.gmra.mrb[0].mxu0 %v398
      %v546 = vpop.f32.mrb[0].mxu0
      %v547 = vadd.f32 %v267, %v546
      %v548 = vpop.f32.mrb[0].mxu0
      %v549 = vpop.f32.mrb[0].mxu0
      %v550 = vadd.f32 %v267, %v549
      %v551 = vpop.f32.mrb[0].mxu0
      %552 = vmatprep.mubr.bf16.mxu0 0
      %553 = vmatmul.mubr.bf16.gmra.mrb[0].mxu0 %v401
      %v554 = vpop.f32.mrb[0].mxu0
      %v555 = vadd.f32 %v267, %v554
      %v556 = vpop.f32.mrb[0].mxu0
      %v557 = vpop.f32.mrb[0].mxu0
      %v558 = vadd.f32 %v267, %v557
      %v559 = vpop.f32.mrb[0].mxu0
      %560 = vmatprep.mubr.bf16.mxu0 0
      %561 = vmatmul.mubr.bf16.gmra.mrb[0].mxu0 %v404
      %v562 = vpop.f32.mrb[0].mxu0
      %v563 = vadd.f32 %v267, %v562
      %v564 = vpop.f32.mrb[0].mxu0
      %v565 = vpop.f32.mrb[0].mxu0
      %v566 = vadd.f32 %v267, %v565
      %v567 = vpop.f32.mrb[0].mxu0
      %568 = vmatprep.mubr.bf16.mxu0 0
      %569 = vmatmul.mubr.bf16.gmra.mrb[0].mxu0 %v407
      %v570 = vpop.f32.mrb[0].mxu0
      %v571 = vadd.f32 %v267, %v570
      %v572 = vpop.f32.mrb[0].mxu0
      %v573 = vpop.f32.mrb[0].mxu0
      %v574 = vadd.f32 %v267, %v573
      %v575 = vpop.f32.mrb[0].mxu0
      %576 = vdwg.mxu0
      %v577 = vmax.f32 %v451, 0.0
      %v578 = vmax.f32 %v454, 0.0
      %v579 = vmax.f32 %v459, 0.0
      %v580 = vmax.f32 %v462, 0.0
      %v581 = vmax.f32 %v467, 0.0
      %v582 = vmax.f32 %v470, 0.0
      %v583 = vmax.f32 %v475, 0.0
      %v584 = vmax.f32 %v478, 0.0
      %v585 = vmax.f32 %v483, 0.0
      %v586 = vmax.f32 %v486, 0.0
      %v587 = vmax.f32 %v491, 0.0
      %v588 = vmax.f32 %v494, 0.0
      %v589 = vmax.f32 %v499, 0.0
      %v590 = vmax.f32 %v502, 0.0
      %v591 = vmax.f32 %v507, 0.0
      %v592 = vmax.f32 %v510, 0.0
      %v593 = vmax.f32 %v515, 0.0
      %v594 = vmax.f32 %v518, 0.0
      %v595 = vmax.f32 %v523, 0.0
      %v596 = vmax.f32 %v526, 0.0
      %v597 = vmax.f32 %v531, 0.0
      %v598 = vmax.f32 %v534, 0.0
      %v599 = vmax.f32 %v539, 0.0
      %v600 = vmax.f32 %v542, 0.0
      %v601 = vmax.f32 %v547, 0.0
      %v602 = vmax.f32 %v550, 0.0
      %v603 = vmax.f32 %v555, 0.0
      %v604 = vmax.f32 %v558, 0.0
      %v605 = vmax.f32 %v563, 0.0
      %v606 = vmax.f32 %v566, 0.0
      %v607 = vmax.f32 %v571, 0.0
      %v608 = vmax.f32 %v574, 0.0
      %v609 = vpack.c.bf16 %v578, %v577
      %v610 = vpack.c.bf16 %v580, %v579
      %v611 = vpack.c.bf16 %v582, %v581
      %v612 = vpack.c.bf16 %v584, %v583
      %v613 = vpack.c.bf16 %v586, %v585
      %v614 = vpack.c.bf16 %v588, %v587
      %v615 = vpack.c.bf16 %v590, %v589
      %v616 = vpack.c.bf16 %v592, %v591
      %v617 = vpack.c.bf16 %v594, %v593
      %v618 = vpack.c.bf16 %v596, %v595
      %v619 = vpack.c.bf16 %v598, %v597
      %v620 = vpack.c.bf16 %v600, %v599
      %v621 = vpack.c.bf16 %v602, %v601
      %v622 = vpack.c.bf16 %v604, %v603
      %v623 = vpack.c.bf16 %v606, %v605
      %v624 = vpack.c.bf16 %v608, %v607
      %v641 = vunpack.c.l.b16 %v609
      %v642 = vunpack.c.h.b16 %v609
      %v643 = vunpack.c.l.b16 %v610
      %v644 = vunpack.c.h.b16 %v610
      %v645 = vunpack.c.l.b16 %v611
      %v646 = vunpack.c.h.b16 %v611
      %v647 = vunpack.c.l.b16 %v612
      %v648 = vunpack.c.h.b16 %v612
      %v649 = vunpack.c.l.b16 %v613
      %v650 = vunpack.c.h.b16 %v613
      %v651 = vunpack.c.l.b16 %v614
      %v652 = vunpack.c.h.b16 %v614
      %v653 = vunpack.c.l.b16 %v615
      %v654 = vunpack.c.h.b16 %v615
      %v655 = vunpack.c.l.b16 %v616
      %v656 = vunpack.c.h.b16 %v616
      %v657 = vunpack.c.l.b16 %v617
      %v658 = vunpack.c.h.b16 %v617
      %v659 = vunpack.c.l.b16 %v618
      %v660 = vunpack.c.h.b16 %v618
      %v661 = vunpack.c.l.b16 %v619
      %v662 = vunpack.c.h.b16 %v619
      %v663 = vunpack.c.l.b16 %v620
      %v664 = vunpack.c.h.b16 %v620
      %v665 = vunpack.c.l.b16 %v621
      %v666 = vunpack.c.h.b16 %v621
      %v667 = vunpack.c.l.b16 %v622
      %v668 = vunpack.c.h.b16 %v622
      %v669 = vunpack.c.l.b16 %v623
      %v670 = vunpack.c.h.b16 %v623
      %v671 = vunpack.c.l.b16 %v624
      %v672 = vunpack.c.h.b16 %v624
      %v673 = vpack.c.b16 %v641, %v641
      %v674 = vpack.c.b16 %v642, %v642
      %v675 = vpack.c.b16 %v643, %v643
      %v676 = vpack.c.b16 %v644, %v644
      %v677 = vpack.c.b16 %v645, %v645
      %v678 = vpack.c.b16 %v646, %v646
      %v679 = vpack.c.b16 %v647, %v647
      %v680 = vpack.c.b16 %v648, %v648
      %v681 = vpack.c.b16 %v649, %v649
      %v682 = vpack.c.b16 %v650, %v650
      %v683 = vpack.c.b16 %v651, %v651
      %v684 = vpack.c.b16 %v652, %v652
      %v685 = vpack.c.b16 %v653, %v653
      %v686 = vpack.c.b16 %v654, %v654
      %v687 = vpack.c.b16 %v655, %v655
      %v688 = vpack.c.b16 %v656, %v656
      %v689 = vpack.c.b16 %v657, %v657
      %v690 = vpack.c.b16 %v658, %v658
      %v691 = vpack.c.b16 %v659, %v659
      %v692 = vpack.c.b16 %v660, %v660
      %v693 = vpack.c.b16 %v661, %v661
      %v694 = vpack.c.b16 %v662, %v662
      %v695 = vpack.c.b16 %v663, %v663
      %v696 = vpack.c.b16 %v664, %v664
      %v697 = vpack.c.b16 %v665, %v665
      %v698 = vpack.c.b16 %v666, %v666
      %v699 = vpack.c.b16 %v667, %v667
      %v700 = vpack.c.b16 %v668, %v668
      %v701 = vpack.c.b16 %v669, %v669
      %v702 = vpack.c.b16 %v670, %v670
      %v703 = vpack.c.b16 %v671, %v671
      %v704 = vpack.c.b16 %v672, %v672
      %vm737 = vcmask 257024
      %738 = vst.msk [vmem:[%s223] sm:$0xf] %vm737, %v673
      %739 = vst.msk [vmem:[%s223 + $0x4] sm:$0xf] %vm737, %v674
      %740 = vst.msk [vmem:[%s223 + $0x8] sm:$0xf] %vm737, %v675
      %741 = vst.msk [vmem:[%s223 + $0xc] sm:$0xf] %vm737, %v676
      %742 = vst.msk [vmem:[%s223 + $0x10] sm:$0xf] %vm737, %v677
      %743 = vst.msk [vmem:[%s223 + $0x14] sm:$0xf] %vm737, %v678
      %744 = vst.msk [vmem:[%s223 + $0x18] sm:$0xf] %vm737, %v679
      %745 = vst.msk [vmem:[%s223 + $0x1c] sm:$0xf] %vm737, %v680
      %746 = vst.msk [vmem:[%s223 + $0x20] sm:$0xf] %vm737, %v681
      %747 = vst.msk [vmem:[%s223 + $0x24] sm:$0xf] %vm737, %v682
      %748 = vst.msk [vmem:[%s223 + $0x28] sm:$0xf] %vm737, %v683
      %749 = vst.msk [vmem:[%s223 + $0x2c] sm:$0xf] %vm737, %v684
      %750 = vst.msk [vmem:[%s223 + $0x30] sm:$0xf] %vm737, %v685
      %751 = vst.msk [vmem:[%s223 + $0x34] sm:$0xf] %vm737, %v686
      %752 = vst.msk [vmem:[%s223 + $0x38] sm:$0xf] %vm737, %v687
      %753 = vst.msk [vmem:[%s223 + $0x3c] sm:$0xf] %vm737, %v688
      %754 = vst.msk [vmem:[%s223 + $0x40] sm:$0xf] %vm737, %v689
      %755 = vst.msk [vmem:[%s223 + $0x44] sm:$0xf] %vm737, %v690
      %756 = vst.msk [vmem:[%s223 + $0x48] sm:$0xf] %vm737, %v691
      %757 = vst.msk [vmem:[%s223 + $0x4c] sm:$0xf] %vm737, %v692
      %758 = vst.msk [vmem:[%s223 + $0x50] sm:$0xf] %vm737, %v693
      %759 = vst.msk [vmem:[%s223 + $0x54] sm:$0xf] %vm737, %v694
      %760 = vst.msk [vmem:[%s223 + $0x58] sm:$0xf] %vm737, %v695
      %761 = vst.msk [vmem:[%s223 + $0x5c] sm:$0xf] %vm737, %v696
      %762 = vst.msk [vmem:[%s223 + $0x60] sm:$0xf] %vm737, %v697
      %763 = vst.msk [vmem:[%s223 + $0x64] sm:$0xf] %vm737, %v698
      %764 = vst.msk [vmem:[%s223 + $0x68] sm:$0xf] %vm737, %v699
      %765 = vst.msk [vmem:[%s223 + $0x6c] sm:$0xf] %vm737, %v700
      %766 = vst.msk [vmem:[%s223 + $0x70] sm:$0xf] %vm737, %v701
      %767 = vst.msk [vmem:[%s223 + $0x74] sm:$0xf] %vm737, %v702
      %768 = vst.msk [vmem:[%s223 + $0x78] sm:$0xf] %vm737, %v703
      %769 = vst.msk [vmem:[%s223 + $0x7c] sm:$0xf] %vm737, %v704
      %s770 = smul.u32 32, %s18
      %p771 = scmp.lt.s32.totalorder %s770, 63
      %s772 = scalar_select %p771, %s770, 63
      %p773 = scmp.lt.s32.totalorder %s19, 0
      %s774 = scalar_select %p773, %s19, 0
      %s775 = sadd.s32 %s774, %s772
      %s776 = smul.addr %s775, 4
      %s777 = scalar_lea.vmem %s3, %s776
      // Predicated region
      $region33: #{stegastamp_decoder_forward.13} parent=31 // pred_check
        %p778 = pneg %p124
      $region34: #{stegastamp_decoder_forward.13} parent=31 // pred_check_branch
        %780 = sbr.rel (%p778) target = $region36
      $region35: #{stegastamp_decoder_forward.13} parent=31 // pred_region
        %s781 = smul.u32 32, %s18
      $region36: #{stegastamp_decoder_forward.13} parent=31 // pred_fallthru
        _
    $region32: #{stegastamp_decoder_forward.13} parent=5 // pred_fallthru
      _
    %p782 = scmp.le.s32.totalorder 2, %s9
    // Predicated region
    $region37: #{stegastamp_decoder_forward.13} parent=5 // pred_check
      %p783 = pneg %p782
    $region38: #{stegastamp_decoder_forward.13} parent=5 // pred_check_branch
      %785 = sbr.rel (%p783) target = $region40
    $region39: #{stegastamp_decoder_forward.13} parent=5 // pred_region
      %s786 = ssub.s32 %s9, 2
      // Predicated region
      $region41: #{stegastamp_decoder_forward.13} parent=39 // pred_check
        %p787 = pneg %p130
      $region42: #{stegastamp_decoder_forward.13} parent=39 // pred_check_branch
        %789 = sbr.rel (%p787) target = $region44
      $region43: #{stegastamp_decoder_forward.13} parent=39 // pred_region
        %s790 = smul.u32 32, %s20
        %p791 = scmp.lt.s32.totalorder %s790, 63
        %s792 = scalar_select %p791, %s790, 63
        %p793 = scmp.lt.s32.totalorder %s21, 0
        %s794 = scalar_select %p793, %s21, 0
        %s795 = sadd.s32 %s794, %s792
        %s796 = smul.addr %s795, 4
        %s797 = scalar_lea.vmem %s3, %s796
      $region44: #{stegastamp_decoder_forward.13} parent=39 // pred_fallthru
        _
    $region40: #{stegastamp_decoder_forward.13} parent=5 // pred_fallthru
      _
  $region6: #{stegastamp_decoder_forward.13} parent=0 // loop_footer
    %s13 = sadd.s32 1, %s9
  $region7: #{stegastamp_decoder_forward.13} parent=0 // loop_footer_branch
    %8 = sbr.rel target = $region3
  $region8: #{stegastamp_decoder_forward.13} parent=0 // loop_exit
    _

// kernel: stegastamp_decoder_forward.14
$region0: #{stegastamp_decoder_forward.14}
  #allocation0 [shape = 'u32[]', space=smem, size = 0x4, offset = 0x4, fixed_abs, tag = 'smem constant byte address 0x4 - core index']
  #allocation1 [shape = 'u32[144,128]{1,0:T(1,128)}', space=vmem, size = 0x12000, scoped, tag = 'internal scratch']
  %s0 = inlined_call_operand.vmem [shape: bf16[128,288], index: 0, kind: input, shape index: {}]
  %s1 = inlined_call_operand.vmem [shape: bf16[288,64], index: 1, kind: input, shape index: {}]
  %s2 = inlined_call_operand.vmem [shape: f32[1,64], index: 2, kind: input, shape index: {}]
  %s3 = inlined_call_operand.vmem [shape: bf16[128,64], index: 3, kind: output, shape index: {}]
  %s4 = sld [smem:[#allocation0]]
  $region22: #{stegastamp_decoder_forward.14} parent=0
    _
  %s6 = ssub.s32 1, %s4
  %s7 = scalar_select 0, %s6, %s4
  // Predicated region
  $region2: #{stegastamp_decoder_forward.14} parent=0 // pred_check
    _
  $region3: #{stegastamp_decoder_forward.14} parent=0 // pred_check_branch
    %9 = sbr.rel (0) target = $region5
  $region4: #{stegastamp_decoder_forward.14} parent=0 // pred_region
    _
  $region5: #{stegastamp_decoder_forward.14} parent=0 // pred_fallthru
    _
  // Predicated region
  $region6: #{stegastamp_decoder_forward.14} parent=0 // pred_check
    _
  $region7: #{stegastamp_decoder_forward.14} parent=0 // pred_check_branch
    %11 = sbr.rel (0) target = $region9
  $region8: #{stegastamp_decoder_forward.14} parent=0 // pred_region
    _
  $region9: #{stegastamp_decoder_forward.14} parent=0 // pred_fallthru
    _
  // Predicated region
  $region10: #{stegastamp_decoder_forward.14} parent=0 // pred_check
    _
  $region11: #{stegastamp_decoder_forward.14} parent=0 // pred_check_branch
    %13 = sbr.rel (0) target = $region13
  $region12: #{stegastamp_decoder_forward.14} parent=0 // pred_region
    _
  $region13: #{stegastamp_decoder_forward.14} parent=0 // pred_fallthru
    _
  %v15 = vld [vmem:[%s0] sm:$0xff]
  %v16 = vld [vmem:[%s0 + $0x8] sm:$0xf]
  %v17 = vld [vmem:[%s0 + $0xc] sm:$0xff]
  %v18 = vld [vmem:[%s0 + $0x14] sm:$0xf]
  %v19 = vld [vmem:[%s0 + $0x18] sm:$0xff]
  %v20 = vld [vmem:[%s0 + $0x20] sm:$0xf]
  %v21 = vld [vmem:[%s0 + $0x24] sm:$0xff]
  %v22 = vld [vmem:[%s0 + $0x2c] sm:$0xf]
  %v23 = vld [vmem:[%s0 + $0x30] sm:$0xff]
  %v24 = vld [vmem:[%s0 + $0x38] sm:$0xf]
  %v25 = vld [vmem:[%s0 + $0x3c] sm:$0xff]
  %v26 = vld [vmem:[%s0 + $0x44] sm:$0xf]
  %v27 = vld [vmem:[%s0 + $0x48] sm:$0xff]
  %v28 = vld [vmem:[%s0 + $0x50] sm:$0xf]
  %v29 = vld [vmem:[%s0 + $0x54] sm:$0xff]
  %v30 = vld [vmem:[%s0 + $0x5c] sm:$0xf]
  %v31 = vld [vmem:[%s0 + $0x60] sm:$0xff]
  %v32 = vld [vmem:[%s0 + $0x68] sm:$0xf]
  %v33 = vld [vmem:[%s0 + $0x6c] sm:$0xff]
  %v34 = vld [vmem:[%s0 + $0x74] sm:$0xf]
  %v35 = vld [vmem:[%s0 + $0x78] sm:$0xff]
  %v36 = vld [vmem:[%s0 + $0x80] sm:$0xf]
  %v37 = vld [vmem:[%s0 + $0x84] sm:$0xff]
  %v38 = vld [vmem:[%s0 + $0x8c] sm:$0xf]
  %v39 = vld [vmem:[%s0 + $0x90] sm:$0xff]
  %v40 = vld [vmem:[%s0 + $0x98] sm:$0xf]
  %v41 = vld [vmem:[%s0 + $0x9c] sm:$0xff]
  %v42 = vld [vmem:[%s0 + $0xa4] sm:$0xf]
  %v43 = vld [vmem:[%s0 + $0xa8] sm:$0xff]
  %v44 = vld [vmem:[%s0 + $0xb0] sm:$0xf]
  %v45 = vld [vmem:[%s0 + $0xb4] sm:$0xff]
  %v46 = vld [vmem:[%s0 + $0xbc] sm:$0xf]
  %v47 = vld [vmem:[%s1] sm:$0xf]
  %v48 = vld [vmem:[%s1 + $0x4] sm:$0xf]
  %v49 = vld [vmem:[%s1 + $0x8] sm:$0xf]
  %v50 = vld [vmem:[%s1 + $0xc] sm:$0xf]
  %v51 = vld [vmem:[%s1 + $0x10] sm:$0xf]
  %v52 = vld [vmem:[%s1 + $0x14] sm:$0xf]
  %v53 = vld [vmem:[%s1 + $0x18] sm:$0xf]
  %v54 = vld [vmem:[%s1 + $0x1c] sm:$0xf]
  %v55 = vld [vmem:[%s1 + $0x20] sm:$0xf]
  %v56 = vld [vmem:[%s1 + $0x24] sm:$0xf]
  %v57 = vld [vmem:[%s1 + $0x28] sm:$0xf]
  %v58 = vld [vmem:[%s1 + $0x2c] sm:$0xf]
  %v59 = vld [vmem:[%s1 + $0x30] sm:$0xf]
  %v60 = vld [vmem:[%s1 + $0x34] sm:$0xf]
  %v61 = vld [vmem:[%s1 + $0x38] sm:$0xf]
  %v62 = vld [vmem:[%s1 + $0x3c] sm:$0xf]
  %v63 = vld [vmem:[%s1 + $0x40] sm:$0xf]
  %v64 = vld [vmem:[%s1 + $0x44] sm:$0xf]
  %v65 = vld [vmem:[%s1 + $0x48] sm:$0xf]
  %v66 = vld [vmem:[%s1 + $0x4c] sm:$0xf]
  %v67 = vld [vmem:[%s1 + $0x50] sm:$0xf]
  %v68 = vld [vmem:[%s1 + $0x54] sm:$0xf]
  %v69 = vld [vmem:[%s1 + $0x58] sm:$0xf]
  %v70 = vld [vmem:[%s1 + $0x5c] sm:$0xf]
  %v71 = vld [vmem:[%s1 + $0x60] sm:$0xf]
  %v72 = vld [vmem:[%s1 + $0x64] sm:$0xf]
  %v73 = vld [vmem:[%s1 + $0x68] sm:$0xf]
  %v74 = vld [vmem:[%s1 + $0x6c] sm:$0xf]
  %v75 = vld [vmem:[%s1 + $0x70] sm:$0xf]
  %v76 = vld [vmem:[%s1 + $0x74] sm:$0xf]
  %v77 = vld [vmem:[%s1 + $0x78] sm:$0xf]
  %v78 = vld [vmem:[%s1 + $0x7c] sm:$0xf]
  %v79 = vld [vmem:[%s1 + $0x80] sm:$0xf]
  %v80 = vld [vmem:[%s1 + $0x84] sm:$0xf]
  %v81 = vld [vmem:[%s1 + $0x88] sm:$0xf]
  %v82 = vld [vmem:[%s1 + $0x8c] sm:$0xf]
  %v83 = vld [vmem:[%s2] sm:$0x1]
  %v85 = vlaneseq
  %v86 = vshrl.u32 %v85, 7
  %v87 = vsub.s32 0, %v86
  %v88 = vrot.slane %v83, %v87
  %v122 = vunpack.c.l.b16 %v15
  %v123 = vunpack.c.h.b16 %v15
  %v124 = vunpack.c.l.b16 %v16
  %v125 = vunpack.c.l.b16 %v17
  %v126 = vunpack.c.h.b16 %v17
  %v127 = vunpack.c.l.b16 %v18
  %v128 = vunpack.c.l.b16 %v19
  %v129 = vunpack.c.h.b16 %v19
  %v130 = vunpack.c.l.b16 %v20
  %v131 = vunpack.c.l.b16 %v21
  %v132 = vunpack.c.h.b16 %v21
  %v133 = vunpack.c.l.b16 %v22
  %v134 = vunpack.c.l.b16 %v23
  %v135 = vunpack.c.h.b16 %v23
  %v136 = vunpack.c.l.b16 %v24
  %v137 = vunpack.c.l.b16 %v25
  %v138 = vunpack.c.h.b16 %v25
  %v139 = vunpack.c.l.b16 %v26
  %v140 = vunpack.c.l.b16 %v27
  %v141 = vunpack.c.h.b16 %v27
  %v142 = vunpack.c.l.b16 %v28
  %v143 = vunpack.c.l.b16 %v29
  %v144 = vunpack.c.h.b16 %v29
  %v145 = vunpack.c.l.b16 %v30
  %v146 = vunpack.c.l.b16 %v31
  %v147 = vunpack.c.h.b16 %v31
  %v148 = vunpack.c.l.b16 %v32
  %v149 = vunpack.c.l.b16 %v33
  %v150 = vunpack.c.h.b16 %v33
  %v151 = vunpack.c.l.b16 %v34
  %v152 = vunpack.c.l.b16 %v35
  %v153 = vunpack.c.h.b16 %v35
  %v154 = vunpack.c.l.b16 %v36
  %v155 = vunpack.c.l.b16 %v37
  %v156 = vunpack.c.h.b16 %v37
  %v157 = vunpack.c.l.b16 %v38
  %v158 = vunpack.c.l.b16 %v39
  %v159 = vunpack.c.h.b16 %v39
  %v160 = vunpack.c.l.b16 %v40
  %v161 = vunpack.c.l.b16 %v41
  %v162 = vunpack.c.h.b16 %v41
  %v163 = vunpack.c.l.b16 %v42
  %v164 = vunpack.c.l.b16 %v43
  %v165 = vunpack.c.h.b16 %v43
  %v166 = vunpack.c.l.b16 %v44
  %v167 = vunpack.c.l.b16 %v45
  %v168 = vunpack.c.h.b16 %v45
  %v169 = vunpack.c.l.b16 %v46
  %v170 = vpack.c.b16 %v125, %v122
  %v171 = vpack.c.b16 %v126, %v123
  %v172 = vpack.c.b16 %v127, %v124
  %v173 = vpack.c.b16 %v131, %v128
  %v174 = vpack.c.b16 %v132, %v129
  %v175 = vpack.c.b16 %v133, %v130
  %v176 = vpack.c.b16 %v137, %v134
  %v177 = vpack.c.b16 %v138, %v135
  %v178 = vpack.c.b16 %v139, %v136
  %v179 = vpack.c.b16 %v143, %v140
  %v180 = vpack.c.b16 %v144, %v141
  %v181 = vpack.c.b16 %v145, %v142
  %v182 = vpack.c.b16 %v149, %v146
  %v183 = vpack.c.b16 %v150, %v147
  %v184 = vpack.c.b16 %v151, %v148
  %v185 = vpack.c.b16 %v155, %v152
  %v186 = vpack.c.b16 %v156, %v153
  %v187 = vpack.c.b16 %v157, %v154
  %v188 = vpack.c.b16 %v161, %v158
  %v189 = vpack.c.b16 %v162, %v159
  %v190 = vpack.c.b16 %v163, %v160
  %v191 = vpack.c.b16 %v167, %v164
  %v192 = vpack.c.b16 %v168, %v165
  %v193 = vpack.c.b16 %v169, %v166
  %v246 = vunpack.c.l.b16 %v47
  %v247 = vunpack.c.l.b16 %v48
  %v248 = vunpack.c.l.b16 %v49
  %v249 = vunpack.c.l.b16 %v50
  %v250 = vunpack.c.l.b16 %v51
  %v251 = vunpack.c.l.b16 %v52
  %v252 = vunpack.c.l.b16 %v53
  %v253 = vunpack.c.l.b16 %v54
  %v254 = vunpack.c.l.b16 %v55
  %v255 = vunpack.c.l.b16 %v56
  %v256 = vunpack.c.l.b16 %v57
  %v257 = vunpack.c.l.b16 %v58
  %v258 = vunpack.c.l.b16 %v59
  %v259 = vunpack.c.l.b16 %v60
  %v260 = vunpack.c.l.b16 %v61
  %v261 = vunpack.c.l.b16 %v62
  %v262 = vunpack.c.l.b16 %v63
  %v263 = vunpack.c.l.b16 %v64
  %v264 = vunpack.c.l.b16 %v65
  %v265 = vunpack.c.l.b16 %v66
  %v266 = vunpack.c.l.b16 %v67
  %v267 = vunpack.c.l.b16 %v68
  %v268 = vunpack.c.l.b16 %v69
  %v269 = vunpack.c.l.b16 %v70
  %v270 = vunpack.c.l.b16 %v71
  %v271 = vunpack.c.l.b16 %v72
  %v272 = vunpack.c.l.b16 %v73
  %v273 = vunpack.c.l.b16 %v74
  %v274 = vunpack.c.l.b16 %v75
  %v275 = vunpack.c.l.b16 %v76
  %v276 = vunpack.c.l.b16 %v77
  %v277 = vunpack.c.l.b16 %v78
  %v278 = vunpack.c.l.b16 %v79
  %v279 = vunpack.c.l.b16 %v80
  %v280 = vunpack.c.l.b16 %v81
  %v281 = vunpack.c.l.b16 %v82
  %v282 = vpack.c.b16 %v247, %v246
  %v283 = vpack.c.b16 %v249, %v248
  %v284 = vpack.c.b16 %v251, %v250
  %v285 = vpack.c.b16 %v253, %v252
  %v286 = vpack.c.b16 %v255, %v254
  %v287 = vpack.c.b16 %v257, %v256
  %v288 = vpack.c.b16 %v259, %v258
  %v289 = vpack.c.b16 %v261, %v260
  %v290 = vpack.c.b16 %v263, %v262
  %v291 = vpack.c.b16 %v265, %v264
  %v292 = vpack.c.b16 %v267, %v266
  %v293 = vpack.c.b16 %v269, %v268
  %v294 = vpack.c.b16 %v271, %v270
  %v295 = vpack.c.b16 %v273, %v272
  %v296 = vpack.c.b16 %v275, %v274
  %v297 = vpack.c.b16 %v277, %v276
  %v298 = vpack.c.b16 %v279, %v278
  %v299 = vpack.c.b16 %v281, %v280
  %vm318 = vcmask 261120
  %v320 = vsel %vm318, %v172, 0
  %v323 = vsel %vm318, %v175, 0
  %v326 = vsel %vm318, %v178, 0
  %v329 = vsel %vm318, %v181, 0
  %v332 = vsel %vm318, %v184, 0
  %v335 = vsel %vm318, %v187, 0
  %v338 = vsel %vm318, %v190, 0
  %v341 = vsel %vm318, %v193, 0
  %343 = vmatprep.subr.bf16.mxu0 0
  %344 = vmatpush1.bf16.msra.mxu0 %v282
  %345 = vmatprep.subr.bf16.mxu0 0
  %346 = vmatpush1.bf16.msra.mxu0 %v283
  %347 = vmatprep.subr.bf16.mxu0 0
  %348 = vmatpush1.bf16.msra.mxu0 %v284
  %349 = vmatprep.subr.bf16.mxu0 0
  %350 = vmatpush1.bf16.msra.mxu0 %v285
  %351 = vmatprep.subr.bf16.mxu0 0
  %352 = vmatpush1.bf16.msra.mxu0 %v286
  %353 = vmatprep.subr.bf16.mxu0 0
  %354 = vmatpush1.bf16.msra.mxu0 %v287
  %355 = vmatprep.subr.bf16.mxu0 0
  %356 = vmatpush1.bf16.msra.mxu0 %v288
  %357 = vmatprep.subr.bf16.mxu0 0
  %358 = vmatpush1.bf16.msra.mxu0 %v289
  %359 = vmatprep.subr.bf16.mxu0 0
  %360 = vmatpush1.bf16.msra.mxu0 %v290
  %361 = vmatprep.subr.bf16.mxu0 0
  %362 = vmatpush1.bf16.msra.mxu0 %v291
  %363 = vmatprep.subr.bf16.mxu0 0
  %364 = vmatpush1.bf16.msra.mxu0 %v292
  %365 = vmatprep.subr.bf16.mxu0 0
  %366 = vmatpush1.bf16.msra.mxu0 %v293
  %367 = vmatprep.subr.bf16.mxu0 0
  %368 = vmatpush1.bf16.msra.mxu0 %v294
  %369 = vmatprep.subr.bf16.mxu0 0
  %370 = vmatpush1.bf16.msra.mxu0 %v295
  %371 = vmatprep.subr.bf16.mxu0 0
  %372 = vmatpush1.bf16.msra.mxu0 %v296
  %373 = vmatprep.subr.bf16.mxu0 0
  %374 = vmatpush1.bf16.msra.mxu0 %v297
  %375 = vmatprep.mubr.bf16.mxu0 %v171
  %376 = vmatmul.mubr.bf16.gmra.mrb[0].mxu0 %v170
  %v377 = vpop.f32.mrb[0].mxu0
  %v378 = vadd.f32 %v88, %v377
  %v379 = vpop.f32.mrb[0].mxu0
  %v380 = vpop.f32.mrb[0].mxu0
  %v381 = vadd.f32 %v88, %v380
  %v382 = vpop.f32.mrb[0].mxu0
  %383 = vmatprep.mubr.bf16.mxu0 %v174
  %384 = vmatmul.mubr.bf16.gmra.mrb[0].mxu0 %v173
  %v385 = vpop.f32.mrb[0].mxu0
  %v386 = vadd.f32 %v88, %v385
  %v387 = vpop.f32.mrb[0].mxu0
  %v388 = vpop.f32.mrb[0].mxu0
  %v389 = vadd.f32 %v88, %v388
  %v390 = vpop.f32.mrb[0].mxu0
  %391 = vmatprep.mubr.bf16.mxu0 %v177
  %392 = vmatmul.mubr.bf16.gmra.mrb[0].mxu0 %v176
  %v393 = vpop.f32.mrb[0].mxu0
  %v394 = vadd.f32 %v88, %v393
  %v395 = vpop.f32.mrb[0].mxu0
  %v396 = vpop.f32.mrb[0].mxu0
  %v397 = vadd.f32 %v88, %v396
  %v398 = vpop.f32.mrb[0].mxu0
  %399 = vmatprep.mubr.bf16.mxu0 %v180
  %400 = vmatmul.mubr.bf16.gmra.mrb[0].mxu0 %v179
  %v401 = vpop.f32.mrb[0].mxu0
  %v402 = vadd.f32 %v88, %v401
  %v403 = vpop.f32.mrb[0].mxu0
  %v404 = vpop.f32.mrb[0].mxu0
  %v405 = vadd.f32 %v88, %v404
  %v406 = vpop.f32.mrb[0].mxu0
  %407 = vmatprep.mubr.bf16.mxu0 %v183
  %408 = vmatmul.mubr.bf16.gmra.mrb[0].mxu0 %v182
  %v409 = vpop.f32.mrb[0].mxu0
  %v410 = vadd.f32 %v88, %v409
  %v411 = vpop.f32.mrb[0].mxu0
  %v412 = vpop.f32.mrb[0].mxu0
  %v413 = vadd.f32 %v88, %v412
  %v414 = vpop.f32.mrb[0].mxu0
  %415 = vmatprep.mubr.bf16.mxu0 %v186
  %416 = vmatmul.mubr.bf16.gmra.mrb[0].mxu0 %v185
  %v417 = vpop.f32.mrb[0].mxu0
  %v418 = vadd.f32 %v88, %v417
  %v419 = vpop.f32.mrb[0].mxu0
  %v420 = vpop.f32.mrb[0].mxu0
  %v421 = vadd.f32 %v88, %v420
  %v422 = vpop.f32.mrb[0].mxu0
  %423 = vmatprep.mubr.bf16.mxu0 %v189
  %424 = vmatmul.mubr.bf16.gmra.mrb[0].mxu0 %v188
  %v425 = vpop.f32.mrb[0].mxu0
  %v426 = vadd.f32 %v88, %v425
  %v427 = vpop.f32.mrb[0].mxu0
  %v428 = vpop.f32.mrb[0].mxu0
  %v429 = vadd.f32 %v88, %v428
  %v430 = vpop.f32.mrb[0].mxu0
  %431 = vmatprep.mubr.bf16.mxu0 %v192
  %432 = vmatmul.mubr.bf16.gmra.mrb[0].mxu0 %v191
  %v433 = vpop.f32.mrb[0].mxu0
  %v434 = vadd.f32 %v88, %v433
  %v435 = vpop.f32.mrb[0].mxu0
  %v436 = vpop.f32.mrb[0].mxu0
  %v437 = vadd.f32 %v88, %v436
  %v438 = vpop.f32.mrb[0].mxu0
  %439 = vdwg.mxu0
  %440 = vmatprep.subr.bf16.mxu0 0
  %441 = vmatpush1.bf16.msra.mxu0 %v298
  %442 = vmatprep.subr.bf16.mxu0 0
  %443 = vmatpush1.bf16.msra.mxu0 %v299
  %444 = vmatprep.subr.bf16.mxu0 0
  %445 = vmatpush1.bf16.msra.mxu0 0
  %446 = vmatprep.subr.bf16.mxu0 0
  %447 = vmatpush1.bf16.msra.mxu0 0
  %448 = vmatprep.subr.bf16.mxu0 0
  %449 = vmatpush1.bf16.msra.mxu0 0
  %450 = vmatprep.subr.bf16.mxu0 0
  %451 = vmatpush1.bf16.msra.mxu0 0
  %452 = vmatprep.subr.bf16.mxu0 0
  %453 = vmatpush1.bf16.msra.mxu0 0
  %454 = vmatprep.subr.bf16.mxu0 0
  %455 = vmatpush1.bf16.msra.mxu0 0
  %456 = vmatprep.subr.bf16.mxu0 0
  %457 = vmatpush1.bf16.msra.mxu0 0
  %458 = vmatprep.subr.bf16.mxu0 0
  %459 = vmatpush1.bf16.msra.mxu0 0
  %460 = vmatprep.subr.bf16.mxu0 0
  %461 = vmatpush1.bf16.msra.mxu0 0
  %462 = vmatprep.subr.bf16.mxu0 0
  %463 = vmatpush1.bf16.msra.mxu0 0
  %464 = vmatprep.subr.bf16.mxu0 0
  %465 = vmatpush1.bf16.msra.mxu0 0
  %466 = vmatprep.subr.bf16.mxu0 0
  %467 = vmatpush1.bf16.msra.mxu0 0
  %468 = vmatprep.subr.bf16.mxu0 0
  %469 = vmatpush1.bf16.msra.mxu0 0
  %470 = vmatprep.subr.bf16.mxu0 0
  %471 = vmatpush1.bf16.msra.mxu0 0
  %472 = vmatprep.mubr.bf16.mxu0 0
  %473 = vmatmul.mubr.bf16.gmra.mrb[0].mxu0 %v320
  %v474 = vpop.f32.mrb[0].mxu0
  %v475 = vadd.f32 %v378, %v474
  %v476 = vpop.f32.mrb[0].mxu0
  %v477 = vpop.f32.mrb[0].mxu0
  %v478 = vadd.f32 %v381, %v477
  %v479 = vpop.f32.mrb[0].mxu0
  %480 = vmatprep.mubr.bf16.mxu0 0
  %481 = vmatmul.mubr.bf16.gmra.mrb[0].mxu0 %v323
  %v482 = vpop.f32.mrb[0].mxu0
  %v483 = vadd.f32 %v386, %v482
  %v484 = vpop.f32.mrb[0].mxu0
  %v485 = vpop.f32.mrb[0].mxu0
  %v486 = vadd.f32 %v389, %v485
  %v487 = vpop.f32.mrb[0].mxu0
  %488 = vmatprep.mubr.bf16.mxu0 0
  %489 = vmatmul.mubr.bf16.gmra.mrb[0].mxu0 %v326
  %v490 = vpop.f32.mrb[0].mxu0
  %v491 = vadd.f32 %v394, %v490
  %v492 = vpop.f32.mrb[0].mxu0
  %v493 = vpop.f32.mrb[0].mxu0
  %v494 = vadd.f32 %v397, %v493
  %v495 = vpop.f32.mrb[0].mxu0
  %496 = vmatprep.mubr.bf16.mxu0 0
  %497 = vmatmul.mubr.bf16.gmra.mrb[0].mxu0 %v329
  %v498 = vpop.f32.mrb[0].mxu0
  %v499 = vadd.f32 %v402, %v498
  %v500 = vpop.f32.mrb[0].mxu0
  %v501 = vpop.f32.mrb[0].mxu0
  %v502 = vadd.f32 %v405, %v501
  %v503 = vpop.f32.mrb[0].mxu0
  %504 = vmatprep.mubr.bf16.mxu0 0
  %505 = vmatmul.mubr.bf16.gmra.mrb[0].mxu0 %v332
  %v506 = vpop.f32.mrb[0].mxu0
  %v507 = vadd.f32 %v410, %v506
  %v508 = vpop.f32.mrb[0].mxu0
  %v509 = vpop.f32.mrb[0].mxu0
  %v510 = vadd.f32 %v413, %v509
  %v511 = vpop.f32.mrb[0].mxu0
  %512 = vmatprep.mubr.bf16.mxu0 0
  %513 = vmatmul.mubr.bf16.gmra.mrb[0].mxu0 %v335
  %v514 = vpop.f32.mrb[0].mxu0
  %v515 = vadd.f32 %v418, %v514
  %v516 = vpop.f32.mrb[0].mxu0
  %v517 = vpop.f32.mrb[0].mxu0
  %v518 = vadd.f32 %v421, %v517
  %v519 = vpop.f32.mrb[0].mxu0
  %520 = vmatprep.mubr.bf16.mxu0 0
  %521 = vmatmul.mubr.bf16.gmra.mrb[0].mxu0 %v338
  %v522 = vpop.f32.mrb[0].mxu0
  %v523 = vadd.f32 %v426, %v522
  %v524 = vpop.f32.mrb[0].mxu0
  %v525 = vpop.f32.mrb[0].mxu0
  %v526 = vadd.f32 %v429, %v525
  %v527 = vpop.f32.mrb[0].mxu0
  %528 = vmatprep.mubr.bf16.mxu0 0
  %529 = vmatmul.mubr.bf16.gmra.mrb[0].mxu0 %v341
  %v530 = vpop.f32.mrb[0].mxu0
  %v531 = vadd.f32 %v434, %v530
  %v532 = vpop.f32.mrb[0].mxu0
  %v533 = vpop.f32.mrb[0].mxu0
  %v534 = vadd.f32 %v437, %v533
  %v535 = vpop.f32.mrb[0].mxu0
  %536 = vdwg.mxu0
  %v537 = vmax.f32 %v475, 0.0
  %v538 = vmax.f32 %v478, 0.0
  %v539 = vmax.f32 %v483, 0.0
  %v540 = vmax.f32 %v486, 0.0
  %v541 = vmax.f32 %v491, 0.0
  %v542 = vmax.f32 %v494, 0.0
  %v543 = vmax.f32 %v499, 0.0
  %v544 = vmax.f32 %v502, 0.0
  %v545 = vmax.f32 %v507, 0.0
  %v546 = vmax.f32 %v510, 0.0
  %v547 = vmax.f32 %v515, 0.0
  %v548 = vmax.f32 %v518, 0.0
  %v549 = vmax.f32 %v523, 0.0
  %v550 = vmax.f32 %v526, 0.0
  %v551 = vmax.f32 %v531, 0.0
  %v552 = vmax.f32 %v534, 0.0
  %v553 = vpack.c.bf16 %v538, %v537
  %v554 = vpack.c.bf16 %v540, %v539
  %v555 = vpack.c.bf16 %v542, %v541
  %v556 = vpack.c.bf16 %v544, %v543
  %v557 = vpack.c.bf16 %v546, %v545
  %v558 = vpack.c.bf16 %v548, %v547
  %v559 = vpack.c.bf16 %v550, %v549
  %v560 = vpack.c.bf16 %v552, %v551
  %v569 = vunpack.c.l.b16 %v553
  %v570 = vunpack.c.h.b16 %v553
  %v571 = vunpack.c.l.b16 %v554
  %v572 = vunpack.c.h.b16 %v554
  %v573 = vunpack.c.l.b16 %v555
  %v574 = vunpack.c.h.b16 %v555
  %v575 = vunpack.c.l.b16 %v556
  %v576 = vunpack.c.h.b16 %v556
  %v577 = vunpack.c.l.b16 %v557
  %v578 = vunpack.c.h.b16 %v557
  %v579 = vunpack.c.l.b16 %v558
  %v580 = vunpack.c.h.b16 %v558
  %v581 = vunpack.c.l.b16 %v559
  %v582 = vunpack.c.h.b16 %v559
  %v583 = vunpack.c.l.b16 %v560
  %v584 = vunpack.c.h.b16 %v560
  %v585 = vpack.c.b16 %v569, %v569
  %v586 = vpack.c.b16 %v570, %v570
  %v587 = vpack.c.b16 %v571, %v571
  %v588 = vpack.c.b16 %v572, %v572
  %v589 = vpack.c.b16 %v573, %v573
  %v590 = vpack.c.b16 %v574, %v574
  %v591 = vpack.c.b16 %v575, %v575
  %v592 = vpack.c.b16 %v576, %v576
  %v593 = vpack.c.b16 %v577, %v577
  %v594 = vpack.c.b16 %v578, %v578
  %v595 = vpack.c.b16 %v579, %v579
  %v596 = vpack.c.b16 %v580, %v580
  %v597 = vpack.c.b16 %v581, %v581
  %v598 = vpack.c.b16 %v582, %v582
  %v599 = vpack.c.b16 %v583, %v583
  %v600 = vpack.c.b16 %v584, %v584
  %vm617 = vcmask 519168
  %618 = vst.msk [vmem:[%s3] sm:$0xf] %vm617, %v585
  %619 = vst.msk [vmem:[%s3 + $0x4] sm:$0xf] %vm617, %v586
  %620 = vst.msk [vmem:[%s3 + $0x8] sm:$0xf] %vm617, %v587
  %621 = vst.msk [vmem:[%s3 + $0xc] sm:$0xf] %vm617, %v588
  %622 = vst.msk [vmem:[%s3 + $0x10] sm:$0xf] %vm617, %v589
  %623 = vst.msk [vmem:[%s3 + $0x14] sm:$0xf] %vm617, %v590
  %624 = vst.msk [vmem:[%s3 + $0x18] sm:$0xf] %vm617, %v591
  %625 = vst.msk [vmem:[%s3 + $0x1c] sm:$0xf] %vm617, %v592
  %626 = vst.msk [vmem:[%s3 + $0x20] sm:$0xf] %vm617, %v593
  %627 = vst.msk [vmem:[%s3 + $0x24] sm:$0xf] %vm617, %v594
  %628 = vst.msk [vmem:[%s3 + $0x28] sm:$0xf] %vm617, %v595
  %629 = vst.msk [vmem:[%s3 + $0x2c] sm:$0xf] %vm617, %v596
  %630 = vst.msk [vmem:[%s3 + $0x30] sm:$0xf] %vm617, %v597
  %631 = vst.msk [vmem:[%s3 + $0x34] sm:$0xf] %vm617, %v598
  %632 = vst.msk [vmem:[%s3 + $0x38] sm:$0xf] %vm617, %v599
  %633 = vst.msk [vmem:[%s3 + $0x3c] sm:$0xf] %vm617, %v600
  // Predicated region
  $region14: #{stegastamp_decoder_forward.14} parent=0 // pred_check
    _
  $region15: #{stegastamp_decoder_forward.14} parent=0 // pred_check_branch
    %635 = sbr.rel (0) target = $region17
  $region16: #{stegastamp_decoder_forward.14} parent=0 // pred_region
    _
  $region17: #{stegastamp_decoder_forward.14} parent=0 // pred_fallthru
    _
  // Predicated region
  $region18: #{stegastamp_decoder_forward.14} parent=0 // pred_check
    _
  $region19: #{stegastamp_decoder_forward.14} parent=0 // pred_check_branch
    %637 = sbr.rel (0) target = $region21
  $region20: #{stegastamp_decoder_forward.14} parent=0 // pred_region
    _
  $region21: #{stegastamp_decoder_forward.14} parent=0 // pred_fallthru
    _

// kernel: stegastamp_decoder_forward.15
$region0: #{stegastamp_decoder_forward.15}
  #allocation0 [shape = 'u32[]', space=smem, size = 0x4, offset = 0x4, fixed_abs, tag = 'smem constant byte address 0x4 - core index']
  #allocation1 [shape = 'u32[144,128]{1,0:T(1,128)}', space=vmem, size = 0x12000, scoped, tag = 'internal scratch']
  %s0 = inlined_call_operand.vmem [shape: bf16[32,576], index: 0, kind: input, shape index: {}]
  %s1 = inlined_call_operand.vmem [shape: bf16[576,128], index: 1, kind: input, shape index: {}]
  %s2 = inlined_call_operand.vmem [shape: f32[1,128], index: 2, kind: input, shape index: {}]
  %s3 = inlined_call_operand.vmem [shape: bf16[32,128], index: 3, kind: output, shape index: {}]
  %s4 = sld [smem:[#allocation0]]
  $region22: #{stegastamp_decoder_forward.15} parent=0
    _
  %s6 = ssub.s32 1, %s4
  %s7 = scalar_select 0, %s6, %s4
  // Predicated region
  $region2: #{stegastamp_decoder_forward.15} parent=0 // pred_check
    _
  $region3: #{stegastamp_decoder_forward.15} parent=0 // pred_check_branch
    %9 = sbr.rel (0) target = $region5
  $region4: #{stegastamp_decoder_forward.15} parent=0 // pred_region
    _
  $region5: #{stegastamp_decoder_forward.15} parent=0 // pred_fallthru
    _
  // Predicated region
  $region6: #{stegastamp_decoder_forward.15} parent=0 // pred_check
    _
  $region7: #{stegastamp_decoder_forward.15} parent=0 // pred_check_branch
    %11 = sbr.rel (0) target = $region9
  $region8: #{stegastamp_decoder_forward.15} parent=0 // pred_region
    _
  $region9: #{stegastamp_decoder_forward.15} parent=0 // pred_fallthru
    _
  // Predicated region
  $region10: #{stegastamp_decoder_forward.15} parent=0 // pred_check
    _
  $region11: #{stegastamp_decoder_forward.15} parent=0 // pred_check_branch
    %13 = sbr.rel (0) target = $region13
  $region12: #{stegastamp_decoder_forward.15} parent=0 // pred_region
    _
  $region13: #{stegastamp_decoder_forward.15} parent=0 // pred_fallthru
    _
  %v15 = vld [vmem:[%s0] sm:$0xff]
  %v16 = vld [vmem:[%s0 + $0x8] sm:$0xff]
  %v17 = vld [vmem:[%s0 + $0x10] sm:$0xf]
  %v18 = vld [vmem:[%s0 + $0x14] sm:$0xff]
  %v19 = vld [vmem:[%s0 + $0x1c] sm:$0xff]
  %v20 = vld [vmem:[%s0 + $0x24] sm:$0xf]
  %v21 = vld [vmem:[%s0 + $0x28] sm:$0xff]
  %v22 = vld [vmem:[%s0 + $0x30] sm:$0xff]
  %v23 = vld [vmem:[%s0 + $0x38] sm:$0xf]
  %v24 = vld [vmem:[%s0 + $0x3c] sm:$0xff]
  %v25 = vld [vmem:[%s0 + $0x44] sm:$0xff]
  %v26 = vld [vmem:[%s0 + $0x4c] sm:$0xf]
  %v27 = vld [vmem:[%s1] sm:$0xf]
  %v28 = vld [vmem:[%s1 + $0x4] sm:$0xf]
  %v29 = vld [vmem:[%s1 + $0x8] sm:$0xf]
  %v30 = vld [vmem:[%s1 + $0xc] sm:$0xf]
  %v31 = vld [vmem:[%s1 + $0x10] sm:$0xf]
  %v32 = vld [vmem:[%s1 + $0x14] sm:$0xf]
  %v33 = vld [vmem:[%s1 + $0x18] sm:$0xf]
  %v34 = vld [vmem:[%s1 + $0x1c] sm:$0xf]
  %v35 = vld [vmem:[%s1 + $0x20] sm:$0xf]
  %v36 = vld [vmem:[%s1 + $0x24] sm:$0xf]
  %v37 = vld [vmem:[%s1 + $0x28] sm:$0xf]
  %v38 = vld [vmem:[%s1 + $0x2c] sm:$0xf]
  %v39 = vld [vmem:[%s1 + $0x30] sm:$0xf]
  %v40 = vld [vmem:[%s1 + $0x34] sm:$0xf]
  %v41 = vld [vmem:[%s1 + $0x38] sm:$0xf]
  %v42 = vld [vmem:[%s1 + $0x3c] sm:$0xf]
  %v43 = vld [vmem:[%s1 + $0x40] sm:$0xf]
  %v44 = vld [vmem:[%s1 + $0x44] sm:$0xf]
  %v45 = vld [vmem:[%s1 + $0x48] sm:$0xf]
  %v46 = vld [vmem:[%s1 + $0x4c] sm:$0xf]
  %v47 = vld [vmem:[%s1 + $0x50] sm:$0xf]
  %v48 = vld [vmem:[%s1 + $0x54] sm:$0xf]
  %v49 = vld [vmem:[%s1 + $0x58] sm:$0xf]
  %v50 = vld [vmem:[%s1 + $0x5c] sm:$0xf]
  %v51 = vld [vmem:[%s1 + $0x60] sm:$0xf]
  %v52 = vld [vmem:[%s1 + $0x64] sm:$0xf]
  %v53 = vld [vmem:[%s1 + $0x68] sm:$0xf]
  %v54 = vld [vmem:[%s1 + $0x6c] sm:$0xf]
  %v55 = vld [vmem:[%s1 + $0x70] sm:$0xf]
  %v56 = vld [vmem:[%s1 + $0x74] sm:$0xf]
  %v57 = vld [vmem:[%s1 + $0x78] sm:$0xf]
  %v58 = vld [vmem:[%s1 + $0x7c] sm:$0xf]
  %v59 = vld [vmem:[%s1 + $0x80] sm:$0xf]
  %v60 = vld [vmem:[%s1 + $0x84] sm:$0xf]
  %v61 = vld [vmem:[%s1 + $0x88] sm:$0xf]
  %v62 = vld [vmem:[%s1 + $0x8c] sm:$0xf]
  %v63 = vld [vmem:[%s1 + $0x90] sm:$0xf]
  %v64 = vld [vmem:[%s1 + $0x94] sm:$0xf]
  %v65 = vld [vmem:[%s1 + $0x98] sm:$0xf]
  %v66 = vld [vmem:[%s1 + $0x9c] sm:$0xf]
  %v67 = vld [vmem:[%s1 + $0xa0] sm:$0xf]
  %v68 = vld [vmem:[%s1 + $0xa4] sm:$0xf]
  %v69 = vld [vmem:[%s1 + $0xa8] sm:$0xf]
  %v70 = vld [vmem:[%s1 + $0xac] sm:$0xf]
  %v71 = vld [vmem:[%s1 + $0xb0] sm:$0xf]
  %v72 = vld [vmem:[%s1 + $0xb4] sm:$0xf]
  %v73 = vld [vmem:[%s1 + $0xb8] sm:$0xf]
  %v74 = vld [vmem:[%s1 + $0xbc] sm:$0xf]
  %v75 = vld [vmem:[%s1 + $0xc0] sm:$0xf]
  %v76 = vld [vmem:[%s1 + $0xc4] sm:$0xf]
  %v77 = vld [vmem:[%s1 + $0xc8] sm:$0xf]
  %v78 = vld [vmem:[%s1 + $0xcc] sm:$0xf]
  %v79 = vld [vmem:[%s1 + $0xd0] sm:$0xf]
  %v80 = vld [vmem:[%s1 + $0xd4] sm:$0xf]
  %v81 = vld [vmem:[%s1 + $0xd8] sm:$0xf]
  %v82 = vld [vmem:[%s1 + $0xdc] sm:$0xf]
  %v83 = vld [vmem:[%s1 + $0xe0] sm:$0xf]
  %v84 = vld [vmem:[%s1 + $0xe4] sm:$0xf]
  %v85 = vld [vmem:[%s1 + $0xe8] sm:$0xf]
  %v86 = vld [vmem:[%s1 + $0xec] sm:$0xf]
  %v87 = vld [vmem:[%s1 + $0xf0] sm:$0xf]
  %v88 = vld [vmem:[%s1 + $0xf4] sm:$0xf]
  %v89 = vld [vmem:[%s1 + $0xf8] sm:$0xf]
  %v90 = vld [vmem:[%s1 + $0xfc] sm:$0xf]
  %v91 = vld [vmem:[%s1 + $0x100] sm:$0xf]
  %v92 = vld [vmem:[%s1 + $0x104] sm:$0xf]
  %v93 = vld [vmem:[%s1 + $0x108] sm:$0xf]
  %v94 = vld [vmem:[%s1 + $0x10c] sm:$0xf]
  %v95 = vld [vmem:[%s1 + $0x110] sm:$0xf]
  %v96 = vld [vmem:[%s1 + $0x114] sm:$0xf]
  %v97 = vld [vmem:[%s1 + $0x118] sm:$0xf]
  %v98 = vld [vmem:[%s1 + $0x11c] sm:$0xf]
  %v99 = vld [vmem:[%s2] sm:$0x1]
  %v101 = vlaneseq
  %v102 = vshrl.u32 %v101, 7
  %v103 = vsub.s32 0, %v102
  %v104 = vrot.slane %v99, %v103
  %v118 = vunpack.c.l.b16 %v15
  %v119 = vunpack.c.h.b16 %v15
  %v120 = vunpack.c.l.b16 %v16
  %v121 = vunpack.c.h.b16 %v16
  %v122 = vunpack.c.l.b16 %v17
  %v123 = vunpack.c.l.b16 %v18
  %v124 = vunpack.c.h.b16 %v18
  %v125 = vunpack.c.l.b16 %v19
  %v126 = vunpack.c.h.b16 %v19
  %v127 = vunpack.c.l.b16 %v20
  %v128 = vunpack.c.l.b16 %v21
  %v129 = vunpack.c.h.b16 %v21
  %v130 = vunpack.c.l.b16 %v22
  %v131 = vunpack.c.h.b16 %v22
  %v132 = vunpack.c.l.b16 %v23
  %v133 = vunpack.c.l.b16 %v24
  %v134 = vunpack.c.h.b16 %v24
  %v135 = vunpack.c.l.b16 %v25
  %v136 = vunpack.c.h.b16 %v25
  %v137 = vunpack.c.l.b16 %v26
  %v138 = vpack.c.b16 %v123, %v118
  %v139 = vpack.c.b16 %v124, %v119
  %v140 = vpack.c.b16 %v125, %v120
  %v141 = vpack.c.b16 %v126, %v121
  %v142 = vpack.c.b16 %v127, %v122
  %v143 = vpack.c.b16 %v133, %v128
  %v144 = vpack.c.b16 %v134, %v129
  %v145 = vpack.c.b16 %v135, %v130
  %v146 = vpack.c.b16 %v136, %v131
  %v147 = vpack.c.b16 %v137, %v132
  %v228 = vunpack.c.l.b16 %v27
  %v229 = vunpack.c.l.b16 %v28
  %v230 = vunpack.c.l.b16 %v29
  %v231 = vunpack.c.l.b16 %v30
  %v232 = vunpack.c.l.b16 %v31
  %v233 = vunpack.c.l.b16 %v32
  %v234 = vunpack.c.l.b16 %v33
  %v235 = vunpack.c.l.b16 %v34
  %v236 = vunpack.c.l.b16 %v35
  %v237 = vunpack.c.l.b16 %v36
  %v238 = vunpack.c.l.b16 %v37
  %v239 = vunpack.c.l.b16 %v38
  %v240 = vunpack.c.l.b16 %v39
  %v241 = vunpack.c.l.b16 %v40
  %v242 = vunpack.c.l.b16 %v41
  %v243 = vunpack.c.l.b16 %v42
  %v244 = vunpack.c.l.b16 %v43
  %v245 = vunpack.c.l.b16 %v44
  %v246 = vunpack.c.l.b16 %v45
  %v247 = vunpack.c.l.b16 %v46
  %v248 = vunpack.c.l.b16 %v47
  %v249 = vunpack.c.l.b16 %v48
  %v250 = vunpack.c.l.b16 %v49
  %v251 = vunpack.c.l.b16 %v50
  %v252 = vunpack.c.l.b16 %v51
  %v253 = vunpack.c.l.b16 %v52
  %v254 = vunpack.c.l.b16 %v53
  %v255 = vunpack.c.l.b16 %v54
  %v256 = vunpack.c.l.b16 %v55
  %v257 = vunpack.c.l.b16 %v56
  %v258 = vunpack.c.l.b16 %v57
  %v259 = vunpack.c.l.b16 %v58
  %v260 = vunpack.c.l.b16 %v59
  %v261 = vunpack.c.l.b16 %v60
  %v262 = vunpack.c.l.b16 %v61
  %v263 = vunpack.c.l.b16 %v62
  %v264 = vunpack.c.l.b16 %v63
  %v265 = vunpack.c.l.b16 %v64
  %v266 = vunpack.c.l.b16 %v65
  %v267 = vunpack.c.l.b16 %v66
  %v268 = vunpack.c.l.b16 %v67
  %v269 = vunpack.c.l.b16 %v68
  %v270 = vunpack.c.l.b16 %v69
  %v271 = vunpack.c.l.b16 %v70
  %v272 = vunpack.c.l.b16 %v71
  %v273 = vunpack.c.l.b16 %v72
  %v274 = vunpack.c.l.b16 %v73
  %v275 = vunpack.c.l.b16 %v74
  %v276 = vunpack.c.l.b16 %v75
  %v277 = vunpack.c.l.b16 %v76
  %v278 = vunpack.c.l.b16 %v77
  %v279 = vunpack.c.l.b16 %v78
  %v280 = vunpack.c.l.b16 %v79
  %v281 = vunpack.c.l.b16 %v80
  %v282 = vunpack.c.l.b16 %v81
  %v283 = vunpack.c.l.b16 %v82
  %v284 = vunpack.c.l.b16 %v83
  %v285 = vunpack.c.l.b16 %v84
  %v286 = vunpack.c.l.b16 %v85
  %v287 = vunpack.c.l.b16 %v86
  %v288 = vunpack.c.l.b16 %v87
  %v289 = vunpack.c.l.b16 %v88
  %v290 = vunpack.c.l.b16 %v89
  %v291 = vunpack.c.l.b16 %v90
  %v292 = vunpack.c.l.b16 %v91
  %v293 = vunpack.c.l.b16 %v92
  %v294 = vunpack.c.l.b16 %v93
  %v295 = vunpack.c.l.b16 %v94
  %v296 = vunpack.c.l.b16 %v95
  %v297 = vunpack.c.l.b16 %v96
  %v298 = vunpack.c.l.b16 %v97
  %v299 = vunpack.c.l.b16 %v98
  %v300 = vpack.c.b16 %v229, %v228
  %v301 = vpack.c.b16 %v231, %v230
  %v302 = vpack.c.b16 %v233, %v232
  %v303 = vpack.c.b16 %v235, %v234
  %v304 = vpack.c.b16 %v237, %v236
  %v305 = vpack.c.b16 %v239, %v238
  %v306 = vpack.c.b16 %v241, %v240
  %v307 = vpack.c.b16 %v243, %v242
  %v308 = vpack.c.b16 %v245, %v244
  %v309 = vpack.c.b16 %v247, %v246
  %v310 = vpack.c.b16 %v249, %v248
  %v311 = vpack.c.b16 %v251, %v250
  %v312 = vpack.c.b16 %v253, %v252
  %v313 = vpack.c.b16 %v255, %v254
  %v314 = vpack.c.b16 %v257, %v256
  %v315 = vpack.c.b16 %v259, %v258
  %v316 = vpack.c.b16 %v261, %v260
  %v317 = vpack.c.b16 %v263, %v262
  %v318 = vpack.c.b16 %v265, %v264
  %v319 = vpack.c.b16 %v267, %v266
  %v320 = vpack.c.b16 %v269, %v268
  %v321 = vpack.c.b16 %v271, %v270
  %v322 = vpack.c.b16 %v273, %v272
  %v323 = vpack.c.b16 %v275, %v274
  %v324 = vpack.c.b16 %v277, %v276
  %v325 = vpack.c.b16 %v279, %v278
  %v326 = vpack.c.b16 %v281, %v280
  %v327 = vpack.c.b16 %v283, %v282
  %v328 = vpack.c.b16 %v285, %v284
  %v329 = vpack.c.b16 %v287, %v286
  %v330 = vpack.c.b16 %v289, %v288
  %v331 = vpack.c.b16 %v291, %v290
  %v332 = vpack.c.b16 %v293, %v292
  %v333 = vpack.c.b16 %v295, %v294
  %v334 = vpack.c.b16 %v297, %v296
  %v335 = vpack.c.b16 %v299, %v298
  %vm372 = vcmask 523264
  %v374 = vsel %vm372, %v142, 0
  %v377 = vsel %vm372, %v147, 0
  %379 = vmatprep.subr.bf16.mxu0 0
  %380 = vmatpush1.bf16.msra.mxu0 %v300
  %381 = vmatprep.subr.bf16.mxu0 0
  %382 = vmatpush1.bf16.msra.mxu0 %v301
  %383 = vmatprep.subr.bf16.mxu0 0
  %384 = vmatpush1.bf16.msra.mxu0 %v302
  %385 = vmatprep.subr.bf16.mxu0 0
  %386 = vmatpush1.bf16.msra.mxu0 %v303
  %387 = vmatprep.subr.bf16.mxu0 0
  %388 = vmatpush1.bf16.msra.mxu0 %v304
  %389 = vmatprep.subr.bf16.mxu0 0
  %390 = vmatpush1.bf16.msra.mxu0 %v305
  %391 = vmatprep.subr.bf16.mxu0 0
  %392 = vmatpush1.bf16.msra.mxu0 %v306
  %393 = vmatprep.subr.bf16.mxu0 0
  %394 = vmatpush1.bf16.msra.mxu0 %v307
  %395 = vmatprep.subr.bf16.mxu0 0
  %396 = vmatpush1.bf16.msra.mxu0 %v308
  %397 = vmatprep.subr.bf16.mxu0 0
  %398 = vmatpush1.bf16.msra.mxu0 %v309
  %399 = vmatprep.subr.bf16.mxu0 0
  %400 = vmatpush1.bf16.msra.mxu0 %v310
  %401 = vmatprep.subr.bf16.mxu0 0
  %402 = vmatpush1.bf16.msra.mxu0 %v311
  %403 = vmatprep.subr.bf16.mxu0 0
  %404 = vmatpush1.bf16.msra.mxu0 %v312
  %405 = vmatprep.subr.bf16.mxu0 0
  %406 = vmatpush1.bf16.msra.mxu0 %v313
  %407 = vmatprep.subr.bf16.mxu0 0
  %408 = vmatpush1.bf16.msra.mxu0 %v314
  %409 = vmatprep.subr.bf16.mxu0 0
  %410 = vmatpush1.bf16.msra.mxu0 %v315
  %411 = vmatprep.mubr.bf16.mxu0 %v139
  %412 = vmatmul.mubr.bf16.gmra.mrb[0].mxu0 %v138
  %v413 = vpop.f32.mrb[0].mxu0
  %v414 = vadd.f32 %v104, %v413
  %v415 = vpop.f32.mrb[0].mxu0
  %v416 = vpop.f32.mrb[0].mxu0
  %v417 = vadd.f32 %v104, %v416
  %v418 = vpop.f32.mrb[0].mxu0
  %419 = vmatprep.mubr.bf16.mxu0 %v144
  %420 = vmatmul.mubr.bf16.gmra.mrb[0].mxu0 %v143
  %v421 = vpop.f32.mrb[0].mxu0
  %v422 = vadd.f32 %v104, %v421
  %v423 = vpop.f32.mrb[0].mxu0
  %v424 = vpop.f32.mrb[0].mxu0
  %v425 = vadd.f32 %v104, %v424
  %v426 = vpop.f32.mrb[0].mxu0
  %427 = vdwg.mxu0
  %428 = vmatprep.subr.bf16.mxu0 0
  %429 = vmatpush1.bf16.msra.mxu0 %v316
  %430 = vmatprep.subr.bf16.mxu0 0
  %431 = vmatpush1.bf16.msra.mxu0 %v317
  %432 = vmatprep.subr.bf16.mxu0 0
  %433 = vmatpush1.bf16.msra.mxu0 %v318
  %434 = vmatprep.subr.bf16.mxu0 0
  %435 = vmatpush1.bf16.msra.mxu0 %v319
  %436 = vmatprep.subr.bf16.mxu0 0
  %437 = vmatpush1.bf16.msra.mxu0 %v320
  %438 = vmatprep.subr.bf16.mxu0 0
  %439 = vmatpush1.bf16.msra.mxu0 %v321
  %440 = vmatprep.subr.bf16.mxu0 0
  %441 = vmatpush1.bf16.msra.mxu0 %v322
  %442 = vmatprep.subr.bf16.mxu0 0
  %443 = vmatpush1.bf16.msra.mxu0 %v323
  %444 = vmatprep.subr.bf16.mxu0 0
  %445 = vmatpush1.bf16.msra.mxu0 %v324
  %446 = vmatprep.subr.bf16.mxu0 0
  %447 = vmatpush1.bf16.msra.mxu0 %v325
  %448 = vmatprep.subr.bf16.mxu0 0
  %449 = vmatpush1.bf16.msra.mxu0 %v326
  %450 = vmatprep.subr.bf16.mxu0 0
  %451 = vmatpush1.bf16.msra.mxu0 %v327
  %452 = vmatprep.subr.bf16.mxu0 0
  %453 = vmatpush1.bf16.msra.mxu0 %v328
  %454 = vmatprep.subr.bf16.mxu0 0
  %455 = vmatpush1.bf16.msra.mxu0 %v329
  %456 = vmatprep.subr.bf16.mxu0 0
  %457 = vmatpush1.bf16.msra.mxu0 %v330
  %458 = vmatprep.subr.bf16.mxu0 0
  %459 = vmatpush1.bf16.msra.mxu0 %v331
  %460 = vmatprep.mubr.bf16.mxu0 %v141
  %461 = vmatmul.mubr.bf16.gmra.mrb[0].mxu0 %v140
  %v462 = vpop.f32.mrb[0].mxu0
  %v463 = vadd.f32 %v414, %v462
  %v464 = vpop.f32.mrb[0].mxu0
  %v465 = vpop.f32.mrb[0].mxu0
  %v466 = vadd.f32 %v417, %v465
  %v467 = vpop.f32.mrb[0].mxu0
  %468 = vmatprep.mubr.bf16.mxu0 %v146
  %469 = vmatmul.mubr.bf16.gmra.mrb[0].mxu0 %v145
  %v470 = vpop.f32.mrb[0].mxu0
  %v471 = vadd.f32 %v422, %v470
  %v472 = vpop.f32.mrb[0].mxu0
  %v473 = vpop.f32.mrb[0].mxu0
  %v474 = vadd.f32 %v425, %v473
  %v475 = vpop.f32.mrb[0].mxu0
  %476 = vdwg.mxu0
  %477 = vmatprep.subr.bf16.mxu0 0
  %478 = vmatpush1.bf16.msra.mxu0 %v332
  %479 = vmatprep.subr.bf16.mxu0 0
  %480 = vmatpush1.bf16.msra.mxu0 %v333
  %481 = vmatprep.subr.bf16.mxu0 0
  %482 = vmatpush1.bf16.msra.mxu0 %v334
  %483 = vmatprep.subr.bf16.mxu0 0
  %484 = vmatpush1.bf16.msra.mxu0 %v335
  %485 = vmatprep.subr.bf16.mxu0 0
  %486 = vmatpush1.bf16.msra.mxu0 0
  %487 = vmatprep.subr.bf16.mxu0 0
  %488 = vmatpush1.bf16.msra.mxu0 0
  %489 = vmatprep.subr.bf16.mxu0 0
  %490 = vmatpush1.bf16.msra.mxu0 0
  %491 = vmatprep.subr.bf16.mxu0 0
  %492 = vmatpush1.bf16.msra.mxu0 0
  %493 = vmatprep.subr.bf16.mxu0 0
  %494 = vmatpush1.bf16.msra.mxu0 0
  %495 = vmatprep.subr.bf16.mxu0 0
  %496 = vmatpush1.bf16.msra.mxu0 0
  %497 = vmatprep.subr.bf16.mxu0 0
  %498 = vmatpush1.bf16.msra.mxu0 0
  %499 = vmatprep.subr.bf16.mxu0 0
  %500 = vmatpush1.bf16.msra.mxu0 0
  %501 = vmatprep.subr.bf16.mxu0 0
  %502 = vmatpush1.bf16.msra.mxu0 0
  %503 = vmatprep.subr.bf16.mxu0 0
  %504 = vmatpush1.bf16.msra.mxu0 0
  %505 = vmatprep.subr.bf16.mxu0 0
  %506 = vmatpush1.bf16.msra.mxu0 0
  %507 = vmatprep.subr.bf16.mxu0 0
  %508 = vmatpush1.bf16.msra.mxu0 0
  %509 = vmatprep.mubr.bf16.mxu0 0
  %510 = vmatmul.mubr.bf16.gmra.mrb[0].mxu0 %v374
  %v511 = vpop.f32.mrb[0].mxu0
  %v512 = vadd.f32 %v463, %v511
  %v513 = vpop.f32.mrb[0].mxu0
  %v514 = vpop.f32.mrb[0].mxu0
  %v515 = vadd.f32 %v466, %v514
  %v516 = vpop.f32.mrb[0].mxu0
  %517 = vmatprep.mubr.bf16.mxu0 0
  %518 = vmatmul.mubr.bf16.gmra.mrb[0].mxu0 %v377
  %v519 = vpop.f32.mrb[0].mxu0
  %v520 = vadd.f32 %v471, %v519
  %v521 = vpop.f32.mrb[0].mxu0
  %v522 = vpop.f32.mrb[0].mxu0
  %v523 = vadd.f32 %v474, %v522
  %v524 = vpop.f32.mrb[0].mxu0
  %525 = vdwg.mxu0
  %v526 = vmax.f32 %v512, 0.0
  %v527 = vmax.f32 %v515, 0.0
  %v528 = vmax.f32 %v520, 0.0
  %v529 = vmax.f32 %v523, 0.0
  %v530 = vpack.c.bf16 %v527, %v526
  %v531 = vpack.c.bf16 %v529, %v528
  %v534 = vunpack.c.l.b16 %v530
  %v535 = vunpack.c.h.b16 %v530
  %v536 = vunpack.c.l.b16 %v531
  %v537 = vunpack.c.h.b16 %v531
  %v538 = vpack.c.b16 %v534, %v534
  %v539 = vpack.c.b16 %v535, %v535
  %v540 = vpack.c.b16 %v536, %v536
  %v541 = vpack.c.b16 %v537, %v537
  %546 = vst [vmem:[%s3] sm:$0xf] %v538
  %547 = vst [vmem:[%s3 + $0x4] sm:$0xf] %v539
  %548 = vst [vmem:[%s3 + $0x8] sm:$0xf] %v540
  %549 = vst [vmem:[%s3 + $0xc] sm:$0xf] %v541
  // Predicated region
  $region14: #{stegastamp_decoder_forward.15} parent=0 // pred_check
    _
  $region15: #{stegastamp_decoder_forward.15} parent=0 // pred_check_branch
    %551 = sbr.rel (0) target = $region17
  $region16: #{stegastamp_decoder_forward.15} parent=0 // pred_region
    _
  $region17: #{stegastamp_decoder_forward.15} parent=0 // pred_fallthru
    _
  // Predicated region
  $region18: #{stegastamp_decoder_forward.15} parent=0 // pred_check
    _
  $region19: #{stegastamp_decoder_forward.15} parent=0 // pred_check_branch
    %553 = sbr.rel (0) target = $region21
  $region20: #{stegastamp_decoder_forward.15} parent=0 // pred_region
    _
  $region21: #{stegastamp_decoder_forward.15} parent=0 // pred_fallthru
    _

// kernel: stegastamp_decoder_forward.16
$region0: #{stegastamp_decoder_forward.16}
  #allocation0 [shape = 'u32[]', space=smem, size = 0x4, offset = 0x4, fixed_abs, tag = 'smem constant byte address 0x4 - core index']
  #allocation1 [shape = 'u32[144,128]{1,0:T(1,128)}', space=vmem, size = 0x12000, scoped, tag = 'internal scratch']
  %s0 = inlined_call_operand.vmem [shape: bf16[2,2048], index: 0, kind: input, shape index: {}]
  %s1 = inlined_call_operand.vmem [shape: bf16[2048,128], index: 1, kind: input, shape index: {}]
  %s2 = inlined_call_operand.vmem [shape: f32[1,128], index: 2, kind: input, shape index: {}]
  %s3 = inlined_call_operand.vmem [shape: f32[2,128], index: 3, kind: output, shape index: {}]
  %s4 = sld [smem:[#allocation0]]
  $region22: #{stegastamp_decoder_forward.16} parent=0
    _
  %s6 = ssub.s32 1, %s4
  %s7 = scalar_select 0, %s6, %s4
  // Predicated region
  $region2: #{stegastamp_decoder_forward.16} parent=0 // pred_check
    _
  $region3: #{stegastamp_decoder_forward.16} parent=0 // pred_check_branch
    %9 = sbr.rel (0) target = $region5
  $region4: #{stegastamp_decoder_forward.16} parent=0 // pred_region
    _
  $region5: #{stegastamp_decoder_forward.16} parent=0 // pred_fallthru
    _
  // Predicated region
  $region6: #{stegastamp_decoder_forward.16} parent=0 // pred_check
    _
  $region7: #{stegastamp_decoder_forward.16} parent=0 // pred_check_branch
    %11 = sbr.rel (0) target = $region9
  $region8: #{stegastamp_decoder_forward.16} parent=0 // pred_region
    _
  $region9: #{stegastamp_decoder_forward.16} parent=0 // pred_fallthru
    _
  // Predicated region
  $region10: #{stegastamp_decoder_forward.16} parent=0 // pred_check
    _
  $region11: #{stegastamp_decoder_forward.16} parent=0 // pred_check_branch
    %13 = sbr.rel (0) target = $region13
  $region12: #{stegastamp_decoder_forward.16} parent=0 // pred_region
    _
  $region13: #{stegastamp_decoder_forward.16} parent=0 // pred_fallthru
    _
  %v15 = vld [vmem:[%s0] sm:$0xff]
  %v16 = vld [vmem:[%s0 + $0x8] sm:$0xff]
  %v17 = vld [vmem:[%s1] sm:$0xf]
  %v18 = vld [vmem:[%s1 + $0x4] sm:$0xf]
  %v19 = vld [vmem:[%s1 + $0x8] sm:$0xf]
  %v20 = vld [vmem:[%s1 + $0xc] sm:$0xf]
  %v21 = vld [vmem:[%s1 + $0x10] sm:$0xf]
  %v22 = vld [vmem:[%s1 + $0x14] sm:$0xf]
  %v23 = vld [vmem:[%s1 + $0x18] sm:$0xf]
  %v24 = vld [vmem:[%s1 + $0x1c] sm:$0xf]
  %v25 = vld [vmem:[%s1 + $0x20] sm:$0xf]
  %v26 = vld [vmem:[%s1 + $0x24] sm:$0xf]
  %v27 = vld [vmem:[%s1 + $0x28] sm:$0xf]
  %v28 = vld [vmem:[%s1 + $0x2c] sm:$0xf]
  %v29 = vld [vmem:[%s1 + $0x30] sm:$0xf]
  %v30 = vld [vmem:[%s1 + $0x34] sm:$0xf]
  %v31 = vld [vmem:[%s1 + $0x38] sm:$0xf]
  %v32 = vld [vmem:[%s1 + $0x3c] sm:$0xf]
  %v33 = vld [vmem:[%s1 + $0x40] sm:$0xf]
  %v34 = vld [vmem:[%s1 + $0x44] sm:$0xf]
  %v35 = vld [vmem:[%s1 + $0x48] sm:$0xf]
  %v36 = vld [vmem:[%s1 + $0x4c] sm:$0xf]
  %v37 = vld [vmem:[%s1 + $0x50] sm:$0xf]
  %v38 = vld [vmem:[%s1 + $0x54] sm:$0xf]
  %v39 = vld [vmem:[%s1 + $0x58] sm:$0xf]
  %v40 = vld [vmem:[%s1 + $0x5c] sm:$0xf]
  %v41 = vld [vmem:[%s1 + $0x60] sm:$0xf]
  %v42 = vld [vmem:[%s1 + $0x64] sm:$0xf]
  %v43 = vld [vmem:[%s1 + $0x68] sm:$0xf]
  %v44 = vld [vmem:[%s1 + $0x6c] sm:$0xf]
  %v45 = vld [vmem:[%s1 + $0x70] sm:$0xf]
  %v46 = vld [vmem:[%s1 + $0x74] sm:$0xf]
  %v47 = vld [vmem:[%s1 + $0x78] sm:$0xf]
  %v48 = vld [vmem:[%s1 + $0x7c] sm:$0xf]
  %v49 = vld [vmem:[%s1 + $0x80] sm:$0xf]
  %v50 = vld [vmem:[%s1 + $0x84] sm:$0xf]
  %v51 = vld [vmem:[%s1 + $0x88] sm:$0xf]
  %v52 = vld [vmem:[%s1 + $0x8c] sm:$0xf]
  %v53 = vld [vmem:[%s1 + $0x90] sm:$0xf]
  %v54 = vld [vmem:[%s1 + $0x94] sm:$0xf]
  %v55 = vld [vmem:[%s1 + $0x98] sm:$0xf]
  %v56 = vld [vmem:[%s1 + $0x9c] sm:$0xf]
  %v57 = vld [vmem:[%s1 + $0xa0] sm:$0xf]
  %v58 = vld [vmem:[%s1 + $0xa4] sm:$0xf]
  %v59 = vld [vmem:[%s1 + $0xa8] sm:$0xf]
  %v60 = vld [vmem:[%s1 + $0xac] sm:$0xf]
  %v61 = vld [vmem:[%s1 + $0xb0] sm:$0xf]
  %v62 = vld [vmem:[%s1 + $0xb4] sm:$0xf]
  %v63 = vld [vmem:[%s1 + $0xb8] sm:$0xf]
  %v64 = vld [vmem:[%s1 + $0xbc] sm:$0xf]
  %v65 = vld [vmem:[%s1 + $0xc0] sm:$0xf]
  %v66 = vld [vmem:[%s1 + $0xc4] sm:$0xf]
  %v67 = vld [vmem:[%s1 + $0xc8] sm:$0xf]
  %v68 = vld [vmem:[%s1 + $0xcc] sm:$0xf]
  %v69 = vld [vmem:[%s1 + $0xd0] sm:$0xf]
  %v70 = vld [vmem:[%s1 + $0xd4] sm:$0xf]
  %v71 = vld [vmem:[%s1 + $0xd8] sm:$0xf]
  %v72 = vld [vmem:[%s1 + $0xdc] sm:$0xf]
  %v73 = vld [vmem:[%s1 + $0xe0] sm:$0xf]
  %v74 = vld [vmem:[%s1 + $0xe4] sm:$0xf]
  %v75 = vld [vmem:[%s1 + $0xe8] sm:$0xf]
  %v76 = vld [vmem:[%s1 + $0xec] sm:$0xf]
  %v77 = vld [vmem:[%s1 + $0xf0] sm:$0xf]
  %v78 = vld [vmem:[%s1 + $0xf4] sm:$0xf]
  %v79 = vld [vmem:[%s1 + $0xf8] sm:$0xf]
  %v80 = vld [vmem:[%s1 + $0xfc] sm:$0xf]
  %v81 = vld [vmem:[%s1 + $0x100] sm:$0xf]
  %v82 = vld [vmem:[%s1 + $0x104] sm:$0xf]
  %v83 = vld [vmem:[%s1 + $0x108] sm:$0xf]
  %v84 = vld [vmem:[%s1 + $0x10c] sm:$0xf]
  %v85 = vld [vmem:[%s1 + $0x110] sm:$0xf]
  %v86 = vld [vmem:[%s1 + $0x114] sm:$0xf]
  %v87 = vld [vmem:[%s1 + $0x118] sm:$0xf]
  %v88 = vld [vmem:[%s1 + $0x11c] sm:$0xf]
  %v89 = vld [vmem:[%s1 + $0x120] sm:$0xf]
  %v90 = vld [vmem:[%s1 + $0x124] sm:$0xf]
  %v91 = vld [vmem:[%s1 + $0x128] sm:$0xf]
  %v92 = vld [vmem:[%s1 + $0x12c] sm:$0xf]
  %v93 = vld [vmem:[%s1 + $0x130] sm:$0xf]
  %v94 = vld [vmem:[%s1 + $0x134] sm:$0xf]
  %v95 = vld [vmem:[%s1 + $0x138] sm:$0xf]
  %v96 = vld [vmem:[%s1 + $0x13c] sm:$0xf]
  %v97 = vld [vmem:[%s1 + $0x140] sm:$0xf]
  %v98 = vld [vmem:[%s1 + $0x144] sm:$0xf]
  %v99 = vld [vmem:[%s1 + $0x148] sm:$0xf]
  %v100 = vld [vmem:[%s1 + $0x14c] sm:$0xf]
  %v101 = vld [vmem:[%s1 + $0x150] sm:$0xf]
  %v102 = vld [vmem:[%s1 + $0x154] sm:$0xf]
  %v103 = vld [vmem:[%s1 + $0x158] sm:$0xf]
  %v104 = vld [vmem:[%s1 + $0x15c] sm:$0xf]
  %v105 = vld [vmem:[%s1 + $0x160] sm:$0xf]
  %v106 = vld [vmem:[%s1 + $0x164] sm:$0xf]
  %v107 = vld [vmem:[%s1 + $0x168] sm:$0xf]
  %v108 = vld [vmem:[%s1 + $0x16c] sm:$0xf]
  %v109 = vld [vmem:[%s1 + $0x170] sm:$0xf]
  %v110 = vld [vmem:[%s1 + $0x174] sm:$0xf]
  %v111 = vld [vmem:[%s1 + $0x178] sm:$0xf]
  %v112 = vld [vmem:[%s1 + $0x17c] sm:$0xf]
  %v113 = vld [vmem:[%s1 + $0x180] sm:$0xf]
  %v114 = vld [vmem:[%s1 + $0x184] sm:$0xf]
  %v115 = vld [vmem:[%s1 + $0x188] sm:$0xf]
  %v116 = vld [vmem:[%s1 + $0x18c] sm:$0xf]
  %v117 = vld [vmem:[%s1 + $0x190] sm:$0xf]
  %v118 = vld [vmem:[%s1 + $0x194] sm:$0xf]
  %v119 = vld [vmem:[%s1 + $0x198] sm:$0xf]
  %v120 = vld [vmem:[%s1 + $0x19c] sm:$0xf]
  %v121 = vld [vmem:[%s1 + $0x1a0] sm:$0xf]
  %v122 = vld [vmem:[%s1 + $0x1a4] sm:$0xf]
  %v123 = vld [vmem:[%s1 + $0x1a8] sm:$0xf]
  %v124 = vld [vmem:[%s1 + $0x1ac] sm:$0xf]
  %v125 = vld [vmem:[%s1 + $0x1b0] sm:$0xf]
  %v126 = vld [vmem:[%s1 + $0x1b4] sm:$0xf]
  %v127 = vld [vmem:[%s1 + $0x1b8] sm:$0xf]
  %v128 = vld [vmem:[%s1 + $0x1bc] sm:$0xf]
  %v129 = vld [vmem:[%s1 + $0x1c0] sm:$0xf]
  %v130 = vld [vmem:[%s1 + $0x1c4] sm:$0xf]
  %v131 = vld [vmem:[%s1 + $0x1c8] sm:$0xf]
  %v132 = vld [vmem:[%s1 + $0x1cc] sm:$0xf]
  %v133 = vld [vmem:[%s1 + $0x1d0] sm:$0xf]
  %v134 = vld [vmem:[%s1 + $0x1d4] sm:$0xf]
  %v135 = vld [vmem:[%s1 + $0x1d8] sm:$0xf]
  %v136 = vld [vmem:[%s1 + $0x1dc] sm:$0xf]
  %v137 = vld [vmem:[%s1 + $0x1e0] sm:$0xf]
  %v138 = vld [vmem:[%s1 + $0x1e4] sm:$0xf]
  %v139 = vld [vmem:[%s1 + $0x1e8] sm:$0xf]
  %v140 = vld [vmem:[%s1 + $0x1ec] sm:$0xf]
  %v141 = vld [vmem:[%s1 + $0x1f0] sm:$0xf]
  %v142 = vld [vmem:[%s1 + $0x1f4] sm:$0xf]
  %v143 = vld [vmem:[%s1 + $0x1f8] sm:$0xf]
  %v144 = vld [vmem:[%s1 + $0x1fc] sm:$0xf]
  %v145 = vld [vmem:[%s1 + $0x200] sm:$0xf]
  %v146 = vld [vmem:[%s1 + $0x204] sm:$0xf]
  %v147 = vld [vmem:[%s1 + $0x208] sm:$0xf]
  %v148 = vld [vmem:[%s1 + $0x20c] sm:$0xf]
  %v149 = vld [vmem:[%s1 + $0x210] sm:$0xf]
  %v150 = vld [vmem:[%s1 + $0x214] sm:$0xf]
  %v151 = vld [vmem:[%s1 + $0x218] sm:$0xf]
  %v152 = vld [vmem:[%s1 + $0x21c] sm:$0xf]
  %v153 = vld [vmem:[%s1 + $0x220] sm:$0xf]
  %v154 = vld [vmem:[%s1 + $0x224] sm:$0xf]
  %v155 = vld [vmem:[%s1 + $0x228] sm:$0xf]
  %v156 = vld [vmem:[%s1 + $0x22c] sm:$0xf]
  %v157 = vld [vmem:[%s1 + $0x230] sm:$0xf]
  %v158 = vld [vmem:[%s1 + $0x234] sm:$0xf]
  %v159 = vld [vmem:[%s1 + $0x238] sm:$0xf]
  %v160 = vld [vmem:[%s1 + $0x23c] sm:$0xf]
  %v161 = vld [vmem:[%s1 + $0x240] sm:$0xf]
  %v162 = vld [vmem:[%s1 + $0x244] sm:$0xf]
  %v163 = vld [vmem:[%s1 + $0x248] sm:$0xf]
  %v164 = vld [vmem:[%s1 + $0x24c] sm:$0xf]
  %v165 = vld [vmem:[%s1 + $0x250] sm:$0xf]
  %v166 = vld [vmem:[%s1 + $0x254] sm:$0xf]
  %v167 = vld [vmem:[%s1 + $0x258] sm:$0xf]
  %v168 = vld [vmem:[%s1 + $0x25c] sm:$0xf]
  %v169 = vld [vmem:[%s1 + $0x260] sm:$0xf]
  %v170 = vld [vmem:[%s1 + $0x264] sm:$0xf]
  %v171 = vld [vmem:[%s1 + $0x268] sm:$0xf]
  %v172 = vld [vmem:[%s1 + $0x26c] sm:$0xf]
  %v173 = vld [vmem:[%s1 + $0x270] sm:$0xf]
  %v174 = vld [vmem:[%s1 + $0x274] sm:$0xf]
  %v175 = vld [vmem:[%s1 + $0x278] sm:$0xf]
  %v176 = vld [vmem:[%s1 + $0x27c] sm:$0xf]
  %v177 = vld [vmem:[%s1 + $0x280] sm:$0xf]
  %v178 = vld [vmem:[%s1 + $0x284] sm:$0xf]
  %v179 = vld [vmem:[%s1 + $0x288] sm:$0xf]
  %v180 = vld [vmem:[%s1 + $0x28c] sm:$0xf]
  %v181 = vld [vmem:[%s1 + $0x290] sm:$0xf]
  %v182 = vld [vmem:[%s1 + $0x294] sm:$0xf]
  %v183 = vld [vmem:[%s1 + $0x298] sm:$0xf]
  %v184 = vld [vmem:[%s1 + $0x29c] sm:$0xf]
  %v185 = vld [vmem:[%s1 + $0x2a0] sm:$0xf]
  %v186 = vld [vmem:[%s1 + $0x2a4] sm:$0xf]
  %v187 = vld [vmem:[%s1 + $0x2a8] sm:$0xf]
  %v188 = vld [vmem:[%s1 + $0x2ac] sm:$0xf]
  %v189 = vld [vmem:[%s1 + $0x2b0] sm:$0xf]
  %v190 = vld [vmem:[%s1 + $0x2b4] sm:$0xf]
  %v191 = vld [vmem:[%s1 + $0x2b8] sm:$0xf]
  %v192 = vld [vmem:[%s1 + $0x2bc] sm:$0xf]
  %v193 = vld [vmem:[%s1 + $0x2c0] sm:$0xf]
  %v194 = vld [vmem:[%s1 + $0x2c4] sm:$0xf]
  %v195 = vld [vmem:[%s1 + $0x2c8] sm:$0xf]
  %v196 = vld [vmem:[%s1 + $0x2cc] sm:$0xf]
  %v197 = vld [vmem:[%s1 + $0x2d0] sm:$0xf]
  %v198 = vld [vmem:[%s1 + $0x2d4] sm:$0xf]
  %v199 = vld [vmem:[%s1 + $0x2d8] sm:$0xf]
  %v200 = vld [vmem:[%s1 + $0x2dc] sm:$0xf]
  %v201 = vld [vmem:[%s1 + $0x2e0] sm:$0xf]
  %v202 = vld [vmem:[%s1 + $0x2e4] sm:$0xf]
  %v203 = vld [vmem:[%s1 + $0x2e8] sm:$0xf]
  %v204 = vld [vmem:[%s1 + $0x2ec] sm:$0xf]
  %v205 = vld [vmem:[%s1 + $0x2f0] sm:$0xf]
  %v206 = vld [vmem:[%s1 + $0x2f4] sm:$0xf]
  %v207 = vld [vmem:[%s1 + $0x2f8] sm:$0xf]
  %v208 = vld [vmem:[%s1 + $0x2fc] sm:$0xf]
  %v209 = vld [vmem:[%s1 + $0x300] sm:$0xf]
  %v210 = vld [vmem:[%s1 + $0x304] sm:$0xf]
  %v211 = vld [vmem:[%s1 + $0x308] sm:$0xf]
  %v212 = vld [vmem:[%s1 + $0x30c] sm:$0xf]
  %v213 = vld [vmem:[%s1 + $0x310] sm:$0xf]
  %v214 = vld [vmem:[%s1 + $0x314] sm:$0xf]
  %v215 = vld [vmem:[%s1 + $0x318] sm:$0xf]
  %v216 = vld [vmem:[%s1 + $0x31c] sm:$0xf]
  %v217 = vld [vmem:[%s1 + $0x320] sm:$0xf]
  %v218 = vld [vmem:[%s1 + $0x324] sm:$0xf]
  %v219 = vld [vmem:[%s1 + $0x328] sm:$0xf]
  %v220 = vld [vmem:[%s1 + $0x32c] sm:$0xf]
  %v221 = vld [vmem:[%s1 + $0x330] sm:$0xf]
  %v222 = vld [vmem:[%s1 + $0x334] sm:$0xf]
  %v223 = vld [vmem:[%s1 + $0x338] sm:$0xf]
  %v224 = vld [vmem:[%s1 + $0x33c] sm:$0xf]
  %v225 = vld [vmem:[%s1 + $0x340] sm:$0xf]
  %v226 = vld [vmem:[%s1 + $0x344] sm:$0xf]
  %v227 = vld [vmem:[%s1 + $0x348] sm:$0xf]
  %v228 = vld [vmem:[%s1 + $0x34c] sm:$0xf]
  %v229 = vld [vmem:[%s1 + $0x350] sm:$0xf]
  %v230 = vld [vmem:[%s1 + $0x354] sm:$0xf]
  %v231 = vld [vmem:[%s1 + $0x358] sm:$0xf]
  %v232 = vld [vmem:[%s1 + $0x35c] sm:$0xf]
  %v233 = vld [vmem:[%s1 + $0x360] sm:$0xf]
  %v234 = vld [vmem:[%s1 + $0x364] sm:$0xf]
  %v235 = vld [vmem:[%s1 + $0x368] sm:$0xf]
  %v236 = vld [vmem:[%s1 + $0x36c] sm:$0xf]
  %v237 = vld [vmem:[%s1 + $0x370] sm:$0xf]
  %v238 = vld [vmem:[%s1 + $0x374] sm:$0xf]
  %v239 = vld [vmem:[%s1 + $0x378] sm:$0xf]
  %v240 = vld [vmem:[%s1 + $0x37c] sm:$0xf]
  %v241 = vld [vmem:[%s1 + $0x380] sm:$0xf]
  %v242 = vld [vmem:[%s1 + $0x384] sm:$0xf]
  %v243 = vld [vmem:[%s1 + $0x388] sm:$0xf]
  %v244 = vld [vmem:[%s1 + $0x38c] sm:$0xf]
  %v245 = vld [vmem:[%s1 + $0x390] sm:$0xf]
  %v246 = vld [vmem:[%s1 + $0x394] sm:$0xf]
  %v247 = vld [vmem:[%s1 + $0x398] sm:$0xf]
  %v248 = vld [vmem:[%s1 + $0x39c] sm:$0xf]
  %v249 = vld [vmem:[%s1 + $0x3a0] sm:$0xf]
  %v250 = vld [vmem:[%s1 + $0x3a4] sm:$0xf]
  %v251 = vld [vmem:[%s1 + $0x3a8] sm:$0xf]
  %v252 = vld [vmem:[%s1 + $0x3ac] sm:$0xf]
  %v253 = vld [vmem:[%s1 + $0x3b0] sm:$0xf]
  %v254 = vld [vmem:[%s1 + $0x3b4] sm:$0xf]
  %v255 = vld [vmem:[%s1 + $0x3b8] sm:$0xf]
  %v256 = vld [vmem:[%s1 + $0x3bc] sm:$0xf]
  %v257 = vld [vmem:[%s1 + $0x3c0] sm:$0xf]
  %v258 = vld [vmem:[%s1 + $0x3c4] sm:$0xf]
  %v259 = vld [vmem:[%s1 + $0x3c8] sm:$0xf]
  %v260 = vld [vmem:[%s1 + $0x3cc] sm:$0xf]
  %v261 = vld [vmem:[%s1 + $0x3d0] sm:$0xf]
  %v262 = vld [vmem:[%s1 + $0x3d4] sm:$0xf]
  %v263 = vld [vmem:[%s1 + $0x3d8] sm:$0xf]
  %v264 = vld [vmem:[%s1 + $0x3dc] sm:$0xf]
  %v265 = vld [vmem:[%s1 + $0x3e0] sm:$0xf]
  %v266 = vld [vmem:[%s1 + $0x3e4] sm:$0xf]
  %v267 = vld [vmem:[%s1 + $0x3e8] sm:$0xf]
  %v268 = vld [vmem:[%s1 + $0x3ec] sm:$0xf]
  %v269 = vld [vmem:[%s1 + $0x3f0] sm:$0xf]
  %v270 = vld [vmem:[%s1 + $0x3f4] sm:$0xf]
  %v271 = vld [vmem:[%s1 + $0x3f8] sm:$0xf]
  %v272 = vld [vmem:[%s1 + $0x3fc] sm:$0xf]
  %v273 = vld [vmem:[%s2] sm:$0x1]
  %v275 = vlaneseq
  %v276 = vshrl.u32 %v275, 7
  %v277 = vsub.s32 0, %v276
  %v278 = vrot.slane %v273, %v277
  %v282 = vcombine.high %v15, %v15
  %v284 = vunpack.c.l.s4 1966171168
  %v285 = vunpack.c.0.s8 %v284
  %v286 = vlaneseq
  %v287 = vshrl.u32 %v286, 7
  %v288 = vsub.s32 %v285, %v287
  %v289 = vrot.slane %v15, %v288
  %v291 = vunpack.c.l.s4 1966171168
  %v292 = vunpack.c.0.s8 %v291
  %v293 = vlaneseq
  %v294 = vshrl.u32 %v293, 7
  %v295 = vsub.s32 %v292, %v294
  %v296 = vrot.slane %v282, %v295
  %v297 = vcombine.high %v289, %v289
  %v298 = vcombine.high %v296, %v296
  %v300 = vunpack.c.l.s4 1966171168
  %v301 = vunpack.c.0.s8 %v300
  %v302 = vlaneseq
  %v303 = vshrl.u32 %v302, 7
  %v304 = vsub.s32 %v301, %v303
  %v305 = vrot.slane %v289, %v304
  %v307 = vunpack.c.l.s4 1966171168
  %v308 = vunpack.c.0.s8 %v307
  %v309 = vlaneseq
  %v310 = vshrl.u32 %v309, 7
  %v311 = vsub.s32 %v308, %v310
  %v312 = vrot.slane %v296, %v311
  %v314 = vunpack.c.l.s4 1966171168
  %v315 = vunpack.c.0.s8 %v314
  %v316 = vlaneseq
  %v317 = vshrl.u32 %v316, 7
  %v318 = vsub.s32 %v315, %v317
  %v319 = vrot.slane %v297, %v318
  %v321 = vunpack.c.l.s4 1966171168
  %v322 = vunpack.c.0.s8 %v321
  %v323 = vlaneseq
  %v324 = vshrl.u32 %v323, 7
  %v325 = vsub.s32 %v322, %v324
  %v326 = vrot.slane %v298, %v325
  %v327 = vcombine.high %v305, %v305
  %v328 = vcombine.high %v312, %v312
  %v329 = vcombine.high %v319, %v319
  %v330 = vcombine.high %v326, %v326
  %v331 = vcombine.high %v16, %v16
  %v333 = vunpack.c.l.s4 1966171168
  %v334 = vunpack.c.0.s8 %v333
  %v335 = vlaneseq
  %v336 = vshrl.u32 %v335, 7
  %v337 = vsub.s32 %v334, %v336
  %v338 = vrot.slane %v16, %v337
  %v340 = vunpack.c.l.s4 1966171168
  %v341 = vunpack.c.0.s8 %v340
  %v342 = vlaneseq
  %v343 = vshrl.u32 %v342, 7
  %v344 = vsub.s32 %v341, %v343
  %v345 = vrot.slane %v331, %v344
  %v346 = vcombine.high %v338, %v338
  %v347 = vcombine.high %v345, %v345
  %v349 = vunpack.c.l.s4 1966171168
  %v350 = vunpack.c.0.s8 %v349
  %v351 = vlaneseq
  %v352 = vshrl.u32 %v351, 7
  %v353 = vsub.s32 %v350, %v352
  %v354 = vrot.slane %v338, %v353
  %v356 = vunpack.c.l.s4 1966171168
  %v357 = vunpack.c.0.s8 %v356
  %v358 = vlaneseq
  %v359 = vshrl.u32 %v358, 7
  %v360 = vsub.s32 %v357, %v359
  %v361 = vrot.slane %v345, %v360
  %v363 = vunpack.c.l.s4 1966171168
  %v364 = vunpack.c.0.s8 %v363
  %v365 = vlaneseq
  %v366 = vshrl.u32 %v365, 7
  %v367 = vsub.s32 %v364, %v366
  %v368 = vrot.slane %v346, %v367
  %v370 = vunpack.c.l.s4 1966171168
  %v371 = vunpack.c.0.s8 %v370
  %v372 = vlaneseq
  %v373 = vshrl.u32 %v372, 7
  %v374 = vsub.s32 %v371, %v373
  %v375 = vrot.slane %v347, %v374
  %v376 = vcombine.high %v354, %v354
  %v377 = vcombine.high %v361, %v361
  %v378 = vcombine.high %v368, %v368
  %v379 = vcombine.high %v375, %v375
  %v652 = vunpack.c.l.b16 %v17
  %v653 = vunpack.c.l.b16 %v18
  %v654 = vunpack.c.l.b16 %v19
  %v655 = vunpack.c.l.b16 %v20
  %v656 = vunpack.c.l.b16 %v21
  %v657 = vunpack.c.l.b16 %v22
  %v658 = vunpack.c.l.b16 %v23
  %v659 = vunpack.c.l.b16 %v24
  %v660 = vunpack.c.l.b16 %v25
  %v661 = vunpack.c.l.b16 %v26
  %v662 = vunpack.c.l.b16 %v27
  %v663 = vunpack.c.l.b16 %v28
  %v664 = vunpack.c.l.b16 %v29
  %v665 = vunpack.c.l.b16 %v30
  %v666 = vunpack.c.l.b16 %v31
  %v667 = vunpack.c.l.b16 %v32
  %v668 = vunpack.c.l.b16 %v33
  %v669 = vunpack.c.l.b16 %v34
  %v670 = vunpack.c.l.b16 %v35
  %v671 = vunpack.c.l.b16 %v36
  %v672 = vunpack.c.l.b16 %v37
  %v673 = vunpack.c.l.b16 %v38
  %v674 = vunpack.c.l.b16 %v39
  %v675 = vunpack.c.l.b16 %v40
  %v676 = vunpack.c.l.b16 %v41
  %v677 = vunpack.c.l.b16 %v42
  %v678 = vunpack.c.l.b16 %v43
  %v679 = vunpack.c.l.b16 %v44
  %v680 = vunpack.c.l.b16 %v45
  %v681 = vunpack.c.l.b16 %v46
  %v682 = vunpack.c.l.b16 %v47
  %v683 = vunpack.c.l.b16 %v48
  %v684 = vunpack.c.l.b16 %v49
  %v685 = vunpack.c.l.b16 %v50
  %v686 = vunpack.c.l.b16 %v51
  %v687 = vunpack.c.l.b16 %v52
  %v688 = vunpack.c.l.b16 %v53
  %v689 = vunpack.c.l.b16 %v54
  %v690 = vunpack.c.l.b16 %v55
  %v691 = vunpack.c.l.b16 %v56
  %v692 = vunpack.c.l.b16 %v57
  %v693 = vunpack.c.l.b16 %v58
  %v694 = vunpack.c.l.b16 %v59
  %v695 = vunpack.c.l.b16 %v60
  %v696 = vunpack.c.l.b16 %v61
  %v697 = vunpack.c.l.b16 %v62
  %v698 = vunpack.c.l.b16 %v63
  %v699 = vunpack.c.l.b16 %v64
  %v700 = vunpack.c.l.b16 %v65
  %v701 = vunpack.c.l.b16 %v66
  %v702 = vunpack.c.l.b16 %v67
  %v703 = vunpack.c.l.b16 %v68
  %v704 = vunpack.c.l.b16 %v69
  %v705 = vunpack.c.l.b16 %v70
  %v706 = vunpack.c.l.b16 %v71
  %v707 = vunpack.c.l.b16 %v72
  %v708 = vunpack.c.l.b16 %v73
  %v709 = vunpack.c.l.b16 %v74
  %v710 = vunpack.c.l.b16 %v75
  %v711 = vunpack.c.l.b16 %v76
  %v712 = vunpack.c.l.b16 %v77
  %v713 = vunpack.c.l.b16 %v78
  %v714 = vunpack.c.l.b16 %v79
  %v715 = vunpack.c.l.b16 %v80
  %v716 = vunpack.c.l.b16 %v81
  %v717 = vunpack.c.l.b16 %v82
  %v718 = vunpack.c.l.b16 %v83
  %v719 = vunpack.c.l.b16 %v84
  %v720 = vunpack.c.l.b16 %v85
  %v721 = vunpack.c.l.b16 %v86
  %v722 = vunpack.c.l.b16 %v87
  %v723 = vunpack.c.l.b16 %v88
  %v724 = vunpack.c.l.b16 %v89
  %v725 = vunpack.c.l.b16 %v90
  %v726 = vunpack.c.l.b16 %v91
  %v727 = vunpack.c.l.b16 %v92
  %v728 = vunpack.c.l.b16 %v93
  %v729 = vunpack.c.l.b16 %v94
  %v730 = vunpack.c.l.b16 %v95
  %v731 = vunpack.c.l.b16 %v96
  %v732 = vunpack.c.l.b16 %v97
  %v733 = vunpack.c.l.b16 %v98
  %v734 = vunpack.c.l.b16 %v99
  %v735 = vunpack.c.l.b16 %v100
  %v736 = vunpack.c.l.b16 %v101
  %v737 = vunpack.c.l.b16 %v102
  %v738 = vunpack.c.l.b16 %v103
  %v739 = vunpack.c.l.b16 %v104
  %v740 = vunpack.c.l.b16 %v105
  %v741 = vunpack.c.l.b16 %v106
  %v742 = vunpack.c.l.b16 %v107
  %v743 = vunpack.c.l.b16 %v108
  %v744 = vunpack.c.l.b16 %v109
  %v745 = vunpack.c.l.b16 %v110
  %v746 = vunpack.c.l.b16 %v111
  %v747 = vunpack.c.l.b16 %v112
  %v748 = vunpack.c.l.b16 %v113
  %v749 = vunpack.c.l.b16 %v114
  %v750 = vunpack.c.l.b16 %v115
  %v751 = vunpack.c.l.b16 %v116
  %v752 = vunpack.c.l.b16 %v117
  %v753 = vunpack.c.l.b16 %v118
  %v754 = vunpack.c.l.b16 %v119
  %v755 = vunpack.c.l.b16 %v120
  %v756 = vunpack.c.l.b16 %v121
  %v757 = vunpack.c.l.b16 %v122
  %v758 = vunpack.c.l.b16 %v123
  %v759 = vunpack.c.l.b16 %v124
  %v760 = vunpack.c.l.b16 %v125
  %v761 = vunpack.c.l.b16 %v126
  %v762 = vunpack.c.l.b16 %v127
  %v763 = vunpack.c.l.b16 %v128
  %v764 = vunpack.c.l.b16 %v129
  %v765 = vunpack.c.l.b16 %v130
  %v766 = vunpack.c.l.b16 %v131
  %v767 = vunpack.c.l.b16 %v132
  %v768 = vunpack.c.l.b16 %v133
  %v769 = vunpack.c.l.b16 %v134
  %v770 = vunpack.c.l.b16 %v135
  %v771 = vunpack.c.l.b16 %v136
  %v772 = vunpack.c.l.b16 %v137
  %v773 = vunpack.c.l.b16 %v138
  %v774 = vunpack.c.l.b16 %v139
  %v775 = vunpack.c.l.b16 %v140
  %v776 = vunpack.c.l.b16 %v141
  %v777 = vunpack.c.l.b16 %v142
  %v778 = vunpack.c.l.b16 %v143
  %v779 = vunpack.c.l.b16 %v144
  %v780 = vunpack.c.l.b16 %v145
  %v781 = vunpack.c.l.b16 %v146
  %v782 = vunpack.c.l.b16 %v147
  %v783 = vunpack.c.l.b16 %v148
  %v784 = vunpack.c.l.b16 %v149
  %v785 = vunpack.c.l.b16 %v150
  %v786 = vunpack.c.l.b16 %v151
  %v787 = vunpack.c.l.b16 %v152
  %v788 = vunpack.c.l.b16 %v153
  %v789 = vunpack.c.l.b16 %v154
  %v790 = vunpack.c.l.b16 %v155
  %v791 = vunpack.c.l.b16 %v156
  %v792 = vunpack.c.l.b16 %v157
  %v793 = vunpack.c.l.b16 %v158
  %v794 = vunpack.c.l.b16 %v159
  %v795 = vunpack.c.l.b16 %v160
  %v796 = vunpack.c.l.b16 %v161
  %v797 = vunpack.c.l.b16 %v162
  %v798 = vunpack.c.l.b16 %v163
  %v799 = vunpack.c.l.b16 %v164
  %v800 = vunpack.c.l.b16 %v165
  %v801 = vunpack.c.l.b16 %v166
  %v802 = vunpack.c.l.b16 %v167
  %v803 = vunpack.c.l.b16 %v168
  %v804 = vunpack.c.l.b16 %v169
  %v805 = vunpack.c.l.b16 %v170
  %v806 = vunpack.c.l.b16 %v171
  %v807 = vunpack.c.l.b16 %v172
  %v808 = vunpack.c.l.b16 %v173
  %v809 = vunpack.c.l.b16 %v174
  %v810 = vunpack.c.l.b16 %v175
  %v811 = vunpack.c.l.b16 %v176
  %v812 = vunpack.c.l.b16 %v177
  %v813 = vunpack.c.l.b16 %v178
  %v814 = vunpack.c.l.b16 %v179
  %v815 = vunpack.c.l.b16 %v180
  %v816 = vunpack.c.l.b16 %v181
  %v817 = vunpack.c.l.b16 %v182
  %v818 = vunpack.c.l.b16 %v183
  %v819 = vunpack.c.l.b16 %v184
  %v820 = vunpack.c.l.b16 %v185
  %v821 = vunpack.c.l.b16 %v186
  %v822 = vunpack.c.l.b16 %v187
  %v823 = vunpack.c.l.b16 %v188
  %v824 = vunpack.c.l.b16 %v189
  %v825 = vunpack.c.l.b16 %v190
  %v826 = vunpack.c.l.b16 %v191
  %v827 = vunpack.c.l.b16 %v192
  %v828 = vunpack.c.l.b16 %v193
  %v829 = vunpack.c.l.b16 %v194
  %v830 = vunpack.c.l.b16 %v195
  %v831 = vunpack.c.l.b16 %v196
  %v832 = vunpack.c.l.b16 %v197
  %v833 = vunpack.c.l.b16 %v198
  %v834 = vunpack.c.l.b16 %v199
  %v835 = vunpack.c.l.b16 %v200
  %v836 = vunpack.c.l.b16 %v201
  %v837 = vunpack.c.l.b16 %v202
  %v838 = vunpack.c.l.b16 %v203
  %v839 = vunpack.c.l.b16 %v204
  %v840 = vunpack.c.l.b16 %v205
  %v841 = vunpack.c.l.b16 %v206
  %v842 = vunpack.c.l.b16 %v207
  %v843 = vunpack.c.l.b16 %v208
  %v844 = vunpack.c.l.b16 %v209
  %v845 = vunpack.c.l.b16 %v210
  %v846 = vunpack.c.l.b16 %v211
  %v847 = vunpack.c.l.b16 %v212
  %v848 = vunpack.c.l.b16 %v213
  %v849 = vunpack.c.l.b16 %v214
  %v850 = vunpack.c.l.b16 %v215
  %v851 = vunpack.c.l.b16 %v216
  %v852 = vunpack.c.l.b16 %v217
  %v853 = vunpack.c.l.b16 %v218
  %v854 = vunpack.c.l.b16 %v219
  %v855 = vunpack.c.l.b16 %v220
  %v856 = vunpack.c.l.b16 %v221
  %v857 = vunpack.c.l.b16 %v222
  %v858 = vunpack.c.l.b16 %v223
  %v859 = vunpack.c.l.b16 %v224
  %v860 = vunpack.c.l.b16 %v225
  %v861 = vunpack.c.l.b16 %v226
  %v862 = vunpack.c.l.b16 %v227
  %v863 = vunpack.c.l.b16 %v228
  %v864 = vunpack.c.l.b16 %v229
  %v865 = vunpack.c.l.b16 %v230
  %v866 = vunpack.c.l.b16 %v231
  %v867 = vunpack.c.l.b16 %v232
  %v868 = vunpack.c.l.b16 %v233
  %v869 = vunpack.c.l.b16 %v234
  %v870 = vunpack.c.l.b16 %v235
  %v871 = vunpack.c.l.b16 %v236
  %v872 = vunpack.c.l.b16 %v237
  %v873 = vunpack.c.l.b16 %v238
  %v874 = vunpack.c.l.b16 %v239
  %v875 = vunpack.c.l.b16 %v240
  %v876 = vunpack.c.l.b16 %v241
  %v877 = vunpack.c.l.b16 %v242
  %v878 = vunpack.c.l.b16 %v243
  %v879 = vunpack.c.l.b16 %v244
  %v880 = vunpack.c.l.b16 %v245
  %v881 = vunpack.c.l.b16 %v246
  %v882 = vunpack.c.l.b16 %v247
  %v883 = vunpack.c.l.b16 %v248
  %v884 = vunpack.c.l.b16 %v249
  %v885 = vunpack.c.l.b16 %v250
  %v886 = vunpack.c.l.b16 %v251
  %v887 = vunpack.c.l.b16 %v252
  %v888 = vunpack.c.l.b16 %v253
  %v889 = vunpack.c.l.b16 %v254
  %v890 = vunpack.c.l.b16 %v255
  %v891 = vunpack.c.l.b16 %v256
  %v892 = vunpack.c.l.b16 %v257
  %v893 = vunpack.c.l.b16 %v258
  %v894 = vunpack.c.l.b16 %v259
  %v895 = vunpack.c.l.b16 %v260
  %v896 = vunpack.c.l.b16 %v261
  %v897 = vunpack.c.l.b16 %v262
  %v898 = vunpack.c.l.b16 %v263
  %v899 = vunpack.c.l.b16 %v264
  %v900 = vunpack.c.l.b16 %v265
  %v901 = vunpack.c.l.b16 %v266
  %v902 = vunpack.c.l.b16 %v267
  %v903 = vunpack.c.l.b16 %v268
  %v904 = vunpack.c.l.b16 %v269
  %v905 = vunpack.c.l.b16 %v270
  %v906 = vunpack.c.l.b16 %v271
  %v907 = vunpack.c.l.b16 %v272
  %v908 = vpack.c.b16 %v653, %v652
  %v909 = vpack.c.b16 %v655, %v654
  %v910 = vpack.c.b16 %v657, %v656
  %v911 = vpack.c.b16 %v659, %v658
  %v912 = vpack.c.b16 %v661, %v660
  %v913 = vpack.c.b16 %v663, %v662
  %v914 = vpack.c.b16 %v665, %v664
  %v915 = vpack.c.b16 %v667, %v666
  %v916 = vpack.c.b16 %v669, %v668
  %v917 = vpack.c.b16 %v671, %v670
  %v918 = vpack.c.b16 %v673, %v672
  %v919 = vpack.c.b16 %v675, %v674
  %v920 = vpack.c.b16 %v677, %v676
  %v921 = vpack.c.b16 %v679, %v678
  %v922 = vpack.c.b16 %v681, %v680
  %v923 = vpack.c.b16 %v683, %v682
  %v924 = vpack.c.b16 %v685, %v684
  %v925 = vpack.c.b16 %v687, %v686
  %v926 = vpack.c.b16 %v689, %v688
  %v927 = vpack.c.b16 %v691, %v690
  %v928 = vpack.c.b16 %v693, %v692
  %v929 = vpack.c.b16 %v695, %v694
  %v930 = vpack.c.b16 %v697, %v696
  %v931 = vpack.c.b16 %v699, %v698
  %v932 = vpack.c.b16 %v701, %v700
  %v933 = vpack.c.b16 %v703, %v702
  %v934 = vpack.c.b16 %v705, %v704
  %v935 = vpack.c.b16 %v707, %v706
  %v936 = vpack.c.b16 %v709, %v708
  %v937 = vpack.c.b16 %v711, %v710
  %v938 = vpack.c.b16 %v713, %v712
  %v939 = vpack.c.b16 %v715, %v714
  %v940 = vpack.c.b16 %v717, %v716
  %v941 = vpack.c.b16 %v719, %v718
  %v942 = vpack.c.b16 %v721, %v720
  %v943 = vpack.c.b16 %v723, %v722
  %v944 = vpack.c.b16 %v725, %v724
  %v945 = vpack.c.b16 %v727, %v726
  %v946 = vpack.c.b16 %v729, %v728
  %v947 = vpack.c.b16 %v731, %v730
  %v948 = vpack.c.b16 %v733, %v732
  %v949 = vpack.c.b16 %v735, %v734
  %v950 = vpack.c.b16 %v737, %v736
  %v951 = vpack.c.b16 %v739, %v738
  %v952 = vpack.c.b16 %v741, %v740
  %v953 = vpack.c.b16 %v743, %v742
  %v954 = vpack.c.b16 %v745, %v744
  %v955 = vpack.c.b16 %v747, %v746
  %v956 = vpack.c.b16 %v749, %v748
  %v957 = vpack.c.b16 %v751, %v750
  %v958 = vpack.c.b16 %v753, %v752
  %v959 = vpack.c.b16 %v755, %v754
  %v960 = vpack.c.b16 %v757, %v756
  %v961 = vpack.c.b16 %v759, %v758
  %v962 = vpack.c.b16 %v761, %v760
  %v963 = vpack.c.b16 %v763, %v762
  %v964 = vpack.c.b16 %v765, %v764
  %v965 = vpack.c.b16 %v767, %v766
  %v966 = vpack.c.b16 %v769, %v768
  %v967 = vpack.c.b16 %v771, %v770
  %v968 = vpack.c.b16 %v773, %v772
  %v969 = vpack.c.b16 %v775, %v774
  %v970 = vpack.c.b16 %v777, %v776
  %v971 = vpack.c.b16 %v779, %v778
  %v972 = vpack.c.b16 %v781, %v780
  %v973 = vpack.c.b16 %v783, %v782
  %v974 = vpack.c.b16 %v785, %v784
  %v975 = vpack.c.b16 %v787, %v786
  %v976 = vpack.c.b16 %v789, %v788
  %v977 = vpack.c.b16 %v791, %v790
  %v978 = vpack.c.b16 %v793, %v792
  %v979 = vpack.c.b16 %v795, %v794
  %v980 = vpack.c.b16 %v797, %v796
  %v981 = vpack.c.b16 %v799, %v798
  %v982 = vpack.c.b16 %v801, %v800
  %v983 = vpack.c.b16 %v803, %v802
  %v984 = vpack.c.b16 %v805, %v804
  %v985 = vpack.c.b16 %v807, %v806
  %v986 = vpack.c.b16 %v809, %v808
  %v987 = vpack.c.b16 %v811, %v810
  %v988 = vpack.c.b16 %v813, %v812
  %v989 = vpack.c.b16 %v815, %v814
  %v990 = vpack.c.b16 %v817, %v816
  %v991 = vpack.c.b16 %v819, %v818
  %v992 = vpack.c.b16 %v821, %v820
  %v993 = vpack.c.b16 %v823, %v822
  %v994 = vpack.c.b16 %v825, %v824
  %v995 = vpack.c.b16 %v827, %v826
  %v996 = vpack.c.b16 %v829, %v828
  %v997 = vpack.c.b16 %v831, %v830
  %v998 = vpack.c.b16 %v833, %v832
  %v999 = vpack.c.b16 %v835, %v834
  %v1000 = vpack.c.b16 %v837, %v836
  %v1001 = vpack.c.b16 %v839, %v838
  %v1002 = vpack.c.b16 %v841, %v840
  %v1003 = vpack.c.b16 %v843, %v842
  %v1004 = vpack.c.b16 %v845, %v844
  %v1005 = vpack.c.b16 %v847, %v846
  %v1006 = vpack.c.b16 %v849, %v848
  %v1007 = vpack.c.b16 %v851, %v850
  %v1008 = vpack.c.b16 %v853, %v852
  %v1009 = vpack.c.b16 %v855, %v854
  %v1010 = vpack.c.b16 %v857, %v856
  %v1011 = vpack.c.b16 %v859, %v858
  %v1012 = vpack.c.b16 %v861, %v860
  %v1013 = vpack.c.b16 %v863, %v862
  %v1014 = vpack.c.b16 %v865, %v864
  %v1015 = vpack.c.b16 %v867, %v866
  %v1016 = vpack.c.b16 %v869, %v868
  %v1017 = vpack.c.b16 %v871, %v870
  %v1018 = vpack.c.b16 %v873, %v872
  %v1019 = vpack.c.b16 %v875, %v874
  %v1020 = vpack.c.b16 %v877, %v876
  %v1021 = vpack.c.b16 %v879, %v878
  %v1022 = vpack.c.b16 %v881, %v880
  %v1023 = vpack.c.b16 %v883, %v882
  %v1024 = vpack.c.b16 %v885, %v884
  %v1025 = vpack.c.b16 %v887, %v886
  %v1026 = vpack.c.b16 %v889, %v888
  %v1027 = vpack.c.b16 %v891, %v890
  %v1028 = vpack.c.b16 %v893, %v892
  %v1029 = vpack.c.b16 %v895, %v894
  %v1030 = vpack.c.b16 %v897, %v896
  %v1031 = vpack.c.b16 %v899, %v898
  %v1032 = vpack.c.b16 %v901, %v900
  %v1033 = vpack.c.b16 %v903, %v902
  %v1034 = vpack.c.b16 %v905, %v904
  %v1035 = vpack.c.b16 %v907, %v906
  %1164 = vmatprep.subr.bf16.mxu0 0
  %1165 = vmatpush1.bf16.msra.mxu0 %v908
  %1166 = vmatprep.subr.bf16.mxu0 0
  %1167 = vmatpush1.bf16.msra.mxu0 %v909
  %1168 = vmatprep.subr.bf16.mxu0 0
  %1169 = vmatpush1.bf16.msra.mxu0 %v910
  %1170 = vmatprep.subr.bf16.mxu0 0
  %1171 = vmatpush1.bf16.msra.mxu0 %v911
  %1172 = vmatprep.subr.bf16.mxu0 0
  %1173 = vmatpush1.bf16.msra.mxu0 %v912
  %1174 = vmatprep.subr.bf16.mxu0 0
  %1175 = vmatpush1.bf16.msra.mxu0 %v913
  %1176 = vmatprep.subr.bf16.mxu0 0
  %1177 = vmatpush1.bf16.msra.mxu0 %v914
  %1178 = vmatprep.subr.bf16.mxu0 0
  %1179 = vmatpush1.bf16.msra.mxu0 %v915
  %1180 = vmatprep.subr.bf16.mxu0 0
  %1181 = vmatpush1.bf16.msra.mxu0 %v916
  %1182 = vmatprep.subr.bf16.mxu0 0
  %1183 = vmatpush1.bf16.msra.mxu0 %v917
  %1184 = vmatprep.subr.bf16.mxu0 0
  %1185 = vmatpush1.bf16.msra.mxu0 %v918
  %1186 = vmatprep.subr.bf16.mxu0 0
  %1187 = vmatpush1.bf16.msra.mxu0 %v919
  %1188 = vmatprep.subr.bf16.mxu0 0
  %1189 = vmatpush1.bf16.msra.mxu0 %v920
  %1190 = vmatprep.subr.bf16.mxu0 0
  %1191 = vmatpush1.bf16.msra.mxu0 %v921
  %1192 = vmatprep.subr.bf16.mxu0 0
  %1193 = vmatpush1.bf16.msra.mxu0 %v922
  %1194 = vmatprep.subr.bf16.mxu0 0
  %1195 = vmatpush1.bf16.msra.mxu0 %v923
  %1196 = vmatprep.mubr.bf16.mxu0 %v319
  %1197 = vmatmul.mubr.bf16.gmra.mrb[0].mxu0 %v305
  %v1198 = vpop.f32.mrb[0].mxu0
  %v1199 = vadd.f32 %v278, %v1198
  %v1200 = vpop.f32.mrb[0].mxu0
  %v1201 = vpop.f32.mrb[0].mxu0
  %v1202 = vpop.f32.mrb[0].mxu0
  %1203 = vdwg.mxu0
  %1204 = vmatprep.subr.bf16.mxu0 0
  %1205 = vmatpush1.bf16.msra.mxu0 %v924
  %1206 = vmatprep.subr.bf16.mxu0 0
  %1207 = vmatpush1.bf16.msra.mxu0 %v925
  %1208 = vmatprep.subr.bf16.mxu0 0
  %1209 = vmatpush1.bf16.msra.mxu0 %v926
  %1210 = vmatprep.subr.bf16.mxu0 0
  %1211 = vmatpush1.bf16.msra.mxu0 %v927
  %1212 = vmatprep.subr.bf16.mxu0 0
  %1213 = vmatpush1.bf16.msra.mxu0 %v928
  %1214 = vmatprep.subr.bf16.mxu0 0
  %1215 = vmatpush1.bf16.msra.mxu0 %v929
  %1216 = vmatprep.subr.bf16.mxu0 0
  %1217 = vmatpush1.bf16.msra.mxu0 %v930
  %1218 = vmatprep.subr.bf16.mxu0 0
  %1219 = vmatpush1.bf16.msra.mxu0 %v931
  %1220 = vmatprep.subr.bf16.mxu0 0
  %1221 = vmatpush1.bf16.msra.mxu0 %v932
  %1222 = vmatprep.subr.bf16.mxu0 0
  %1223 = vmatpush1.bf16.msra.mxu0 %v933
  %1224 = vmatprep.subr.bf16.mxu0 0
  %1225 = vmatpush1.bf16.msra.mxu0 %v934
  %1226 = vmatprep.subr.bf16.mxu0 0
  %1227 = vmatpush1.bf16.msra.mxu0 %v935
  %1228 = vmatprep.subr.bf16.mxu0 0
  %1229 = vmatpush1.bf16.msra.mxu0 %v936
  %1230 = vmatprep.subr.bf16.mxu0 0
  %1231 = vmatpush1.bf16.msra.mxu0 %v937
  %1232 = vmatprep.subr.bf16.mxu0 0
  %1233 = vmatpush1.bf16.msra.mxu0 %v938
  %1234 = vmatprep.subr.bf16.mxu0 0
  %1235 = vmatpush1.bf16.msra.mxu0 %v939
  %1236 = vmatprep.mubr.bf16.mxu0 %v329
  %1237 = vmatmul.mubr.bf16.gmra.mrb[0].mxu0 %v327
  %v1238 = vpop.f32.mrb[0].mxu0
  %v1239 = vadd.f32 %v1199, %v1238
  %v1240 = vpop.f32.mrb[0].mxu0
  %v1241 = vpop.f32.mrb[0].mxu0
  %v1242 = vpop.f32.mrb[0].mxu0
  %1243 = vdwg.mxu0
  %1244 = vmatprep.subr.bf16.mxu0 0
  %1245 = vmatpush1.bf16.msra.mxu0 %v940
  %1246 = vmatprep.subr.bf16.mxu0 0
  %1247 = vmatpush1.bf16.msra.mxu0 %v941
  %1248 = vmatprep.subr.bf16.mxu0 0
  %1249 = vmatpush1.bf16.msra.mxu0 %v942
  %1250 = vmatprep.subr.bf16.mxu0 0
  %1251 = vmatpush1.bf16.msra.mxu0 %v943
  %1252 = vmatprep.subr.bf16.mxu0 0
  %1253 = vmatpush1.bf16.msra.mxu0 %v944
  %1254 = vmatprep.subr.bf16.mxu0 0
  %1255 = vmatpush1.bf16.msra.mxu0 %v945
  %1256 = vmatprep.subr.bf16.mxu0 0
  %1257 = vmatpush1.bf16.msra.mxu0 %v946
  %1258 = vmatprep.subr.bf16.mxu0 0
  %1259 = vmatpush1.bf16.msra.mxu0 %v947
  %1260 = vmatprep.subr.bf16.mxu0 0
  %1261 = vmatpush1.bf16.msra.mxu0 %v948
  %1262 = vmatprep.subr.bf16.mxu0 0
  %1263 = vmatpush1.bf16.msra.mxu0 %v949
  %1264 = vmatprep.subr.bf16.mxu0 0
  %1265 = vmatpush1.bf16.msra.mxu0 %v950
  %1266 = vmatprep.subr.bf16.mxu0 0
  %1267 = vmatpush1.bf16.msra.mxu0 %v951
  %1268 = vmatprep.subr.bf16.mxu0 0
  %1269 = vmatpush1.bf16.msra.mxu0 %v952
  %1270 = vmatprep.subr.bf16.mxu0 0
  %1271 = vmatpush1.bf16.msra.mxu0 %v953
  %1272 = vmatprep.subr.bf16.mxu0 0
  %1273 = vmatpush1.bf16.msra.mxu0 %v954
  %1274 = vmatprep.subr.bf16.mxu0 0
  %1275 = vmatpush1.bf16.msra.mxu0 %v955
  %1276 = vmatprep.mubr.bf16.mxu0 %v326
  %1277 = vmatmul.mubr.bf16.gmra.mrb[0].mxu0 %v312
  %v1278 = vpop.f32.mrb[0].mxu0
  %v1279 = vadd.f32 %v1239, %v1278
  %v1280 = vpop.f32.mrb[0].mxu0
  %v1281 = vpop.f32.mrb[0].mxu0
  %v1282 = vpop.f32.mrb[0].mxu0
  %1283 = vdwg.mxu0
  %1284 = vmatprep.subr.bf16.mxu0 0
  %1285 = vmatpush1.bf16.msra.mxu0 %v956
  %1286 = vmatprep.subr.bf16.mxu0 0
  %1287 = vmatpush1.bf16.msra.mxu0 %v957
  %1288 = vmatprep.subr.bf16.mxu0 0
  %1289 = vmatpush1.bf16.msra.mxu0 %v958
  %1290 = vmatprep.subr.bf16.mxu0 0
  %1291 = vmatpush1.bf16.msra.mxu0 %v959
  %1292 = vmatprep.subr.bf16.mxu0 0
  %1293 = vmatpush1.bf16.msra.mxu0 %v960
  %1294 = vmatprep.subr.bf16.mxu0 0
  %1295 = vmatpush1.bf16.msra.mxu0 %v961
  %1296 = vmatprep.subr.bf16.mxu0 0
  %1297 = vmatpush1.bf16.msra.mxu0 %v962
  %1298 = vmatprep.subr.bf16.mxu0 0
  %1299 = vmatpush1.bf16.msra.mxu0 %v963
  %1300 = vmatprep.subr.bf16.mxu0 0
  %1301 = vmatpush1.bf16.msra.mxu0 %v964
  %1302 = vmatprep.subr.bf16.mxu0 0
  %1303 = vmatpush1.bf16.msra.mxu0 %v965
  %1304 = vmatprep.subr.bf16.mxu0 0
  %1305 = vmatpush1.bf16.msra.mxu0 %v966
  %1306 = vmatprep.subr.bf16.mxu0 0
  %1307 = vmatpush1.bf16.msra.mxu0 %v967
  %1308 = vmatprep.subr.bf16.mxu0 0
  %1309 = vmatpush1.bf16.msra.mxu0 %v968
  %1310 = vmatprep.subr.bf16.mxu0 0
  %1311 = vmatpush1.bf16.msra.mxu0 %v969
  %1312 = vmatprep.subr.bf16.mxu0 0
  %1313 = vmatpush1.bf16.msra.mxu0 %v970
  %1314 = vmatprep.subr.bf16.mxu0 0
  %1315 = vmatpush1.bf16.msra.mxu0 %v971
  %1316 = vmatprep.mubr.bf16.mxu0 %v330
  %1317 = vmatmul.mubr.bf16.gmra.mrb[0].mxu0 %v328
  %v1318 = vpop.f32.mrb[0].mxu0
  %v1319 = vadd.f32 %v1279, %v1318
  %v1320 = vpop.f32.mrb[0].mxu0
  %v1321 = vpop.f32.mrb[0].mxu0
  %v1322 = vpop.f32.mrb[0].mxu0
  %1323 = vdwg.mxu0
  %1324 = vmatprep.subr.bf16.mxu0 0
  %1325 = vmatpush1.bf16.msra.mxu0 %v972
  %1326 = vmatprep.subr.bf16.mxu0 0
  %1327 = vmatpush1.bf16.msra.mxu0 %v973
  %1328 = vmatprep.subr.bf16.mxu0 0
  %1329 = vmatpush1.bf16.msra.mxu0 %v974
  %1330 = vmatprep.subr.bf16.mxu0 0
  %1331 = vmatpush1.bf16.msra.mxu0 %v975
  %1332 = vmatprep.subr.bf16.mxu0 0
  %1333 = vmatpush1.bf16.msra.mxu0 %v976
  %1334 = vmatprep.subr.bf16.mxu0 0
  %1335 = vmatpush1.bf16.msra.mxu0 %v977
  %1336 = vmatprep.subr.bf16.mxu0 0
  %1337 = vmatpush1.bf16.msra.mxu0 %v978
  %1338 = vmatprep.subr.bf16.mxu0 0
  %1339 = vmatpush1.bf16.msra.mxu0 %v979
  %1340 = vmatprep.subr.bf16.mxu0 0
  %1341 = vmatpush1.bf16.msra.mxu0 %v980
  %1342 = vmatprep.subr.bf16.mxu0 0
  %1343 = vmatpush1.bf16.msra.mxu0 %v981
  %1344 = vmatprep.subr.bf16.mxu0 0
  %1345 = vmatpush1.bf16.msra.mxu0 %v982
  %1346 = vmatprep.subr.bf16.mxu0 0
  %1347 = vmatpush1.bf16.msra.mxu0 %v983
  %1348 = vmatprep.subr.bf16.mxu0 0
  %1349 = vmatpush1.bf16.msra.mxu0 %v984
  %1350 = vmatprep.subr.bf16.mxu0 0
  %1351 = vmatpush1.bf16.msra.mxu0 %v985
  %1352 = vmatprep.subr.bf16.mxu0 0
  %1353 = vmatpush1.bf16.msra.mxu0 %v986
  %1354 = vmatprep.subr.bf16.mxu0 0
  %1355 = vmatpush1.bf16.msra.mxu0 %v987
  %1356 = vmatprep.mubr.bf16.mxu0 %v368
  %1357 = vmatmul.mubr.bf16.gmra.mrb[0].mxu0 %v354
  %v1358 = vpop.f32.mrb[0].mxu0
  %v1359 = vadd.f32 %v1319, %v1358
  %v1360 = vpop.f32.mrb[0].mxu0
  %v1361 = vpop.f32.mrb[0].mxu0
  %v1362 = vpop.f32.mrb[0].mxu0
  %1363 = vdwg.mxu0
  %1364 = vmatprep.subr.bf16.mxu0 0
  %1365 = vmatpush1.bf16.msra.mxu0 %v988
  %1366 = vmatprep.subr.bf16.mxu0 0
  %1367 = vmatpush1.bf16.msra.mxu0 %v989
  %1368 = vmatprep.subr.bf16.mxu0 0
  %1369 = vmatpush1.bf16.msra.mxu0 %v990
  %1370 = vmatprep.subr.bf16.mxu0 0
  %1371 = vmatpush1.bf16.msra.mxu0 %v991
  %1372 = vmatprep.subr.bf16.mxu0 0
  %1373 = vmatpush1.bf16.msra.mxu0 %v992
  %1374 = vmatprep.subr.bf16.mxu0 0
  %1375 = vmatpush1.bf16.msra.mxu0 %v993
  %1376 = vmatprep.subr.bf16.mxu0 0
  %1377 = vmatpush1.bf16.msra.mxu0 %v994
  %1378 = vmatprep.subr.bf16.mxu0 0
  %1379 = vmatpush1.bf16.msra.mxu0 %v995
  %1380 = vmatprep.subr.bf16.mxu0 0
  %1381 = vmatpush1.bf16.msra.mxu0 %v996
  %1382 = vmatprep.subr.bf16.mxu0 0
  %1383 = vmatpush1.bf16.msra.mxu0 %v997
  %1384 = vmatprep.subr.bf16.mxu0 0
  %1385 = vmatpush1.bf16.msra.mxu0 %v998
  %1386 = vmatprep.subr.bf16.mxu0 0
  %1387 = vmatpush1.bf16.msra.mxu0 %v999
  %1388 = vmatprep.subr.bf16.mxu0 0
  %1389 = vmatpush1.bf16.msra.mxu0 %v1000
  %1390 = vmatprep.subr.bf16.mxu0 0
  %1391 = vmatpush1.bf16.msra.mxu0 %v1001
  %1392 = vmatprep.subr.bf16.mxu0 0
  %1393 = vmatpush1.bf16.msra.mxu0 %v1002
  %1394 = vmatprep.subr.bf16.mxu0 0
  %1395 = vmatpush1.bf16.msra.mxu0 %v1003
  %1396 = vmatprep.mubr.bf16.mxu0 %v378
  %1397 = vmatmul.mubr.bf16.gmra.mrb[0].mxu0 %v376
  %v1398 = vpop.f32.mrb[0].mxu0
  %v1399 = vadd.f32 %v1359, %v1398
  %v1400 = vpop.f32.mrb[0].mxu0
  %v1401 = vpop.f32.mrb[0].mxu0
  %v1402 = vpop.f32.mrb[0].mxu0
  %1403 = vdwg.mxu0
  %1404 = vmatprep.subr.bf16.mxu0 0
  %1405 = vmatpush1.bf16.msra.mxu0 %v1004
  %1406 = vmatprep.subr.bf16.mxu0 0
  %1407 = vmatpush1.bf16.msra.mxu0 %v1005
  %1408 = vmatprep.subr.bf16.mxu0 0
  %1409 = vmatpush1.bf16.msra.mxu0 %v1006
  %1410 = vmatprep.subr.bf16.mxu0 0
  %1411 = vmatpush1.bf16.msra.mxu0 %v1007
  %1412 = vmatprep.subr.bf16.mxu0 0
  %1413 = vmatpush1.bf16.msra.mxu0 %v1008
  %1414 = vmatprep.subr.bf16.mxu0 0
  %1415 = vmatpush1.bf16.msra.mxu0 %v1009
  %1416 = vmatprep.subr.bf16.mxu0 0
  %1417 = vmatpush1.bf16.msra.mxu0 %v1010
  %1418 = vmatprep.subr.bf16.mxu0 0
  %1419 = vmatpush1.bf16.msra.mxu0 %v1011
  %1420 = vmatprep.subr.bf16.mxu0 0
  %1421 = vmatpush1.bf16.msra.mxu0 %v1012
  %1422 = vmatprep.subr.bf16.mxu0 0
  %1423 = vmatpush1.bf16.msra.mxu0 %v1013
  %1424 = vmatprep.subr.bf16.mxu0 0
  %1425 = vmatpush1.bf16.msra.mxu0 %v1014
  %1426 = vmatprep.subr.bf16.mxu0 0
  %1427 = vmatpush1.bf16.msra.mxu0 %v1015
  %1428 = vmatprep.subr.bf16.mxu0 0
  %1429 = vmatpush1.bf16.msra.mxu0 %v1016
  %1430 = vmatprep.subr.bf16.mxu0 0
  %1431 = vmatpush1.bf16.msra.mxu0 %v1017
  %1432 = vmatprep.subr.bf16.mxu0 0
  %1433 = vmatpush1.bf16.msra.mxu0 %v1018
  %1434 = vmatprep.subr.bf16.mxu0 0
  %1435 = vmatpush1.bf16.msra.mxu0 %v1019
  %1436 = vmatprep.mubr.bf16.mxu0 %v375
  %1437 = vmatmul.mubr.bf16.gmra.mrb[0].mxu0 %v361
  %v1438 = vpop.f32.mrb[0].mxu0
  %v1439 = vadd.f32 %v1399, %v1438
  %v1440 = vpop.f32.mrb[0].mxu0
  %v1441 = vpop.f32.mrb[0].mxu0
  %v1442 = vpop.f32.mrb[0].mxu0
  %1443 = vdwg.mxu0
  %1444 = vmatprep.subr.bf16.mxu0 0
  %1445 = vmatpush1.bf16.msra.mxu0 %v1020
  %1446 = vmatprep.subr.bf16.mxu0 0
  %1447 = vmatpush1.bf16.msra.mxu0 %v1021
  %1448 = vmatprep.subr.bf16.mxu0 0
  %1449 = vmatpush1.bf16.msra.mxu0 %v1022
  %1450 = vmatprep.subr.bf16.mxu0 0
  %1451 = vmatpush1.bf16.msra.mxu0 %v1023
  %1452 = vmatprep.subr.bf16.mxu0 0
  %1453 = vmatpush1.bf16.msra.mxu0 %v1024
  %1454 = vmatprep.subr.bf16.mxu0 0
  %1455 = vmatpush1.bf16.msra.mxu0 %v1025
  %1456 = vmatprep.subr.bf16.mxu0 0
  %1457 = vmatpush1.bf16.msra.mxu0 %v1026
  %1458 = vmatprep.subr.bf16.mxu0 0
  %1459 = vmatpush1.bf16.msra.mxu0 %v1027
  %1460 = vmatprep.subr.bf16.mxu0 0
  %1461 = vmatpush1.bf16.msra.mxu0 %v1028
  %1462 = vmatprep.subr.bf16.mxu0 0
  %1463 = vmatpush1.bf16.msra.mxu0 %v1029
  %1464 = vmatprep.subr.bf16.mxu0 0
  %1465 = vmatpush1.bf16.msra.mxu0 %v1030
  %1466 = vmatprep.subr.bf16.mxu0 0
  %1467 = vmatpush1.bf16.msra.mxu0 %v1031
  %1468 = vmatprep.subr.bf16.mxu0 0
  %1469 = vmatpush1.bf16.msra.mxu0 %v1032
  %1470 = vmatprep.subr.bf16.mxu0 0
  %1471 = vmatpush1.bf16.msra.mxu0 %v1033
  %1472 = vmatprep.subr.bf16.mxu0 0
  %1473 = vmatpush1.bf16.msra.mxu0 %v1034
  %1474 = vmatprep.subr.bf16.mxu0 0
  %1475 = vmatpush1.bf16.msra.mxu0 %v1035
  %1476 = vmatprep.mubr.bf16.mxu0 %v379
  %1477 = vmatmul.mubr.bf16.gmra.mrb[0].mxu0 %v377
  %v1478 = vpop.f32.mrb[0].mxu0
  %v1479 = vadd.f32 %v1439, %v1478
  %v1480 = vpop.f32.mrb[0].mxu0
  %v1481 = vpop.f32.mrb[0].mxu0
  %v1482 = vpop.f32.mrb[0].mxu0
  %1483 = vdwg.mxu0
  %v1484 = vmax.f32 %v1479, 0.0
  %1485 = vst [vmem:[%s3] sm:$0x3] %v1484
  // Predicated region
  $region14: #{stegastamp_decoder_forward.16} parent=0 // pred_check
    _
  $region15: #{stegastamp_decoder_forward.16} parent=0 // pred_check_branch
    %1487 = sbr.rel (0) target = $region17
  $region16: #{stegastamp_decoder_forward.16} parent=0 // pred_region
    _
  $region17: #{stegastamp_decoder_forward.16} parent=0 // pred_fallthru
    _
  // Predicated region
  $region18: #{stegastamp_decoder_forward.16} parent=0 // pred_check
    _
  $region19: #{stegastamp_decoder_forward.16} parent=0 // pred_check_branch
    %1489 = sbr.rel (0) target = $region21
  $region20: #{stegastamp_decoder_forward.16} parent=0 // pred_region
    _
  $region21: #{stegastamp_decoder_forward.16} parent=0 // pred_fallthru
    _

// kernel: stegastamp_decoder_forward.18
$region0: #{stegastamp_decoder_forward.18}
  #allocation0 [shape = 'u32[]', space=smem, size = 0x4, offset = 0x4, fixed_abs, tag = 'smem constant byte address 0x4 - core index']
  #allocation1 [shape = 'u32[144,128]{1,0:T(1,128)}', space=vmem, size = 0x12000, scoped, tag = 'internal scratch']
  %s0 = inlined_call_operand.vmem [shape: bf16[512,288], index: 0, kind: input, shape index: {}]
  %s1 = inlined_call_operand.vmem [shape: bf16[288,32], index: 1, kind: input, shape index: {}]
  %s2 = inlined_call_operand.vmem [shape: f32[1,32], index: 2, kind: input, shape index: {}]
  %s3 = inlined_call_operand.vmem [shape: bf16[512,32], index: 3, kind: output, shape index: {}]
  %s4 = sld [smem:[#allocation0]]
  $region45: #{stegastamp_decoder_forward.18} parent=0
    _
  %s6 = ssub.s32 1, %s4
  %s7 = scalar_select 0, %s6, %s4
  loop: start=0, step=1, limit=4
  $region2: #{stegastamp_decoder_forward.18} parent=0 // loop_pre_header
    _
  $region3: #{stegastamp_decoder_forward.18} parent=0 // loop_header
    %s9 = sphi 0, %s13
    %p10 = scmp.ge.s32.totalorder %s9, 4
    %s16 = sphi 0, %s28
    %s17 = sphi 0, %s24
    %s18 = sphi 0, %s16
    %s19 = sphi 0, %s17
    %s20 = sphi 0, %s18
    %s21 = sphi 0, %s19
    %s31 = sphi 0, %s33
    %s34 = sphi 0, %s31
    %s35 = sphi 0, %s34
    %s51 = sphi 0, %s35
    %s57 = sphi 0, %s59
    %s60 = sphi 0, %s57
    %s61 = sphi 0, %s60
    %s77 = sphi 0, %s61
    %s83 = sphi 0, %s85
    %s86 = sphi 0, %s83
    %s87 = sphi 0, %s86
    %s103 = sphi 0, %s87
    %s111 = sphi 0, %s113
    %s114 = sphi 0, %s111
    %s115 = sphi 0, %s114
    %s131 = sphi 0, %s115
  $region4: #{stegastamp_decoder_forward.18} parent=0 // loop_header_branch
    %12 = sbr.rel (%p10) target = $region8
  $region5: #{stegastamp_decoder_forward.18} parent=0 // loop_body
    %s14 = ssub.s32 %s9, 1
    %s15 = ssub.s32 %s9, 2
    %s22 = sadd.s32 1, %s17
    %p23 = scmp.ge.s32.totalorder %s22, 1
    %s24 = scalar_select %p23, 0, %s22
    %s25 = sadd.s32 1, %s16
    %s26 = scalar_select %p23, %s25, %s16
    %p27 = scmp.ge.s32.totalorder %s26, 2
    %s28 = scalar_select %p27, 0, %s26
    %s29 = ssub.s32 %s16, %s28
    %p30 = scmp.eq.s32.totalorder %s29, 0
    %s32 = sadd.s32 %s31, 1
    %s33 = scalar_select %p30, %s31, %s32
    %p36 = pneg %p30
    %p37 = scmp.eq.s32.totalorder %s9, 1
    %p38 = por %p36, %p37
    %p39 = scmp.ne.s32.totalorder %s31, %s34
    %p40 = scmp.eq.s32.totalorder %s9, 0
    %p41 = por %p39, %p40
    %p42 = scmp.ne.s32.totalorder %s31, %s34
    %p43 = scmp.eq.s32.totalorder %s14, 1
    %p44 = por %p42, %p43
    %p45 = scmp.ne.s32.totalorder %s34, %s35
    %p46 = scmp.eq.s32.totalorder %s14, 0
    %p47 = por %p45, %p46
    %p48 = scmp.ne.s32.totalorder %s34, %s35
    %p49 = scmp.eq.s32.totalorder %s15, 1
    %p50 = por %p48, %p49
    %p52 = scmp.ne.s32.totalorder %s35, %s51
    %p53 = scmp.eq.s32.totalorder %s15, 0
    %p54 = por %p52, %p53
    %s55 = ssub.s32 %s17, %s24
    %p56 = scmp.eq.s32.totalorder %s55, 0
    %s58 = sadd.s32 %s57, 1
    %s59 = scalar_select %p56, %s57, %s58
    %p62 = pneg %p56
    %p63 = scmp.eq.s32.totalorder %s9, 1
    %p64 = por %p62, %p63
    %p65 = scmp.ne.s32.totalorder %s57, %s60
    %p66 = scmp.eq.s32.totalorder %s9, 0
    %p67 = por %p65, %p66
    %p68 = scmp.ne.s32.totalorder %s57, %s60
    %p69 = scmp.eq.s32.totalorder %s14, 1
    %p70 = por %p68, %p69
    %p71 = scmp.ne.s32.totalorder %s60, %s61
    %p72 = scmp.eq.s32.totalorder %s14, 0
    %p73 = por %p71, %p72
    %p74 = scmp.ne.s32.totalorder %s60, %s61
    %p75 = scmp.eq.s32.totalorder %s15, 1
    %p76 = por %p74, %p75
    %p78 = scmp.ne.s32.totalorder %s61, %s77
    %p79 = scmp.eq.s32.totalorder %s15, 0
    %p80 = por %p78, %p79
    %s81 = ssub.s32 %s17, %s24
    %p82 = scmp.eq.s32.totalorder %s81, 0
    %s84 = sadd.s32 %s83, 1
    %s85 = scalar_select %p82, %s83, %s84
    %p88 = pneg %p82
    %p89 = scmp.eq.s32.totalorder %s9, 1
    %p90 = por %p88, %p89
    %p91 = scmp.ne.s32.totalorder %s83, %s86
    %p92 = scmp.eq.s32.totalorder %s9, 0
    %p93 = por %p91, %p92
    %p94 = scmp.ne.s32.totalorder %s83, %s86
    %p95 = scmp.eq.s32.totalorder %s14, 1
    %p96 = por %p94, %p95
    %p97 = scmp.ne.s32.totalorder %s86, %s87
    %p98 = scmp.eq.s32.totalorder %s14, 0
    %p99 = por %p97, %p98
    %p100 = scmp.ne.s32.totalorder %s86, %s87
    %p101 = scmp.eq.s32.totalorder %s15, 1
    %p102 = por %p100, %p101
    %p104 = scmp.ne.s32.totalorder %s87, %s103
    %p105 = scmp.eq.s32.totalorder %s15, 0
    %p106 = por %p104, %p105
    %s107 = ssub.s32 %s16, %s28
    %s108 = ssub.s32 %s17, %s24
    %s109 = sor.u32 %s107, %s108
    %p110 = scmp.eq.s32.totalorder %s109, 0
    %s112 = sadd.s32 %s111, 1
    %s113 = scalar_select %p110, %s111, %s112
    %p116 = pneg %p110
    %p117 = scmp.eq.s32.totalorder %s9, 1
    %p118 = por %p116, %p117
    %p119 = scmp.ne.s32.totalorder %s111, %s114
    %p120 = scmp.eq.s32.totalorder %s9, 0
    %p121 = por %p119, %p120
    %p122 = scmp.ne.s32.totalorder %s111, %s114
    %p123 = scmp.eq.s32.totalorder %s14, 1
    %p124 = por %p122, %p123
    %p125 = scmp.ne.s32.totalorder %s114, %s115
    %p126 = scmp.eq.s32.totalorder %s14, 0
    %p127 = por %p125, %p126
    %p128 = scmp.ne.s32.totalorder %s114, %s115
    %p129 = scmp.eq.s32.totalorder %s15, 1
    %p130 = por %p128, %p129
    %p132 = scmp.ne.s32.totalorder %s115, %s131
    %p133 = scmp.eq.s32.totalorder %s15, 0
    %p134 = por %p132, %p133
    %p135 = scmp.le.s32.totalorder 1, %s9
    %p136 = scmp.lt.s32.totalorder %s9, 3
    %p137 = pnand %p135, %p136
    %p138 = pneg %p137
    // Predicated region
    $region9: #{stegastamp_decoder_forward.18} parent=5 // pred_check
      _
    $region10: #{stegastamp_decoder_forward.18} parent=5 // pred_check_branch
      %140 = sbr.rel (%p137) target = $region12
    $region11: #{stegastamp_decoder_forward.18} parent=5 // pred_region
      %s141 = ssub.s32 %s9, 1
      // Predicated region
      $region13: #{stegastamp_decoder_forward.18} parent=11 // pred_check
        %p142 = pneg %p73
      $region14: #{stegastamp_decoder_forward.18} parent=11 // pred_check_branch
        %144 = sbr.rel (%p142) target = $region16
      $region15: #{stegastamp_decoder_forward.18} parent=11 // pred_region
        %p145 = scmp.lt.s32.totalorder %s19, 0
        %s146 = scalar_select %p145, %s19, 0
        %s147 = smul.addr %s146, 4
        %s148 = scalar_lea.vmem %s1, %s147
      $region16: #{stegastamp_decoder_forward.18} parent=11 // pred_fallthru
        _
      // Predicated region
      $region17: #{stegastamp_decoder_forward.18} parent=11 // pred_check
        %p149 = pneg %p99
      $region18: #{stegastamp_decoder_forward.18} parent=11 // pred_check_branch
        %151 = sbr.rel (%p149) target = $region20
      $region19: #{stegastamp_decoder_forward.18} parent=11 // pred_region
        %p152 = scmp.lt.s32.totalorder %s19, 0
        %s153 = scalar_select %p152, %s19, 0
        %s154 = scalar_lea.vmem %s2, %s153
      $region20: #{stegastamp_decoder_forward.18} parent=11 // pred_fallthru
        _
    $region12: #{stegastamp_decoder_forward.18} parent=5 // pred_fallthru
      _
    %p155 = scmp.lt.s32.totalorder %s9, 2
    // Predicated region
    $region21: #{stegastamp_decoder_forward.18} parent=5 // pred_check
      %p156 = pneg %p155
    $region22: #{stegastamp_decoder_forward.18} parent=5 // pred_check_branch
      %158 = sbr.rel (%p156) target = $region24
    $region23: #{stegastamp_decoder_forward.18} parent=5 // pred_region
      // Predicated region
      $region25: #{stegastamp_decoder_forward.18} parent=23 // pred_check
        %p159 = pneg %p41
      $region26: #{stegastamp_decoder_forward.18} parent=23 // pred_check_branch
        %161 = sbr.rel (%p159) target = $region28
      $region27: #{stegastamp_decoder_forward.18} parent=23 // pred_region
        %s162 = smul.u32 32, %s16
        %p163 = scmp.lt.s32.totalorder %s162, 63
        %s164 = scalar_select %p163, %s162, 63
        %s165 = smul.addr %s164, 3
        %s166 = smul.addr %s165, 4
        %s167 = scalar_lea.vmem %s0, %s166
        %s168 = smul.u32 32, %s16
      $region28: #{stegastamp_decoder_forward.18} parent=23 // pred_fallthru
        _
    $region24: #{stegastamp_decoder_forward.18} parent=5 // pred_fallthru
      _
    %p169 = scmp.le.s32.totalorder 1, %s9
    %p170 = scmp.lt.s32.totalorder %s9, 3
    %p171 = pnand %p169, %p170
    %p172 = pneg %p171
    // Predicated region
    $region29: #{stegastamp_decoder_forward.18} parent=5 // pred_check
      _
    $region30: #{stegastamp_decoder_forward.18} parent=5 // pred_check_branch
      %174 = sbr.rel (%p171) target = $region32
    $region31: #{stegastamp_decoder_forward.18} parent=5 // pred_region
      %s175 = ssub.s32 %s9, 1
      %s176 = smul.u32 32, %s18
      %p177 = scmp.lt.s32.totalorder %s176, 63
      %s178 = scalar_select %p177, %s176, 63
      %s179 = smul.addr %s178, 3
      %s180 = smul.addr %s179, 4
      %s181 = scalar_lea.vmem %s0, %s180
      %p182 = pneg %p47
      %p183 = pneg %p44
      %p184 = scmp.lt.s32.totalorder %s19, 0
      %s185 = scalar_select %p184, %s19, 0
      %s186 = smul.addr %s185, 4
      %s187 = scalar_lea.vmem %s1, %s186
      %p188 = pneg %p73
      %p189 = pneg %p70
      %p190 = scmp.lt.s32.totalorder %s19, 0
      %s191 = scalar_select %p190, %s19, 0
      %s192 = scalar_lea.vmem %s2, %s191
      %p193 = pneg %p99
      %p194 = pneg %p96
      %p195 = pneg %p127
      %p196 = pneg %p124
      %s197 = smul.u32 32, %s18
      %p198 = scmp.lt.s32.totalorder %s197, 63
      %s199 = scalar_select %p198, %s197, 63
      %p200 = scmp.lt.s32.totalorder %s19, 0
      %s201 = scalar_select %p200, %s19, 0
      %s202 = sadd.s32 %s201, %s199
      %s203 = smul.addr %s202, 4
      %s204 = scalar_lea.vmem %s3, %s203
      %s205 = smul.u32 32, %s18
      %p206 = scmp.lt.s32.totalorder %s205, 63
      %s207 = scalar_select %p206, %s205, 63
      %s208 = smul.addr %s207, 3
      %s209 = smul.addr %s208, 4
      %s210 = scalar_lea.vmem %s0, %s209
      %s211 = smul.u32 32, %s18
      %p212 = scmp.lt.s32.totalorder %s19, 0
      %s213 = scalar_select %p212, %s19, 0
      %s214 = smul.addr %s213, 4
      %s215 = scalar_lea.vmem %s1, %s214
      %p216 = scmp.lt.s32.totalorder %s19, 0
      %s217 = scalar_select %p216, %s19, 0
      %s218 = scalar_lea.vmem %s2, %s217
      %s219 = smul.u32 32, %s18
      %p220 = scmp.lt.s32.totalorder %s219, 63
      %s221 = scalar_select %p220, %s219, 63
      %p222 = scmp.lt.s32.totalorder %s19, 0
      %s223 = scalar_select %p222, %s19, 0
      %s224 = sadd.s32 %s223, %s221
      %s225 = smul.addr %s224, 4
      %s226 = scalar_lea.vmem %s3, %s225
      %s227 = smul.u32 32, %s18
      %v229 = vld [vmem:[%s210] sm:$0xff]
      %v230 = vld [vmem:[%s210 + $0x8] sm:$0xf]
      %v231 = vld [vmem:[%s210 + $0xc] sm:$0xff]
      %v232 = vld [vmem:[%s210 + $0x14] sm:$0xf]
      %v233 = vld [vmem:[%s210 + $0x18] sm:$0xff]
      %v234 = vld [vmem:[%s210 + $0x20] sm:$0xf]
      %v235 = vld [vmem:[%s210 + $0x24] sm:$0xff]
      %v236 = vld [vmem:[%s210 + $0x2c] sm:$0xf]
      %v237 = vld [vmem:[%s210 + $0x30] sm:$0xff]
      %v238 = vld [vmem:[%s210 + $0x38] sm:$0xf]
      %v239 = vld [vmem:[%s210 + $0x3c] sm:$0xff]
      %v240 = vld [vmem:[%s210 + $0x44] sm:$0xf]
      %v241 = vld [vmem:[%s210 + $0x48] sm:$0xff]
      %v242 = vld [vmem:[%s210 + $0x50] sm:$0xf]
      %v243 = vld [vmem:[%s210 + $0x54] sm:$0xff]
      %v244 = vld [vmem:[%s210 + $0x5c] sm:$0xf]
      %v245 = vld [vmem:[%s210 + $0x60] sm:$0xff]
      %v246 = vld [vmem:[%s210 + $0x68] sm:$0xf]
      %v247 = vld [vmem:[%s210 + $0x6c] sm:$0xff]
      %v248 = vld [vmem:[%s210 + $0x74] sm:$0xf]
      %v249 = vld [vmem:[%s210 + $0x78] sm:$0xff]
      %v250 = vld [vmem:[%s210 + $0x80] sm:$0xf]
      %v251 = vld [vmem:[%s210 + $0x84] sm:$0xff]
      %v252 = vld [vmem:[%s210 + $0x8c] sm:$0xf]
      %v253 = vld [vmem:[%s210 + $0x90] sm:$0xff]
      %v254 = vld [vmem:[%s210 + $0x98] sm:$0xf]
      %v255 = vld [vmem:[%s210 + $0x9c] sm:$0xff]
      %v256 = vld [vmem:[%s210 + $0xa4] sm:$0xf]
      %v257 = vld [vmem:[%s210 + $0xa8] sm:$0xff]
      %v258 = vld [vmem:[%s210 + $0xb0] sm:$0xf]
      %v259 = vld [vmem:[%s210 + $0xb4] sm:$0xff]
      %v260 = vld [vmem:[%s210 + $0xbc] sm:$0xf]
      %v261 = vld [vmem:[%s210 + $0xc0] sm:$0xff]
      %v262 = vld [vmem:[%s210 + $0xc8] sm:$0xf]
      %v263 = vld [vmem:[%s210 + $0xcc] sm:$0xff]
      %v264 = vld [vmem:[%s210 + $0xd4] sm:$0xf]
      %v265 = vld [vmem:[%s210 + $0xd8] sm:$0xff]
      %v266 = vld [vmem:[%s210 + $0xe0] sm:$0xf]
      %v267 = vld [vmem:[%s210 + $0xe4] sm:$0xff]
      %v268 = vld [vmem:[%s210 + $0xec] sm:$0xf]
      %v269 = vld [vmem:[%s210 + $0xf0] sm:$0xff]
      %v270 = vld [vmem:[%s210 + $0xf8] sm:$0xf]
      %v271 = vld [vmem:[%s210 + $0xfc] sm:$0xff]
      %v272 = vld [vmem:[%s210 + $0x104] sm:$0xf]
      %v273 = vld [vmem:[%s210 + $0x108] sm:$0xff]
      %v274 = vld [vmem:[%s210 + $0x110] sm:$0xf]
      %v275 = vld [vmem:[%s210 + $0x114] sm:$0xff]
      %v276 = vld [vmem:[%s210 + $0x11c] sm:$0xf]
      %v277 = vld [vmem:[%s210 + $0x120] sm:$0xff]
      %v278 = vld [vmem:[%s210 + $0x128] sm:$0xf]
      %v279 = vld [vmem:[%s210 + $0x12c] sm:$0xff]
      %v280 = vld [vmem:[%s210 + $0x134] sm:$0xf]
      %v281 = vld [vmem:[%s210 + $0x138] sm:$0xff]
      %v282 = vld [vmem:[%s210 + $0x140] sm:$0xf]
      %v283 = vld [vmem:[%s210 + $0x144] sm:$0xff]
      %v284 = vld [vmem:[%s210 + $0x14c] sm:$0xf]
      %v285 = vld [vmem:[%s210 + $0x150] sm:$0xff]
      %v286 = vld [vmem:[%s210 + $0x158] sm:$0xf]
      %v287 = vld [vmem:[%s210 + $0x15c] sm:$0xff]
      %v288 = vld [vmem:[%s210 + $0x164] sm:$0xf]
      %v289 = vld [vmem:[%s210 + $0x168] sm:$0xff]
      %v290 = vld [vmem:[%s210 + $0x170] sm:$0xf]
      %v291 = vld [vmem:[%s210 + $0x174] sm:$0xff]
      %v292 = vld [vmem:[%s210 + $0x17c] sm:$0xf]
      %v293 = vld [vmem:[%s215] sm:$0xf]
      %v294 = vld [vmem:[%s215 + $0x4] sm:$0xf]
      %v295 = vld [vmem:[%s215 + $0x8] sm:$0xf]
      %v296 = vld [vmem:[%s215 + $0xc] sm:$0xf]
      %v297 = vld [vmem:[%s215 + $0x10] sm:$0xf]
      %v298 = vld [vmem:[%s215 + $0x14] sm:$0xf]
      %v299 = vld [vmem:[%s215 + $0x18] sm:$0xf]
      %v300 = vld [vmem:[%s215 + $0x1c] sm:$0xf]
      %v301 = vld [vmem:[%s215 + $0x20] sm:$0xf]
      %v302 = vld [vmem:[%s215 + $0x24] sm:$0xf]
      %v303 = vld [vmem:[%s215 + $0x28] sm:$0xf]
      %v304 = vld [vmem:[%s215 + $0x2c] sm:$0xf]
      %v305 = vld [vmem:[%s215 + $0x30] sm:$0xf]
      %v306 = vld [vmem:[%s215 + $0x34] sm:$0xf]
      %v307 = vld [vmem:[%s215 + $0x38] sm:$0xf]
      %v308 = vld [vmem:[%s215 + $0x3c] sm:$0xf]
      %v309 = vld [vmem:[%s215 + $0x40] sm:$0xf]
      %v310 = vld [vmem:[%s215 + $0x44] sm:$0xf]
      %v311 = vld [vmem:[%s215 + $0x48] sm:$0xf]
      %v312 = vld [vmem:[%s215 + $0x4c] sm:$0xf]
      %v313 = vld [vmem:[%s215 + $0x50] sm:$0xf]
      %v314 = vld [vmem:[%s215 + $0x54] sm:$0xf]
      %v315 = vld [vmem:[%s215 + $0x58] sm:$0xf]
      %v316 = vld [vmem:[%s215 + $0x5c] sm:$0xf]
      %v317 = vld [vmem:[%s215 + $0x60] sm:$0xf]
      %v318 = vld [vmem:[%s215 + $0x64] sm:$0xf]
      %v319 = vld [vmem:[%s215 + $0x68] sm:$0xf]
      %v320 = vld [vmem:[%s215 + $0x6c] sm:$0xf]
      %v321 = vld [vmem:[%s215 + $0x70] sm:$0xf]
      %v322 = vld [vmem:[%s215 + $0x74] sm:$0xf]
      %v323 = vld [vmem:[%s215 + $0x78] sm:$0xf]
      %v324 = vld [vmem:[%s215 + $0x7c] sm:$0xf]
      %v325 = vld [vmem:[%s215 + $0x80] sm:$0xf]
      %v326 = vld [vmem:[%s215 + $0x84] sm:$0xf]
      %v327 = vld [vmem:[%s215 + $0x88] sm:$0xf]
      %v328 = vld [vmem:[%s215 + $0x8c] sm:$0xf]
      %v329 = vld [vmem:[%s218] sm:$0x1]
      %v331 = vlaneseq
      %v332 = vshrl.u32 %v331, 7
      %v333 = vsub.s32 0, %v332
      %v334 = vrot.slane %v329, %v333
      %v400 = vunpack.c.l.b16 %v229
      %v401 = vunpack.c.h.b16 %v229
      %v402 = vunpack.c.l.b16 %v230
      %v403 = vunpack.c.l.b16 %v231
      %v404 = vunpack.c.h.b16 %v231
      %v405 = vunpack.c.l.b16 %v232
      %v406 = vunpack.c.l.b16 %v233
      %v407 = vunpack.c.h.b16 %v233
      %v408 = vunpack.c.l.b16 %v234
      %v409 = vunpack.c.l.b16 %v235
      %v410 = vunpack.c.h.b16 %v235
      %v411 = vunpack.c.l.b16 %v236
      %v412 = vunpack.c.l.b16 %v237
      %v413 = vunpack.c.h.b16 %v237
      %v414 = vunpack.c.l.b16 %v238
      %v415 = vunpack.c.l.b16 %v239
      %v416 = vunpack.c.h.b16 %v239
      %v417 = vunpack.c.l.b16 %v240
      %v418 = vunpack.c.l.b16 %v241
      %v419 = vunpack.c.h.b16 %v241
      %v420 = vunpack.c.l.b16 %v242
      %v421 = vunpack.c.l.b16 %v243
      %v422 = vunpack.c.h.b16 %v243
      %v423 = vunpack.c.l.b16 %v244
      %v424 = vunpack.c.l.b16 %v245
      %v425 = vunpack.c.h.b16 %v245
      %v426 = vunpack.c.l.b16 %v246
      %v427 = vunpack.c.l.b16 %v247
      %v428 = vunpack.c.h.b16 %v247
      %v429 = vunpack.c.l.b16 %v248
      %v430 = vunpack.c.l.b16 %v249
      %v431 = vunpack.c.h.b16 %v249
      %v432 = vunpack.c.l.b16 %v250
      %v433 = vunpack.c.l.b16 %v251
      %v434 = vunpack.c.h.b16 %v251
      %v435 = vunpack.c.l.b16 %v252
      %v436 = vunpack.c.l.b16 %v253
      %v437 = vunpack.c.h.b16 %v253
      %v438 = vunpack.c.l.b16 %v254
      %v439 = vunpack.c.l.b16 %v255
      %v440 = vunpack.c.h.b16 %v255
      %v441 = vunpack.c.l.b16 %v256
      %v442 = vunpack.c.l.b16 %v257
      %v443 = vunpack.c.h.b16 %v257
      %v444 = vunpack.c.l.b16 %v258
      %v445 = vunpack.c.l.b16 %v259
      %v446 = vunpack.c.h.b16 %v259
      %v447 = vunpack.c.l.b16 %v260
      %v448 = vunpack.c.l.b16 %v261
      %v449 = vunpack.c.h.b16 %v261
      %v450 = vunpack.c.l.b16 %v262
      %v451 = vunpack.c.l.b16 %v263
      %v452 = vunpack.c.h.b16 %v263
      %v453 = vunpack.c.l.b16 %v264
      %v454 = vunpack.c.l.b16 %v265
      %v455 = vunpack.c.h.b16 %v265
      %v456 = vunpack.c.l.b16 %v266
      %v457 = vunpack.c.l.b16 %v267
      %v458 = vunpack.c.h.b16 %v267
      %v459 = vunpack.c.l.b16 %v268
      %v460 = vunpack.c.l.b16 %v269
      %v461 = vunpack.c.h.b16 %v269
      %v462 = vunpack.c.l.b16 %v270
      %v463 = vunpack.c.l.b16 %v271
      %v464 = vunpack.c.h.b16 %v271
      %v465 = vunpack.c.l.b16 %v272
      %v466 = vunpack.c.l.b16 %v273
      %v467 = vunpack.c.h.b16 %v273
      %v468 = vunpack.c.l.b16 %v274
      %v469 = vunpack.c.l.b16 %v275
      %v470 = vunpack.c.h.b16 %v275
      %v471 = vunpack.c.l.b16 %v276
      %v472 = vunpack.c.l.b16 %v277
      %v473 = vunpack.c.h.b16 %v277
      %v474 = vunpack.c.l.b16 %v278
      %v475 = vunpack.c.l.b16 %v279
      %v476 = vunpack.c.h.b16 %v279
      %v477 = vunpack.c.l.b16 %v280
      %v478 = vunpack.c.l.b16 %v281
      %v479 = vunpack.c.h.b16 %v281
      %v480 = vunpack.c.l.b16 %v282
      %v481 = vunpack.c.l.b16 %v283
      %v482 = vunpack.c.h.b16 %v283
      %v483 = vunpack.c.l.b16 %v284
      %v484 = vunpack.c.l.b16 %v285
      %v485 = vunpack.c.h.b16 %v285
      %v486 = vunpack.c.l.b16 %v286
      %v487 = vunpack.c.l.b16 %v287
      %v488 = vunpack.c.h.b16 %v287
      %v489 = vunpack.c.l.b16 %v288
      %v490 = vunpack.c.l.b16 %v289
      %v491 = vunpack.c.h.b16 %v289
      %v492 = vunpack.c.l.b16 %v290
      %v493 = vunpack.c.l.b16 %v291
      %v494 = vunpack.c.h.b16 %v291
      %v495 = vunpack.c.l.b16 %v292
      %v496 = vpack.c.b16 %v403, %v400
      %v497 = vpack.c.b16 %v404, %v401
      %v498 = vpack.c.b16 %v405, %v402
      %v499 = vpack.c.b16 %v409, %v406
      %v500 = vpack.c.b16 %v410, %v407
      %v501 = vpack.c.b16 %v411, %v408
      %v502 = vpack.c.b16 %v415, %v412
      %v503 = vpack.c.b16 %v416, %v413
      %v504 = vpack.c.b16 %v417, %v414
      %v505 = vpack.c.b16 %v421, %v418
      %v506 = vpack.c.b16 %v422, %v419
      %v507 = vpack.c.b16 %v423, %v420
      %v508 = vpack.c.b16 %v427, %v424
      %v509 = vpack.c.b16 %v428, %v425
      %v510 = vpack.c.b16 %v429, %v426
      %v511 = vpack.c.b16 %v433, %v430
      %v512 = vpack.c.b16 %v434, %v431
      %v513 = vpack.c.b16 %v435, %v432
      %v514 = vpack.c.b16 %v439, %v436
      %v515 = vpack.c.b16 %v440, %v437
      %v516 = vpack.c.b16 %v441, %v438
      %v517 = vpack.c.b16 %v445, %v442
      %v518 = vpack.c.b16 %v446, %v443
      %v519 = vpack.c.b16 %v447, %v444
      %v520 = vpack.c.b16 %v451, %v448
      %v521 = vpack.c.b16 %v452, %v449
      %v522 = vpack.c.b16 %v453, %v450
      %v523 = vpack.c.b16 %v457, %v454
      %v524 = vpack.c.b16 %v458, %v455
      %v525 = vpack.c.b16 %v459, %v456
      %v526 = vpack.c.b16 %v463, %v460
      %v527 = vpack.c.b16 %v464, %v461
      %v528 = vpack.c.b16 %v465, %v462
      %v529 = vpack.c.b16 %v469, %v466
      %v530 = vpack.c.b16 %v470, %v467
      %v531 = vpack.c.b16 %v471, %v468
      %v532 = vpack.c.b16 %v475, %v472
      %v533 = vpack.c.b16 %v476, %v473
      %v534 = vpack.c.b16 %v477, %v474
      %v535 = vpack.c.b16 %v481, %v478
      %v536 = vpack.c.b16 %v482, %v479
      %v537 = vpack.c.b16 %v483, %v480
      %v538 = vpack.c.b16 %v487, %v484
      %v539 = vpack.c.b16 %v488, %v485
      %v540 = vpack.c.b16 %v489, %v486
      %v541 = vpack.c.b16 %v493, %v490
      %v542 = vpack.c.b16 %v494, %v491
      %v543 = vpack.c.b16 %v495, %v492
      %v612 = vunpack.c.l.b16 %v293
      %v613 = vunpack.c.l.b16 %v294
      %v614 = vunpack.c.l.b16 %v295
      %v615 = vunpack.c.l.b16 %v296
      %v616 = vunpack.c.l.b16 %v297
      %v617 = vunpack.c.l.b16 %v298
      %v618 = vunpack.c.l.b16 %v299
      %v619 = vunpack.c.l.b16 %v300
      %v620 = vunpack.c.l.b16 %v301
      %v621 = vunpack.c.l.b16 %v302
      %v622 = vunpack.c.l.b16 %v303
      %v623 = vunpack.c.l.b16 %v304
      %v624 = vunpack.c.l.b16 %v305
      %v625 = vunpack.c.l.b16 %v306
      %v626 = vunpack.c.l.b16 %v307
      %v627 = vunpack.c.l.b16 %v308
      %v628 = vunpack.c.l.b16 %v309
      %v629 = vunpack.c.l.b16 %v310
      %v630 = vunpack.c.l.b16 %v311
      %v631 = vunpack.c.l.b16 %v312
      %v632 = vunpack.c.l.b16 %v313
      %v633 = vunpack.c.l.b16 %v314
      %v634 = vunpack.c.l.b16 %v315
      %v635 = vunpack.c.l.b16 %v316
      %v636 = vunpack.c.l.b16 %v317
      %v637 = vunpack.c.l.b16 %v318
      %v638 = vunpack.c.l.b16 %v319
      %v639 = vunpack.c.l.b16 %v320
      %v640 = vunpack.c.l.b16 %v321
      %v641 = vunpack.c.l.b16 %v322
      %v642 = vunpack.c.l.b16 %v323
      %v643 = vunpack.c.l.b16 %v324
      %v644 = vunpack.c.l.b16 %v325
      %v645 = vunpack.c.l.b16 %v326
      %v646 = vunpack.c.l.b16 %v327
      %v647 = vunpack.c.l.b16 %v328
      %v648 = vpack.c.b16 %v613, %v612
      %v649 = vpack.c.b16 %v615, %v614
      %v650 = vpack.c.b16 %v617, %v616
      %v651 = vpack.c.b16 %v619, %v618
      %v652 = vpack.c.b16 %v621, %v620
      %v653 = vpack.c.b16 %v623, %v622
      %v654 = vpack.c.b16 %v625, %v624
      %v655 = vpack.c.b16 %v627, %v626
      %v656 = vpack.c.b16 %v629, %v628
      %v657 = vpack.c.b16 %v631, %v630
      %v658 = vpack.c.b16 %v633, %v632
      %v659 = vpack.c.b16 %v635, %v634
      %v660 = vpack.c.b16 %v637, %v636
      %v661 = vpack.c.b16 %v639, %v638
      %v662 = vpack.c.b16 %v641, %v640
      %v663 = vpack.c.b16 %v643, %v642
      %v664 = vpack.c.b16 %v645, %v644
      %v665 = vpack.c.b16 %v647, %v646
      %vm684 = vcmask 261120
      %v686 = vsel %vm684, %v498, 0
      %v689 = vsel %vm684, %v501, 0
      %v692 = vsel %vm684, %v504, 0
      %v695 = vsel %vm684, %v507, 0
      %v698 = vsel %vm684, %v510, 0
      %v701 = vsel %vm684, %v513, 0
      %v704 = vsel %vm684, %v516, 0
      %v707 = vsel %vm684, %v519, 0
      %v710 = vsel %vm684, %v522, 0
      %v713 = vsel %vm684, %v525, 0
      %v716 = vsel %vm684, %v528, 0
      %v719 = vsel %vm684, %v531, 0
      %v722 = vsel %vm684, %v534, 0
      %v725 = vsel %vm684, %v537, 0
      %v728 = vsel %vm684, %v540, 0
      %v731 = vsel %vm684, %v543, 0
      %733 = vmatprep.subr.bf16.mxu0 0
      %734 = vmatpush1.bf16.msra.mxu0 %v648
      %735 = vmatprep.subr.bf16.mxu0 0
      %736 = vmatpush1.bf16.msra.mxu0 %v649
      %737 = vmatprep.subr.bf16.mxu0 0
      %738 = vmatpush1.bf16.msra.mxu0 %v650
      %739 = vmatprep.subr.bf16.mxu0 0
      %740 = vmatpush1.bf16.msra.mxu0 %v651
      %741 = vmatprep.subr.bf16.mxu0 0
      %742 = vmatpush1.bf16.msra.mxu0 %v652
      %743 = vmatprep.subr.bf16.mxu0 0
      %744 = vmatpush1.bf16.msra.mxu0 %v653
      %745 = vmatprep.subr.bf16.mxu0 0
      %746 = vmatpush1.bf16.msra.mxu0 %v654
      %747 = vmatprep.subr.bf16.mxu0 0
      %748 = vmatpush1.bf16.msra.mxu0 %v655
      %749 = vmatprep.subr.bf16.mxu0 0
      %750 = vmatpush1.bf16.msra.mxu0 %v656
      %751 = vmatprep.subr.bf16.mxu0 0
      %752 = vmatpush1.bf16.msra.mxu0 %v657
      %753 = vmatprep.subr.bf16.mxu0 0
      %754 = vmatpush1.bf16.msra.mxu0 %v658
      %755 = vmatprep.subr.bf16.mxu0 0
      %756 = vmatpush1.bf16.msra.mxu0 %v659
      %757 = vmatprep.subr.bf16.mxu0 0
      %758 = vmatpush1.bf16.msra.mxu0 %v660
      %759 = vmatprep.subr.bf16.mxu0 0
      %760 = vmatpush1.bf16.msra.mxu0 %v661
      %761 = vmatprep.subr.bf16.mxu0 0
      %762 = vmatpush1.bf16.msra.mxu0 %v662
      %763 = vmatprep.subr.bf16.mxu0 0
      %764 = vmatpush1.bf16.msra.mxu0 %v663
      %765 = vmatprep.mubr.bf16.mxu0 %v497
      %766 = vmatmul.mubr.bf16.gmra.mrb[0].mxu0 %v496
      %v767 = vpop.f32.mrb[0].mxu0
      %v768 = vadd.f32 %v334, %v767
      %v769 = vpop.f32.mrb[0].mxu0
      %v770 = vpop.f32.mrb[0].mxu0
      %v771 = vadd.f32 %v334, %v770
      %v772 = vpop.f32.mrb[0].mxu0
      %773 = vmatprep.mubr.bf16.mxu0 %v500
      %774 = vmatmul.mubr.bf16.gmra.mrb[0].mxu0 %v499
      %v775 = vpop.f32.mrb[0].mxu0
      %v776 = vadd.f32 %v334, %v775
      %v777 = vpop.f32.mrb[0].mxu0
      %v778 = vpop.f32.mrb[0].mxu0
      %v779 = vadd.f32 %v334, %v778
      %v780 = vpop.f32.mrb[0].mxu0
      %781 = vmatprep.mubr.bf16.mxu0 %v503
      %782 = vmatmul.mubr.bf16.gmra.mrb[0].mxu0 %v502
      %v783 = vpop.f32.mrb[0].mxu0
      %v784 = vadd.f32 %v334, %v783
      %v785 = vpop.f32.mrb[0].mxu0
      %v786 = vpop.f32.mrb[0].mxu0
      %v787 = vadd.f32 %v334, %v786
      %v788 = vpop.f32.mrb[0].mxu0
      %789 = vmatprep.mubr.bf16.mxu0 %v506
      %790 = vmatmul.mubr.bf16.gmra.mrb[0].mxu0 %v505
      %v791 = vpop.f32.mrb[0].mxu0
      %v792 = vadd.f32 %v334, %v791
      %v793 = vpop.f32.mrb[0].mxu0
      %v794 = vpop.f32.mrb[0].mxu0
      %v795 = vadd.f32 %v334, %v794
      %v796 = vpop.f32.mrb[0].mxu0
      %797 = vmatprep.mubr.bf16.mxu0 %v509
      %798 = vmatmul.mubr.bf16.gmra.mrb[0].mxu0 %v508
      %v799 = vpop.f32.mrb[0].mxu0
      %v800 = vadd.f32 %v334, %v799
      %v801 = vpop.f32.mrb[0].mxu0
      %v802 = vpop.f32.mrb[0].mxu0
      %v803 = vadd.f32 %v334, %v802
      %v804 = vpop.f32.mrb[0].mxu0
      %805 = vmatprep.mubr.bf16.mxu0 %v512
      %806 = vmatmul.mubr.bf16.gmra.mrb[0].mxu0 %v511
      %v807 = vpop.f32.mrb[0].mxu0
      %v808 = vadd.f32 %v334, %v807
      %v809 = vpop.f32.mrb[0].mxu0
      %v810 = vpop.f32.mrb[0].mxu0
      %v811 = vadd.f32 %v334, %v810
      %v812 = vpop.f32.mrb[0].mxu0
      %813 = vmatprep.mubr.bf16.mxu0 %v515
      %814 = vmatmul.mubr.bf16.gmra.mrb[0].mxu0 %v514
      %v815 = vpop.f32.mrb[0].mxu0
      %v816 = vadd.f32 %v334, %v815
      %v817 = vpop.f32.mrb[0].mxu0
      %v818 = vpop.f32.mrb[0].mxu0
      %v819 = vadd.f32 %v334, %v818
      %v820 = vpop.f32.mrb[0].mxu0
      %821 = vmatprep.mubr.bf16.mxu0 %v518
      %822 = vmatmul.mubr.bf16.gmra.mrb[0].mxu0 %v517
      %v823 = vpop.f32.mrb[0].mxu0
      %v824 = vadd.f32 %v334, %v823
      %v825 = vpop.f32.mrb[0].mxu0
      %v826 = vpop.f32.mrb[0].mxu0
      %v827 = vadd.f32 %v334, %v826
      %v828 = vpop.f32.mrb[0].mxu0
      %829 = vmatprep.mubr.bf16.mxu0 %v521
      %830 = vmatmul.mubr.bf16.gmra.mrb[0].mxu0 %v520
      %v831 = vpop.f32.mrb[0].mxu0
      %v832 = vadd.f32 %v334, %v831
      %v833 = vpop.f32.mrb[0].mxu0
      %v834 = vpop.f32.mrb[0].mxu0
      %v835 = vadd.f32 %v334, %v834
      %v836 = vpop.f32.mrb[0].mxu0
      %837 = vmatprep.mubr.bf16.mxu0 %v524
      %838 = vmatmul.mubr.bf16.gmra.mrb[0].mxu0 %v523
      %v839 = vpop.f32.mrb[0].mxu0
      %v840 = vadd.f32 %v334, %v839
      %v841 = vpop.f32.mrb[0].mxu0
      %v842 = vpop.f32.mrb[0].mxu0
      %v843 = vadd.f32 %v334, %v842
      %v844 = vpop.f32.mrb[0].mxu0
      %845 = vmatprep.mubr.bf16.mxu0 %v527
      %846 = vmatmul.mubr.bf16.gmra.mrb[0].mxu0 %v526
      %v847 = vpop.f32.mrb[0].mxu0
      %v848 = vadd.f32 %v334, %v847
      %v849 = vpop.f32.mrb[0].mxu0
      %v850 = vpop.f32.mrb[0].mxu0
      %v851 = vadd.f32 %v334, %v850
      %v852 = vpop.f32.mrb[0].mxu0
      %853 = vmatprep.mubr.bf16.mxu0 %v530
      %854 = vmatmul.mubr.bf16.gmra.mrb[0].mxu0 %v529
      %v855 = vpop.f32.mrb[0].mxu0
      %v856 = vadd.f32 %v334, %v855
      %v857 = vpop.f32.mrb[0].mxu0
      %v858 = vpop.f32.mrb[0].mxu0
      %v859 = vadd.f32 %v334, %v858
      %v860 = vpop.f32.mrb[0].mxu0
      %861 = vmatprep.mubr.bf16.mxu0 %v533
      %862 = vmatmul.mubr.bf16.gmra.mrb[0].mxu0 %v532
      %v863 = vpop.f32.mrb[0].mxu0
      %v864 = vadd.f32 %v334, %v863
      %v865 = vpop.f32.mrb[0].mxu0
      %v866 = vpop.f32.mrb[0].mxu0
      %v867 = vadd.f32 %v334, %v866
      %v868 = vpop.f32.mrb[0].mxu0
      %869 = vmatprep.mubr.bf16.mxu0 %v536
      %870 = vmatmul.mubr.bf16.gmra.mrb[0].mxu0 %v535
      %v871 = vpop.f32.mrb[0].mxu0
      %v872 = vadd.f32 %v334, %v871
      %v873 = vpop.f32.mrb[0].mxu0
      %v874 = vpop.f32.mrb[0].mxu0
      %v875 = vadd.f32 %v334, %v874
      %v876 = vpop.f32.mrb[0].mxu0
      %877 = vmatprep.mubr.bf16.mxu0 %v539
      %878 = vmatmul.mubr.bf16.gmra.mrb[0].mxu0 %v538
      %v879 = vpop.f32.mrb[0].mxu0
      %v880 = vadd.f32 %v334, %v879
      %v881 = vpop.f32.mrb[0].mxu0
      %v882 = vpop.f32.mrb[0].mxu0
      %v883 = vadd.f32 %v334, %v882
      %v884 = vpop.f32.mrb[0].mxu0
      %885 = vmatprep.mubr.bf16.mxu0 %v542
      %886 = vmatmul.mubr.bf16.gmra.mrb[0].mxu0 %v541
      %v887 = vpop.f32.mrb[0].mxu0
      %v888 = vadd.f32 %v334, %v887
      %v889 = vpop.f32.mrb[0].mxu0
      %v890 = vpop.f32.mrb[0].mxu0
      %v891 = vadd.f32 %v334, %v890
      %v892 = vpop.f32.mrb[0].mxu0
      %893 = vdwg.mxu0
      %894 = vmatprep.subr.bf16.mxu0 0
      %895 = vmatpush1.bf16.msra.mxu0 %v664
      %896 = vmatprep.subr.bf16.mxu0 0
      %897 = vmatpush1.bf16.msra.mxu0 %v665
      %898 = vmatprep.subr.bf16.mxu0 0
      %899 = vmatpush1.bf16.msra.mxu0 0
      %900 = vmatprep.subr.bf16.mxu0 0
      %901 = vmatpush1.bf16.msra.mxu0 0
      %902 = vmatprep.subr.bf16.mxu0 0
      %903 = vmatpush1.bf16.msra.mxu0 0
      %904 = vmatprep.subr.bf16.mxu0 0
      %905 = vmatpush1.bf16.msra.mxu0 0
      %906 = vmatprep.subr.bf16.mxu0 0
      %907 = vmatpush1.bf16.msra.mxu0 0
      %908 = vmatprep.subr.bf16.mxu0 0
      %909 = vmatpush1.bf16.msra.mxu0 0
      %910 = vmatprep.subr.bf16.mxu0 0
      %911 = vmatpush1.bf16.msra.mxu0 0
      %912 = vmatprep.subr.bf16.mxu0 0
      %913 = vmatpush1.bf16.msra.mxu0 0
      %914 = vmatprep.subr.bf16.mxu0 0
      %915 = vmatpush1.bf16.msra.mxu0 0
      %916 = vmatprep.subr.bf16.mxu0 0
      %917 = vmatpush1.bf16.msra.mxu0 0
      %918 = vmatprep.subr.bf16.mxu0 0
      %919 = vmatpush1.bf16.msra.mxu0 0
      %920 = vmatprep.subr.bf16.mxu0 0
      %921 = vmatpush1.bf16.msra.mxu0 0
      %922 = vmatprep.subr.bf16.mxu0 0
      %923 = vmatpush1.bf16.msra.mxu0 0
      %924 = vmatprep.subr.bf16.mxu0 0
      %925 = vmatpush1.bf16.msra.mxu0 0
      %926 = vmatprep.mubr.bf16.mxu0 0
      %927 = vmatmul.mubr.bf16.gmra.mrb[0].mxu0 %v686
      %v928 = vpop.f32.mrb[0].mxu0
      %v929 = vadd.f32 %v768, %v928
      %v930 = vpop.f32.mrb[0].mxu0
      %v931 = vpop.f32.mrb[0].mxu0
      %v932 = vadd.f32 %v771, %v931
      %v933 = vpop.f32.mrb[0].mxu0
      %934 = vmatprep.mubr.bf16.mxu0 0
      %935 = vmatmul.mubr.bf16.gmra.mrb[0].mxu0 %v689
      %v936 = vpop.f32.mrb[0].mxu0
      %v937 = vadd.f32 %v776, %v936
      %v938 = vpop.f32.mrb[0].mxu0
      %v939 = vpop.f32.mrb[0].mxu0
      %v940 = vadd.f32 %v779, %v939
      %v941 = vpop.f32.mrb[0].mxu0
      %942 = vmatprep.mubr.bf16.mxu0 0
      %943 = vmatmul.mubr.bf16.gmra.mrb[0].mxu0 %v692
      %v944 = vpop.f32.mrb[0].mxu0
      %v945 = vadd.f32 %v784, %v944
      %v946 = vpop.f32.mrb[0].mxu0
      %v947 = vpop.f32.mrb[0].mxu0
      %v948 = vadd.f32 %v787, %v947
      %v949 = vpop.f32.mrb[0].mxu0
      %950 = vmatprep.mubr.bf16.mxu0 0
      %951 = vmatmul.mubr.bf16.gmra.mrb[0].mxu0 %v695
      %v952 = vpop.f32.mrb[0].mxu0
      %v953 = vadd.f32 %v792, %v952
      %v954 = vpop.f32.mrb[0].mxu0
      %v955 = vpop.f32.mrb[0].mxu0
      %v956 = vadd.f32 %v795, %v955
      %v957 = vpop.f32.mrb[0].mxu0
      %958 = vmatprep.mubr.bf16.mxu0 0
      %959 = vmatmul.mubr.bf16.gmra.mrb[0].mxu0 %v698
      %v960 = vpop.f32.mrb[0].mxu0
      %v961 = vadd.f32 %v800, %v960
      %v962 = vpop.f32.mrb[0].mxu0
      %v963 = vpop.f32.mrb[0].mxu0
      %v964 = vadd.f32 %v803, %v963
      %v965 = vpop.f32.mrb[0].mxu0
      %966 = vmatprep.mubr.bf16.mxu0 0
      %967 = vmatmul.mubr.bf16.gmra.mrb[0].mxu0 %v701
      %v968 = vpop.f32.mrb[0].mxu0
      %v969 = vadd.f32 %v808, %v968
      %v970 = vpop.f32.mrb[0].mxu0
      %v971 = vpop.f32.mrb[0].mxu0
      %v972 = vadd.f32 %v811, %v971
      %v973 = vpop.f32.mrb[0].mxu0
      %974 = vmatprep.mubr.bf16.mxu0 0
      %975 = vmatmul.mubr.bf16.gmra.mrb[0].mxu0 %v704
      %v976 = vpop.f32.mrb[0].mxu0
      %v977 = vadd.f32 %v816, %v976
      %v978 = vpop.f32.mrb[0].mxu0
      %v979 = vpop.f32.mrb[0].mxu0
      %v980 = vadd.f32 %v819, %v979
      %v981 = vpop.f32.mrb[0].mxu0
      %982 = vmatprep.mubr.bf16.mxu0 0
      %983 = vmatmul.mubr.bf16.gmra.mrb[0].mxu0 %v707
      %v984 = vpop.f32.mrb[0].mxu0
      %v985 = vadd.f32 %v824, %v984
      %v986 = vpop.f32.mrb[0].mxu0
      %v987 = vpop.f32.mrb[0].mxu0
      %v988 = vadd.f32 %v827, %v987
      %v989 = vpop.f32.mrb[0].mxu0
      %990 = vmatprep.mubr.bf16.mxu0 0
      %991 = vmatmul.mubr.bf16.gmra.mrb[0].mxu0 %v710
      %v992 = vpop.f32.mrb[0].mxu0
      %v993 = vadd.f32 %v832, %v992
      %v994 = vpop.f32.mrb[0].mxu0
      %v995 = vpop.f32.mrb[0].mxu0
      %v996 = vadd.f32 %v835, %v995
      %v997 = vpop.f32.mrb[0].mxu0
      %998 = vmatprep.mubr.bf16.mxu0 0
      %999 = vmatmul.mubr.bf16.gmra.mrb[0].mxu0 %v713
      %v1000 = vpop.f32.mrb[0].mxu0
      %v1001 = vadd.f32 %v840, %v1000
      %v1002 = vpop.f32.mrb[0].mxu0
      %v1003 = vpop.f32.mrb[0].mxu0
      %v1004 = vadd.f32 %v843, %v1003
      %v1005 = vpop.f32.mrb[0].mxu0
      %1006 = vmatprep.mubr.bf16.mxu0 0
      %1007 = vmatmul.mubr.bf16.gmra.mrb[0].mxu0 %v716
      %v1008 = vpop.f32.mrb[0].mxu0
      %v1009 = vadd.f32 %v848, %v1008
      %v1010 = vpop.f32.mrb[0].mxu0
      %v1011 = vpop.f32.mrb[0].mxu0
      %v1012 = vadd.f32 %v851, %v1011
      %v1013 = vpop.f32.mrb[0].mxu0
      %1014 = vmatprep.mubr.bf16.mxu0 0
      %1015 = vmatmul.mubr.bf16.gmra.mrb[0].mxu0 %v719
      %v1016 = vpop.f32.mrb[0].mxu0
      %v1017 = vadd.f32 %v856, %v1016
      %v1018 = vpop.f32.mrb[0].mxu0
      %v1019 = vpop.f32.mrb[0].mxu0
      %v1020 = vadd.f32 %v859, %v1019
      %v1021 = vpop.f32.mrb[0].mxu0
      %1022 = vmatprep.mubr.bf16.mxu0 0
      %1023 = vmatmul.mubr.bf16.gmra.mrb[0].mxu0 %v722
      %v1024 = vpop.f32.mrb[0].mxu0
      %v1025 = vadd.f32 %v864, %v1024
      %v1026 = vpop.f32.mrb[0].mxu0
      %v1027 = vpop.f32.mrb[0].mxu0
      %v1028 = vadd.f32 %v867, %v1027
      %v1029 = vpop.f32.mrb[0].mxu0
      %1030 = vmatprep.mubr.bf16.mxu0 0
      %1031 = vmatmul.mubr.bf16.gmra.mrb[0].mxu0 %v725
      %v1032 = vpop.f32.mrb[0].mxu0
      %v1033 = vadd.f32 %v872, %v1032
      %v1034 = vpop.f32.mrb[0].mxu0
      %v1035 = vpop.f32.mrb[0].mxu0
      %v1036 = vadd.f32 %v875, %v1035
      %v1037 = vpop.f32.mrb[0].mxu0
      %1038 = vmatprep.mubr.bf16.mxu0 0
      %1039 = vmatmul.mubr.bf16.gmra.mrb[0].mxu0 %v728
      %v1040 = vpop.f32.mrb[0].mxu0
      %v1041 = vadd.f32 %v880, %v1040
      %v1042 = vpop.f32.mrb[0].mxu0
      %v1043 = vpop.f32.mrb[0].mxu0
      %v1044 = vadd.f32 %v883, %v1043
      %v1045 = vpop.f32.mrb[0].mxu0
      %1046 = vmatprep.mubr.bf16.mxu0 0
      %1047 = vmatmul.mubr.bf16.gmra.mrb[0].mxu0 %v731
      %v1048 = vpop.f32.mrb[0].mxu0
      %v1049 = vadd.f32 %v888, %v1048
      %v1050 = vpop.f32.mrb[0].mxu0
      %v1051 = vpop.f32.mrb[0].mxu0
      %v1052 = vadd.f32 %v891, %v1051
      %v1053 = vpop.f32.mrb[0].mxu0
      %1054 = vdwg.mxu0
      %v1055 = vmax.f32 %v929, 0.0
      %v1056 = vmax.f32 %v932, 0.0
      %v1057 = vmax.f32 %v937, 0.0
      %v1058 = vmax.f32 %v940, 0.0
      %v1059 = vmax.f32 %v945, 0.0
      %v1060 = vmax.f32 %v948, 0.0
      %v1061 = vmax.f32 %v953, 0.0
      %v1062 = vmax.f32 %v956, 0.0
      %v1063 = vmax.f32 %v961, 0.0
      %v1064 = vmax.f32 %v964, 0.0
      %v1065 = vmax.f32 %v969, 0.0
      %v1066 = vmax.f32 %v972, 0.0
      %v1067 = vmax.f32 %v977, 0.0
      %v1068 = vmax.f32 %v980, 0.0
      %v1069 = vmax.f32 %v985, 0.0
      %v1070 = vmax.f32 %v988, 0.0
      %v1071 = vmax.f32 %v993, 0.0
      %v1072 = vmax.f32 %v996, 0.0
      %v1073 = vmax.f32 %v1001, 0.0
      %v1074 = vmax.f32 %v1004, 0.0
      %v1075 = vmax.f32 %v1009, 0.0
      %v1076 = vmax.f32 %v1012, 0.0
      %v1077 = vmax.f32 %v1017, 0.0
      %v1078 = vmax.f32 %v1020, 0.0
      %v1079 = vmax.f32 %v1025, 0.0
      %v1080 = vmax.f32 %v1028, 0.0
      %v1081 = vmax.f32 %v1033, 0.0
      %v1082 = vmax.f32 %v1036, 0.0
      %v1083 = vmax.f32 %v1041, 0.0
      %v1084 = vmax.f32 %v1044, 0.0
      %v1085 = vmax.f32 %v1049, 0.0
      %v1086 = vmax.f32 %v1052, 0.0
      %v1087 = vpack.c.bf16 %v1056, %v1055
      %v1088 = vpack.c.bf16 %v1058, %v1057
      %v1089 = vpack.c.bf16 %v1060, %v1059
      %v1090 = vpack.c.bf16 %v1062, %v1061
      %v1091 = vpack.c.bf16 %v1064, %v1063
      %v1092 = vpack.c.bf16 %v1066, %v1065
      %v1093 = vpack.c.bf16 %v1068, %v1067
      %v1094 = vpack.c.bf16 %v1070, %v1069
      %v1095 = vpack.c.bf16 %v1072, %v1071
      %v1096 = vpack.c.bf16 %v1074, %v1073
      %v1097 = vpack.c.bf16 %v1076, %v1075
      %v1098 = vpack.c.bf16 %v1078, %v1077
      %v1099 = vpack.c.bf16 %v1080, %v1079
      %v1100 = vpack.c.bf16 %v1082, %v1081
      %v1101 = vpack.c.bf16 %v1084, %v1083
      %v1102 = vpack.c.bf16 %v1086, %v1085
      %v1119 = vunpack.c.l.b16 %v1087
      %v1120 = vunpack.c.h.b16 %v1087
      %v1121 = vunpack.c.l.b16 %v1088
      %v1122 = vunpack.c.h.b16 %v1088
      %v1123 = vunpack.c.l.b16 %v1089
      %v1124 = vunpack.c.h.b16 %v1089
      %v1125 = vunpack.c.l.b16 %v1090
      %v1126 = vunpack.c.h.b16 %v1090
      %v1127 = vunpack.c.l.b16 %v1091
      %v1128 = vunpack.c.h.b16 %v1091
      %v1129 = vunpack.c.l.b16 %v1092
      %v1130 = vunpack.c.h.b16 %v1092
      %v1131 = vunpack.c.l.b16 %v1093
      %v1132 = vunpack.c.h.b16 %v1093
      %v1133 = vunpack.c.l.b16 %v1094
      %v1134 = vunpack.c.h.b16 %v1094
      %v1135 = vunpack.c.l.b16 %v1095
      %v1136 = vunpack.c.h.b16 %v1095
      %v1137 = vunpack.c.l.b16 %v1096
      %v1138 = vunpack.c.h.b16 %v1096
      %v1139 = vunpack.c.l.b16 %v1097
      %v1140 = vunpack.c.h.b16 %v1097
      %v1141 = vunpack.c.l.b16 %v1098
      %v1142 = vunpack.c.h.b16 %v1098
      %v1143 = vunpack.c.l.b16 %v1099
      %v1144 = vunpack.c.h.b16 %v1099
      %v1145 = vunpack.c.l.b16 %v1100
      %v1146 = vunpack.c.h.b16 %v1100
      %v1147 = vunpack.c.l.b16 %v1101
      %v1148 = vunpack.c.h.b16 %v1101
      %v1149 = vunpack.c.l.b16 %v1102
      %v1150 = vunpack.c.h.b16 %v1102
      %v1151 = vpack.c.b16 %v1119, %v1119
      %v1152 = vpack.c.b16 %v1120, %v1120
      %v1153 = vpack.c.b16 %v1121, %v1121
      %v1154 = vpack.c.b16 %v1122, %v1122
      %v1155 = vpack.c.b16 %v1123, %v1123
      %v1156 = vpack.c.b16 %v1124, %v1124
      %v1157 = vpack.c.b16 %v1125, %v1125
      %v1158 = vpack.c.b16 %v1126, %v1126
      %v1159 = vpack.c.b16 %v1127, %v1127
      %v1160 = vpack.c.b16 %v1128, %v1128
      %v1161 = vpack.c.b16 %v1129, %v1129
      %v1162 = vpack.c.b16 %v1130, %v1130
      %v1163 = vpack.c.b16 %v1131, %v1131
      %v1164 = vpack.c.b16 %v1132, %v1132
      %v1165 = vpack.c.b16 %v1133, %v1133
      %v1166 = vpack.c.b16 %v1134, %v1134
      %v1167 = vpack.c.b16 %v1135, %v1135
      %v1168 = vpack.c.b16 %v1136, %v1136
      %v1169 = vpack.c.b16 %v1137, %v1137
      %v1170 = vpack.c.b16 %v1138, %v1138
      %v1171 = vpack.c.b16 %v1139, %v1139
      %v1172 = vpack.c.b16 %v1140, %v1140
      %v1173 = vpack.c.b16 %v1141, %v1141
      %v1174 = vpack.c.b16 %v1142, %v1142
      %v1175 = vpack.c.b16 %v1143, %v1143
      %v1176 = vpack.c.b16 %v1144, %v1144
      %v1177 = vpack.c.b16 %v1145, %v1145
      %v1178 = vpack.c.b16 %v1146, %v1146
      %v1179 = vpack.c.b16 %v1147, %v1147
      %v1180 = vpack.c.b16 %v1148, %v1148
      %v1181 = vpack.c.b16 %v1149, %v1149
      %v1182 = vpack.c.b16 %v1150, %v1150
      %vm1215 = vcmask 257024
      %1216 = vst.msk [vmem:[%s226] sm:$0xf] %vm1215, %v1151
      %1217 = vst.msk [vmem:[%s226 + $0x4] sm:$0xf] %vm1215, %v1152
      %1218 = vst.msk [vmem:[%s226 + $0x8] sm:$0xf] %vm1215, %v1153
      %1219 = vst.msk [vmem:[%s226 + $0xc] sm:$0xf] %vm1215, %v1154
      %1220 = vst.msk [vmem:[%s226 + $0x10] sm:$0xf] %vm1215, %v1155
      %1221 = vst.msk [vmem:[%s226 + $0x14] sm:$0xf] %vm1215, %v1156
      %1222 = vst.msk [vmem:[%s226 + $0x18] sm:$0xf] %vm1215, %v1157
      %1223 = vst.msk [vmem:[%s226 + $0x1c] sm:$0xf] %vm1215, %v1158
      %1224 = vst.msk [vmem:[%s226 + $0x20] sm:$0xf] %vm1215, %v1159
      %1225 = vst.msk [vmem:[%s226 + $0x24] sm:$0xf] %vm1215, %v1160
      %1226 = vst.msk [vmem:[%s226 + $0x28] sm:$0xf] %vm1215, %v1161
      %1227 = vst.msk [vmem:[%s226 + $0x2c] sm:$0xf] %vm1215, %v1162
      %1228 = vst.msk [vmem:[%s226 + $0x30] sm:$0xf] %vm1215, %v1163
      %1229 = vst.msk [vmem:[%s226 + $0x34] sm:$0xf] %vm1215, %v1164
      %1230 = vst.msk [vmem:[%s226 + $0x38] sm:$0xf] %vm1215, %v1165
      %1231 = vst.msk [vmem:[%s226 + $0x3c] sm:$0xf] %vm1215, %v1166
      %1232 = vst.msk [vmem:[%s226 + $0x40] sm:$0xf] %vm1215, %v1167
      %1233 = vst.msk [vmem:[%s226 + $0x44] sm:$0xf] %vm1215, %v1168
      %1234 = vst.msk [vmem:[%s226 + $0x48] sm:$0xf] %vm1215, %v1169
      %1235 = vst.msk [vmem:[%s226 + $0x4c] sm:$0xf] %vm1215, %v1170
      %1236 = vst.msk [vmem:[%s226 + $0x50] sm:$0xf] %vm1215, %v1171
      %1237 = vst.msk [vmem:[%s226 + $0x54] sm:$0xf] %vm1215, %v1172
      %1238 = vst.msk [vmem:[%s226 + $0x58] sm:$0xf] %vm1215, %v1173
      %1239 = vst.msk [vmem:[%s226 + $0x5c] sm:$0xf] %vm1215, %v1174
      %1240 = vst.msk [vmem:[%s226 + $0x60] sm:$0xf] %vm1215, %v1175
      %1241 = vst.msk [vmem:[%s226 + $0x64] sm:$0xf] %vm1215, %v1176
      %1242 = vst.msk [vmem:[%s226 + $0x68] sm:$0xf] %vm1215, %v1177
      %1243 = vst.msk [vmem:[%s226 + $0x6c] sm:$0xf] %vm1215, %v1178
      %1244 = vst.msk [vmem:[%s226 + $0x70] sm:$0xf] %vm1215, %v1179
      %1245 = vst.msk [vmem:[%s226 + $0x74] sm:$0xf] %vm1215, %v1180
      %1246 = vst.msk [vmem:[%s226 + $0x78] sm:$0xf] %vm1215, %v1181
      %1247 = vst.msk [vmem:[%s226 + $0x7c] sm:$0xf] %vm1215, %v1182
      %s1248 = smul.u32 32, %s18
      %p1249 = scmp.lt.s32.totalorder %s1248, 63
      %s1250 = scalar_select %p1249, %s1248, 63
      %p1251 = scmp.lt.s32.totalorder %s19, 0
      %s1252 = scalar_select %p1251, %s19, 0
      %s1253 = sadd.s32 %s1252, %s1250
      %s1254 = smul.addr %s1253, 4
      %s1255 = scalar_lea.vmem %s3, %s1254
      // Predicated region
      $region33: #{stegastamp_decoder_forward.18} parent=31 // pred_check
        %p1256 = pneg %p124
      $region34: #{stegastamp_decoder_forward.18} parent=31 // pred_check_branch
        %1258 = sbr.rel (%p1256) target = $region36
      $region35: #{stegastamp_decoder_forward.18} parent=31 // pred_region
        %s1259 = smul.u32 32, %s18
      $region36: #{stegastamp_decoder_forward.18} parent=31 // pred_fallthru
        _
    $region32: #{stegastamp_decoder_forward.18} parent=5 // pred_fallthru
      _
    %p1260 = scmp.le.s32.totalorder 2, %s9
    // Predicated region
    $region37: #{stegastamp_decoder_forward.18} parent=5 // pred_check
      %p1261 = pneg %p1260
    $region38: #{stegastamp_decoder_forward.18} parent=5 // pred_check_branch
      %1263 = sbr.rel (%p1261) target = $region40
    $region39: #{stegastamp_decoder_forward.18} parent=5 // pred_region
      %s1264 = ssub.s32 %s9, 2
      // Predicated region
      $region41: #{stegastamp_decoder_forward.18} parent=39 // pred_check
        %p1265 = pneg %p130
      $region42: #{stegastamp_decoder_forward.18} parent=39 // pred_check_branch
        %1267 = sbr.rel (%p1265) target = $region44
      $region43: #{stegastamp_decoder_forward.18} parent=39 // pred_region
        %s1268 = smul.u32 32, %s20
        %p1269 = scmp.lt.s32.totalorder %s1268, 63
        %s1270 = scalar_select %p1269, %s1268, 63
        %p1271 = scmp.lt.s32.totalorder %s21, 0
        %s1272 = scalar_select %p1271, %s21, 0
        %s1273 = sadd.s32 %s1272, %s1270
        %s1274 = smul.addr %s1273, 4
        %s1275 = scalar_lea.vmem %s3, %s1274
      $region44: #{stegastamp_decoder_forward.18} parent=39 // pred_fallthru
        _
    $region40: #{stegastamp_decoder_forward.18} parent=5 // pred_fallthru
      _
  $region6: #{stegastamp_decoder_forward.18} parent=0 // loop_footer
    %s13 = sadd.s32 1, %s9
  $region7: #{stegastamp_decoder_forward.18} parent=0 // loop_footer_branch
    %8 = sbr.rel target = $region3
  $region8: #{stegastamp_decoder_forward.18} parent=0 // loop_exit
    _

// kernel: stegastamp_decoder_forward.20
$region0: #{stegastamp_decoder_forward.20}
  #allocation0 [shape = 'u32[]', space=smem, size = 0x4, offset = 0x4, fixed_abs, tag = 'smem constant byte address 0x4 - core index']
  #allocation1 [shape = 'u32[144,128]{1,0:T(1,128)}', space=vmem, size = 0x12000, scoped, tag = 'internal scratch']
  %s0 = inlined_call_operand.vmem [shape: bf16[128,576], index: 0, kind: input, shape index: {}]
  %s1 = inlined_call_operand.vmem [shape: bf16[576,64], index: 1, kind: input, shape index: {}]
  %s2 = inlined_call_operand.vmem [shape: f32[1,64], index: 2, kind: input, shape index: {}]
  %s3 = inlined_call_operand.vmem [shape: bf16[128,64], index: 3, kind: output, shape index: {}]
  %s4 = sld [smem:[#allocation0]]
  $region22: #{stegastamp_decoder_forward.20} parent=0
    _
  %s6 = ssub.s32 1, %s4
  %s7 = scalar_select 0, %s6, %s4
  // Predicated region
  $region2: #{stegastamp_decoder_forward.20} parent=0 // pred_check
    _
  $region3: #{stegastamp_decoder_forward.20} parent=0 // pred_check_branch
    %9 = sbr.rel (0) target = $region5
  $region4: #{stegastamp_decoder_forward.20} parent=0 // pred_region
    _
  $region5: #{stegastamp_decoder_forward.20} parent=0 // pred_fallthru
    _
  // Predicated region
  $region6: #{stegastamp_decoder_forward.20} parent=0 // pred_check
    _
  $region7: #{stegastamp_decoder_forward.20} parent=0 // pred_check_branch
    %11 = sbr.rel (0) target = $region9
  $region8: #{stegastamp_decoder_forward.20} parent=0 // pred_region
    _
  $region9: #{stegastamp_decoder_forward.20} parent=0 // pred_fallthru
    _
  // Predicated region
  $region10: #{stegastamp_decoder_forward.20} parent=0 // pred_check
    _
  $region11: #{stegastamp_decoder_forward.20} parent=0 // pred_check_branch
    %13 = sbr.rel (0) target = $region13
  $region12: #{stegastamp_decoder_forward.20} parent=0 // pred_region
    _
  $region13: #{stegastamp_decoder_forward.20} parent=0 // pred_fallthru
    _
  %v15 = vld [vmem:[%s0] sm:$0xff]
  %v16 = vld [vmem:[%s0 + $0x8] sm:$0xff]
  %v17 = vld [vmem:[%s0 + $0x10] sm:$0xf]
  %v18 = vld [vmem:[%s0 + $0x14] sm:$0xff]
  %v19 = vld [vmem:[%s0 + $0x1c] sm:$0xff]
  %v20 = vld [vmem:[%s0 + $0x24] sm:$0xf]
  %v21 = vld [vmem:[%s0 + $0x28] sm:$0xff]
  %v22 = vld [vmem:[%s0 + $0x30] sm:$0xff]
  %v23 = vld [vmem:[%s0 + $0x38] sm:$0xf]
  %v24 = vld [vmem:[%s0 + $0x3c] sm:$0xff]
  %v25 = vld [vmem:[%s0 + $0x44] sm:$0xff]
  %v26 = vld [vmem:[%s0 + $0x4c] sm:$0xf]
  %v27 = vld [vmem:[%s0 + $0x50] sm:$0xff]
  %v28 = vld [vmem:[%s0 + $0x58] sm:$0xff]
  %v29 = vld [vmem:[%s0 + $0x60] sm:$0xf]
  %v30 = vld [vmem:[%s0 + $0x64] sm:$0xff]
  %v31 = vld [vmem:[%s0 + $0x6c] sm:$0xff]
  %v32 = vld [vmem:[%s0 + $0x74] sm:$0xf]
  %v33 = vld [vmem:[%s0 + $0x78] sm:$0xff]
  %v34 = vld [vmem:[%s0 + $0x80] sm:$0xff]
  %v35 = vld [vmem:[%s0 + $0x88] sm:$0xf]
  %v36 = vld [vmem:[%s0 + $0x8c] sm:$0xff]
  %v37 = vld [vmem:[%s0 + $0x94] sm:$0xff]
  %v38 = vld [vmem:[%s0 + $0x9c] sm:$0xf]
  %v39 = vld [vmem:[%s0 + $0xa0] sm:$0xff]
  %v40 = vld [vmem:[%s0 + $0xa8] sm:$0xff]
  %v41 = vld [vmem:[%s0 + $0xb0] sm:$0xf]
  %v42 = vld [vmem:[%s0 + $0xb4] sm:$0xff]
  %v43 = vld [vmem:[%s0 + $0xbc] sm:$0xff]
  %v44 = vld [vmem:[%s0 + $0xc4] sm:$0xf]
  %v45 = vld [vmem:[%s0 + $0xc8] sm:$0xff]
  %v46 = vld [vmem:[%s0 + $0xd0] sm:$0xff]
  %v47 = vld [vmem:[%s0 + $0xd8] sm:$0xf]
  %v48 = vld [vmem:[%s0 + $0xdc] sm:$0xff]
  %v49 = vld [vmem:[%s0 + $0xe4] sm:$0xff]
  %v50 = vld [vmem:[%s0 + $0xec] sm:$0xf]
  %v51 = vld [vmem:[%s0 + $0xf0] sm:$0xff]
  %v52 = vld [vmem:[%s0 + $0xf8] sm:$0xff]
  %v53 = vld [vmem:[%s0 + $0x100] sm:$0xf]
  %v54 = vld [vmem:[%s0 + $0x104] sm:$0xff]
  %v55 = vld [vmem:[%s0 + $0x10c] sm:$0xff]
  %v56 = vld [vmem:[%s0 + $0x114] sm:$0xf]
  %v57 = vld [vmem:[%s0 + $0x118] sm:$0xff]
  %v58 = vld [vmem:[%s0 + $0x120] sm:$0xff]
  %v59 = vld [vmem:[%s0 + $0x128] sm:$0xf]
  %v60 = vld [vmem:[%s0 + $0x12c] sm:$0xff]
  %v61 = vld [vmem:[%s0 + $0x134] sm:$0xff]
  %v62 = vld [vmem:[%s0 + $0x13c] sm:$0xf]
  %v63 = vld [vmem:[%s1] sm:$0xf]
  %v64 = vld [vmem:[%s1 + $0x4] sm:$0xf]
  %v65 = vld [vmem:[%s1 + $0x8] sm:$0xf]
  %v66 = vld [vmem:[%s1 + $0xc] sm:$0xf]
  %v67 = vld [vmem:[%s1 + $0x10] sm:$0xf]
  %v68 = vld [vmem:[%s1 + $0x14] sm:$0xf]
  %v69 = vld [vmem:[%s1 + $0x18] sm:$0xf]
  %v70 = vld [vmem:[%s1 + $0x1c] sm:$0xf]
  %v71 = vld [vmem:[%s1 + $0x20] sm:$0xf]
  %v72 = vld [vmem:[%s1 + $0x24] sm:$0xf]
  %v73 = vld [vmem:[%s1 + $0x28] sm:$0xf]
  %v74 = vld [vmem:[%s1 + $0x2c] sm:$0xf]
  %v75 = vld [vmem:[%s1 + $0x30] sm:$0xf]
  %v76 = vld [vmem:[%s1 + $0x34] sm:$0xf]
  %v77 = vld [vmem:[%s1 + $0x38] sm:$0xf]
  %v78 = vld [vmem:[%s1 + $0x3c] sm:$0xf]
  %v79 = vld [vmem:[%s1 + $0x40] sm:$0xf]
  %v80 = vld [vmem:[%s1 + $0x44] sm:$0xf]
  %v81 = vld [vmem:[%s1 + $0x48] sm:$0xf]
  %v82 = vld [vmem:[%s1 + $0x4c] sm:$0xf]
  %v83 = vld [vmem:[%s1 + $0x50] sm:$0xf]
  %v84 = vld [vmem:[%s1 + $0x54] sm:$0xf]
  %v85 = vld [vmem:[%s1 + $0x58] sm:$0xf]
  %v86 = vld [vmem:[%s1 + $0x5c] sm:$0xf]
  %v87 = vld [vmem:[%s1 + $0x60] sm:$0xf]
  %v88 = vld [vmem:[%s1 + $0x64] sm:$0xf]
  %v89 = vld [vmem:[%s1 + $0x68] sm:$0xf]
  %v90 = vld [vmem:[%s1 + $0x6c] sm:$0xf]
  %v91 = vld [vmem:[%s1 + $0x70] sm:$0xf]
  %v92 = vld [vmem:[%s1 + $0x74] sm:$0xf]
  %v93 = vld [vmem:[%s1 + $0x78] sm:$0xf]
  %v94 = vld [vmem:[%s1 + $0x7c] sm:$0xf]
  %v95 = vld [vmem:[%s1 + $0x80] sm:$0xf]
  %v96 = vld [vmem:[%s1 + $0x84] sm:$0xf]
  %v97 = vld [vmem:[%s1 + $0x88] sm:$0xf]
  %v98 = vld [vmem:[%s1 + $0x8c] sm:$0xf]
  %v99 = vld [vmem:[%s1 + $0x90] sm:$0xf]
  %v100 = vld [vmem:[%s1 + $0x94] sm:$0xf]
  %v101 = vld [vmem:[%s1 + $0x98] sm:$0xf]
  %v102 = vld [vmem:[%s1 + $0x9c] sm:$0xf]
  %v103 = vld [vmem:[%s1 + $0xa0] sm:$0xf]
  %v104 = vld [vmem:[%s1 + $0xa4] sm:$0xf]
  %v105 = vld [vmem:[%s1 + $0xa8] sm:$0xf]
  %v106 = vld [vmem:[%s1 + $0xac] sm:$0xf]
  %v107 = vld [vmem:[%s1 + $0xb0] sm:$0xf]
  %v108 = vld [vmem:[%s1 + $0xb4] sm:$0xf]
  %v109 = vld [vmem:[%s1 + $0xb8] sm:$0xf]
  %v110 = vld [vmem:[%s1 + $0xbc] sm:$0xf]
  %v111 = vld [vmem:[%s1 + $0xc0] sm:$0xf]
  %v112 = vld [vmem:[%s1 + $0xc4] sm:$0xf]
  %v113 = vld [vmem:[%s1 + $0xc8] sm:$0xf]
  %v114 = vld [vmem:[%s1 + $0xcc] sm:$0xf]
  %v115 = vld [vmem:[%s1 + $0xd0] sm:$0xf]
  %v116 = vld [vmem:[%s1 + $0xd4] sm:$0xf]
  %v117 = vld [vmem:[%s1 + $0xd8] sm:$0xf]
  %v118 = vld [vmem:[%s1 + $0xdc] sm:$0xf]
  %v119 = vld [vmem:[%s1 + $0xe0] sm:$0xf]
  %v120 = vld [vmem:[%s1 + $0xe4] sm:$0xf]
  %v121 = vld [vmem:[%s1 + $0xe8] sm:$0xf]
  %v122 = vld [vmem:[%s1 + $0xec] sm:$0xf]
  %v123 = vld [vmem:[%s1 + $0xf0] sm:$0xf]
  %v124 = vld [vmem:[%s1 + $0xf4] sm:$0xf]
  %v125 = vld [vmem:[%s1 + $0xf8] sm:$0xf]
  %v126 = vld [vmem:[%s1 + $0xfc] sm:$0xf]
  %v127 = vld [vmem:[%s1 + $0x100] sm:$0xf]
  %v128 = vld [vmem:[%s1 + $0x104] sm:$0xf]
  %v129 = vld [vmem:[%s1 + $0x108] sm:$0xf]
  %v130 = vld [vmem:[%s1 + $0x10c] sm:$0xf]
  %v131 = vld [vmem:[%s1 + $0x110] sm:$0xf]
  %v132 = vld [vmem:[%s1 + $0x114] sm:$0xf]
  %v133 = vld [vmem:[%s1 + $0x118] sm:$0xf]
  %v134 = vld [vmem:[%s1 + $0x11c] sm:$0xf]
  %v135 = vld [vmem:[%s2] sm:$0x1]
  %v137 = vlaneseq
  %v138 = vshrl.u32 %v137, 7
  %v139 = vsub.s32 0, %v138
  %v140 = vrot.slane %v135, %v139
  %v190 = vunpack.c.l.b16 %v15
  %v191 = vunpack.c.h.b16 %v15
  %v192 = vunpack.c.l.b16 %v16
  %v193 = vunpack.c.h.b16 %v16
  %v194 = vunpack.c.l.b16 %v17
  %v195 = vunpack.c.l.b16 %v18
  %v196 = vunpack.c.h.b16 %v18
  %v197 = vunpack.c.l.b16 %v19
  %v198 = vunpack.c.h.b16 %v19
  %v199 = vunpack.c.l.b16 %v20
  %v200 = vunpack.c.l.b16 %v21
  %v201 = vunpack.c.h.b16 %v21
  %v202 = vunpack.c.l.b16 %v22
  %v203 = vunpack.c.h.b16 %v22
  %v204 = vunpack.c.l.b16 %v23
  %v205 = vunpack.c.l.b16 %v24
  %v206 = vunpack.c.h.b16 %v24
  %v207 = vunpack.c.l.b16 %v25
  %v208 = vunpack.c.h.b16 %v25
  %v209 = vunpack.c.l.b16 %v26
  %v210 = vunpack.c.l.b16 %v27
  %v211 = vunpack.c.h.b16 %v27
  %v212 = vunpack.c.l.b16 %v28
  %v213 = vunpack.c.h.b16 %v28
  %v214 = vunpack.c.l.b16 %v29
  %v215 = vunpack.c.l.b16 %v30
  %v216 = vunpack.c.h.b16 %v30
  %v217 = vunpack.c.l.b16 %v31
  %v218 = vunpack.c.h.b16 %v31
  %v219 = vunpack.c.l.b16 %v32
  %v220 = vunpack.c.l.b16 %v33
  %v221 = vunpack.c.h.b16 %v33
  %v222 = vunpack.c.l.b16 %v34
  %v223 = vunpack.c.h.b16 %v34
  %v224 = vunpack.c.l.b16 %v35
  %v225 = vunpack.c.l.b16 %v36
  %v226 = vunpack.c.h.b16 %v36
  %v227 = vunpack.c.l.b16 %v37
  %v228 = vunpack.c.h.b16 %v37
  %v229 = vunpack.c.l.b16 %v38
  %v230 = vunpack.c.l.b16 %v39
  %v231 = vunpack.c.h.b16 %v39
  %v232 = vunpack.c.l.b16 %v40
  %v233 = vunpack.c.h.b16 %v40
  %v234 = vunpack.c.l.b16 %v41
  %v235 = vunpack.c.l.b16 %v42
  %v236 = vunpack.c.h.b16 %v42
  %v237 = vunpack.c.l.b16 %v43
  %v238 = vunpack.c.h.b16 %v43
  %v239 = vunpack.c.l.b16 %v44
  %v240 = vunpack.c.l.b16 %v45
  %v241 = vunpack.c.h.b16 %v45
  %v242 = vunpack.c.l.b16 %v46
  %v243 = vunpack.c.h.b16 %v46
  %v244 = vunpack.c.l.b16 %v47
  %v245 = vunpack.c.l.b16 %v48
  %v246 = vunpack.c.h.b16 %v48
  %v247 = vunpack.c.l.b16 %v49
  %v248 = vunpack.c.h.b16 %v49
  %v249 = vunpack.c.l.b16 %v50
  %v250 = vunpack.c.l.b16 %v51
  %v251 = vunpack.c.h.b16 %v51
  %v252 = vunpack.c.l.b16 %v52
  %v253 = vunpack.c.h.b16 %v52
  %v254 = vunpack.c.l.b16 %v53
  %v255 = vunpack.c.l.b16 %v54
  %v256 = vunpack.c.h.b16 %v54
  %v257 = vunpack.c.l.b16 %v55
  %v258 = vunpack.c.h.b16 %v55
  %v259 = vunpack.c.l.b16 %v56
  %v260 = vunpack.c.l.b16 %v57
  %v261 = vunpack.c.h.b16 %v57
  %v262 = vunpack.c.l.b16 %v58
  %v263 = vunpack.c.h.b16 %v58
  %v264 = vunpack.c.l.b16 %v59
  %v265 = vunpack.c.l.b16 %v60
  %v266 = vunpack.c.h.b16 %v60
  %v267 = vunpack.c.l.b16 %v61
  %v268 = vunpack.c.h.b16 %v61
  %v269 = vunpack.c.l.b16 %v62
  %v270 = vpack.c.b16 %v195, %v190
  %v271 = vpack.c.b16 %v196, %v191
  %v272 = vpack.c.b16 %v197, %v192
  %v273 = vpack.c.b16 %v198, %v193
  %v274 = vpack.c.b16 %v199, %v194
  %v275 = vpack.c.b16 %v205, %v200
  %v276 = vpack.c.b16 %v206, %v201
  %v277 = vpack.c.b16 %v207, %v202
  %v278 = vpack.c.b16 %v208, %v203
  %v279 = vpack.c.b16 %v209, %v204
  %v280 = vpack.c.b16 %v215, %v210
  %v281 = vpack.c.b16 %v216, %v211
  %v282 = vpack.c.b16 %v217, %v212
  %v283 = vpack.c.b16 %v218, %v213
  %v284 = vpack.c.b16 %v219, %v214
  %v285 = vpack.c.b16 %v225, %v220
  %v286 = vpack.c.b16 %v226, %v221
  %v287 = vpack.c.b16 %v227, %v222
  %v288 = vpack.c.b16 %v228, %v223
  %v289 = vpack.c.b16 %v229, %v224
  %v290 = vpack.c.b16 %v235, %v230
  %v291 = vpack.c.b16 %v236, %v231
  %v292 = vpack.c.b16 %v237, %v232
  %v293 = vpack.c.b16 %v238, %v233
  %v294 = vpack.c.b16 %v239, %v234
  %v295 = vpack.c.b16 %v245, %v240
  %v296 = vpack.c.b16 %v246, %v241
  %v297 = vpack.c.b16 %v247, %v242
  %v298 = vpack.c.b16 %v248, %v243
  %v299 = vpack.c.b16 %v249, %v244
  %v300 = vpack.c.b16 %v255, %v250
  %v301 = vpack.c.b16 %v256, %v251
  %v302 = vpack.c.b16 %v257, %v252
  %v303 = vpack.c.b16 %v258, %v253
  %v304 = vpack.c.b16 %v259, %v254
  %v305 = vpack.c.b16 %v265, %v260
  %v306 = vpack.c.b16 %v266, %v261
  %v307 = vpack.c.b16 %v267, %v262
  %v308 = vpack.c.b16 %v268, %v263
  %v309 = vpack.c.b16 %v269, %v264
  %v414 = vunpack.c.l.b16 %v63
  %v415 = vunpack.c.l.b16 %v64
  %v416 = vunpack.c.l.b16 %v65
  %v417 = vunpack.c.l.b16 %v66
  %v418 = vunpack.c.l.b16 %v67
  %v419 = vunpack.c.l.b16 %v68
  %v420 = vunpack.c.l.b16 %v69
  %v421 = vunpack.c.l.b16 %v70
  %v422 = vunpack.c.l.b16 %v71
  %v423 = vunpack.c.l.b16 %v72
  %v424 = vunpack.c.l.b16 %v73
  %v425 = vunpack.c.l.b16 %v74
  %v426 = vunpack.c.l.b16 %v75
  %v427 = vunpack.c.l.b16 %v76
  %v428 = vunpack.c.l.b16 %v77
  %v429 = vunpack.c.l.b16 %v78
  %v430 = vunpack.c.l.b16 %v79
  %v431 = vunpack.c.l.b16 %v80
  %v432 = vunpack.c.l.b16 %v81
  %v433 = vunpack.c.l.b16 %v82
  %v434 = vunpack.c.l.b16 %v83
  %v435 = vunpack.c.l.b16 %v84
  %v436 = vunpack.c.l.b16 %v85
  %v437 = vunpack.c.l.b16 %v86
  %v438 = vunpack.c.l.b16 %v87
  %v439 = vunpack.c.l.b16 %v88
  %v440 = vunpack.c.l.b16 %v89
  %v441 = vunpack.c.l.b16 %v90
  %v442 = vunpack.c.l.b16 %v91
  %v443 = vunpack.c.l.b16 %v92
  %v444 = vunpack.c.l.b16 %v93
  %v445 = vunpack.c.l.b16 %v94
  %v446 = vunpack.c.l.b16 %v95
  %v447 = vunpack.c.l.b16 %v96
  %v448 = vunpack.c.l.b16 %v97
  %v449 = vunpack.c.l.b16 %v98
  %v450 = vunpack.c.l.b16 %v99
  %v451 = vunpack.c.l.b16 %v100
  %v452 = vunpack.c.l.b16 %v101
  %v453 = vunpack.c.l.b16 %v102
  %v454 = vunpack.c.l.b16 %v103
  %v455 = vunpack.c.l.b16 %v104
  %v456 = vunpack.c.l.b16 %v105
  %v457 = vunpack.c.l.b16 %v106
  %v458 = vunpack.c.l.b16 %v107
  %v459 = vunpack.c.l.b16 %v108
  %v460 = vunpack.c.l.b16 %v109
  %v461 = vunpack.c.l.b16 %v110
  %v462 = vunpack.c.l.b16 %v111
  %v463 = vunpack.c.l.b16 %v112
  %v464 = vunpack.c.l.b16 %v113
  %v465 = vunpack.c.l.b16 %v114
  %v466 = vunpack.c.l.b16 %v115
  %v467 = vunpack.c.l.b16 %v116
  %v468 = vunpack.c.l.b16 %v117
  %v469 = vunpack.c.l.b16 %v118
  %v470 = vunpack.c.l.b16 %v119
  %v471 = vunpack.c.l.b16 %v120
  %v472 = vunpack.c.l.b16 %v121
  %v473 = vunpack.c.l.b16 %v122
  %v474 = vunpack.c.l.b16 %v123
  %v475 = vunpack.c.l.b16 %v124
  %v476 = vunpack.c.l.b16 %v125
  %v477 = vunpack.c.l.b16 %v126
  %v478 = vunpack.c.l.b16 %v127
  %v479 = vunpack.c.l.b16 %v128
  %v480 = vunpack.c.l.b16 %v129
  %v481 = vunpack.c.l.b16 %v130
  %v482 = vunpack.c.l.b16 %v131
  %v483 = vunpack.c.l.b16 %v132
  %v484 = vunpack.c.l.b16 %v133
  %v485 = vunpack.c.l.b16 %v134
  %v486 = vpack.c.b16 %v415, %v414
  %v487 = vpack.c.b16 %v417, %v416
  %v488 = vpack.c.b16 %v419, %v418
  %v489 = vpack.c.b16 %v421, %v420
  %v490 = vpack.c.b16 %v423, %v422
  %v491 = vpack.c.b16 %v425, %v424
  %v492 = vpack.c.b16 %v427, %v426
  %v493 = vpack.c.b16 %v429, %v428
  %v494 = vpack.c.b16 %v431, %v430
  %v495 = vpack.c.b16 %v433, %v432
  %v496 = vpack.c.b16 %v435, %v434
  %v497 = vpack.c.b16 %v437, %v436
  %v498 = vpack.c.b16 %v439, %v438
  %v499 = vpack.c.b16 %v441, %v440
  %v500 = vpack.c.b16 %v443, %v442
  %v501 = vpack.c.b16 %v445, %v444
  %v502 = vpack.c.b16 %v447, %v446
  %v503 = vpack.c.b16 %v449, %v448
  %v504 = vpack.c.b16 %v451, %v450
  %v505 = vpack.c.b16 %v453, %v452
  %v506 = vpack.c.b16 %v455, %v454
  %v507 = vpack.c.b16 %v457, %v456
  %v508 = vpack.c.b16 %v459, %v458
  %v509 = vpack.c.b16 %v461, %v460
  %v510 = vpack.c.b16 %v463, %v462
  %v511 = vpack.c.b16 %v465, %v464
  %v512 = vpack.c.b16 %v467, %v466
  %v513 = vpack.c.b16 %v469, %v468
  %v514 = vpack.c.b16 %v471, %v470
  %v515 = vpack.c.b16 %v473, %v472
  %v516 = vpack.c.b16 %v475, %v474
  %v517 = vpack.c.b16 %v477, %v476
  %v518 = vpack.c.b16 %v479, %v478
  %v519 = vpack.c.b16 %v481, %v480
  %v520 = vpack.c.b16 %v483, %v482
  %v521 = vpack.c.b16 %v485, %v484
  %vm558 = vcmask 523264
  %v560 = vsel %vm558, %v274, 0
  %v563 = vsel %vm558, %v279, 0
  %v566 = vsel %vm558, %v284, 0
  %v569 = vsel %vm558, %v289, 0
  %v572 = vsel %vm558, %v294, 0
  %v575 = vsel %vm558, %v299, 0
  %v578 = vsel %vm558, %v304, 0
  %v581 = vsel %vm558, %v309, 0
  %583 = vmatprep.subr.bf16.mxu0 0
  %584 = vmatpush1.bf16.msra.mxu0 %v486
  %585 = vmatprep.subr.bf16.mxu0 0
  %586 = vmatpush1.bf16.msra.mxu0 %v487
  %587 = vmatprep.subr.bf16.mxu0 0
  %588 = vmatpush1.bf16.msra.mxu0 %v488
  %589 = vmatprep.subr.bf16.mxu0 0
  %590 = vmatpush1.bf16.msra.mxu0 %v489
  %591 = vmatprep.subr.bf16.mxu0 0
  %592 = vmatpush1.bf16.msra.mxu0 %v490
  %593 = vmatprep.subr.bf16.mxu0 0
  %594 = vmatpush1.bf16.msra.mxu0 %v491
  %595 = vmatprep.subr.bf16.mxu0 0
  %596 = vmatpush1.bf16.msra.mxu0 %v492
  %597 = vmatprep.subr.bf16.mxu0 0
  %598 = vmatpush1.bf16.msra.mxu0 %v493
  %599 = vmatprep.subr.bf16.mxu0 0
  %600 = vmatpush1.bf16.msra.mxu0 %v494
  %601 = vmatprep.subr.bf16.mxu0 0
  %602 = vmatpush1.bf16.msra.mxu0 %v495
  %603 = vmatprep.subr.bf16.mxu0 0
  %604 = vmatpush1.bf16.msra.mxu0 %v496
  %605 = vmatprep.subr.bf16.mxu0 0
  %606 = vmatpush1.bf16.msra.mxu0 %v497
  %607 = vmatprep.subr.bf16.mxu0 0
  %608 = vmatpush1.bf16.msra.mxu0 %v498
  %609 = vmatprep.subr.bf16.mxu0 0
  %610 = vmatpush1.bf16.msra.mxu0 %v499
  %611 = vmatprep.subr.bf16.mxu0 0
  %612 = vmatpush1.bf16.msra.mxu0 %v500
  %613 = vmatprep.subr.bf16.mxu0 0
  %614 = vmatpush1.bf16.msra.mxu0 %v501
  %615 = vmatprep.mubr.bf16.mxu0 %v271
  %616 = vmatmul.mubr.bf16.gmra.mrb[0].mxu0 %v270
  %v617 = vpop.f32.mrb[0].mxu0
  %v618 = vadd.f32 %v140, %v617
  %v619 = vpop.f32.mrb[0].mxu0
  %v620 = vpop.f32.mrb[0].mxu0
  %v621 = vadd.f32 %v140, %v620
  %v622 = vpop.f32.mrb[0].mxu0
  %623 = vmatprep.mubr.bf16.mxu0 %v276
  %624 = vmatmul.mubr.bf16.gmra.mrb[0].mxu0 %v275
  %v625 = vpop.f32.mrb[0].mxu0
  %v626 = vadd.f32 %v140, %v625
  %v627 = vpop.f32.mrb[0].mxu0
  %v628 = vpop.f32.mrb[0].mxu0
  %v629 = vadd.f32 %v140, %v628
  %v630 = vpop.f32.mrb[0].mxu0
  %631 = vmatprep.mubr.bf16.mxu0 %v281
  %632 = vmatmul.mubr.bf16.gmra.mrb[0].mxu0 %v280
  %v633 = vpop.f32.mrb[0].mxu0
  %v634 = vadd.f32 %v140, %v633
  %v635 = vpop.f32.mrb[0].mxu0
  %v636 = vpop.f32.mrb[0].mxu0
  %v637 = vadd.f32 %v140, %v636
  %v638 = vpop.f32.mrb[0].mxu0
  %639 = vmatprep.mubr.bf16.mxu0 %v286
  %640 = vmatmul.mubr.bf16.gmra.mrb[0].mxu0 %v285
  %v641 = vpop.f32.mrb[0].mxu0
  %v642 = vadd.f32 %v140, %v641
  %v643 = vpop.f32.mrb[0].mxu0
  %v644 = vpop.f32.mrb[0].mxu0
  %v645 = vadd.f32 %v140, %v644
  %v646 = vpop.f32.mrb[0].mxu0
  %647 = vmatprep.mubr.bf16.mxu0 %v291
  %648 = vmatmul.mubr.bf16.gmra.mrb[0].mxu0 %v290
  %v649 = vpop.f32.mrb[0].mxu0
  %v650 = vadd.f32 %v140, %v649
  %v651 = vpop.f32.mrb[0].mxu0
  %v652 = vpop.f32.mrb[0].mxu0
  %v653 = vadd.f32 %v140, %v652
  %v654 = vpop.f32.mrb[0].mxu0
  %655 = vmatprep.mubr.bf16.mxu0 %v296
  %656 = vmatmul.mubr.bf16.gmra.mrb[0].mxu0 %v295
  %v657 = vpop.f32.mrb[0].mxu0
  %v658 = vadd.f32 %v140, %v657
  %v659 = vpop.f32.mrb[0].mxu0
  %v660 = vpop.f32.mrb[0].mxu0
  %v661 = vadd.f32 %v140, %v660
  %v662 = vpop.f32.mrb[0].mxu0
  %663 = vmatprep.mubr.bf16.mxu0 %v301
  %664 = vmatmul.mubr.bf16.gmra.mrb[0].mxu0 %v300
  %v665 = vpop.f32.mrb[0].mxu0
  %v666 = vadd.f32 %v140, %v665
  %v667 = vpop.f32.mrb[0].mxu0
  %v668 = vpop.f32.mrb[0].mxu0
  %v669 = vadd.f32 %v140, %v668
  %v670 = vpop.f32.mrb[0].mxu0
  %671 = vmatprep.mubr.bf16.mxu0 %v306
  %672 = vmatmul.mubr.bf16.gmra.mrb[0].mxu0 %v305
  %v673 = vpop.f32.mrb[0].mxu0
  %v674 = vadd.f32 %v140, %v673
  %v675 = vpop.f32.mrb[0].mxu0
  %v676 = vpop.f32.mrb[0].mxu0
  %v677 = vadd.f32 %v140, %v676
  %v678 = vpop.f32.mrb[0].mxu0
  %679 = vdwg.mxu0
  %680 = vmatprep.subr.bf16.mxu0 0
  %681 = vmatpush1.bf16.msra.mxu0 %v502
  %682 = vmatprep.subr.bf16.mxu0 0
  %683 = vmatpush1.bf16.msra.mxu0 %v503
  %684 = vmatprep.subr.bf16.mxu0 0
  %685 = vmatpush1.bf16.msra.mxu0 %v504
  %686 = vmatprep.subr.bf16.mxu0 0
  %687 = vmatpush1.bf16.msra.mxu0 %v505
  %688 = vmatprep.subr.bf16.mxu0 0
  %689 = vmatpush1.bf16.msra.mxu0 %v506
  %690 = vmatprep.subr.bf16.mxu0 0
  %691 = vmatpush1.bf16.msra.mxu0 %v507
  %692 = vmatprep.subr.bf16.mxu0 0
  %693 = vmatpush1.bf16.msra.mxu0 %v508
  %694 = vmatprep.subr.bf16.mxu0 0
  %695 = vmatpush1.bf16.msra.mxu0 %v509
  %696 = vmatprep.subr.bf16.mxu0 0
  %697 = vmatpush1.bf16.msra.mxu0 %v510
  %698 = vmatprep.subr.bf16.mxu0 0
  %699 = vmatpush1.bf16.msra.mxu0 %v511
  %700 = vmatprep.subr.bf16.mxu0 0
  %701 = vmatpush1.bf16.msra.mxu0 %v512
  %702 = vmatprep.subr.bf16.mxu0 0
  %703 = vmatpush1.bf16.msra.mxu0 %v513
  %704 = vmatprep.subr.bf16.mxu0 0
  %705 = vmatpush1.bf16.msra.mxu0 %v514
  %706 = vmatprep.subr.bf16.mxu0 0
  %707 = vmatpush1.bf16.msra.mxu0 %v515
  %708 = vmatprep.subr.bf16.mxu0 0
  %709 = vmatpush1.bf16.msra.mxu0 %v516
  %710 = vmatprep.subr.bf16.mxu0 0
  %711 = vmatpush1.bf16.msra.mxu0 %v517
  %712 = vmatprep.mubr.bf16.mxu0 %v273
  %713 = vmatmul.mubr.bf16.gmra.mrb[0].mxu0 %v272
  %v714 = vpop.f32.mrb[0].mxu0
  %v715 = vadd.f32 %v618, %v714
  %v716 = vpop.f32.mrb[0].mxu0
  %v717 = vpop.f32.mrb[0].mxu0
  %v718 = vadd.f32 %v621, %v717
  %v719 = vpop.f32.mrb[0].mxu0
  %720 = vmatprep.mubr.bf16.mxu0 %v278
  %721 = vmatmul.mubr.bf16.gmra.mrb[0].mxu0 %v277
  %v722 = vpop.f32.mrb[0].mxu0
  %v723 = vadd.f32 %v626, %v722
  %v724 = vpop.f32.mrb[0].mxu0
  %v725 = vpop.f32.mrb[0].mxu0
  %v726 = vadd.f32 %v629, %v725
  %v727 = vpop.f32.mrb[0].mxu0
  %728 = vmatprep.mubr.bf16.mxu0 %v283
  %729 = vmatmul.mubr.bf16.gmra.mrb[0].mxu0 %v282
  %v730 = vpop.f32.mrb[0].mxu0
  %v731 = vadd.f32 %v634, %v730
  %v732 = vpop.f32.mrb[0].mxu0
  %v733 = vpop.f32.mrb[0].mxu0
  %v734 = vadd.f32 %v637, %v733
  %v735 = vpop.f32.mrb[0].mxu0
  %736 = vmatprep.mubr.bf16.mxu0 %v288
  %737 = vmatmul.mubr.bf16.gmra.mrb[0].mxu0 %v287
  %v738 = vpop.f32.mrb[0].mxu0
  %v739 = vadd.f32 %v642, %v738
  %v740 = vpop.f32.mrb[0].mxu0
  %v741 = vpop.f32.mrb[0].mxu0
  %v742 = vadd.f32 %v645, %v741
  %v743 = vpop.f32.mrb[0].mxu0
  %744 = vmatprep.mubr.bf16.mxu0 %v293
  %745 = vmatmul.mubr.bf16.gmra.mrb[0].mxu0 %v292
  %v746 = vpop.f32.mrb[0].mxu0
  %v747 = vadd.f32 %v650, %v746
  %v748 = vpop.f32.mrb[0].mxu0
  %v749 = vpop.f32.mrb[0].mxu0
  %v750 = vadd.f32 %v653, %v749
  %v751 = vpop.f32.mrb[0].mxu0
  %752 = vmatprep.mubr.bf16.mxu0 %v298
  %753 = vmatmul.mubr.bf16.gmra.mrb[0].mxu0 %v297
  %v754 = vpop.f32.mrb[0].mxu0
  %v755 = vadd.f32 %v658, %v754
  %v756 = vpop.f32.mrb[0].mxu0
  %v757 = vpop.f32.mrb[0].mxu0
  %v758 = vadd.f32 %v661, %v757
  %v759 = vpop.f32.mrb[0].mxu0
  %760 = vmatprep.mubr.bf16.mxu0 %v303
  %761 = vmatmul.mubr.bf16.gmra.mrb[0].mxu0 %v302
  %v762 = vpop.f32.mrb[0].mxu0
  %v763 = vadd.f32 %v666, %v762
  %v764 = vpop.f32.mrb[0].mxu0
  %v765 = vpop.f32.mrb[0].mxu0
  %v766 = vadd.f32 %v669, %v765
  %v767 = vpop.f32.mrb[0].mxu0
  %768 = vmatprep.mubr.bf16.mxu0 %v308
  %769 = vmatmul.mubr.bf16.gmra.mrb[0].mxu0 %v307
  %v770 = vpop.f32.mrb[0].mxu0
  %v771 = vadd.f32 %v674, %v770
  %v772 = vpop.f32.mrb[0].mxu0
  %v773 = vpop.f32.mrb[0].mxu0
  %v774 = vadd.f32 %v677, %v773
  %v775 = vpop.f32.mrb[0].mxu0
  %776 = vdwg.mxu0
  %777 = vmatprep.subr.bf16.mxu0 0
  %778 = vmatpush1.bf16.msra.mxu0 %v518
  %779 = vmatprep.subr.bf16.mxu0 0
  %780 = vmatpush1.bf16.msra.mxu0 %v519
  %781 = vmatprep.subr.bf16.mxu0 0
  %782 = vmatpush1.bf16.msra.mxu0 %v520
  %783 = vmatprep.subr.bf16.mxu0 0
  %784 = vmatpush1.bf16.msra.mxu0 %v521
  %785 = vmatprep.subr.bf16.mxu0 0
  %786 = vmatpush1.bf16.msra.mxu0 0
  %787 = vmatprep.subr.bf16.mxu0 0
  %788 = vmatpush1.bf16.msra.mxu0 0
  %789 = vmatprep.subr.bf16.mxu0 0
  %790 = vmatpush1.bf16.msra.mxu0 0
  %791 = vmatprep.subr.bf16.mxu0 0
  %792 = vmatpush1.bf16.msra.mxu0 0
  %793 = vmatprep.subr.bf16.mxu0 0
  %794 = vmatpush1.bf16.msra.mxu0 0
  %795 = vmatprep.subr.bf16.mxu0 0
  %796 = vmatpush1.bf16.msra.mxu0 0
  %797 = vmatprep.subr.bf16.mxu0 0
  %798 = vmatpush1.bf16.msra.mxu0 0
  %799 = vmatprep.subr.bf16.mxu0 0
  %800 = vmatpush1.bf16.msra.mxu0 0
  %801 = vmatprep.subr.bf16.mxu0 0
  %802 = vmatpush1.bf16.msra.mxu0 0
  %803 = vmatprep.subr.bf16.mxu0 0
  %804 = vmatpush1.bf16.msra.mxu0 0
  %805 = vmatprep.subr.bf16.mxu0 0
  %806 = vmatpush1.bf16.msra.mxu0 0
  %807 = vmatprep.subr.bf16.mxu0 0
  %808 = vmatpush1.bf16.msra.mxu0 0
  %809 = vmatprep.mubr.bf16.mxu0 0
  %810 = vmatmul.mubr.bf16.gmra.mrb[0].mxu0 %v560
  %v811 = vpop.f32.mrb[0].mxu0
  %v812 = vadd.f32 %v715, %v811
  %v813 = vpop.f32.mrb[0].mxu0
  %v814 = vpop.f32.mrb[0].mxu0
  %v815 = vadd.f32 %v718, %v814
  %v816 = vpop.f32.mrb[0].mxu0
  %817 = vmatprep.mubr.bf16.mxu0 0
  %818 = vmatmul.mubr.bf16.gmra.mrb[0].mxu0 %v563
  %v819 = vpop.f32.mrb[0].mxu0
  %v820 = vadd.f32 %v723, %v819
  %v821 = vpop.f32.mrb[0].mxu0
  %v822 = vpop.f32.mrb[0].mxu0
  %v823 = vadd.f32 %v726, %v822
  %v824 = vpop.f32.mrb[0].mxu0
  %825 = vmatprep.mubr.bf16.mxu0 0
  %826 = vmatmul.mubr.bf16.gmra.mrb[0].mxu0 %v566
  %v827 = vpop.f32.mrb[0].mxu0
  %v828 = vadd.f32 %v731, %v827
  %v829 = vpop.f32.mrb[0].mxu0
  %v830 = vpop.f32.mrb[0].mxu0
  %v831 = vadd.f32 %v734, %v830
  %v832 = vpop.f32.mrb[0].mxu0
  %833 = vmatprep.mubr.bf16.mxu0 0
  %834 = vmatmul.mubr.bf16.gmra.mrb[0].mxu0 %v569
  %v835 = vpop.f32.mrb[0].mxu0
  %v836 = vadd.f32 %v739, %v835
  %v837 = vpop.f32.mrb[0].mxu0
  %v838 = vpop.f32.mrb[0].mxu0
  %v839 = vadd.f32 %v742, %v838
  %v840 = vpop.f32.mrb[0].mxu0
  %841 = vmatprep.mubr.bf16.mxu0 0
  %842 = vmatmul.mubr.bf16.gmra.mrb[0].mxu0 %v572
  %v843 = vpop.f32.mrb[0].mxu0
  %v844 = vadd.f32 %v747, %v843
  %v845 = vpop.f32.mrb[0].mxu0
  %v846 = vpop.f32.mrb[0].mxu0
  %v847 = vadd.f32 %v750, %v846
  %v848 = vpop.f32.mrb[0].mxu0
  %849 = vmatprep.mubr.bf16.mxu0 0
  %850 = vmatmul.mubr.bf16.gmra.mrb[0].mxu0 %v575
  %v851 = vpop.f32.mrb[0].mxu0
  %v852 = vadd.f32 %v755, %v851
  %v853 = vpop.f32.mrb[0].mxu0
  %v854 = vpop.f32.mrb[0].mxu0
  %v855 = vadd.f32 %v758, %v854
  %v856 = vpop.f32.mrb[0].mxu0
  %857 = vmatprep.mubr.bf16.mxu0 0
  %858 = vmatmul.mubr.bf16.gmra.mrb[0].mxu0 %v578
  %v859 = vpop.f32.mrb[0].mxu0
  %v860 = vadd.f32 %v763, %v859
  %v861 = vpop.f32.mrb[0].mxu0
  %v862 = vpop.f32.mrb[0].mxu0
  %v863 = vadd.f32 %v766, %v862
  %v864 = vpop.f32.mrb[0].mxu0
  %865 = vmatprep.mubr.bf16.mxu0 0
  %866 = vmatmul.mubr.bf16.gmra.mrb[0].mxu0 %v581
  %v867 = vpop.f32.mrb[0].mxu0
  %v868 = vadd.f32 %v771, %v867
  %v869 = vpop.f32.mrb[0].mxu0
  %v870 = vpop.f32.mrb[0].mxu0
  %v871 = vadd.f32 %v774, %v870
  %v872 = vpop.f32.mrb[0].mxu0
  %873 = vdwg.mxu0
  %v874 = vmax.f32 %v812, 0.0
  %v875 = vmax.f32 %v815, 0.0
  %v876 = vmax.f32 %v820, 0.0
  %v877 = vmax.f32 %v823, 0.0
  %v878 = vmax.f32 %v828, 0.0
  %v879 = vmax.f32 %v831, 0.0
  %v880 = vmax.f32 %v836, 0.0
  %v881 = vmax.f32 %v839, 0.0
  %v882 = vmax.f32 %v844, 0.0
  %v883 = vmax.f32 %v847, 0.0
  %v884 = vmax.f32 %v852, 0.0
  %v885 = vmax.f32 %v855, 0.0
  %v886 = vmax.f32 %v860, 0.0
  %v887 = vmax.f32 %v863, 0.0
  %v888 = vmax.f32 %v868, 0.0
  %v889 = vmax.f32 %v871, 0.0
  %v890 = vpack.c.bf16 %v875, %v874
  %v891 = vpack.c.bf16 %v877, %v876
  %v892 = vpack.c.bf16 %v879, %v878
  %v893 = vpack.c.bf16 %v881, %v880
  %v894 = vpack.c.bf16 %v883, %v882
  %v895 = vpack.c.bf16 %v885, %v884
  %v896 = vpack.c.bf16 %v887, %v886
  %v897 = vpack.c.bf16 %v889, %v888
  %v906 = vunpack.c.l.b16 %v890
  %v907 = vunpack.c.h.b16 %v890
  %v908 = vunpack.c.l.b16 %v891
  %v909 = vunpack.c.h.b16 %v891
  %v910 = vunpack.c.l.b16 %v892
  %v911 = vunpack.c.h.b16 %v892
  %v912 = vunpack.c.l.b16 %v893
  %v913 = vunpack.c.h.b16 %v893
  %v914 = vunpack.c.l.b16 %v894
  %v915 = vunpack.c.h.b16 %v894
  %v916 = vunpack.c.l.b16 %v895
  %v917 = vunpack.c.h.b16 %v895
  %v918 = vunpack.c.l.b16 %v896
  %v919 = vunpack.c.h.b16 %v896
  %v920 = vunpack.c.l.b16 %v897
  %v921 = vunpack.c.h.b16 %v897
  %v922 = vpack.c.b16 %v906, %v906
  %v923 = vpack.c.b16 %v907, %v907
  %v924 = vpack.c.b16 %v908, %v908
  %v925 = vpack.c.b16 %v909, %v909
  %v926 = vpack.c.b16 %v910, %v910
  %v927 = vpack.c.b16 %v911, %v911
  %v928 = vpack.c.b16 %v912, %v912
  %v929 = vpack.c.b16 %v913, %v913
  %v930 = vpack.c.b16 %v914, %v914
  %v931 = vpack.c.b16 %v915, %v915
  %v932 = vpack.c.b16 %v916, %v916
  %v933 = vpack.c.b16 %v917, %v917
  %v934 = vpack.c.b16 %v918, %v918
  %v935 = vpack.c.b16 %v919, %v919
  %v936 = vpack.c.b16 %v920, %v920
  %v937 = vpack.c.b16 %v921, %v921
  %vm954 = vcmask 519168
  %955 = vst.msk [vmem:[%s3] sm:$0xf] %vm954, %v922
  %956 = vst.msk [vmem:[%s3 + $0x4] sm:$0xf] %vm954, %v923
  %957 = vst.msk [vmem:[%s3 + $0x8] sm:$0xf] %vm954, %v924
  %958 = vst.msk [vmem:[%s3 + $0xc] sm:$0xf] %vm954, %v925
  %959 = vst.msk [vmem:[%s3 + $0x10] sm:$0xf] %vm954, %v926
  %960 = vst.msk [vmem:[%s3 + $0x14] sm:$0xf] %vm954, %v927
  %961 = vst.msk [vmem:[%s3 + $0x18] sm:$0xf] %vm954, %v928
  %962 = vst.msk [vmem:[%s3 + $0x1c] sm:$0xf] %vm954, %v929
  %963 = vst.msk [vmem:[%s3 + $0x20] sm:$0xf] %vm954, %v930
  %964 = vst.msk [vmem:[%s3 + $0x24] sm:$0xf] %vm954, %v931
  %965 = vst.msk [vmem:[%s3 + $0x28] sm:$0xf] %vm954, %v932
  %966 = vst.msk [vmem:[%s3 + $0x2c] sm:$0xf] %vm954, %v933
  %967 = vst.msk [vmem:[%s3 + $0x30] sm:$0xf] %vm954, %v934
  %968 = vst.msk [vmem:[%s3 + $0x34] sm:$0xf] %vm954, %v935
  %969 = vst.msk [vmem:[%s3 + $0x38] sm:$0xf] %vm954, %v936
  %970 = vst.msk [vmem:[%s3 + $0x3c] sm:$0xf] %vm954, %v937
  // Predicated region
  $region14: #{stegastamp_decoder_forward.20} parent=0 // pred_check
    _
  $region15: #{stegastamp_decoder_forward.20} parent=0 // pred_check_branch
    %972 = sbr.rel (0) target = $region17
  $region16: #{stegastamp_decoder_forward.20} parent=0 // pred_region
    _
  $region17: #{stegastamp_decoder_forward.20} parent=0 // pred_fallthru
    _
  // Predicated region
  $region18: #{stegastamp_decoder_forward.20} parent=0 // pred_check
    _
  $region19: #{stegastamp_decoder_forward.20} parent=0 // pred_check_branch
    %974 = sbr.rel (0) target = $region21
  $region20: #{stegastamp_decoder_forward.20} parent=0 // pred_region
    _
  $region21: #{stegastamp_decoder_forward.20} parent=0 // pred_fallthru
    _

// kernel: stegastamp_decoder_forward.21
$region0: #{stegastamp_decoder_forward.21}
  #allocation0 [shape = 'u32[]', space=smem, size = 0x4, offset = 0x4, fixed_abs, tag = 'smem constant byte address 0x4 - core index']
  #allocation1 [shape = 'u32[144,128]{1,0:T(1,128)}', space=vmem, size = 0x12000, scoped, tag = 'internal scratch']
  %s0 = inlined_call_operand.vmem [shape: bf16[32,576], index: 0, kind: input, shape index: {}]
  %s1 = inlined_call_operand.vmem [shape: bf16[576,64], index: 1, kind: input, shape index: {}]
  %s2 = inlined_call_operand.vmem [shape: f32[1,64], index: 2, kind: input, shape index: {}]
  %s3 = inlined_call_operand.vmem [shape: bf16[32,64], index: 3, kind: output, shape index: {}]
  %s4 = sld [smem:[#allocation0]]
  $region22: #{stegastamp_decoder_forward.21} parent=0
    _
  %s6 = ssub.s32 1, %s4
  %s7 = scalar_select 0, %s6, %s4
  // Predicated region
  $region2: #{stegastamp_decoder_forward.21} parent=0 // pred_check
    _
  $region3: #{stegastamp_decoder_forward.21} parent=0 // pred_check_branch
    %9 = sbr.rel (0) target = $region5
  $region4: #{stegastamp_decoder_forward.21} parent=0 // pred_region
    _
  $region5: #{stegastamp_decoder_forward.21} parent=0 // pred_fallthru
    _
  // Predicated region
  $region6: #{stegastamp_decoder_forward.21} parent=0 // pred_check
    _
  $region7: #{stegastamp_decoder_forward.21} parent=0 // pred_check_branch
    %11 = sbr.rel (0) target = $region9
  $region8: #{stegastamp_decoder_forward.21} parent=0 // pred_region
    _
  $region9: #{stegastamp_decoder_forward.21} parent=0 // pred_fallthru
    _
  // Predicated region
  $region10: #{stegastamp_decoder_forward.21} parent=0 // pred_check
    _
  $region11: #{stegastamp_decoder_forward.21} parent=0 // pred_check_branch
    %13 = sbr.rel (0) target = $region13
  $region12: #{stegastamp_decoder_forward.21} parent=0 // pred_region
    _
  $region13: #{stegastamp_decoder_forward.21} parent=0 // pred_fallthru
    _
  %v15 = vld [vmem:[%s0] sm:$0xff]
  %v16 = vld [vmem:[%s0 + $0x8] sm:$0xff]
  %v17 = vld [vmem:[%s0 + $0x10] sm:$0xf]
  %v18 = vld [vmem:[%s0 + $0x14] sm:$0xff]
  %v19 = vld [vmem:[%s0 + $0x1c] sm:$0xff]
  %v20 = vld [vmem:[%s0 + $0x24] sm:$0xf]
  %v21 = vld [vmem:[%s0 + $0x28] sm:$0xff]
  %v22 = vld [vmem:[%s0 + $0x30] sm:$0xff]
  %v23 = vld [vmem:[%s0 + $0x38] sm:$0xf]
  %v24 = vld [vmem:[%s0 + $0x3c] sm:$0xff]
  %v25 = vld [vmem:[%s0 + $0x44] sm:$0xff]
  %v26 = vld [vmem:[%s0 + $0x4c] sm:$0xf]
  %v27 = vld [vmem:[%s1] sm:$0xf]
  %v28 = vld [vmem:[%s1 + $0x4] sm:$0xf]
  %v29 = vld [vmem:[%s1 + $0x8] sm:$0xf]
  %v30 = vld [vmem:[%s1 + $0xc] sm:$0xf]
  %v31 = vld [vmem:[%s1 + $0x10] sm:$0xf]
  %v32 = vld [vmem:[%s1 + $0x14] sm:$0xf]
  %v33 = vld [vmem:[%s1 + $0x18] sm:$0xf]
  %v34 = vld [vmem:[%s1 + $0x1c] sm:$0xf]
  %v35 = vld [vmem:[%s1 + $0x20] sm:$0xf]
  %v36 = vld [vmem:[%s1 + $0x24] sm:$0xf]
  %v37 = vld [vmem:[%s1 + $0x28] sm:$0xf]
  %v38 = vld [vmem:[%s1 + $0x2c] sm:$0xf]
  %v39 = vld [vmem:[%s1 + $0x30] sm:$0xf]
  %v40 = vld [vmem:[%s1 + $0x34] sm:$0xf]
  %v41 = vld [vmem:[%s1 + $0x38] sm:$0xf]
  %v42 = vld [vmem:[%s1 + $0x3c] sm:$0xf]
  %v43 = vld [vmem:[%s1 + $0x40] sm:$0xf]
  %v44 = vld [vmem:[%s1 + $0x44] sm:$0xf]
  %v45 = vld [vmem:[%s1 + $0x48] sm:$0xf]
  %v46 = vld [vmem:[%s1 + $0x4c] sm:$0xf]
  %v47 = vld [vmem:[%s1 + $0x50] sm:$0xf]
  %v48 = vld [vmem:[%s1 + $0x54] sm:$0xf]
  %v49 = vld [vmem:[%s1 + $0x58] sm:$0xf]
  %v50 = vld [vmem:[%s1 + $0x5c] sm:$0xf]
  %v51 = vld [vmem:[%s1 + $0x60] sm:$0xf]
  %v52 = vld [vmem:[%s1 + $0x64] sm:$0xf]
  %v53 = vld [vmem:[%s1 + $0x68] sm:$0xf]
  %v54 = vld [vmem:[%s1 + $0x6c] sm:$0xf]
  %v55 = vld [vmem:[%s1 + $0x70] sm:$0xf]
  %v56 = vld [vmem:[%s1 + $0x74] sm:$0xf]
  %v57 = vld [vmem:[%s1 + $0x78] sm:$0xf]
  %v58 = vld [vmem:[%s1 + $0x7c] sm:$0xf]
  %v59 = vld [vmem:[%s1 + $0x80] sm:$0xf]
  %v60 = vld [vmem:[%s1 + $0x84] sm:$0xf]
  %v61 = vld [vmem:[%s1 + $0x88] sm:$0xf]
  %v62 = vld [vmem:[%s1 + $0x8c] sm:$0xf]
  %v63 = vld [vmem:[%s1 + $0x90] sm:$0xf]
  %v64 = vld [vmem:[%s1 + $0x94] sm:$0xf]
  %v65 = vld [vmem:[%s1 + $0x98] sm:$0xf]
  %v66 = vld [vmem:[%s1 + $0x9c] sm:$0xf]
  %v67 = vld [vmem:[%s1 + $0xa0] sm:$0xf]
  %v68 = vld [vmem:[%s1 + $0xa4] sm:$0xf]
  %v69 = vld [vmem:[%s1 + $0xa8] sm:$0xf]
  %v70 = vld [vmem:[%s1 + $0xac] sm:$0xf]
  %v71 = vld [vmem:[%s1 + $0xb0] sm:$0xf]
  %v72 = vld [vmem:[%s1 + $0xb4] sm:$0xf]
  %v73 = vld [vmem:[%s1 + $0xb8] sm:$0xf]
  %v74 = vld [vmem:[%s1 + $0xbc] sm:$0xf]
  %v75 = vld [vmem:[%s1 + $0xc0] sm:$0xf]
  %v76 = vld [vmem:[%s1 + $0xc4] sm:$0xf]
  %v77 = vld [vmem:[%s1 + $0xc8] sm:$0xf]
  %v78 = vld [vmem:[%s1 + $0xcc] sm:$0xf]
  %v79 = vld [vmem:[%s1 + $0xd0] sm:$0xf]
  %v80 = vld [vmem:[%s1 + $0xd4] sm:$0xf]
  %v81 = vld [vmem:[%s1 + $0xd8] sm:$0xf]
  %v82 = vld [vmem:[%s1 + $0xdc] sm:$0xf]
  %v83 = vld [vmem:[%s1 + $0xe0] sm:$0xf]
  %v84 = vld [vmem:[%s1 + $0xe4] sm:$0xf]
  %v85 = vld [vmem:[%s1 + $0xe8] sm:$0xf]
  %v86 = vld [vmem:[%s1 + $0xec] sm:$0xf]
  %v87 = vld [vmem:[%s1 + $0xf0] sm:$0xf]
  %v88 = vld [vmem:[%s1 + $0xf4] sm:$0xf]
  %v89 = vld [vmem:[%s1 + $0xf8] sm:$0xf]
  %v90 = vld [vmem:[%s1 + $0xfc] sm:$0xf]
  %v91 = vld [vmem:[%s1 + $0x100] sm:$0xf]
  %v92 = vld [vmem:[%s1 + $0x104] sm:$0xf]
  %v93 = vld [vmem:[%s1 + $0x108] sm:$0xf]
  %v94 = vld [vmem:[%s1 + $0x10c] sm:$0xf]
  %v95 = vld [vmem:[%s1 + $0x110] sm:$0xf]
  %v96 = vld [vmem:[%s1 + $0x114] sm:$0xf]
  %v97 = vld [vmem:[%s1 + $0x118] sm:$0xf]
  %v98 = vld [vmem:[%s1 + $0x11c] sm:$0xf]
  %v99 = vld [vmem:[%s2] sm:$0x1]
  %v101 = vlaneseq
  %v102 = vshrl.u32 %v101, 7
  %v103 = vsub.s32 0, %v102
  %v104 = vrot.slane %v99, %v103
  %v118 = vunpack.c.l.b16 %v15
  %v119 = vunpack.c.h.b16 %v15
  %v120 = vunpack.c.l.b16 %v16
  %v121 = vunpack.c.h.b16 %v16
  %v122 = vunpack.c.l.b16 %v17
  %v123 = vunpack.c.l.b16 %v18
  %v124 = vunpack.c.h.b16 %v18
  %v125 = vunpack.c.l.b16 %v19
  %v126 = vunpack.c.h.b16 %v19
  %v127 = vunpack.c.l.b16 %v20
  %v128 = vunpack.c.l.b16 %v21
  %v129 = vunpack.c.h.b16 %v21
  %v130 = vunpack.c.l.b16 %v22
  %v131 = vunpack.c.h.b16 %v22
  %v132 = vunpack.c.l.b16 %v23
  %v133 = vunpack.c.l.b16 %v24
  %v134 = vunpack.c.h.b16 %v24
  %v135 = vunpack.c.l.b16 %v25
  %v136 = vunpack.c.h.b16 %v25
  %v137 = vunpack.c.l.b16 %v26
  %v138 = vpack.c.b16 %v123, %v118
  %v139 = vpack.c.b16 %v124, %v119
  %v140 = vpack.c.b16 %v125, %v120
  %v141 = vpack.c.b16 %v126, %v121
  %v142 = vpack.c.b16 %v127, %v122
  %v143 = vpack.c.b16 %v133, %v128
  %v144 = vpack.c.b16 %v134, %v129
  %v145 = vpack.c.b16 %v135, %v130
  %v146 = vpack.c.b16 %v136, %v131
  %v147 = vpack.c.b16 %v137, %v132
  %v228 = vunpack.c.l.b16 %v27
  %v229 = vunpack.c.l.b16 %v28
  %v230 = vunpack.c.l.b16 %v29
  %v231 = vunpack.c.l.b16 %v30
  %v232 = vunpack.c.l.b16 %v31
  %v233 = vunpack.c.l.b16 %v32
  %v234 = vunpack.c.l.b16 %v33
  %v235 = vunpack.c.l.b16 %v34
  %v236 = vunpack.c.l.b16 %v35
  %v237 = vunpack.c.l.b16 %v36
  %v238 = vunpack.c.l.b16 %v37
  %v239 = vunpack.c.l.b16 %v38
  %v240 = vunpack.c.l.b16 %v39
  %v241 = vunpack.c.l.b16 %v40
  %v242 = vunpack.c.l.b16 %v41
  %v243 = vunpack.c.l.b16 %v42
  %v244 = vunpack.c.l.b16 %v43
  %v245 = vunpack.c.l.b16 %v44
  %v246 = vunpack.c.l.b16 %v45
  %v247 = vunpack.c.l.b16 %v46
  %v248 = vunpack.c.l.b16 %v47
  %v249 = vunpack.c.l.b16 %v48
  %v250 = vunpack.c.l.b16 %v49
  %v251 = vunpack.c.l.b16 %v50
  %v252 = vunpack.c.l.b16 %v51
  %v253 = vunpack.c.l.b16 %v52
  %v254 = vunpack.c.l.b16 %v53
  %v255 = vunpack.c.l.b16 %v54
  %v256 = vunpack.c.l.b16 %v55
  %v257 = vunpack.c.l.b16 %v56
  %v258 = vunpack.c.l.b16 %v57
  %v259 = vunpack.c.l.b16 %v58
  %v260 = vunpack.c.l.b16 %v59
  %v261 = vunpack.c.l.b16 %v60
  %v262 = vunpack.c.l.b16 %v61
  %v263 = vunpack.c.l.b16 %v62
  %v264 = vunpack.c.l.b16 %v63
  %v265 = vunpack.c.l.b16 %v64
  %v266 = vunpack.c.l.b16 %v65
  %v267 = vunpack.c.l.b16 %v66
  %v268 = vunpack.c.l.b16 %v67
  %v269 = vunpack.c.l.b16 %v68
  %v270 = vunpack.c.l.b16 %v69
  %v271 = vunpack.c.l.b16 %v70
  %v272 = vunpack.c.l.b16 %v71
  %v273 = vunpack.c.l.b16 %v72
  %v274 = vunpack.c.l.b16 %v73
  %v275 = vunpack.c.l.b16 %v74
  %v276 = vunpack.c.l.b16 %v75
  %v277 = vunpack.c.l.b16 %v76
  %v278 = vunpack.c.l.b16 %v77
  %v279 = vunpack.c.l.b16 %v78
  %v280 = vunpack.c.l.b16 %v79
  %v281 = vunpack.c.l.b16 %v80
  %v282 = vunpack.c.l.b16 %v81
  %v283 = vunpack.c.l.b16 %v82
  %v284 = vunpack.c.l.b16 %v83
  %v285 = vunpack.c.l.b16 %v84
  %v286 = vunpack.c.l.b16 %v85
  %v287 = vunpack.c.l.b16 %v86
  %v288 = vunpack.c.l.b16 %v87
  %v289 = vunpack.c.l.b16 %v88
  %v290 = vunpack.c.l.b16 %v89
  %v291 = vunpack.c.l.b16 %v90
  %v292 = vunpack.c.l.b16 %v91
  %v293 = vunpack.c.l.b16 %v92
  %v294 = vunpack.c.l.b16 %v93
  %v295 = vunpack.c.l.b16 %v94
  %v296 = vunpack.c.l.b16 %v95
  %v297 = vunpack.c.l.b16 %v96
  %v298 = vunpack.c.l.b16 %v97
  %v299 = vunpack.c.l.b16 %v98
  %v300 = vpack.c.b16 %v229, %v228
  %v301 = vpack.c.b16 %v231, %v230
  %v302 = vpack.c.b16 %v233, %v232
  %v303 = vpack.c.b16 %v235, %v234
  %v304 = vpack.c.b16 %v237, %v236
  %v305 = vpack.c.b16 %v239, %v238
  %v306 = vpack.c.b16 %v241, %v240
  %v307 = vpack.c.b16 %v243, %v242
  %v308 = vpack.c.b16 %v245, %v244
  %v309 = vpack.c.b16 %v247, %v246
  %v310 = vpack.c.b16 %v249, %v248
  %v311 = vpack.c.b16 %v251, %v250
  %v312 = vpack.c.b16 %v253, %v252
  %v313 = vpack.c.b16 %v255, %v254
  %v314 = vpack.c.b16 %v257, %v256
  %v315 = vpack.c.b16 %v259, %v258
  %v316 = vpack.c.b16 %v261, %v260
  %v317 = vpack.c.b16 %v263, %v262
  %v318 = vpack.c.b16 %v265, %v264
  %v319 = vpack.c.b16 %v267, %v266
  %v320 = vpack.c.b16 %v269, %v268
  %v321 = vpack.c.b16 %v271, %v270
  %v322 = vpack.c.b16 %v273, %v272
  %v323 = vpack.c.b16 %v275, %v274
  %v324 = vpack.c.b16 %v277, %v276
  %v325 = vpack.c.b16 %v279, %v278
  %v326 = vpack.c.b16 %v281, %v280
  %v327 = vpack.c.b16 %v283, %v282
  %v328 = vpack.c.b16 %v285, %v284
  %v329 = vpack.c.b16 %v287, %v286
  %v330 = vpack.c.b16 %v289, %v288
  %v331 = vpack.c.b16 %v291, %v290
  %v332 = vpack.c.b16 %v293, %v292
  %v333 = vpack.c.b16 %v295, %v294
  %v334 = vpack.c.b16 %v297, %v296
  %v335 = vpack.c.b16 %v299, %v298
  %vm372 = vcmask 523264
  %v374 = vsel %vm372, %v142, 0
  %v377 = vsel %vm372, %v147, 0
  %379 = vmatprep.subr.bf16.mxu0 0
  %380 = vmatpush1.bf16.msra.mxu0 %v300
  %381 = vmatprep.subr.bf16.mxu0 0
  %382 = vmatpush1.bf16.msra.mxu0 %v301
  %383 = vmatprep.subr.bf16.mxu0 0
  %384 = vmatpush1.bf16.msra.mxu0 %v302
  %385 = vmatprep.subr.bf16.mxu0 0
  %386 = vmatpush1.bf16.msra.mxu0 %v303
  %387 = vmatprep.subr.bf16.mxu0 0
  %388 = vmatpush1.bf16.msra.mxu0 %v304
  %389 = vmatprep.subr.bf16.mxu0 0
  %390 = vmatpush1.bf16.msra.mxu0 %v305
  %391 = vmatprep.subr.bf16.mxu0 0
  %392 = vmatpush1.bf16.msra.mxu0 %v306
  %393 = vmatprep.subr.bf16.mxu0 0
  %394 = vmatpush1.bf16.msra.mxu0 %v307
  %395 = vmatprep.subr.bf16.mxu0 0
  %396 = vmatpush1.bf16.msra.mxu0 %v308
  %397 = vmatprep.subr.bf16.mxu0 0
  %398 = vmatpush1.bf16.msra.mxu0 %v309
  %399 = vmatprep.subr.bf16.mxu0 0
  %400 = vmatpush1.bf16.msra.mxu0 %v310
  %401 = vmatprep.subr.bf16.mxu0 0
  %402 = vmatpush1.bf16.msra.mxu0 %v311
  %403 = vmatprep.subr.bf16.mxu0 0
  %404 = vmatpush1.bf16.msra.mxu0 %v312
  %405 = vmatprep.subr.bf16.mxu0 0
  %406 = vmatpush1.bf16.msra.mxu0 %v313
  %407 = vmatprep.subr.bf16.mxu0 0
  %408 = vmatpush1.bf16.msra.mxu0 %v314
  %409 = vmatprep.subr.bf16.mxu0 0
  %410 = vmatpush1.bf16.msra.mxu0 %v315
  %411 = vmatprep.mubr.bf16.mxu0 %v139
  %412 = vmatmul.mubr.bf16.gmra.mrb[0].mxu0 %v138
  %v413 = vpop.f32.mrb[0].mxu0
  %v414 = vadd.f32 %v104, %v413
  %v415 = vpop.f32.mrb[0].mxu0
  %v416 = vpop.f32.mrb[0].mxu0
  %v417 = vadd.f32 %v104, %v416
  %v418 = vpop.f32.mrb[0].mxu0
  %419 = vmatprep.mubr.bf16.mxu0 %v144
  %420 = vmatmul.mubr.bf16.gmra.mrb[0].mxu0 %v143
  %v421 = vpop.f32.mrb[0].mxu0
  %v422 = vadd.f32 %v104, %v421
  %v423 = vpop.f32.mrb[0].mxu0
  %v424 = vpop.f32.mrb[0].mxu0
  %v425 = vadd.f32 %v104, %v424
  %v426 = vpop.f32.mrb[0].mxu0
  %427 = vdwg.mxu0
  %428 = vmatprep.subr.bf16.mxu0 0
  %429 = vmatpush1.bf16.msra.mxu0 %v316
  %430 = vmatprep.subr.bf16.mxu0 0
  %431 = vmatpush1.bf16.msra.mxu0 %v317
  %432 = vmatprep.subr.bf16.mxu0 0
  %433 = vmatpush1.bf16.msra.mxu0 %v318
  %434 = vmatprep.subr.bf16.mxu0 0
  %435 = vmatpush1.bf16.msra.mxu0 %v319
  %436 = vmatprep.subr.bf16.mxu0 0
  %437 = vmatpush1.bf16.msra.mxu0 %v320
  %438 = vmatprep.subr.bf16.mxu0 0
  %439 = vmatpush1.bf16.msra.mxu0 %v321
  %440 = vmatprep.subr.bf16.mxu0 0
  %441 = vmatpush1.bf16.msra.mxu0 %v322
  %442 = vmatprep.subr.bf16.mxu0 0
  %443 = vmatpush1.bf16.msra.mxu0 %v323
  %444 = vmatprep.subr.bf16.mxu0 0
  %445 = vmatpush1.bf16.msra.mxu0 %v324
  %446 = vmatprep.subr.bf16.mxu0 0
  %447 = vmatpush1.bf16.msra.mxu0 %v325
  %448 = vmatprep.subr.bf16.mxu0 0
  %449 = vmatpush1.bf16.msra.mxu0 %v326
  %450 = vmatprep.subr.bf16.mxu0 0
  %451 = vmatpush1.bf16.msra.mxu0 %v327
  %452 = vmatprep.subr.bf16.mxu0 0
  %453 = vmatpush1.bf16.msra.mxu0 %v328
  %454 = vmatprep.subr.bf16.mxu0 0
  %455 = vmatpush1.bf16.msra.mxu0 %v329
  %456 = vmatprep.subr.bf16.mxu0 0
  %457 = vmatpush1.bf16.msra.mxu0 %v330
  %458 = vmatprep.subr.bf16.mxu0 0
  %459 = vmatpush1.bf16.msra.mxu0 %v331
  %460 = vmatprep.mubr.bf16.mxu0 %v141
  %461 = vmatmul.mubr.bf16.gmra.mrb[0].mxu0 %v140
  %v462 = vpop.f32.mrb[0].mxu0
  %v463 = vadd.f32 %v414, %v462
  %v464 = vpop.f32.mrb[0].mxu0
  %v465 = vpop.f32.mrb[0].mxu0
  %v466 = vadd.f32 %v417, %v465
  %v467 = vpop.f32.mrb[0].mxu0
  %468 = vmatprep.mubr.bf16.mxu0 %v146
  %469 = vmatmul.mubr.bf16.gmra.mrb[0].mxu0 %v145
  %v470 = vpop.f32.mrb[0].mxu0
  %v471 = vadd.f32 %v422, %v470
  %v472 = vpop.f32.mrb[0].mxu0
  %v473 = vpop.f32.mrb[0].mxu0
  %v474 = vadd.f32 %v425, %v473
  %v475 = vpop.f32.mrb[0].mxu0
  %476 = vdwg.mxu0
  %477 = vmatprep.subr.bf16.mxu0 0
  %478 = vmatpush1.bf16.msra.mxu0 %v332
  %479 = vmatprep.subr.bf16.mxu0 0
  %480 = vmatpush1.bf16.msra.mxu0 %v333
  %481 = vmatprep.subr.bf16.mxu0 0
  %482 = vmatpush1.bf16.msra.mxu0 %v334
  %483 = vmatprep.subr.bf16.mxu0 0
  %484 = vmatpush1.bf16.msra.mxu0 %v335
  %485 = vmatprep.subr.bf16.mxu0 0
  %486 = vmatpush1.bf16.msra.mxu0 0
  %487 = vmatprep.subr.bf16.mxu0 0
  %488 = vmatpush1.bf16.msra.mxu0 0
  %489 = vmatprep.subr.bf16.mxu0 0
  %490 = vmatpush1.bf16.msra.mxu0 0
  %491 = vmatprep.subr.bf16.mxu0 0
  %492 = vmatpush1.bf16.msra.mxu0 0
  %493 = vmatprep.subr.bf16.mxu0 0
  %494 = vmatpush1.bf16.msra.mxu0 0
  %495 = vmatprep.subr.bf16.mxu0 0
  %496 = vmatpush1.bf16.msra.mxu0 0
  %497 = vmatprep.subr.bf16.mxu0 0
  %498 = vmatpush1.bf16.msra.mxu0 0
  %499 = vmatprep.subr.bf16.mxu0 0
  %500 = vmatpush1.bf16.msra.mxu0 0
  %501 = vmatprep.subr.bf16.mxu0 0
  %502 = vmatpush1.bf16.msra.mxu0 0
  %503 = vmatprep.subr.bf16.mxu0 0
  %504 = vmatpush1.bf16.msra.mxu0 0
  %505 = vmatprep.subr.bf16.mxu0 0
  %506 = vmatpush1.bf16.msra.mxu0 0
  %507 = vmatprep.subr.bf16.mxu0 0
  %508 = vmatpush1.bf16.msra.mxu0 0
  %509 = vmatprep.mubr.bf16.mxu0 0
  %510 = vmatmul.mubr.bf16.gmra.mrb[0].mxu0 %v374
  %v511 = vpop.f32.mrb[0].mxu0
  %v512 = vadd.f32 %v463, %v511
  %v513 = vpop.f32.mrb[0].mxu0
  %v514 = vpop.f32.mrb[0].mxu0
  %v515 = vadd.f32 %v466, %v514
  %v516 = vpop.f32.mrb[0].mxu0
  %517 = vmatprep.mubr.bf16.mxu0 0
  %518 = vmatmul.mubr.bf16.gmra.mrb[0].mxu0 %v377
  %v519 = vpop.f32.mrb[0].mxu0
  %v520 = vadd.f32 %v471, %v519
  %v521 = vpop.f32.mrb[0].mxu0
  %v522 = vpop.f32.mrb[0].mxu0
  %v523 = vadd.f32 %v474, %v522
  %v524 = vpop.f32.mrb[0].mxu0
  %525 = vdwg.mxu0
  %v526 = vmax.f32 %v512, 0.0
  %v527 = vmax.f32 %v515, 0.0
  %v528 = vmax.f32 %v520, 0.0
  %v529 = vmax.f32 %v523, 0.0
  %v530 = vpack.c.bf16 %v527, %v526
  %v531 = vpack.c.bf16 %v529, %v528
  %v534 = vunpack.c.l.b16 %v530
  %v535 = vunpack.c.h.b16 %v530
  %v536 = vunpack.c.l.b16 %v531
  %v537 = vunpack.c.h.b16 %v531
  %v538 = vpack.c.b16 %v534, %v534
  %v539 = vpack.c.b16 %v535, %v535
  %v540 = vpack.c.b16 %v536, %v536
  %v541 = vpack.c.b16 %v537, %v537
  %vm546 = vcmask 519168
  %547 = vst.msk [vmem:[%s3] sm:$0xf] %vm546, %v538
  %548 = vst.msk [vmem:[%s3 + $0x4] sm:$0xf] %vm546, %v539
  %549 = vst.msk [vmem:[%s3 + $0x8] sm:$0xf] %vm546, %v540
  %550 = vst.msk [vmem:[%s3 + $0xc] sm:$0xf] %vm546, %v541
  // Predicated region
  $region14: #{stegastamp_decoder_forward.21} parent=0 // pred_check
    _
  $region15: #{stegastamp_decoder_forward.21} parent=0 // pred_check_branch
    %552 = sbr.rel (0) target = $region17
  $region16: #{stegastamp_decoder_forward.21} parent=0 // pred_region
    _
  $region17: #{stegastamp_decoder_forward.21} parent=0 // pred_fallthru
    _
  // Predicated region
  $region18: #{stegastamp_decoder_forward.21} parent=0 // pred_check
    _
  $region19: #{stegastamp_decoder_forward.21} parent=0 // pred_check_branch
    %554 = sbr.rel (0) target = $region21
  $region20: #{stegastamp_decoder_forward.21} parent=0 // pred_region
    _
  $region21: #{stegastamp_decoder_forward.21} parent=0 // pred_fallthru
    _

// kernel: stegastamp_decoder_forward.22
$region0: #{stegastamp_decoder_forward.22}
  #allocation0 [shape = 'u32[]', space=smem, size = 0x4, offset = 0x4, fixed_abs, tag = 'smem constant byte address 0x4 - core index']
  #allocation1 [shape = 'u32[144,128]{1,0:T(1,128)}', space=vmem, size = 0x12000, scoped, tag = 'internal scratch']
  %s0 = inlined_call_operand.vmem [shape: bf16[8,576], index: 0, kind: input, shape index: {}]
  %s1 = inlined_call_operand.vmem [shape: bf16[576,128], index: 1, kind: input, shape index: {}]
  %s2 = inlined_call_operand.vmem [shape: f32[1,128], index: 2, kind: input, shape index: {}]
  %s3 = inlined_call_operand.vmem [shape: bf16[8,128], index: 3, kind: output, shape index: {}]
  %s4 = sld [smem:[#allocation0]]
  $region22: #{stegastamp_decoder_forward.22} parent=0
    _
  %s6 = ssub.s32 1, %s4
  %s7 = scalar_select 0, %s6, %s4
  // Predicated region
  $region2: #{stegastamp_decoder_forward.22} parent=0 // pred_check
    _
  $region3: #{stegastamp_decoder_forward.22} parent=0 // pred_check_branch
    %9 = sbr.rel (0) target = $region5
  $region4: #{stegastamp_decoder_forward.22} parent=0 // pred_region
    _
  $region5: #{stegastamp_decoder_forward.22} parent=0 // pred_fallthru
    _
  // Predicated region
  $region6: #{stegastamp_decoder_forward.22} parent=0 // pred_check
    _
  $region7: #{stegastamp_decoder_forward.22} parent=0 // pred_check_branch
    %11 = sbr.rel (0) target = $region9
  $region8: #{stegastamp_decoder_forward.22} parent=0 // pred_region
    _
  $region9: #{stegastamp_decoder_forward.22} parent=0 // pred_fallthru
    _
  // Predicated region
  $region10: #{stegastamp_decoder_forward.22} parent=0 // pred_check
    _
  $region11: #{stegastamp_decoder_forward.22} parent=0 // pred_check_branch
    %13 = sbr.rel (0) target = $region13
  $region12: #{stegastamp_decoder_forward.22} parent=0 // pred_region
    _
  $region13: #{stegastamp_decoder_forward.22} parent=0 // pred_fallthru
    _
  %v15 = vld [vmem:[%s0] sm:$0xff]
  %v16 = vld [vmem:[%s0 + $0x8] sm:$0xff]
  %v17 = vld [vmem:[%s0 + $0x10] sm:$0xf]
  %v18 = vld [vmem:[%s1] sm:$0xf]
  %v19 = vld [vmem:[%s1 + $0x4] sm:$0xf]
  %v20 = vld [vmem:[%s1 + $0x8] sm:$0xf]
  %v21 = vld [vmem:[%s1 + $0xc] sm:$0xf]
  %v22 = vld [vmem:[%s1 + $0x10] sm:$0xf]
  %v23 = vld [vmem:[%s1 + $0x14] sm:$0xf]
  %v24 = vld [vmem:[%s1 + $0x18] sm:$0xf]
  %v25 = vld [vmem:[%s1 + $0x1c] sm:$0xf]
  %v26 = vld [vmem:[%s1 + $0x20] sm:$0xf]
  %v27 = vld [vmem:[%s1 + $0x24] sm:$0xf]
  %v28 = vld [vmem:[%s1 + $0x28] sm:$0xf]
  %v29 = vld [vmem:[%s1 + $0x2c] sm:$0xf]
  %v30 = vld [vmem:[%s1 + $0x30] sm:$0xf]
  %v31 = vld [vmem:[%s1 + $0x34] sm:$0xf]
  %v32 = vld [vmem:[%s1 + $0x38] sm:$0xf]
  %v33 = vld [vmem:[%s1 + $0x3c] sm:$0xf]
  %v34 = vld [vmem:[%s1 + $0x40] sm:$0xf]
  %v35 = vld [vmem:[%s1 + $0x44] sm:$0xf]
  %v36 = vld [vmem:[%s1 + $0x48] sm:$0xf]
  %v37 = vld [vmem:[%s1 + $0x4c] sm:$0xf]
  %v38 = vld [vmem:[%s1 + $0x50] sm:$0xf]
  %v39 = vld [vmem:[%s1 + $0x54] sm:$0xf]
  %v40 = vld [vmem:[%s1 + $0x58] sm:$0xf]
  %v41 = vld [vmem:[%s1 + $0x5c] sm:$0xf]
  %v42 = vld [vmem:[%s1 + $0x60] sm:$0xf]
  %v43 = vld [vmem:[%s1 + $0x64] sm:$0xf]
  %v44 = vld [vmem:[%s1 + $0x68] sm:$0xf]
  %v45 = vld [vmem:[%s1 + $0x6c] sm:$0xf]
  %v46 = vld [vmem:[%s1 + $0x70] sm:$0xf]
  %v47 = vld [vmem:[%s1 + $0x74] sm:$0xf]
  %v48 = vld [vmem:[%s1 + $0x78] sm:$0xf]
  %v49 = vld [vmem:[%s1 + $0x7c] sm:$0xf]
  %v50 = vld [vmem:[%s1 + $0x80] sm:$0xf]
  %v51 = vld [vmem:[%s1 + $0x84] sm:$0xf]
  %v52 = vld [vmem:[%s1 + $0x88] sm:$0xf]
  %v53 = vld [vmem:[%s1 + $0x8c] sm:$0xf]
  %v54 = vld [vmem:[%s1 + $0x90] sm:$0xf]
  %v55 = vld [vmem:[%s1 + $0x94] sm:$0xf]
  %v56 = vld [vmem:[%s1 + $0x98] sm:$0xf]
  %v57 = vld [vmem:[%s1 + $0x9c] sm:$0xf]
  %v58 = vld [vmem:[%s1 + $0xa0] sm:$0xf]
  %v59 = vld [vmem:[%s1 + $0xa4] sm:$0xf]
  %v60 = vld [vmem:[%s1 + $0xa8] sm:$0xf]
  %v61 = vld [vmem:[%s1 + $0xac] sm:$0xf]
  %v62 = vld [vmem:[%s1 + $0xb0] sm:$0xf]
  %v63 = vld [vmem:[%s1 + $0xb4] sm:$0xf]
  %v64 = vld [vmem:[%s1 + $0xb8] sm:$0xf]
  %v65 = vld [vmem:[%s1 + $0xbc] sm:$0xf]
  %v66 = vld [vmem:[%s1 + $0xc0] sm:$0xf]
  %v67 = vld [vmem:[%s1 + $0xc4] sm:$0xf]
  %v68 = vld [vmem:[%s1 + $0xc8] sm:$0xf]
  %v69 = vld [vmem:[%s1 + $0xcc] sm:$0xf]
  %v70 = vld [vmem:[%s1 + $0xd0] sm:$0xf]
  %v71 = vld [vmem:[%s1 + $0xd4] sm:$0xf]
  %v72 = vld [vmem:[%s1 + $0xd8] sm:$0xf]
  %v73 = vld [vmem:[%s1 + $0xdc] sm:$0xf]
  %v74 = vld [vmem:[%s1 + $0xe0] sm:$0xf]
  %v75 = vld [vmem:[%s1 + $0xe4] sm:$0xf]
  %v76 = vld [vmem:[%s1 + $0xe8] sm:$0xf]
  %v77 = vld [vmem:[%s1 + $0xec] sm:$0xf]
  %v78 = vld [vmem:[%s1 + $0xf0] sm:$0xf]
  %v79 = vld [vmem:[%s1 + $0xf4] sm:$0xf]
  %v80 = vld [vmem:[%s1 + $0xf8] sm:$0xf]
  %v81 = vld [vmem:[%s1 + $0xfc] sm:$0xf]
  %v82 = vld [vmem:[%s1 + $0x100] sm:$0xf]
  %v83 = vld [vmem:[%s1 + $0x104] sm:$0xf]
  %v84 = vld [vmem:[%s1 + $0x108] sm:$0xf]
  %v85 = vld [vmem:[%s1 + $0x10c] sm:$0xf]
  %v86 = vld [vmem:[%s1 + $0x110] sm:$0xf]
  %v87 = vld [vmem:[%s1 + $0x114] sm:$0xf]
  %v88 = vld [vmem:[%s1 + $0x118] sm:$0xf]
  %v89 = vld [vmem:[%s1 + $0x11c] sm:$0xf]
  %v90 = vld [vmem:[%s2] sm:$0x1]
  %v92 = vlaneseq
  %v93 = vshrl.u32 %v92, 7
  %v94 = vsub.s32 0, %v93
  %v95 = vrot.slane %v90, %v94
  %v100 = vunpack.c.l.b16 %v15
  %v101 = vunpack.c.h.b16 %v15
  %v102 = vunpack.c.l.b16 %v16
  %v103 = vunpack.c.h.b16 %v16
  %v104 = vunpack.c.l.b16 %v17
  %v105 = vpack.c.b16 %v100, %v100
  %v106 = vpack.c.b16 %v101, %v101
  %v107 = vpack.c.b16 %v102, %v102
  %v108 = vpack.c.b16 %v103, %v103
  %v109 = vpack.c.b16 %v104, %v104
  %v186 = vunpack.c.l.b16 %v18
  %v187 = vunpack.c.l.b16 %v19
  %v188 = vunpack.c.l.b16 %v20
  %v189 = vunpack.c.l.b16 %v21
  %v190 = vunpack.c.l.b16 %v22
  %v191 = vunpack.c.l.b16 %v23
  %v192 = vunpack.c.l.b16 %v24
  %v193 = vunpack.c.l.b16 %v25
  %v194 = vunpack.c.l.b16 %v26
  %v195 = vunpack.c.l.b16 %v27
  %v196 = vunpack.c.l.b16 %v28
  %v197 = vunpack.c.l.b16 %v29
  %v198 = vunpack.c.l.b16 %v30
  %v199 = vunpack.c.l.b16 %v31
  %v200 = vunpack.c.l.b16 %v32
  %v201 = vunpack.c.l.b16 %v33
  %v202 = vunpack.c.l.b16 %v34
  %v203 = vunpack.c.l.b16 %v35
  %v204 = vunpack.c.l.b16 %v36
  %v205 = vunpack.c.l.b16 %v37
  %v206 = vunpack.c.l.b16 %v38
  %v207 = vunpack.c.l.b16 %v39
  %v208 = vunpack.c.l.b16 %v40
  %v209 = vunpack.c.l.b16 %v41
  %v210 = vunpack.c.l.b16 %v42
  %v211 = vunpack.c.l.b16 %v43
  %v212 = vunpack.c.l.b16 %v44
  %v213 = vunpack.c.l.b16 %v45
  %v214 = vunpack.c.l.b16 %v46
  %v215 = vunpack.c.l.b16 %v47
  %v216 = vunpack.c.l.b16 %v48
  %v217 = vunpack.c.l.b16 %v49
  %v218 = vunpack.c.l.b16 %v50
  %v219 = vunpack.c.l.b16 %v51
  %v220 = vunpack.c.l.b16 %v52
  %v221 = vunpack.c.l.b16 %v53
  %v222 = vunpack.c.l.b16 %v54
  %v223 = vunpack.c.l.b16 %v55
  %v224 = vunpack.c.l.b16 %v56
  %v225 = vunpack.c.l.b16 %v57
  %v226 = vunpack.c.l.b16 %v58
  %v227 = vunpack.c.l.b16 %v59
  %v228 = vunpack.c.l.b16 %v60
  %v229 = vunpack.c.l.b16 %v61
  %v230 = vunpack.c.l.b16 %v62
  %v231 = vunpack.c.l.b16 %v63
  %v232 = vunpack.c.l.b16 %v64
  %v233 = vunpack.c.l.b16 %v65
  %v234 = vunpack.c.l.b16 %v66
  %v235 = vunpack.c.l.b16 %v67
  %v236 = vunpack.c.l.b16 %v68
  %v237 = vunpack.c.l.b16 %v69
  %v238 = vunpack.c.l.b16 %v70
  %v239 = vunpack.c.l.b16 %v71
  %v240 = vunpack.c.l.b16 %v72
  %v241 = vunpack.c.l.b16 %v73
  %v242 = vunpack.c.l.b16 %v74
  %v243 = vunpack.c.l.b16 %v75
  %v244 = vunpack.c.l.b16 %v76
  %v245 = vunpack.c.l.b16 %v77
  %v246 = vunpack.c.l.b16 %v78
  %v247 = vunpack.c.l.b16 %v79
  %v248 = vunpack.c.l.b16 %v80
  %v249 = vunpack.c.l.b16 %v81
  %v250 = vunpack.c.l.b16 %v82
  %v251 = vunpack.c.l.b16 %v83
  %v252 = vunpack.c.l.b16 %v84
  %v253 = vunpack.c.l.b16 %v85
  %v254 = vunpack.c.l.b16 %v86
  %v255 = vunpack.c.l.b16 %v87
  %v256 = vunpack.c.l.b16 %v88
  %v257 = vunpack.c.l.b16 %v89
  %v258 = vpack.c.b16 %v187, %v186
  %v259 = vpack.c.b16 %v189, %v188
  %v260 = vpack.c.b16 %v191, %v190
  %v261 = vpack.c.b16 %v193, %v192
  %v262 = vpack.c.b16 %v195, %v194
  %v263 = vpack.c.b16 %v197, %v196
  %v264 = vpack.c.b16 %v199, %v198
  %v265 = vpack.c.b16 %v201, %v200
  %v266 = vpack.c.b16 %v203, %v202
  %v267 = vpack.c.b16 %v205, %v204
  %v268 = vpack.c.b16 %v207, %v206
  %v269 = vpack.c.b16 %v209, %v208
  %v270 = vpack.c.b16 %v211, %v210
  %v271 = vpack.c.b16 %v213, %v212
  %v272 = vpack.c.b16 %v215, %v214
  %v273 = vpack.c.b16 %v217, %v216
  %v274 = vpack.c.b16 %v219, %v218
  %v275 = vpack.c.b16 %v221, %v220
  %v276 = vpack.c.b16 %v223, %v222
  %v277 = vpack.c.b16 %v225, %v224
  %v278 = vpack.c.b16 %v227, %v226
  %v279 = vpack.c.b16 %v229, %v228
  %v280 = vpack.c.b16 %v231, %v230
  %v281 = vpack.c.b16 %v233, %v232
  %v282 = vpack.c.b16 %v235, %v234
  %v283 = vpack.c.b16 %v237, %v236
  %v284 = vpack.c.b16 %v239, %v238
  %v285 = vpack.c.b16 %v241, %v240
  %v286 = vpack.c.b16 %v243, %v242
  %v287 = vpack.c.b16 %v245, %v244
  %v288 = vpack.c.b16 %v247, %v246
  %v289 = vpack.c.b16 %v249, %v248
  %v290 = vpack.c.b16 %v251, %v250
  %v291 = vpack.c.b16 %v253, %v252
  %v292 = vpack.c.b16 %v255, %v254
  %v293 = vpack.c.b16 %v257, %v256
  %vm330 = vcmask 523264
  %v332 = vsel %vm330, %v109, 0
  %334 = vmatprep.subr.bf16.mxu0 0
  %335 = vmatpush1.bf16.msra.mxu0 %v258
  %336 = vmatprep.subr.bf16.mxu0 0
  %337 = vmatpush1.bf16.msra.mxu0 %v259
  %338 = vmatprep.subr.bf16.mxu0 0
  %339 = vmatpush1.bf16.msra.mxu0 %v260
  %340 = vmatprep.subr.bf16.mxu0 0
  %341 = vmatpush1.bf16.msra.mxu0 %v261
  %342 = vmatprep.subr.bf16.mxu0 0
  %343 = vmatpush1.bf16.msra.mxu0 %v262
  %344 = vmatprep.subr.bf16.mxu0 0
  %345 = vmatpush1.bf16.msra.mxu0 %v263
  %346 = vmatprep.subr.bf16.mxu0 0
  %347 = vmatpush1.bf16.msra.mxu0 %v264
  %348 = vmatprep.subr.bf16.mxu0 0
  %349 = vmatpush1.bf16.msra.mxu0 %v265
  %350 = vmatprep.subr.bf16.mxu0 0
  %351 = vmatpush1.bf16.msra.mxu0 %v266
  %352 = vmatprep.subr.bf16.mxu0 0
  %353 = vmatpush1.bf16.msra.mxu0 %v267
  %354 = vmatprep.subr.bf16.mxu0 0
  %355 = vmatpush1.bf16.msra.mxu0 %v268
  %356 = vmatprep.subr.bf16.mxu0 0
  %357 = vmatpush1.bf16.msra.mxu0 %v269
  %358 = vmatprep.subr.bf16.mxu0 0
  %359 = vmatpush1.bf16.msra.mxu0 %v270
  %360 = vmatprep.subr.bf16.mxu0 0
  %361 = vmatpush1.bf16.msra.mxu0 %v271
  %362 = vmatprep.subr.bf16.mxu0 0
  %363 = vmatpush1.bf16.msra.mxu0 %v272
  %364 = vmatprep.subr.bf16.mxu0 0
  %365 = vmatpush1.bf16.msra.mxu0 %v273
  %366 = vmatprep.mubr.bf16.mxu0 %v106
  %367 = vmatmul.mubr.bf16.gmra.mrb[0].mxu0 %v105
  %v368 = vpop.f32.mrb[0].mxu0
  %v369 = vadd.f32 %v95, %v368
  %v370 = vpop.f32.mrb[0].mxu0
  %v371 = vpop.f32.mrb[0].mxu0
  %v372 = vpop.f32.mrb[0].mxu0
  %373 = vdwg.mxu0
  %374 = vmatprep.subr.bf16.mxu0 0
  %375 = vmatpush1.bf16.msra.mxu0 %v274
  %376 = vmatprep.subr.bf16.mxu0 0
  %377 = vmatpush1.bf16.msra.mxu0 %v275
  %378 = vmatprep.subr.bf16.mxu0 0
  %379 = vmatpush1.bf16.msra.mxu0 %v276
  %380 = vmatprep.subr.bf16.mxu0 0
  %381 = vmatpush1.bf16.msra.mxu0 %v277
  %382 = vmatprep.subr.bf16.mxu0 0
  %383 = vmatpush1.bf16.msra.mxu0 %v278
  %384 = vmatprep.subr.bf16.mxu0 0
  %385 = vmatpush1.bf16.msra.mxu0 %v279
  %386 = vmatprep.subr.bf16.mxu0 0
  %387 = vmatpush1.bf16.msra.mxu0 %v280
  %388 = vmatprep.subr.bf16.mxu0 0
  %389 = vmatpush1.bf16.msra.mxu0 %v281
  %390 = vmatprep.subr.bf16.mxu0 0
  %391 = vmatpush1.bf16.msra.mxu0 %v282
  %392 = vmatprep.subr.bf16.mxu0 0
  %393 = vmatpush1.bf16.msra.mxu0 %v283
  %394 = vmatprep.subr.bf16.mxu0 0
  %395 = vmatpush1.bf16.msra.mxu0 %v284
  %396 = vmatprep.subr.bf16.mxu0 0
  %397 = vmatpush1.bf16.msra.mxu0 %v285
  %398 = vmatprep.subr.bf16.mxu0 0
  %399 = vmatpush1.bf16.msra.mxu0 %v286
  %400 = vmatprep.subr.bf16.mxu0 0
  %401 = vmatpush1.bf16.msra.mxu0 %v287
  %402 = vmatprep.subr.bf16.mxu0 0
  %403 = vmatpush1.bf16.msra.mxu0 %v288
  %404 = vmatprep.subr.bf16.mxu0 0
  %405 = vmatpush1.bf16.msra.mxu0 %v289
  %406 = vmatprep.mubr.bf16.mxu0 %v108
  %407 = vmatmul.mubr.bf16.gmra.mrb[0].mxu0 %v107
  %v408 = vpop.f32.mrb[0].mxu0
  %v409 = vadd.f32 %v369, %v408
  %v410 = vpop.f32.mrb[0].mxu0
  %v411 = vpop.f32.mrb[0].mxu0
  %v412 = vpop.f32.mrb[0].mxu0
  %413 = vdwg.mxu0
  %414 = vmatprep.subr.bf16.mxu0 0
  %415 = vmatpush1.bf16.msra.mxu0 %v290
  %416 = vmatprep.subr.bf16.mxu0 0
  %417 = vmatpush1.bf16.msra.mxu0 %v291
  %418 = vmatprep.subr.bf16.mxu0 0
  %419 = vmatpush1.bf16.msra.mxu0 %v292
  %420 = vmatprep.subr.bf16.mxu0 0
  %421 = vmatpush1.bf16.msra.mxu0 %v293
  %422 = vmatprep.subr.bf16.mxu0 0
  %423 = vmatpush1.bf16.msra.mxu0 0
  %424 = vmatprep.subr.bf16.mxu0 0
  %425 = vmatpush1.bf16.msra.mxu0 0
  %426 = vmatprep.subr.bf16.mxu0 0
  %427 = vmatpush1.bf16.msra.mxu0 0
  %428 = vmatprep.subr.bf16.mxu0 0
  %429 = vmatpush1.bf16.msra.mxu0 0
  %430 = vmatprep.subr.bf16.mxu0 0
  %431 = vmatpush1.bf16.msra.mxu0 0
  %432 = vmatprep.subr.bf16.mxu0 0
  %433 = vmatpush1.bf16.msra.mxu0 0
  %434 = vmatprep.subr.bf16.mxu0 0
  %435 = vmatpush1.bf16.msra.mxu0 0
  %436 = vmatprep.subr.bf16.mxu0 0
  %437 = vmatpush1.bf16.msra.mxu0 0
  %438 = vmatprep.subr.bf16.mxu0 0
  %439 = vmatpush1.bf16.msra.mxu0 0
  %440 = vmatprep.subr.bf16.mxu0 0
  %441 = vmatpush1.bf16.msra.mxu0 0
  %442 = vmatprep.subr.bf16.mxu0 0
  %443 = vmatpush1.bf16.msra.mxu0 0
  %444 = vmatprep.subr.bf16.mxu0 0
  %445 = vmatpush1.bf16.msra.mxu0 0
  %446 = vmatprep.mubr.bf16.mxu0 0
  %447 = vmatmul.mubr.bf16.gmra.mrb[0].mxu0 %v332
  %v448 = vpop.f32.mrb[0].mxu0
  %v449 = vadd.f32 %v409, %v448
  %v450 = vpop.f32.mrb[0].mxu0
  %v451 = vpop.f32.mrb[0].mxu0
  %v452 = vpop.f32.mrb[0].mxu0
  %453 = vdwg.mxu0
  %v454 = vmax.f32 %v449, 0.0
  %v455 = vpack.c.bf16 %v454, %v454
  %456 = vst [vmem:[%s3] sm:$0xf] %v455
  // Predicated region
  $region14: #{stegastamp_decoder_forward.22} parent=0 // pred_check
    _
  $region15: #{stegastamp_decoder_forward.22} parent=0 // pred_check_branch
    %458 = sbr.rel (0) target = $region17
  $region16: #{stegastamp_decoder_forward.22} parent=0 // pred_region
    _
  $region17: #{stegastamp_decoder_forward.22} parent=0 // pred_fallthru
    _
  // Predicated region
  $region18: #{stegastamp_decoder_forward.22} parent=0 // pred_check
    _
  $region19: #{stegastamp_decoder_forward.22} parent=0 // pred_check_branch
    %460 = sbr.rel (0) target = $region21
  $region20: #{stegastamp_decoder_forward.22} parent=0 // pred_region
    _
  $region21: #{stegastamp_decoder_forward.22} parent=0 // pred_fallthru
    _

// kernel: stegastamp_decoder_forward.25
$region0: #{stegastamp_decoder_forward.25}
  #allocation0 [shape = 'u32[]', space=smem, size = 0x4, offset = 0x4, fixed_abs, tag = 'smem constant byte address 0x4 - core index']
  #allocation1 [shape = 'u32[144,128]{1,0:T(1,128)}', space=vmem, size = 0x12000, scoped, tag = 'internal scratch']
  %s0 = inlined_call_operand.vmem [shape: bf16[2,512], index: 0, kind: input, shape index: {}]
  %s1 = inlined_call_operand.vmem [shape: bf16[512,8], index: 1, kind: input, shape index: {}]
  %s2 = inlined_call_operand.vmem [shape: f32[1,8], index: 2, kind: input, shape index: {}]
  %s3 = inlined_call_operand.hbm [shape: f32[2,8], index: 3, kind: output, shape index: {}]
  %s4 = sld [smem:[#allocation0]]
  $region22: #{stegastamp_decoder_forward.25} parent=0
    _
  %s6 = ssub.s32 1, %s4
  %s7 = scalar_select 0, %s6, %s4
  $region1: #{stegastamp_decoder_forward.25} parent=0
    #allocation2 [shape = 'u8[1024]{0}', space=vmem, size = 0x400, scoped, tag = 'output window, operand 0, single buffered']
    #allocation3 [shape = 's32[1]{0}', space=sflag, size = 0x4, scoped, tag = 'scoped memory for stegastamp_decoder_forward.25']
    %8 = vsyncpa [#allocation3], 0
    // Predicated region
    $region2: #{stegastamp_decoder_forward.25} parent=1 // pred_check
      _
    $region3: #{stegastamp_decoder_forward.25} parent=1 // pred_check_branch
      %10 = sbr.rel (0) target = $region5
    $region4: #{stegastamp_decoder_forward.25} parent=1 // pred_region
      _
    $region5: #{stegastamp_decoder_forward.25} parent=1 // pred_fallthru
      _
    // Predicated region
    $region6: #{stegastamp_decoder_forward.25} parent=1 // pred_check
      _
    $region7: #{stegastamp_decoder_forward.25} parent=1 // pred_check_branch
      %12 = sbr.rel (0) target = $region9
    $region8: #{stegastamp_decoder_forward.25} parent=1 // pred_region
      _
    $region9: #{stegastamp_decoder_forward.25} parent=1 // pred_fallthru
      _
    // Predicated region
    $region10: #{stegastamp_decoder_forward.25} parent=1 // pred_check
      _
    $region11: #{stegastamp_decoder_forward.25} parent=1 // pred_check_branch
      %14 = sbr.rel (0) target = $region13
    $region12: #{stegastamp_decoder_forward.25} parent=1 // pred_region
      _
    $region13: #{stegastamp_decoder_forward.25} parent=1 // pred_fallthru
      _
    %v16 = vld [vmem:[%s0] sm:$0xf]
    %v17 = vld [vmem:[%s1] sm:$0xf]
    %v18 = vld [vmem:[%s1 + $0x4] sm:$0xf]
    %v19 = vld [vmem:[%s1 + $0x8] sm:$0xf]
    %v20 = vld [vmem:[%s1 + $0xc] sm:$0xf]
    %v21 = vld [vmem:[%s1 + $0x10] sm:$0xf]
    %v22 = vld [vmem:[%s1 + $0x14] sm:$0xf]
    %v23 = vld [vmem:[%s1 + $0x18] sm:$0xf]
    %v24 = vld [vmem:[%s1 + $0x1c] sm:$0xf]
    %v25 = vld [vmem:[%s1 + $0x20] sm:$0xf]
    %v26 = vld [vmem:[%s1 + $0x24] sm:$0xf]
    %v27 = vld [vmem:[%s1 + $0x28] sm:$0xf]
    %v28 = vld [vmem:[%s1 + $0x2c] sm:$0xf]
    %v29 = vld [vmem:[%s1 + $0x30] sm:$0xf]
    %v30 = vld [vmem:[%s1 + $0x34] sm:$0xf]
    %v31 = vld [vmem:[%s1 + $0x38] sm:$0xf]
    %v32 = vld [vmem:[%s1 + $0x3c] sm:$0xf]
    %v33 = vld [vmem:[%s1 + $0x40] sm:$0xf]
    %v34 = vld [vmem:[%s1 + $0x44] sm:$0xf]
    %v35 = vld [vmem:[%s1 + $0x48] sm:$0xf]
    %v36 = vld [vmem:[%s1 + $0x4c] sm:$0xf]
    %v37 = vld [vmem:[%s1 + $0x50] sm:$0xf]
    %v38 = vld [vmem:[%s1 + $0x54] sm:$0xf]
    %v39 = vld [vmem:[%s1 + $0x58] sm:$0xf]
    %v40 = vld [vmem:[%s1 + $0x5c] sm:$0xf]
    %v41 = vld [vmem:[%s1 + $0x60] sm:$0xf]
    %v42 = vld [vmem:[%s1 + $0x64] sm:$0xf]
    %v43 = vld [vmem:[%s1 + $0x68] sm:$0xf]
    %v44 = vld [vmem:[%s1 + $0x6c] sm:$0xf]
    %v45 = vld [vmem:[%s1 + $0x70] sm:$0xf]
    %v46 = vld [vmem:[%s1 + $0x74] sm:$0xf]
    %v47 = vld [vmem:[%s1 + $0x78] sm:$0xf]
    %v48 = vld [vmem:[%s1 + $0x7c] sm:$0xf]
    %v49 = vld [vmem:[%s1 + $0x80] sm:$0xf]
    %v50 = vld [vmem:[%s1 + $0x84] sm:$0xf]
    %v51 = vld [vmem:[%s1 + $0x88] sm:$0xf]
    %v52 = vld [vmem:[%s1 + $0x8c] sm:$0xf]
    %v53 = vld [vmem:[%s1 + $0x90] sm:$0xf]
    %v54 = vld [vmem:[%s1 + $0x94] sm:$0xf]
    %v55 = vld [vmem:[%s1 + $0x98] sm:$0xf]
    %v56 = vld [vmem:[%s1 + $0x9c] sm:$0xf]
    %v57 = vld [vmem:[%s1 + $0xa0] sm:$0xf]
    %v58 = vld [vmem:[%s1 + $0xa4] sm:$0xf]
    %v59 = vld [vmem:[%s1 + $0xa8] sm:$0xf]
    %v60 = vld [vmem:[%s1 + $0xac] sm:$0xf]
    %v61 = vld [vmem:[%s1 + $0xb0] sm:$0xf]
    %v62 = vld [vmem:[%s1 + $0xb4] sm:$0xf]
    %v63 = vld [vmem:[%s1 + $0xb8] sm:$0xf]
    %v64 = vld [vmem:[%s1 + $0xbc] sm:$0xf]
    %v65 = vld [vmem:[%s1 + $0xc0] sm:$0xf]
    %v66 = vld [vmem:[%s1 + $0xc4] sm:$0xf]
    %v67 = vld [vmem:[%s1 + $0xc8] sm:$0xf]
    %v68 = vld [vmem:[%s1 + $0xcc] sm:$0xf]
    %v69 = vld [vmem:[%s1 + $0xd0] sm:$0xf]
    %v70 = vld [vmem:[%s1 + $0xd4] sm:$0xf]
    %v71 = vld [vmem:[%s1 + $0xd8] sm:$0xf]
    %v72 = vld [vmem:[%s1 + $0xdc] sm:$0xf]
    %v73 = vld [vmem:[%s1 + $0xe0] sm:$0xf]
    %v74 = vld [vmem:[%s1 + $0xe4] sm:$0xf]
    %v75 = vld [vmem:[%s1 + $0xe8] sm:$0xf]
    %v76 = vld [vmem:[%s1 + $0xec] sm:$0xf]
    %v77 = vld [vmem:[%s1 + $0xf0] sm:$0xf]
    %v78 = vld [vmem:[%s1 + $0xf4] sm:$0xf]
    %v79 = vld [vmem:[%s1 + $0xf8] sm:$0xf]
    %v80 = vld [vmem:[%s1 + $0xfc] sm:$0xf]
    %v81 = vld [vmem:[%s2] sm:$0x1]
    %v83 = vlaneseq
    %v84 = vshrl.u32 %v83, 7
    %v85 = vsub.s32 0, %v84
    %v86 = vrot.slane %v81, %v85
    %v90 = vunpack.c.l.s4 1966171168
    %v91 = vunpack.c.0.s8 %v90
    %v92 = vlaneseq
    %v93 = vshrl.u32 %v92, 7
    %v94 = vsub.s32 %v91, %v93
    %v95 = vrot.slane %v16, %v94
    %v96 = vcombine.high %v95, %v95
    %v98 = vunpack.c.l.s4 1966171168
    %v99 = vunpack.c.0.s8 %v98
    %v100 = vlaneseq
    %v101 = vshrl.u32 %v100, 7
    %v102 = vsub.s32 %v99, %v101
    %v103 = vrot.slane %v95, %v102
    %v105 = vunpack.c.l.s4 1966171168
    %v106 = vunpack.c.0.s8 %v105
    %v107 = vlaneseq
    %v108 = vshrl.u32 %v107, 7
    %v109 = vsub.s32 %v106, %v108
    %v110 = vrot.slane %v96, %v109
    %v111 = vcombine.high %v103, %v103
    %v112 = vcombine.high %v110, %v110
    %v181 = vunpack.c.l.b16 %v17
    %v182 = vunpack.c.l.b16 %v18
    %v183 = vunpack.c.l.b16 %v19
    %v184 = vunpack.c.l.b16 %v20
    %v185 = vunpack.c.l.b16 %v21
    %v186 = vunpack.c.l.b16 %v22
    %v187 = vunpack.c.l.b16 %v23
    %v188 = vunpack.c.l.b16 %v24
    %v189 = vunpack.c.l.b16 %v25
    %v190 = vunpack.c.l.b16 %v26
    %v191 = vunpack.c.l.b16 %v27
    %v192 = vunpack.c.l.b16 %v28
    %v193 = vunpack.c.l.b16 %v29
    %v194 = vunpack.c.l.b16 %v30
    %v195 = vunpack.c.l.b16 %v31
    %v196 = vunpack.c.l.b16 %v32
    %v197 = vunpack.c.l.b16 %v33
    %v198 = vunpack.c.l.b16 %v34
    %v199 = vunpack.c.l.b16 %v35
    %v200 = vunpack.c.l.b16 %v36
    %v201 = vunpack.c.l.b16 %v37
    %v202 = vunpack.c.l.b16 %v38
    %v203 = vunpack.c.l.b16 %v39
    %v204 = vunpack.c.l.b16 %v40
    %v205 = vunpack.c.l.b16 %v41
    %v206 = vunpack.c.l.b16 %v42
    %v207 = vunpack.c.l.b16 %v43
    %v208 = vunpack.c.l.b16 %v44
    %v209 = vunpack.c.l.b16 %v45
    %v210 = vunpack.c.l.b16 %v46
    %v211 = vunpack.c.l.b16 %v47
    %v212 = vunpack.c.l.b16 %v48
    %v213 = vunpack.c.l.b16 %v49
    %v214 = vunpack.c.l.b16 %v50
    %v215 = vunpack.c.l.b16 %v51
    %v216 = vunpack.c.l.b16 %v52
    %v217 = vunpack.c.l.b16 %v53
    %v218 = vunpack.c.l.b16 %v54
    %v219 = vunpack.c.l.b16 %v55
    %v220 = vunpack.c.l.b16 %v56
    %v221 = vunpack.c.l.b16 %v57
    %v222 = vunpack.c.l.b16 %v58
    %v223 = vunpack.c.l.b16 %v59
    %v224 = vunpack.c.l.b16 %v60
    %v225 = vunpack.c.l.b16 %v61
    %v226 = vunpack.c.l.b16 %v62
    %v227 = vunpack.c.l.b16 %v63
    %v228 = vunpack.c.l.b16 %v64
    %v229 = vunpack.c.l.b16 %v65
    %v230 = vunpack.c.l.b16 %v66
    %v231 = vunpack.c.l.b16 %v67
    %v232 = vunpack.c.l.b16 %v68
    %v233 = vunpack.c.l.b16 %v69
    %v234 = vunpack.c.l.b16 %v70
    %v235 = vunpack.c.l.b16 %v71
    %v236 = vunpack.c.l.b16 %v72
    %v237 = vunpack.c.l.b16 %v73
    %v238 = vunpack.c.l.b16 %v74
    %v239 = vunpack.c.l.b16 %v75
    %v240 = vunpack.c.l.b16 %v76
    %v241 = vunpack.c.l.b16 %v77
    %v242 = vunpack.c.l.b16 %v78
    %v243 = vunpack.c.l.b16 %v79
    %v244 = vunpack.c.l.b16 %v80
    %v245 = vpack.c.b16 %v182, %v181
    %v246 = vpack.c.b16 %v184, %v183
    %v247 = vpack.c.b16 %v186, %v185
    %v248 = vpack.c.b16 %v188, %v187
    %v249 = vpack.c.b16 %v190, %v189
    %v250 = vpack.c.b16 %v192, %v191
    %v251 = vpack.c.b16 %v194, %v193
    %v252 = vpack.c.b16 %v196, %v195
    %v253 = vpack.c.b16 %v198, %v197
    %v254 = vpack.c.b16 %v200, %v199
    %v255 = vpack.c.b16 %v202, %v201
    %v256 = vpack.c.b16 %v204, %v203
    %v257 = vpack.c.b16 %v206, %v205
    %v258 = vpack.c.b16 %v208, %v207
    %v259 = vpack.c.b16 %v210, %v209
    %v260 = vpack.c.b16 %v212, %v211
    %v261 = vpack.c.b16 %v214, %v213
    %v262 = vpack.c.b16 %v216, %v215
    %v263 = vpack.c.b16 %v218, %v217
    %v264 = vpack.c.b16 %v220, %v219
    %v265 = vpack.c.b16 %v222, %v221
    %v266 = vpack.c.b16 %v224, %v223
    %v267 = vpack.c.b16 %v226, %v225
    %v268 = vpack.c.b16 %v228, %v227
    %v269 = vpack.c.b16 %v230, %v229
    %v270 = vpack.c.b16 %v232, %v231
    %v271 = vpack.c.b16 %v234, %v233
    %v272 = vpack.c.b16 %v236, %v235
    %v273 = vpack.c.b16 %v238, %v237
    %v274 = vpack.c.b16 %v240, %v239
    %v275 = vpack.c.b16 %v242, %v241
    %v276 = vpack.c.b16 %v244, %v243
    %309 = vmatprep.subr.bf16.mxu0 0
    %310 = vmatpush1.bf16.msra.mxu0 %v245
    %311 = vmatprep.subr.bf16.mxu0 0
    %312 = vmatpush1.bf16.msra.mxu0 %v246
    %313 = vmatprep.subr.bf16.mxu0 0
    %314 = vmatpush1.bf16.msra.mxu0 %v247
    %315 = vmatprep.subr.bf16.mxu0 0
    %316 = vmatpush1.bf16.msra.mxu0 %v248
    %317 = vmatprep.subr.bf16.mxu0 0
    %318 = vmatpush1.bf16.msra.mxu0 %v249
    %319 = vmatprep.subr.bf16.mxu0 0
    %320 = vmatpush1.bf16.msra.mxu0 %v250
    %321 = vmatprep.subr.bf16.mxu0 0
    %322 = vmatpush1.bf16.msra.mxu0 %v251
    %323 = vmatprep.subr.bf16.mxu0 0
    %324 = vmatpush1.bf16.msra.mxu0 %v252
    %325 = vmatprep.subr.bf16.mxu0 0
    %326 = vmatpush1.bf16.msra.mxu0 %v253
    %327 = vmatprep.subr.bf16.mxu0 0
    %328 = vmatpush1.bf16.msra.mxu0 %v254
    %329 = vmatprep.subr.bf16.mxu0 0
    %330 = vmatpush1.bf16.msra.mxu0 %v255
    %331 = vmatprep.subr.bf16.mxu0 0
    %332 = vmatpush1.bf16.msra.mxu0 %v256
    %333 = vmatprep.subr.bf16.mxu0 0
    %334 = vmatpush1.bf16.msra.mxu0 %v257
    %335 = vmatprep.subr.bf16.mxu0 0
    %336 = vmatpush1.bf16.msra.mxu0 %v258
    %337 = vmatprep.subr.bf16.mxu0 0
    %338 = vmatpush1.bf16.msra.mxu0 %v259
    %339 = vmatprep.subr.bf16.mxu0 0
    %340 = vmatpush1.bf16.msra.mxu0 %v260
    %341 = vmatprep.mubr.bf16.mxu0 %v110
    %342 = vmatmul.mubr.bf16.gmra.mrb[0].mxu0 %v103
    %v343 = vpop.f32.mrb[0].mxu0
    %v344 = vadd.f32 %v86, %v343
    %v345 = vpop.f32.mrb[0].mxu0
    %v346 = vpop.f32.mrb[0].mxu0
    %v347 = vpop.f32.mrb[0].mxu0
    %348 = vdwg.mxu0
    %349 = vmatprep.subr.bf16.mxu0 0
    %350 = vmatpush1.bf16.msra.mxu0 %v261
    %351 = vmatprep.subr.bf16.mxu0 0
    %352 = vmatpush1.bf16.msra.mxu0 %v262
    %353 = vmatprep.subr.bf16.mxu0 0
    %354 = vmatpush1.bf16.msra.mxu0 %v263
    %355 = vmatprep.subr.bf16.mxu0 0
    %356 = vmatpush1.bf16.msra.mxu0 %v264
    %357 = vmatprep.subr.bf16.mxu0 0
    %358 = vmatpush1.bf16.msra.mxu0 %v265
    %359 = vmatprep.subr.bf16.mxu0 0
    %360 = vmatpush1.bf16.msra.mxu0 %v266
    %361 = vmatprep.subr.bf16.mxu0 0
    %362 = vmatpush1.bf16.msra.mxu0 %v267
    %363 = vmatprep.subr.bf16.mxu0 0
    %364 = vmatpush1.bf16.msra.mxu0 %v268
    %365 = vmatprep.subr.bf16.mxu0 0
    %366 = vmatpush1.bf16.msra.mxu0 %v269
    %367 = vmatprep.subr.bf16.mxu0 0
    %368 = vmatpush1.bf16.msra.mxu0 %v270
    %369 = vmatprep.subr.bf16.mxu0 0
    %370 = vmatpush1.bf16.msra.mxu0 %v271
    %371 = vmatprep.subr.bf16.mxu0 0
    %372 = vmatpush1.bf16.msra.mxu0 %v272
    %373 = vmatprep.subr.bf16.mxu0 0
    %374 = vmatpush1.bf16.msra.mxu0 %v273
    %375 = vmatprep.subr.bf16.mxu0 0
    %376 = vmatpush1.bf16.msra.mxu0 %v274
    %377 = vmatprep.subr.bf16.mxu0 0
    %378 = vmatpush1.bf16.msra.mxu0 %v275
    %379 = vmatprep.subr.bf16.mxu0 0
    %380 = vmatpush1.bf16.msra.mxu0 %v276
    %381 = vmatprep.mubr.bf16.mxu0 %v112
    %382 = vmatmul.mubr.bf16.gmra.mrb[0].mxu0 %v111
    %v383 = vpop.f32.mrb[0].mxu0
    %v384 = vadd.f32 %v344, %v383
    %v385 = vpop.f32.mrb[0].mxu0
    %v386 = vpop.f32.mrb[0].mxu0
    %v387 = vpop.f32.mrb[0].mxu0
    %388 = vdwg.mxu0
    %vm389 = vcmask 58368
    %390 = vst.msk [vmem:[#allocation2] sm:$0x3] %vm389, %v384
    // Predicated region
    $region14: #{stegastamp_decoder_forward.25} parent=1 // pred_check
      _
    $region15: #{stegastamp_decoder_forward.25} parent=1 // pred_check_branch
      %392 = sbr.rel (0) target = $region17
    $region16: #{stegastamp_decoder_forward.25} parent=1 // pred_region
      %s394 = ssub.s32 32, 32
      %395 = vsyncadd [#allocation3], %s394
      %s397 = sshll.u32 [#allocation2], 4
      %s398 = int_to_ptr.vmem [resolvable:$true] %s397
      %400 = dma.vmem_to_hbm [thread:$0]  %s398, 32, %s3, [#allocation3]
    $region17: #{stegastamp_decoder_forward.25} parent=1 // pred_fallthru
      _
    // Predicated region
    $region18: #{stegastamp_decoder_forward.25} parent=1 // pred_check
      _
    $region19: #{stegastamp_decoder_forward.25} parent=1 // pred_check_branch
      %402 = sbr.rel (0) target = $region21
    $region20: #{stegastamp_decoder_forward.25} parent=1 // pred_region
      %403 = dma.done [#allocation3], 32
    $region21: #{stegastamp_decoder_forward.25} parent=1 // pred_fallthru
      _
    %404 = vsyncpa [#allocation3], 1

// kernel: stegastamp_decoder_forward.23
$region0: #{stegastamp_decoder_forward.23}
  #allocation0 [shape = 'u32[]', space=smem, size = 0x4, offset = 0x4, fixed_abs, tag = 'smem constant byte address 0x4 - core index']
  #allocation1 [shape = 'u32[144,128]{1,0:T(1,128)}', space=vmem, size = 0x12000, scoped, tag = 'internal scratch']
  %s0 = inlined_call_operand.vmem [shape: bf16[2,1152], index: 0, kind: input, shape index: {}]
  %s1 = inlined_call_operand.vmem [shape: bf16[1152,128], index: 1, kind: input, shape index: {}]
  %s2 = inlined_call_operand.vmem [shape: f32[1,128], index: 2, kind: input, shape index: {}]
  %s3 = inlined_call_operand.vmem [shape: bf16[2,128], index: 3, kind: output, shape index: {}]
  %s4 = sld [smem:[#allocation0]]
  $region22: #{stegastamp_decoder_forward.23} parent=0
    _
  %s6 = ssub.s32 1, %s4
  %s7 = scalar_select 0, %s6, %s4
  // Predicated region
  $region2: #{stegastamp_decoder_forward.23} parent=0 // pred_check
    _
  $region3: #{stegastamp_decoder_forward.23} parent=0 // pred_check_branch
    %9 = sbr.rel (0) target = $region5
  $region4: #{stegastamp_decoder_forward.23} parent=0 // pred_region
    _
  $region5: #{stegastamp_decoder_forward.23} parent=0 // pred_fallthru
    _
  // Predicated region
  $region6: #{stegastamp_decoder_forward.23} parent=0 // pred_check
    _
  $region7: #{stegastamp_decoder_forward.23} parent=0 // pred_check_branch
    %11 = sbr.rel (0) target = $region9
  $region8: #{stegastamp_decoder_forward.23} parent=0 // pred_region
    _
  $region9: #{stegastamp_decoder_forward.23} parent=0 // pred_fallthru
    _
  // Predicated region
  $region10: #{stegastamp_decoder_forward.23} parent=0 // pred_check
    _
  $region11: #{stegastamp_decoder_forward.23} parent=0 // pred_check_branch
    %13 = sbr.rel (0) target = $region13
  $region12: #{stegastamp_decoder_forward.23} parent=0 // pred_region
    _
  $region13: #{stegastamp_decoder_forward.23} parent=0 // pred_fallthru
    _
  %v15 = vld [vmem:[%s0] sm:$0xff]
  %v16 = vld [vmem:[%s0 + $0x8] sm:$0x1]
  %v17 = vld [vmem:[%s1] sm:$0xf]
  %v18 = vld [vmem:[%s1 + $0x4] sm:$0xf]
  %v19 = vld [vmem:[%s1 + $0x8] sm:$0xf]
  %v20 = vld [vmem:[%s1 + $0xc] sm:$0xf]
  %v21 = vld [vmem:[%s1 + $0x10] sm:$0xf]
  %v22 = vld [vmem:[%s1 + $0x14] sm:$0xf]
  %v23 = vld [vmem:[%s1 + $0x18] sm:$0xf]
  %v24 = vld [vmem:[%s1 + $0x1c] sm:$0xf]
  %v25 = vld [vmem:[%s1 + $0x20] sm:$0xf]
  %v26 = vld [vmem:[%s1 + $0x24] sm:$0xf]
  %v27 = vld [vmem:[%s1 + $0x28] sm:$0xf]
  %v28 = vld [vmem:[%s1 + $0x2c] sm:$0xf]
  %v29 = vld [vmem:[%s1 + $0x30] sm:$0xf]
  %v30 = vld [vmem:[%s1 + $0x34] sm:$0xf]
  %v31 = vld [vmem:[%s1 + $0x38] sm:$0xf]
  %v32 = vld [vmem:[%s1 + $0x3c] sm:$0xf]
  %v33 = vld [vmem:[%s1 + $0x40] sm:$0xf]
  %v34 = vld [vmem:[%s1 + $0x44] sm:$0xf]
  %v35 = vld [vmem:[%s1 + $0x48] sm:$0xf]
  %v36 = vld [vmem:[%s1 + $0x4c] sm:$0xf]
  %v37 = vld [vmem:[%s1 + $0x50] sm:$0xf]
  %v38 = vld [vmem:[%s1 + $0x54] sm:$0xf]
  %v39 = vld [vmem:[%s1 + $0x58] sm:$0xf]
  %v40 = vld [vmem:[%s1 + $0x5c] sm:$0xf]
  %v41 = vld [vmem:[%s1 + $0x60] sm:$0xf]
  %v42 = vld [vmem:[%s1 + $0x64] sm:$0xf]
  %v43 = vld [vmem:[%s1 + $0x68] sm:$0xf]
  %v44 = vld [vmem:[%s1 + $0x6c] sm:$0xf]
  %v45 = vld [vmem:[%s1 + $0x70] sm:$0xf]
  %v46 = vld [vmem:[%s1 + $0x74] sm:$0xf]
  %v47 = vld [vmem:[%s1 + $0x78] sm:$0xf]
  %v48 = vld [vmem:[%s1 + $0x7c] sm:$0xf]
  %v49 = vld [vmem:[%s1 + $0x80] sm:$0xf]
  %v50 = vld [vmem:[%s1 + $0x84] sm:$0xf]
  %v51 = vld [vmem:[%s1 + $0x88] sm:$0xf]
  %v52 = vld [vmem:[%s1 + $0x8c] sm:$0xf]
  %v53 = vld [vmem:[%s1 + $0x90] sm:$0xf]
  %v54 = vld [vmem:[%s1 + $0x94] sm:$0xf]
  %v55 = vld [vmem:[%s1 + $0x98] sm:$0xf]
  %v56 = vld [vmem:[%s1 + $0x9c] sm:$0xf]
  %v57 = vld [vmem:[%s1 + $0xa0] sm:$0xf]
  %v58 = vld [vmem:[%s1 + $0xa4] sm:$0xf]
  %v59 = vld [vmem:[%s1 + $0xa8] sm:$0xf]
  %v60 = vld [vmem:[%s1 + $0xac] sm:$0xf]
  %v61 = vld [vmem:[%s1 + $0xb0] sm:$0xf]
  %v62 = vld [vmem:[%s1 + $0xb4] sm:$0xf]
  %v63 = vld [vmem:[%s1 + $0xb8] sm:$0xf]
  %v64 = vld [vmem:[%s1 + $0xbc] sm:$0xf]
  %v65 = vld [vmem:[%s1 + $0xc0] sm:$0xf]
  %v66 = vld [vmem:[%s1 + $0xc4] sm:$0xf]
  %v67 = vld [vmem:[%s1 + $0xc8] sm:$0xf]
  %v68 = vld [vmem:[%s1 + $0xcc] sm:$0xf]
  %v69 = vld [vmem:[%s1 + $0xd0] sm:$0xf]
  %v70 = vld [vmem:[%s1 + $0xd4] sm:$0xf]
  %v71 = vld [vmem:[%s1 + $0xd8] sm:$0xf]
  %v72 = vld [vmem:[%s1 + $0xdc] sm:$0xf]
  %v73 = vld [vmem:[%s1 + $0xe0] sm:$0xf]
  %v74 = vld [vmem:[%s1 + $0xe4] sm:$0xf]
  %v75 = vld [vmem:[%s1 + $0xe8] sm:$0xf]
  %v76 = vld [vmem:[%s1 + $0xec] sm:$0xf]
  %v77 = vld [vmem:[%s1 + $0xf0] sm:$0xf]
  %v78 = vld [vmem:[%s1 + $0xf4] sm:$0xf]
  %v79 = vld [vmem:[%s1 + $0xf8] sm:$0xf]
  %v80 = vld [vmem:[%s1 + $0xfc] sm:$0xf]
  %v81 = vld [vmem:[%s1 + $0x100] sm:$0xf]
  %v82 = vld [vmem:[%s1 + $0x104] sm:$0xf]
  %v83 = vld [vmem:[%s1 + $0x108] sm:$0xf]
  %v84 = vld [vmem:[%s1 + $0x10c] sm:$0xf]
  %v85 = vld [vmem:[%s1 + $0x110] sm:$0xf]
  %v86 = vld [vmem:[%s1 + $0x114] sm:$0xf]
  %v87 = vld [vmem:[%s1 + $0x118] sm:$0xf]
  %v88 = vld [vmem:[%s1 + $0x11c] sm:$0xf]
  %v89 = vld [vmem:[%s1 + $0x120] sm:$0xf]
  %v90 = vld [vmem:[%s1 + $0x124] sm:$0xf]
  %v91 = vld [vmem:[%s1 + $0x128] sm:$0xf]
  %v92 = vld [vmem:[%s1 + $0x12c] sm:$0xf]
  %v93 = vld [vmem:[%s1 + $0x130] sm:$0xf]
  %v94 = vld [vmem:[%s1 + $0x134] sm:$0xf]
  %v95 = vld [vmem:[%s1 + $0x138] sm:$0xf]
  %v96 = vld [vmem:[%s1 + $0x13c] sm:$0xf]
  %v97 = vld [vmem:[%s1 + $0x140] sm:$0xf]
  %v98 = vld [vmem:[%s1 + $0x144] sm:$0xf]
  %v99 = vld [vmem:[%s1 + $0x148] sm:$0xf]
  %v100 = vld [vmem:[%s1 + $0x14c] sm:$0xf]
  %v101 = vld [vmem:[%s1 + $0x150] sm:$0xf]
  %v102 = vld [vmem:[%s1 + $0x154] sm:$0xf]
  %v103 = vld [vmem:[%s1 + $0x158] sm:$0xf]
  %v104 = vld [vmem:[%s1 + $0x15c] sm:$0xf]
  %v105 = vld [vmem:[%s1 + $0x160] sm:$0xf]
  %v106 = vld [vmem:[%s1 + $0x164] sm:$0xf]
  %v107 = vld [vmem:[%s1 + $0x168] sm:$0xf]
  %v108 = vld [vmem:[%s1 + $0x16c] sm:$0xf]
  %v109 = vld [vmem:[%s1 + $0x170] sm:$0xf]
  %v110 = vld [vmem:[%s1 + $0x174] sm:$0xf]
  %v111 = vld [vmem:[%s1 + $0x178] sm:$0xf]
  %v112 = vld [vmem:[%s1 + $0x17c] sm:$0xf]
  %v113 = vld [vmem:[%s1 + $0x180] sm:$0xf]
  %v114 = vld [vmem:[%s1 + $0x184] sm:$0xf]
  %v115 = vld [vmem:[%s1 + $0x188] sm:$0xf]
  %v116 = vld [vmem:[%s1 + $0x18c] sm:$0xf]
  %v117 = vld [vmem:[%s1 + $0x190] sm:$0xf]
  %v118 = vld [vmem:[%s1 + $0x194] sm:$0xf]
  %v119 = vld [vmem:[%s1 + $0x198] sm:$0xf]
  %v120 = vld [vmem:[%s1 + $0x19c] sm:$0xf]
  %v121 = vld [vmem:[%s1 + $0x1a0] sm:$0xf]
  %v122 = vld [vmem:[%s1 + $0x1a4] sm:$0xf]
  %v123 = vld [vmem:[%s1 + $0x1a8] sm:$0xf]
  %v124 = vld [vmem:[%s1 + $0x1ac] sm:$0xf]
  %v125 = vld [vmem:[%s1 + $0x1b0] sm:$0xf]
  %v126 = vld [vmem:[%s1 + $0x1b4] sm:$0xf]
  %v127 = vld [vmem:[%s1 + $0x1b8] sm:$0xf]
  %v128 = vld [vmem:[%s1 + $0x1bc] sm:$0xf]
  %v129 = vld [vmem:[%s1 + $0x1c0] sm:$0xf]
  %v130 = vld [vmem:[%s1 + $0x1c4] sm:$0xf]
  %v131 = vld [vmem:[%s1 + $0x1c8] sm:$0xf]
  %v132 = vld [vmem:[%s1 + $0x1cc] sm:$0xf]
  %v133 = vld [vmem:[%s1 + $0x1d0] sm:$0xf]
  %v134 = vld [vmem:[%s1 + $0x1d4] sm:$0xf]
  %v135 = vld [vmem:[%s1 + $0x1d8] sm:$0xf]
  %v136 = vld [vmem:[%s1 + $0x1dc] sm:$0xf]
  %v137 = vld [vmem:[%s1 + $0x1e0] sm:$0xf]
  %v138 = vld [vmem:[%s1 + $0x1e4] sm:$0xf]
  %v139 = vld [vmem:[%s1 + $0x1e8] sm:$0xf]
  %v140 = vld [vmem:[%s1 + $0x1ec] sm:$0xf]
  %v141 = vld [vmem:[%s1 + $0x1f0] sm:$0xf]
  %v142 = vld [vmem:[%s1 + $0x1f4] sm:$0xf]
  %v143 = vld [vmem:[%s1 + $0x1f8] sm:$0xf]
  %v144 = vld [vmem:[%s1 + $0x1fc] sm:$0xf]
  %v145 = vld [vmem:[%s1 + $0x200] sm:$0xf]
  %v146 = vld [vmem:[%s1 + $0x204] sm:$0xf]
  %v147 = vld [vmem:[%s1 + $0x208] sm:$0xf]
  %v148 = vld [vmem:[%s1 + $0x20c] sm:$0xf]
  %v149 = vld [vmem:[%s1 + $0x210] sm:$0xf]
  %v150 = vld [vmem:[%s1 + $0x214] sm:$0xf]
  %v151 = vld [vmem:[%s1 + $0x218] sm:$0xf]
  %v152 = vld [vmem:[%s1 + $0x21c] sm:$0xf]
  %v153 = vld [vmem:[%s1 + $0x220] sm:$0xf]
  %v154 = vld [vmem:[%s1 + $0x224] sm:$0xf]
  %v155 = vld [vmem:[%s1 + $0x228] sm:$0xf]
  %v156 = vld [vmem:[%s1 + $0x22c] sm:$0xf]
  %v157 = vld [vmem:[%s1 + $0x230] sm:$0xf]
  %v158 = vld [vmem:[%s1 + $0x234] sm:$0xf]
  %v159 = vld [vmem:[%s1 + $0x238] sm:$0xf]
  %v160 = vld [vmem:[%s1 + $0x23c] sm:$0xf]
  %v161 = vld [vmem:[%s2] sm:$0x1]
  %v163 = vlaneseq
  %v164 = vshrl.u32 %v163, 7
  %v165 = vsub.s32 0, %v164
  %v166 = vrot.slane %v161, %v165
  %v170 = vcombine.high %v15, %v15
  %v172 = vunpack.c.l.s4 1966171168
  %v173 = vunpack.c.0.s8 %v172
  %v174 = vlaneseq
  %v175 = vshrl.u32 %v174, 7
  %v176 = vsub.s32 %v173, %v175
  %v177 = vrot.slane %v15, %v176
  %v179 = vunpack.c.l.s4 1966171168
  %v180 = vunpack.c.0.s8 %v179
  %v181 = vlaneseq
  %v182 = vshrl.u32 %v181, 7
  %v183 = vsub.s32 %v180, %v182
  %v184 = vrot.slane %v170, %v183
  %v185 = vcombine.high %v177, %v177
  %v186 = vcombine.high %v184, %v184
  %v188 = vunpack.c.l.s4 1966171168
  %v189 = vunpack.c.0.s8 %v188
  %v190 = vlaneseq
  %v191 = vshrl.u32 %v190, 7
  %v192 = vsub.s32 %v189, %v191
  %v193 = vrot.slane %v177, %v192
  %v195 = vunpack.c.l.s4 1966171168
  %v196 = vunpack.c.0.s8 %v195
  %v197 = vlaneseq
  %v198 = vshrl.u32 %v197, 7
  %v199 = vsub.s32 %v196, %v198
  %v200 = vrot.slane %v184, %v199
  %v202 = vunpack.c.l.s4 1966171168
  %v203 = vunpack.c.0.s8 %v202
  %v204 = vlaneseq
  %v205 = vshrl.u32 %v204, 7
  %v206 = vsub.s32 %v203, %v205
  %v207 = vrot.slane %v185, %v206
  %v209 = vunpack.c.l.s4 1966171168
  %v210 = vunpack.c.0.s8 %v209
  %v211 = vlaneseq
  %v212 = vshrl.u32 %v211, 7
  %v213 = vsub.s32 %v210, %v212
  %v214 = vrot.slane %v186, %v213
  %v215 = vcombine.high %v193, %v193
  %v216 = vcombine.high %v200, %v200
  %v217 = vcombine.high %v207, %v207
  %v218 = vcombine.high %v214, %v214
  %v220 = vunpack.c.l.s4 1966171168
  %v221 = vunpack.c.0.s8 %v220
  %v222 = vlaneseq
  %v223 = vshrl.u32 %v222, 7
  %v224 = vsub.s32 %v221, %v223
  %v225 = vrot.slane %v16, %v224
  %v227 = vunpack.c.l.s4 1966171168
  %v228 = vunpack.c.0.s8 %v227
  %v229 = vlaneseq
  %v230 = vshrl.u32 %v229, 7
  %v231 = vsub.s32 %v228, %v230
  %v232 = vrot.slane %v225, %v231
  %v386 = vunpack.c.l.b16 %v17
  %v387 = vunpack.c.l.b16 %v18
  %v388 = vunpack.c.l.b16 %v19
  %v389 = vunpack.c.l.b16 %v20
  %v390 = vunpack.c.l.b16 %v21
  %v391 = vunpack.c.l.b16 %v22
  %v392 = vunpack.c.l.b16 %v23
  %v393 = vunpack.c.l.b16 %v24
  %v394 = vunpack.c.l.b16 %v25
  %v395 = vunpack.c.l.b16 %v26
  %v396 = vunpack.c.l.b16 %v27
  %v397 = vunpack.c.l.b16 %v28
  %v398 = vunpack.c.l.b16 %v29
  %v399 = vunpack.c.l.b16 %v30
  %v400 = vunpack.c.l.b16 %v31
  %v401 = vunpack.c.l.b16 %v32
  %v402 = vunpack.c.l.b16 %v33
  %v403 = vunpack.c.l.b16 %v34
  %v404 = vunpack.c.l.b16 %v35
  %v405 = vunpack.c.l.b16 %v36
  %v406 = vunpack.c.l.b16 %v37
  %v407 = vunpack.c.l.b16 %v38
  %v408 = vunpack.c.l.b16 %v39
  %v409 = vunpack.c.l.b16 %v40
  %v410 = vunpack.c.l.b16 %v41
  %v411 = vunpack.c.l.b16 %v42
  %v412 = vunpack.c.l.b16 %v43
  %v413 = vunpack.c.l.b16 %v44
  %v414 = vunpack.c.l.b16 %v45
  %v415 = vunpack.c.l.b16 %v46
  %v416 = vunpack.c.l.b16 %v47
  %v417 = vunpack.c.l.b16 %v48
  %v418 = vunpack.c.l.b16 %v49
  %v419 = vunpack.c.l.b16 %v50
  %v420 = vunpack.c.l.b16 %v51
  %v421 = vunpack.c.l.b16 %v52
  %v422 = vunpack.c.l.b16 %v53
  %v423 = vunpack.c.l.b16 %v54
  %v424 = vunpack.c.l.b16 %v55
  %v425 = vunpack.c.l.b16 %v56
  %v426 = vunpack.c.l.b16 %v57
  %v427 = vunpack.c.l.b16 %v58
  %v428 = vunpack.c.l.b16 %v59
  %v429 = vunpack.c.l.b16 %v60
  %v430 = vunpack.c.l.b16 %v61
  %v431 = vunpack.c.l.b16 %v62
  %v432 = vunpack.c.l.b16 %v63
  %v433 = vunpack.c.l.b16 %v64
  %v434 = vunpack.c.l.b16 %v65
  %v435 = vunpack.c.l.b16 %v66
  %v436 = vunpack.c.l.b16 %v67
  %v437 = vunpack.c.l.b16 %v68
  %v438 = vunpack.c.l.b16 %v69
  %v439 = vunpack.c.l.b16 %v70
  %v440 = vunpack.c.l.b16 %v71
  %v441 = vunpack.c.l.b16 %v72
  %v442 = vunpack.c.l.b16 %v73
  %v443 = vunpack.c.l.b16 %v74
  %v444 = vunpack.c.l.b16 %v75
  %v445 = vunpack.c.l.b16 %v76
  %v446 = vunpack.c.l.b16 %v77
  %v447 = vunpack.c.l.b16 %v78
  %v448 = vunpack.c.l.b16 %v79
  %v449 = vunpack.c.l.b16 %v80
  %v450 = vunpack.c.l.b16 %v81
  %v451 = vunpack.c.l.b16 %v82
  %v452 = vunpack.c.l.b16 %v83
  %v453 = vunpack.c.l.b16 %v84
  %v454 = vunpack.c.l.b16 %v85
  %v455 = vunpack.c.l.b16 %v86
  %v456 = vunpack.c.l.b16 %v87
  %v457 = vunpack.c.l.b16 %v88
  %v458 = vunpack.c.l.b16 %v89
  %v459 = vunpack.c.l.b16 %v90
  %v460 = vunpack.c.l.b16 %v91
  %v461 = vunpack.c.l.b16 %v92
  %v462 = vunpack.c.l.b16 %v93
  %v463 = vunpack.c.l.b16 %v94
  %v464 = vunpack.c.l.b16 %v95
  %v465 = vunpack.c.l.b16 %v96
  %v466 = vunpack.c.l.b16 %v97
  %v467 = vunpack.c.l.b16 %v98
  %v468 = vunpack.c.l.b16 %v99
  %v469 = vunpack.c.l.b16 %v100
  %v470 = vunpack.c.l.b16 %v101
  %v471 = vunpack.c.l.b16 %v102
  %v472 = vunpack.c.l.b16 %v103
  %v473 = vunpack.c.l.b16 %v104
  %v474 = vunpack.c.l.b16 %v105
  %v475 = vunpack.c.l.b16 %v106
  %v476 = vunpack.c.l.b16 %v107
  %v477 = vunpack.c.l.b16 %v108
  %v478 = vunpack.c.l.b16 %v109
  %v479 = vunpack.c.l.b16 %v110
  %v480 = vunpack.c.l.b16 %v111
  %v481 = vunpack.c.l.b16 %v112
  %v482 = vunpack.c.l.b16 %v113
  %v483 = vunpack.c.l.b16 %v114
  %v484 = vunpack.c.l.b16 %v115
  %v485 = vunpack.c.l.b16 %v116
  %v486 = vunpack.c.l.b16 %v117
  %v487 = vunpack.c.l.b16 %v118
  %v488 = vunpack.c.l.b16 %v119
  %v489 = vunpack.c.l.b16 %v120
  %v490 = vunpack.c.l.b16 %v121
  %v491 = vunpack.c.l.b16 %v122
  %v492 = vunpack.c.l.b16 %v123
  %v493 = vunpack.c.l.b16 %v124
  %v494 = vunpack.c.l.b16 %v125
  %v495 = vunpack.c.l.b16 %v126
  %v496 = vunpack.c.l.b16 %v127
  %v497 = vunpack.c.l.b16 %v128
  %v498 = vunpack.c.l.b16 %v129
  %v499 = vunpack.c.l.b16 %v130
  %v500 = vunpack.c.l.b16 %v131
  %v501 = vunpack.c.l.b16 %v132
  %v502 = vunpack.c.l.b16 %v133
  %v503 = vunpack.c.l.b16 %v134
  %v504 = vunpack.c.l.b16 %v135
  %v505 = vunpack.c.l.b16 %v136
  %v506 = vunpack.c.l.b16 %v137
  %v507 = vunpack.c.l.b16 %v138
  %v508 = vunpack.c.l.b16 %v139
  %v509 = vunpack.c.l.b16 %v140
  %v510 = vunpack.c.l.b16 %v141
  %v511 = vunpack.c.l.b16 %v142
  %v512 = vunpack.c.l.b16 %v143
  %v513 = vunpack.c.l.b16 %v144
  %v514 = vunpack.c.l.b16 %v145
  %v515 = vunpack.c.l.b16 %v146
  %v516 = vunpack.c.l.b16 %v147
  %v517 = vunpack.c.l.b16 %v148
  %v518 = vunpack.c.l.b16 %v149
  %v519 = vunpack.c.l.b16 %v150
  %v520 = vunpack.c.l.b16 %v151
  %v521 = vunpack.c.l.b16 %v152
  %v522 = vunpack.c.l.b16 %v153
  %v523 = vunpack.c.l.b16 %v154
  %v524 = vunpack.c.l.b16 %v155
  %v525 = vunpack.c.l.b16 %v156
  %v526 = vunpack.c.l.b16 %v157
  %v527 = vunpack.c.l.b16 %v158
  %v528 = vunpack.c.l.b16 %v159
  %v529 = vunpack.c.l.b16 %v160
  %v530 = vpack.c.b16 %v387, %v386
  %v531 = vpack.c.b16 %v389, %v388
  %v532 = vpack.c.b16 %v391, %v390
  %v533 = vpack.c.b16 %v393, %v392
  %v534 = vpack.c.b16 %v395, %v394
  %v535 = vpack.c.b16 %v397, %v396
  %v536 = vpack.c.b16 %v399, %v398
  %v537 = vpack.c.b16 %v401, %v400
  %v538 = vpack.c.b16 %v403, %v402
  %v539 = vpack.c.b16 %v405, %v404
  %v540 = vpack.c.b16 %v407, %v406
  %v541 = vpack.c.b16 %v409, %v408
  %v542 = vpack.c.b16 %v411, %v410
  %v543 = vpack.c.b16 %v413, %v412
  %v544 = vpack.c.b16 %v415, %v414
  %v545 = vpack.c.b16 %v417, %v416
  %v546 = vpack.c.b16 %v419, %v418
  %v547 = vpack.c.b16 %v421, %v420
  %v548 = vpack.c.b16 %v423, %v422
  %v549 = vpack.c.b16 %v425, %v424
  %v550 = vpack.c.b16 %v427, %v426
  %v551 = vpack.c.b16 %v429, %v428
  %v552 = vpack.c.b16 %v431, %v430
  %v553 = vpack.c.b16 %v433, %v432
  %v554 = vpack.c.b16 %v435, %v434
  %v555 = vpack.c.b16 %v437, %v436
  %v556 = vpack.c.b16 %v439, %v438
  %v557 = vpack.c.b16 %v441, %v440
  %v558 = vpack.c.b16 %v443, %v442
  %v559 = vpack.c.b16 %v445, %v444
  %v560 = vpack.c.b16 %v447, %v446
  %v561 = vpack.c.b16 %v449, %v448
  %v562 = vpack.c.b16 %v451, %v450
  %v563 = vpack.c.b16 %v453, %v452
  %v564 = vpack.c.b16 %v455, %v454
  %v565 = vpack.c.b16 %v457, %v456
  %v566 = vpack.c.b16 %v459, %v458
  %v567 = vpack.c.b16 %v461, %v460
  %v568 = vpack.c.b16 %v463, %v462
  %v569 = vpack.c.b16 %v465, %v464
  %v570 = vpack.c.b16 %v467, %v466
  %v571 = vpack.c.b16 %v469, %v468
  %v572 = vpack.c.b16 %v471, %v470
  %v573 = vpack.c.b16 %v473, %v472
  %v574 = vpack.c.b16 %v475, %v474
  %v575 = vpack.c.b16 %v477, %v476
  %v576 = vpack.c.b16 %v479, %v478
  %v577 = vpack.c.b16 %v481, %v480
  %v578 = vpack.c.b16 %v483, %v482
  %v579 = vpack.c.b16 %v485, %v484
  %v580 = vpack.c.b16 %v487, %v486
  %v581 = vpack.c.b16 %v489, %v488
  %v582 = vpack.c.b16 %v491, %v490
  %v583 = vpack.c.b16 %v493, %v492
  %v584 = vpack.c.b16 %v495, %v494
  %v585 = vpack.c.b16 %v497, %v496
  %v586 = vpack.c.b16 %v499, %v498
  %v587 = vpack.c.b16 %v501, %v500
  %v588 = vpack.c.b16 %v503, %v502
  %v589 = vpack.c.b16 %v505, %v504
  %v590 = vpack.c.b16 %v507, %v506
  %v591 = vpack.c.b16 %v509, %v508
  %v592 = vpack.c.b16 %v511, %v510
  %v593 = vpack.c.b16 %v513, %v512
  %v594 = vpack.c.b16 %v515, %v514
  %v595 = vpack.c.b16 %v517, %v516
  %v596 = vpack.c.b16 %v519, %v518
  %v597 = vpack.c.b16 %v521, %v520
  %v598 = vpack.c.b16 %v523, %v522
  %v599 = vpack.c.b16 %v525, %v524
  %v600 = vpack.c.b16 %v527, %v526
  %v601 = vpack.c.b16 %v529, %v528
  %674 = vmatprep.subr.bf16.mxu0 0
  %675 = vmatpush1.bf16.msra.mxu0 %v530
  %676 = vmatprep.subr.bf16.mxu0 0
  %677 = vmatpush1.bf16.msra.mxu0 %v531
  %678 = vmatprep.subr.bf16.mxu0 0
  %679 = vmatpush1.bf16.msra.mxu0 %v532
  %680 = vmatprep.subr.bf16.mxu0 0
  %681 = vmatpush1.bf16.msra.mxu0 %v533
  %682 = vmatprep.subr.bf16.mxu0 0
  %683 = vmatpush1.bf16.msra.mxu0 %v534
  %684 = vmatprep.subr.bf16.mxu0 0
  %685 = vmatpush1.bf16.msra.mxu0 %v535
  %686 = vmatprep.subr.bf16.mxu0 0
  %687 = vmatpush1.bf16.msra.mxu0 %v536
  %688 = vmatprep.subr.bf16.mxu0 0
  %689 = vmatpush1.bf16.msra.mxu0 %v537
  %690 = vmatprep.subr.bf16.mxu0 0
  %691 = vmatpush1.bf16.msra.mxu0 %v538
  %692 = vmatprep.subr.bf16.mxu0 0
  %693 = vmatpush1.bf16.msra.mxu0 %v539
  %694 = vmatprep.subr.bf16.mxu0 0
  %695 = vmatpush1.bf16.msra.mxu0 %v540
  %696 = vmatprep.subr.bf16.mxu0 0
  %697 = vmatpush1.bf16.msra.mxu0 %v541
  %698 = vmatprep.subr.bf16.mxu0 0
  %699 = vmatpush1.bf16.msra.mxu0 %v542
  %700 = vmatprep.subr.bf16.mxu0 0
  %701 = vmatpush1.bf16.msra.mxu0 %v543
  %702 = vmatprep.subr.bf16.mxu0 0
  %703 = vmatpush1.bf16.msra.mxu0 %v544
  %704 = vmatprep.subr.bf16.mxu0 0
  %705 = vmatpush1.bf16.msra.mxu0 %v545
  %706 = vmatprep.mubr.bf16.mxu0 %v207
  %707 = vmatmul.mubr.bf16.gmra.mrb[0].mxu0 %v193
  %v708 = vpop.f32.mrb[0].mxu0
  %v709 = vadd.f32 %v166, %v708
  %v710 = vpop.f32.mrb[0].mxu0
  %v711 = vpop.f32.mrb[0].mxu0
  %v712 = vpop.f32.mrb[0].mxu0
  %713 = vdwg.mxu0
  %714 = vmatprep.subr.bf16.mxu0 0
  %715 = vmatpush1.bf16.msra.mxu0 %v546
  %716 = vmatprep.subr.bf16.mxu0 0
  %717 = vmatpush1.bf16.msra.mxu0 %v547
  %718 = vmatprep.subr.bf16.mxu0 0
  %719 = vmatpush1.bf16.msra.mxu0 %v548
  %720 = vmatprep.subr.bf16.mxu0 0
  %721 = vmatpush1.bf16.msra.mxu0 %v549
  %722 = vmatprep.subr.bf16.mxu0 0
  %723 = vmatpush1.bf16.msra.mxu0 %v550
  %724 = vmatprep.subr.bf16.mxu0 0
  %725 = vmatpush1.bf16.msra.mxu0 %v551
  %726 = vmatprep.subr.bf16.mxu0 0
  %727 = vmatpush1.bf16.msra.mxu0 %v552
  %728 = vmatprep.subr.bf16.mxu0 0
  %729 = vmatpush1.bf16.msra.mxu0 %v553
  %730 = vmatprep.subr.bf16.mxu0 0
  %731 = vmatpush1.bf16.msra.mxu0 %v554
  %732 = vmatprep.subr.bf16.mxu0 0
  %733 = vmatpush1.bf16.msra.mxu0 %v555
  %734 = vmatprep.subr.bf16.mxu0 0
  %735 = vmatpush1.bf16.msra.mxu0 %v556
  %736 = vmatprep.subr.bf16.mxu0 0
  %737 = vmatpush1.bf16.msra.mxu0 %v557
  %738 = vmatprep.subr.bf16.mxu0 0
  %739 = vmatpush1.bf16.msra.mxu0 %v558
  %740 = vmatprep.subr.bf16.mxu0 0
  %741 = vmatpush1.bf16.msra.mxu0 %v559
  %742 = vmatprep.subr.bf16.mxu0 0
  %743 = vmatpush1.bf16.msra.mxu0 %v560
  %744 = vmatprep.subr.bf16.mxu0 0
  %745 = vmatpush1.bf16.msra.mxu0 %v561
  %746 = vmatprep.mubr.bf16.mxu0 %v217
  %747 = vmatmul.mubr.bf16.gmra.mrb[0].mxu0 %v215
  %v748 = vpop.f32.mrb[0].mxu0
  %v749 = vadd.f32 %v709, %v748
  %v750 = vpop.f32.mrb[0].mxu0
  %v751 = vpop.f32.mrb[0].mxu0
  %v752 = vpop.f32.mrb[0].mxu0
  %753 = vdwg.mxu0
  %754 = vmatprep.subr.bf16.mxu0 0
  %755 = vmatpush1.bf16.msra.mxu0 %v562
  %756 = vmatprep.subr.bf16.mxu0 0
  %757 = vmatpush1.bf16.msra.mxu0 %v563
  %758 = vmatprep.subr.bf16.mxu0 0
  %759 = vmatpush1.bf16.msra.mxu0 %v564
  %760 = vmatprep.subr.bf16.mxu0 0
  %761 = vmatpush1.bf16.msra.mxu0 %v565
  %762 = vmatprep.subr.bf16.mxu0 0
  %763 = vmatpush1.bf16.msra.mxu0 %v566
  %764 = vmatprep.subr.bf16.mxu0 0
  %765 = vmatpush1.bf16.msra.mxu0 %v567
  %766 = vmatprep.subr.bf16.mxu0 0
  %767 = vmatpush1.bf16.msra.mxu0 %v568
  %768 = vmatprep.subr.bf16.mxu0 0
  %769 = vmatpush1.bf16.msra.mxu0 %v569
  %770 = vmatprep.subr.bf16.mxu0 0
  %771 = vmatpush1.bf16.msra.mxu0 %v570
  %772 = vmatprep.subr.bf16.mxu0 0
  %773 = vmatpush1.bf16.msra.mxu0 %v571
  %774 = vmatprep.subr.bf16.mxu0 0
  %775 = vmatpush1.bf16.msra.mxu0 %v572
  %776 = vmatprep.subr.bf16.mxu0 0
  %777 = vmatpush1.bf16.msra.mxu0 %v573
  %778 = vmatprep.subr.bf16.mxu0 0
  %779 = vmatpush1.bf16.msra.mxu0 %v574
  %780 = vmatprep.subr.bf16.mxu0 0
  %781 = vmatpush1.bf16.msra.mxu0 %v575
  %782 = vmatprep.subr.bf16.mxu0 0
  %783 = vmatpush1.bf16.msra.mxu0 %v576
  %784 = vmatprep.subr.bf16.mxu0 0
  %785 = vmatpush1.bf16.msra.mxu0 %v577
  %786 = vmatprep.mubr.bf16.mxu0 %v214
  %787 = vmatmul.mubr.bf16.gmra.mrb[0].mxu0 %v200
  %v788 = vpop.f32.mrb[0].mxu0
  %v789 = vadd.f32 %v749, %v788
  %v790 = vpop.f32.mrb[0].mxu0
  %v791 = vpop.f32.mrb[0].mxu0
  %v792 = vpop.f32.mrb[0].mxu0
  %793 = vdwg.mxu0
  %794 = vmatprep.subr.bf16.mxu0 0
  %795 = vmatpush1.bf16.msra.mxu0 %v578
  %796 = vmatprep.subr.bf16.mxu0 0
  %797 = vmatpush1.bf16.msra.mxu0 %v579
  %798 = vmatprep.subr.bf16.mxu0 0
  %799 = vmatpush1.bf16.msra.mxu0 %v580
  %800 = vmatprep.subr.bf16.mxu0 0
  %801 = vmatpush1.bf16.msra.mxu0 %v581
  %802 = vmatprep.subr.bf16.mxu0 0
  %803 = vmatpush1.bf16.msra.mxu0 %v582
  %804 = vmatprep.subr.bf16.mxu0 0
  %805 = vmatpush1.bf16.msra.mxu0 %v583
  %806 = vmatprep.subr.bf16.mxu0 0
  %807 = vmatpush1.bf16.msra.mxu0 %v584
  %808 = vmatprep.subr.bf16.mxu0 0
  %809 = vmatpush1.bf16.msra.mxu0 %v585
  %810 = vmatprep.subr.bf16.mxu0 0
  %811 = vmatpush1.bf16.msra.mxu0 %v586
  %812 = vmatprep.subr.bf16.mxu0 0
  %813 = vmatpush1.bf16.msra.mxu0 %v587
  %814 = vmatprep.subr.bf16.mxu0 0
  %815 = vmatpush1.bf16.msra.mxu0 %v588
  %816 = vmatprep.subr.bf16.mxu0 0
  %817 = vmatpush1.bf16.msra.mxu0 %v589
  %818 = vmatprep.subr.bf16.mxu0 0
  %819 = vmatpush1.bf16.msra.mxu0 %v590
  %820 = vmatprep.subr.bf16.mxu0 0
  %821 = vmatpush1.bf16.msra.mxu0 %v591
  %822 = vmatprep.subr.bf16.mxu0 0
  %823 = vmatpush1.bf16.msra.mxu0 %v592
  %824 = vmatprep.subr.bf16.mxu0 0
  %825 = vmatpush1.bf16.msra.mxu0 %v593
  %826 = vmatprep.mubr.bf16.mxu0 %v218
  %827 = vmatmul.mubr.bf16.gmra.mrb[0].mxu0 %v216
  %v828 = vpop.f32.mrb[0].mxu0
  %v829 = vadd.f32 %v789, %v828
  %v830 = vpop.f32.mrb[0].mxu0
  %v831 = vpop.f32.mrb[0].mxu0
  %v832 = vpop.f32.mrb[0].mxu0
  %833 = vdwg.mxu0
  %834 = vmatprep.subr.bf16.mxu0 0
  %835 = vmatpush1.bf16.msra.mxu0 %v594
  %836 = vmatprep.subr.bf16.mxu0 0
  %837 = vmatpush1.bf16.msra.mxu0 %v595
  %838 = vmatprep.subr.bf16.mxu0 0
  %839 = vmatpush1.bf16.msra.mxu0 %v596
  %840 = vmatprep.subr.bf16.mxu0 0
  %841 = vmatpush1.bf16.msra.mxu0 %v597
  %842 = vmatprep.subr.bf16.mxu0 0
  %843 = vmatpush1.bf16.msra.mxu0 %v598
  %844 = vmatprep.subr.bf16.mxu0 0
  %845 = vmatpush1.bf16.msra.mxu0 %v599
  %846 = vmatprep.subr.bf16.mxu0 0
  %847 = vmatpush1.bf16.msra.mxu0 %v600
  %848 = vmatprep.subr.bf16.mxu0 0
  %849 = vmatpush1.bf16.msra.mxu0 %v601
  %850 = vmatprep.subr.bf16.mxu0 0
  %851 = vmatpush1.bf16.msra.mxu0 0
  %852 = vmatprep.subr.bf16.mxu0 0
  %853 = vmatpush1.bf16.msra.mxu0 0
  %854 = vmatprep.subr.bf16.mxu0 0
  %855 = vmatpush1.bf16.msra.mxu0 0
  %856 = vmatprep.subr.bf16.mxu0 0
  %857 = vmatpush1.bf16.msra.mxu0 0
  %858 = vmatprep.subr.bf16.mxu0 0
  %859 = vmatpush1.bf16.msra.mxu0 0
  %860 = vmatprep.subr.bf16.mxu0 0
  %861 = vmatpush1.bf16.msra.mxu0 0
  %862 = vmatprep.subr.bf16.mxu0 0
  %863 = vmatpush1.bf16.msra.mxu0 0
  %864 = vmatprep.subr.bf16.mxu0 0
  %865 = vmatpush1.bf16.msra.mxu0 0
  %866 = vmatprep.mubr.bf16.mxu0 0
  %867 = vmatmul.mubr.bf16.gmra.mrb[0].mxu0 %v232
  %v868 = vpop.f32.mrb[0].mxu0
  %v869 = vadd.f32 %v829, %v868
  %v870 = vpop.f32.mrb[0].mxu0
  %v871 = vpop.f32.mrb[0].mxu0
  %v872 = vpop.f32.mrb[0].mxu0
  %873 = vdwg.mxu0
  %v874 = vmax.f32 %v869, 0.0
  %v875 = vpack.c.bf16 %v874, %v874
  %876 = vst [vmem:[%s3] sm:$0x1] %v875
  // Predicated region
  $region14: #{stegastamp_decoder_forward.23} parent=0 // pred_check
    _
  $region15: #{stegastamp_decoder_forward.23} parent=0 // pred_check_branch
    %878 = sbr.rel (0) target = $region17
  $region16: #{stegastamp_decoder_forward.23} parent=0 // pred_region
    _
  $region17: #{stegastamp_decoder_forward.23} parent=0 // pred_fallthru
    _
  // Predicated region
  $region18: #{stegastamp_decoder_forward.23} parent=0 // pred_check
    _
  $region19: #{stegastamp_decoder_forward.23} parent=0 // pred_check_branch
    %880 = sbr.rel (0) target = $region21
  $region20: #{stegastamp_decoder_forward.23} parent=0 // pred_region
    _
  $region21: #{stegastamp_decoder_forward.23} parent=0 // pred_fallthru
    _

// kernel: stegastamp_decoder_forward.24
$region0: #{stegastamp_decoder_forward.24}
  #allocation0 [shape = 'u32[]', space=smem, size = 0x4, offset = 0x4, fixed_abs, tag = 'smem constant byte address 0x4 - core index']
  #allocation1 [shape = 'u32[144,128]{1,0:T(1,128)}', space=vmem, size = 0x12000, scoped, tag = 'internal scratch']
  %s0 = inlined_call_operand.vmem [shape: bf16[2,128], index: 0, kind: input, shape index: {}]
  %s1 = inlined_call_operand.vmem [shape: bf16[128,512], index: 1, kind: input, shape index: {}]
  %s2 = inlined_call_operand.vmem [shape: f32[1,512], index: 2, kind: input, shape index: {}]
  %s3 = inlined_call_operand.vmem [shape: bf16[2,512], index: 3, kind: output, shape index: {}]
  %s4 = sld [smem:[#allocation0]]
  $region22: #{stegastamp_decoder_forward.24} parent=0
    _
  %s6 = ssub.s32 1, %s4
  %s7 = scalar_select 0, %s6, %s4
  // Predicated region
  $region2: #{stegastamp_decoder_forward.24} parent=0 // pred_check
    _
  $region3: #{stegastamp_decoder_forward.24} parent=0 // pred_check_branch
    %9 = sbr.rel (0) target = $region5
  $region4: #{stegastamp_decoder_forward.24} parent=0 // pred_region
    _
  $region5: #{stegastamp_decoder_forward.24} parent=0 // pred_fallthru
    _
  // Predicated region
  $region6: #{stegastamp_decoder_forward.24} parent=0 // pred_check
    _
  $region7: #{stegastamp_decoder_forward.24} parent=0 // pred_check_branch
    %11 = sbr.rel (0) target = $region9
  $region8: #{stegastamp_decoder_forward.24} parent=0 // pred_region
    _
  $region9: #{stegastamp_decoder_forward.24} parent=0 // pred_fallthru
    _
  // Predicated region
  $region10: #{stegastamp_decoder_forward.24} parent=0 // pred_check
    _
  $region11: #{stegastamp_decoder_forward.24} parent=0 // pred_check_branch
    %13 = sbr.rel (0) target = $region13
  $region12: #{stegastamp_decoder_forward.24} parent=0 // pred_region
    _
  $region13: #{stegastamp_decoder_forward.24} parent=0 // pred_fallthru
    _
  %v15 = vld [vmem:[%s0] sm:$0x1]
  %v16 = vld [vmem:[%s1] sm:$0xff]
  %v17 = vld [vmem:[%s1 + $0x8] sm:$0xff]
  %v18 = vld [vmem:[%s1 + $0x10] sm:$0xff]
  %v19 = vld [vmem:[%s1 + $0x18] sm:$0xff]
  %v20 = vld [vmem:[%s1 + $0x20] sm:$0xff]
  %v21 = vld [vmem:[%s1 + $0x28] sm:$0xff]
  %v22 = vld [vmem:[%s1 + $0x30] sm:$0xff]
  %v23 = vld [vmem:[%s1 + $0x38] sm:$0xff]
  %v24 = vld [vmem:[%s1 + $0x40] sm:$0xff]
  %v25 = vld [vmem:[%s1 + $0x48] sm:$0xff]
  %v26 = vld [vmem:[%s1 + $0x50] sm:$0xff]
  %v27 = vld [vmem:[%s1 + $0x58] sm:$0xff]
  %v28 = vld [vmem:[%s1 + $0x60] sm:$0xff]
  %v29 = vld [vmem:[%s1 + $0x68] sm:$0xff]
  %v30 = vld [vmem:[%s1 + $0x70] sm:$0xff]
  %v31 = vld [vmem:[%s1 + $0x78] sm:$0xff]
  %v32 = vld [vmem:[%s1 + $0x80] sm:$0xff]
  %v33 = vld [vmem:[%s1 + $0x88] sm:$0xff]
  %v34 = vld [vmem:[%s1 + $0x90] sm:$0xff]
  %v35 = vld [vmem:[%s1 + $0x98] sm:$0xff]
  %v36 = vld [vmem:[%s1 + $0xa0] sm:$0xff]
  %v37 = vld [vmem:[%s1 + $0xa8] sm:$0xff]
  %v38 = vld [vmem:[%s1 + $0xb0] sm:$0xff]
  %v39 = vld [vmem:[%s1 + $0xb8] sm:$0xff]
  %v40 = vld [vmem:[%s1 + $0xc0] sm:$0xff]
  %v41 = vld [vmem:[%s1 + $0xc8] sm:$0xff]
  %v42 = vld [vmem:[%s1 + $0xd0] sm:$0xff]
  %v43 = vld [vmem:[%s1 + $0xd8] sm:$0xff]
  %v44 = vld [vmem:[%s1 + $0xe0] sm:$0xff]
  %v45 = vld [vmem:[%s1 + $0xe8] sm:$0xff]
  %v46 = vld [vmem:[%s1 + $0xf0] sm:$0xff]
  %v47 = vld [vmem:[%s1 + $0xf8] sm:$0xff]
  %v48 = vld [vmem:[%s2] sm:$0xf]
  %v50 = vlaneseq
  %v51 = vshrl.u32 %v50, 7
  %v52 = vsub.s32 0, %v51
  %v53 = vrot.slane %v48, %v52
  %v54 = vlaneseq
  %v55 = vshrl.u32 %v54, 7
  %v56 = vsub.s32 1, %v55
  %v57 = vrot.slane %v48, %v56
  %v58 = vlaneseq
  %v59 = vshrl.u32 %v58, 7
  %v60 = vsub.s32 2, %v59
  %v61 = vrot.slane %v48, %v60
  %v62 = vlaneseq
  %v63 = vshrl.u32 %v62, 7
  %v64 = vsub.s32 3, %v63
  %v65 = vrot.slane %v48, %v64
  %v102 = vunpack.c.l.b16 %v16
  %v103 = vunpack.c.h.b16 %v16
  %v104 = vunpack.c.l.b16 %v17
  %v105 = vunpack.c.h.b16 %v17
  %v106 = vunpack.c.l.b16 %v18
  %v107 = vunpack.c.h.b16 %v18
  %v108 = vunpack.c.l.b16 %v19
  %v109 = vunpack.c.h.b16 %v19
  %v110 = vunpack.c.l.b16 %v20
  %v111 = vunpack.c.h.b16 %v20
  %v112 = vunpack.c.l.b16 %v21
  %v113 = vunpack.c.h.b16 %v21
  %v114 = vunpack.c.l.b16 %v22
  %v115 = vunpack.c.h.b16 %v22
  %v116 = vunpack.c.l.b16 %v23
  %v117 = vunpack.c.h.b16 %v23
  %v118 = vunpack.c.l.b16 %v24
  %v119 = vunpack.c.h.b16 %v24
  %v120 = vunpack.c.l.b16 %v25
  %v121 = vunpack.c.h.b16 %v25
  %v122 = vunpack.c.l.b16 %v26
  %v123 = vunpack.c.h.b16 %v26
  %v124 = vunpack.c.l.b16 %v27
  %v125 = vunpack.c.h.b16 %v27
  %v126 = vunpack.c.l.b16 %v28
  %v127 = vunpack.c.h.b16 %v28
  %v128 = vunpack.c.l.b16 %v29
  %v129 = vunpack.c.h.b16 %v29
  %v130 = vunpack.c.l.b16 %v30
  %v131 = vunpack.c.h.b16 %v30
  %v132 = vunpack.c.l.b16 %v31
  %v133 = vunpack.c.h.b16 %v31
  %v134 = vunpack.c.l.b16 %v32
  %v135 = vunpack.c.h.b16 %v32
  %v136 = vunpack.c.l.b16 %v33
  %v137 = vunpack.c.h.b16 %v33
  %v138 = vunpack.c.l.b16 %v34
  %v139 = vunpack.c.h.b16 %v34
  %v140 = vunpack.c.l.b16 %v35
  %v141 = vunpack.c.h.b16 %v35
  %v142 = vunpack.c.l.b16 %v36
  %v143 = vunpack.c.h.b16 %v36
  %v144 = vunpack.c.l.b16 %v37
  %v145 = vunpack.c.h.b16 %v37
  %v146 = vunpack.c.l.b16 %v38
  %v147 = vunpack.c.h.b16 %v38
  %v148 = vunpack.c.l.b16 %v39
  %v149 = vunpack.c.h.b16 %v39
  %v150 = vunpack.c.l.b16 %v40
  %v151 = vunpack.c.h.b16 %v40
  %v152 = vunpack.c.l.b16 %v41
  %v153 = vunpack.c.h.b16 %v41
  %v154 = vunpack.c.l.b16 %v42
  %v155 = vunpack.c.h.b16 %v42
  %v156 = vunpack.c.l.b16 %v43
  %v157 = vunpack.c.h.b16 %v43
  %v158 = vunpack.c.l.b16 %v44
  %v159 = vunpack.c.h.b16 %v44
  %v160 = vunpack.c.l.b16 %v45
  %v161 = vunpack.c.h.b16 %v45
  %v162 = vunpack.c.l.b16 %v46
  %v163 = vunpack.c.h.b16 %v46
  %v164 = vunpack.c.l.b16 %v47
  %v165 = vunpack.c.h.b16 %v47
  %v166 = vpack.c.b16 %v106, %v102
  %v167 = vpack.c.b16 %v107, %v103
  %v168 = vpack.c.b16 %v108, %v104
  %v169 = vpack.c.b16 %v109, %v105
  %v170 = vpack.c.b16 %v114, %v110
  %v171 = vpack.c.b16 %v115, %v111
  %v172 = vpack.c.b16 %v116, %v112
  %v173 = vpack.c.b16 %v117, %v113
  %v174 = vpack.c.b16 %v122, %v118
  %v175 = vpack.c.b16 %v123, %v119
  %v176 = vpack.c.b16 %v124, %v120
  %v177 = vpack.c.b16 %v125, %v121
  %v178 = vpack.c.b16 %v130, %v126
  %v179 = vpack.c.b16 %v131, %v127
  %v180 = vpack.c.b16 %v132, %v128
  %v181 = vpack.c.b16 %v133, %v129
  %v182 = vpack.c.b16 %v138, %v134
  %v183 = vpack.c.b16 %v139, %v135
  %v184 = vpack.c.b16 %v140, %v136
  %v185 = vpack.c.b16 %v141, %v137
  %v186 = vpack.c.b16 %v146, %v142
  %v187 = vpack.c.b16 %v147, %v143
  %v188 = vpack.c.b16 %v148, %v144
  %v189 = vpack.c.b16 %v149, %v145
  %v190 = vpack.c.b16 %v154, %v150
  %v191 = vpack.c.b16 %v155, %v151
  %v192 = vpack.c.b16 %v156, %v152
  %v193 = vpack.c.b16 %v157, %v153
  %v194 = vpack.c.b16 %v162, %v158
  %v195 = vpack.c.b16 %v163, %v159
  %v196 = vpack.c.b16 %v164, %v160
  %v197 = vpack.c.b16 %v165, %v161
  %230 = vmatprep.subr.bf16.mxu0 %v167
  %231 = vmatpush1.bf16.msra.mxu0 %v166
  %232 = vmatprep.subr.bf16.mxu0 %v171
  %233 = vmatpush1.bf16.msra.mxu0 %v170
  %234 = vmatprep.subr.bf16.mxu0 %v175
  %235 = vmatpush1.bf16.msra.mxu0 %v174
  %236 = vmatprep.subr.bf16.mxu0 %v179
  %237 = vmatpush1.bf16.msra.mxu0 %v178
  %238 = vmatprep.subr.bf16.mxu0 %v183
  %239 = vmatpush1.bf16.msra.mxu0 %v182
  %240 = vmatprep.subr.bf16.mxu0 %v187
  %241 = vmatpush1.bf16.msra.mxu0 %v186
  %242 = vmatprep.subr.bf16.mxu0 %v191
  %243 = vmatpush1.bf16.msra.mxu0 %v190
  %244 = vmatprep.subr.bf16.mxu0 %v195
  %245 = vmatpush1.bf16.msra.mxu0 %v194
  %246 = vmatprep.subr.bf16.mxu0 0
  %247 = vmatpush1.bf16.msra.mxu0 0
  %248 = vmatprep.subr.bf16.mxu0 0
  %249 = vmatpush1.bf16.msra.mxu0 0
  %250 = vmatprep.subr.bf16.mxu0 0
  %251 = vmatpush1.bf16.msra.mxu0 0
  %252 = vmatprep.subr.bf16.mxu0 0
  %253 = vmatpush1.bf16.msra.mxu0 0
  %254 = vmatprep.subr.bf16.mxu0 0
  %255 = vmatpush1.bf16.msra.mxu0 0
  %256 = vmatprep.subr.bf16.mxu0 0
  %257 = vmatpush1.bf16.msra.mxu0 0
  %258 = vmatprep.subr.bf16.mxu0 0
  %259 = vmatpush1.bf16.msra.mxu0 0
  %260 = vmatprep.subr.bf16.mxu0 0
  %261 = vmatpush1.bf16.msra.mxu0 0
  %262 = vmatprep.mubr.bf16.mxu0 0
  %263 = vmatmul.mubr.bf16.gmra.mrb[0].mxu0 %v15
  %v264 = vpop.f32.mrb[0].mxu0
  %v265 = vadd.f32 %v53, %v264
  %v266 = vpop.f32.mrb[0].mxu0
  %v267 = vadd.f32 %v57, %v266
  %v268 = vpop.f32.mrb[0].mxu0
  %v269 = vpop.f32.mrb[0].mxu0
  %270 = vdwg.mxu0
  %271 = vmatprep.subr.bf16.mxu0 %v169
  %272 = vmatpush1.bf16.msra.mxu0 %v168
  %273 = vmatprep.subr.bf16.mxu0 %v173
  %274 = vmatpush1.bf16.msra.mxu0 %v172
  %275 = vmatprep.subr.bf16.mxu0 %v177
  %276 = vmatpush1.bf16.msra.mxu0 %v176
  %277 = vmatprep.subr.bf16.mxu0 %v181
  %278 = vmatpush1.bf16.msra.mxu0 %v180
  %279 = vmatprep.subr.bf16.mxu0 %v185
  %280 = vmatpush1.bf16.msra.mxu0 %v184
  %281 = vmatprep.subr.bf16.mxu0 %v189
  %282 = vmatpush1.bf16.msra.mxu0 %v188
  %283 = vmatprep.subr.bf16.mxu0 %v193
  %284 = vmatpush1.bf16.msra.mxu0 %v192
  %285 = vmatprep.subr.bf16.mxu0 %v197
  %286 = vmatpush1.bf16.msra.mxu0 %v196
  %287 = vmatprep.subr.bf16.mxu0 0
  %288 = vmatpush1.bf16.msra.mxu0 0
  %289 = vmatprep.subr.bf16.mxu0 0
  %290 = vmatpush1.bf16.msra.mxu0 0
  %291 = vmatprep.subr.bf16.mxu0 0
  %292 = vmatpush1.bf16.msra.mxu0 0
  %293 = vmatprep.subr.bf16.mxu0 0
  %294 = vmatpush1.bf16.msra.mxu0 0
  %295 = vmatprep.subr.bf16.mxu0 0
  %296 = vmatpush1.bf16.msra.mxu0 0
  %297 = vmatprep.subr.bf16.mxu0 0
  %298 = vmatpush1.bf16.msra.mxu0 0
  %299 = vmatprep.subr.bf16.mxu0 0
  %300 = vmatpush1.bf16.msra.mxu0 0
  %301 = vmatprep.subr.bf16.mxu0 0
  %302 = vmatpush1.bf16.msra.mxu0 0
  %303 = vmatprep.mubr.bf16.mxu0 0
  %304 = vmatmul.mubr.bf16.gmra.mrb[0].mxu0 %v15
  %v305 = vpop.f32.mrb[0].mxu0
  %v306 = vadd.f32 %v61, %v305
  %v307 = vpop.f32.mrb[0].mxu0
  %v308 = vadd.f32 %v65, %v307
  %v309 = vpop.f32.mrb[0].mxu0
  %v310 = vpop.f32.mrb[0].mxu0
  %311 = vdwg.mxu0
  %v312 = vmax.f32 %v265, 0.0
  %v313 = vmax.f32 %v267, 0.0
  %v314 = vmax.f32 %v306, 0.0
  %v315 = vmax.f32 %v308, 0.0
  %v316 = vpack.c.bf16 %v312, %v312
  %v317 = vpack.c.bf16 %v313, %v313
  %v318 = vpack.c.bf16 %v314, %v314
  %v319 = vpack.c.bf16 %v315, %v315
  %v324 = vcombine.low %v316, %v317
  %v325 = vcombine.low %v318, %v319
  %v327 = vunpack.c.l.s4 1966171168
  %v328 = vunpack.c.0.s8 %v327
  %v329 = vlaneseq
  %v330 = vshrl.u32 %v329, 7
  %v331 = vsub.s32 %v328, %v330
  %v332 = vrot.slane %v324, %v331
  %v334 = vunpack.c.l.s4 1966171168
  %v335 = vunpack.c.0.s8 %v334
  %v336 = vlaneseq
  %v337 = vshrl.u32 %v336, 7
  %v338 = vsub.s32 %v335, %v337
  %v339 = vrot.slane %v325, %v338
  %v340 = vcombine.low %v332, %v339
  %v342 = vunpack.c.l.s4 1966171168
  %v343 = vunpack.c.0.s8 %v342
  %v344 = vlaneseq
  %v345 = vshrl.u32 %v344, 7
  %v346 = vsub.s32 %v343, %v345
  %v347 = vrot.slane %v340, %v346
  %349 = vst [vmem:[%s3] sm:$0xf] %v347
  // Predicated region
  $region14: #{stegastamp_decoder_forward.24} parent=0 // pred_check
    _
  $region15: #{stegastamp_decoder_forward.24} parent=0 // pred_check_branch
    %351 = sbr.rel (0) target = $region17
  $region16: #{stegastamp_decoder_forward.24} parent=0 // pred_region
    _
  $region17: #{stegastamp_decoder_forward.24} parent=0 // pred_fallthru
    _
  // Predicated region
  $region18: #{stegastamp_decoder_forward.24} parent=0 // pred_check
    _
  $region19: #{stegastamp_decoder_forward.24} parent=0 // pred_check_branch
    %353 = sbr.rel (0) target = $region21
  $region20: #{stegastamp_decoder_forward.24} parent=0 // pred_region
    _
  $region21: #{stegastamp_decoder_forward.24} parent=0 // pred_fallthru
    _

</llo_original>
